<compile_context>
chip_gen: v5e
topology: v5e:2x2
jax: 0.10.0
libtpu: 0.0.40
codegen_flags: <defaults>
</compile_context>

<pallas_src>
from functools import partial

import numpy as np
import jax
import jax.numpy as jnp
from jax.experimental import pallas as pl
from jax.experimental.pallas import tpu as pltpu


def _full_spec(shape):
    n = len(shape)
    return pl.BlockSpec(tuple(shape), lambda *_: (0,) * n)


def _tap_mask(h, w):
    """(9, H*W) 0/1 border-validity mask for the 3x3 taps (tap = kh*3+kw)."""
    hw = h * w
    m = np.zeros((9, hw), np.float32)
    for kh in range(3):
        for kw in range(3):
            dy, dx = kh - 1, kw - 1
            for p in range(hw):
                r, c = p // w, p % w
                if 0 <= r + dy < h and 0 <= c + dx < w:
                    m[kh * 3 + kw, p] = 1.0
    return jnp.asarray(m)


# --------------------------------------------------------------------------
# Kernel 1: per batch element (T images, channels-first (C, HW) tiles):
#   3x residual [Conv3x3 + BN(eval, folded) + ReLU] via per-tap accumulation,
#   spatial attention (two 1x1 convs, lane-dense map), global average pool.
# --------------------------------------------------------------------------
def _spatial_kernel(x_ref, w_ref, b_ref, wa1_ref, ba1_ref, wa2_ref, ba2_ref,
                    mask_ref, pooled_ref, attn_ref, *, n_img, width):
    C = x_ref.shape[1]
    HW = x_ref.shape[2]
    bf16 = jnp.bfloat16

    # static 3x3 tap shifts (tap = kh*3 + kw), matching mask_ref row order
    shifts = [(kh - 1) * width + (kw - 1) for kh in range(3) for kw in range(3)]

    # hoist weights / masks out of the per-image loop (grid-invariant)
    w_taps = [[w_ref[l, k] for k in range(9)] for l in range(3)]      # (C,C) bf16
    b_layers = [b_ref[l * C:(l + 1) * C, :] for l in range(3)]        # (C,1) f32
    masks = [mask_ref[k:k + 1, :] for k in range(9)]                  # (1,HW) f32
    wa1 = wa1_ref[...]
    ba1 = ba1_ref[...]
    wa2 = wa2_ref[...]
    ba2 = ba2_ref[...]

    pooled_cols = []
    attn_rows = []
    for t in range(n_img):
        xi = x_ref[t]                                                 # (C, HW) f32

        # --- 3 x [Conv3x3 + BN(eval) + ReLU + Dropout2d(id)] with residual ---
        for l in range(3):
            acc = jnp.zeros((C, HW), jnp.float32)
            for k, s in enumerate(shifts):
                shifted = xi if s == 0 else pltpu.roll(xi, shift=(-s) % HW, axis=1)
                col = (shifted * masks[k]).astype(bf16)               # zero padding
                acc = acc + jnp.dot(w_taps[l][k], col,
                                    preferred_element_type=jnp.float32)
            xi = jnp.maximum(acc + b_layers[l], 0.0) + xi             # residual

        # --- spatial attention: 1x1 -> ReLU -> 1x1 -> sigmoid (lane-dense) ---
        h = jnp.maximum(
            jnp.dot(wa1, xi.astype(bf16), preferred_element_type=jnp.float32)
            + ba1, 0.0)
        a = jax.nn.sigmoid(
            jnp.dot(wa2, h.astype(bf16), preferred_element_type=jnp.float32)
            + ba2)                                                    # (1, HW)
        att = xi * a

        # --- per-image global average pool (lane reduction) ---
        pooled_cols.append(jnp.mean(att, axis=1, keepdims=True))      # (C, 1)
        attn_rows.append(a)

    pooled_ref[...] = jnp.concatenate(pooled_cols, axis=1)            # (C, T)
    attn_ref[...] = jnp.concatenate(attn_rows, axis=0)                # (T, HW)


# --------------------------------------------------------------------------
# Kernel 2 (fused): 2-layer bidirectional LSTM (hoisted input projections,
#   block-diagonal fwd/rev recurrent matmul) + batched temporal attention +
#   projection MLP + LayerNorm.
# --------------------------------------------------------------------------
def _temporal_kernel(x_ref, wl_ref, wh_ref, b_ref, emb_ref, tattn_ref,
                     ig_ref, seq0_ref, seq1_ref, *, n_time, n_batch, hidden):
    T, B, H = n_time, n_batch, hidden
    C = x_ref.shape[1]
    E = 2 * H            # bidirectional feature width
    G = 4 * H            # per-direction fused gate width
    bf16 = jnp.bfloat16

    def cell(g, c):      # PyTorch gate order: i, f, g, o  (f32 nonlinearities)
        i = jax.nn.sigmoid(g[:, 0:H])
        f = jax.nn.sigmoid(g[:, H:2 * H])
        gg = jnp.tanh(g[:, 2 * H:3 * H])
        o = jax.nn.sigmoid(g[:, 3 * H:4 * H])
        c2 = f * c + i * gg
        return o * jnp.tanh(c2), c2

    def bilstm_layer(w_rec, out_ref):
        # recurrence only: input-gate contributions are already in ig_ref
        cf = jnp.zeros((B, H), jnp.float32)
        cr = jnp.zeros((B, H), jnp.float32)
        h_cat = None
        for s in range(T):
            tf, tr = s, T - 1 - s
            gf = ig_ref[tf * B:(tf + 1) * B, 0:G]
            gr = ig_ref[tr * B:(tr + 1) * B, G:2 * G]
            if h_cat is not None:
                rec = jnp.dot(h_cat.astype(bf16), w_rec,
                              preferred_element_type=jnp.float32)     # (B, 8H)
                gf = gf + rec[:, 0:G]
                gr = gr + rec[:, G:2 * G]
            hf, cf = cell(gf, cf)
            hr, cr = cell(gr, cr)
            h_cat = jnp.concatenate([hf, hr], axis=1)                 # [fwd | rev]
            out_ref[tf * B:(tf + 1) * B, 0:H] = hf
            out_ref[tr * B:(tr + 1) * B, H:E] = hr

    # ---- layer 0: input projection hoisted out of the recurrence ----
    ig_ref[...] = jnp.dot(x_ref[...].astype(bf16), wl_ref[0:C, :],
                          preferred_element_type=jnp.float32) + b_ref[0:1, :]
    bilstm_layer(wl_ref[C:C + E, :], seq0_ref)

    # ---- layer 1 (input = bidirectional layer-0 output; eval dropout = id) ----
    ig_ref[...] = jnp.dot(seq0_ref[...].astype(bf16), wl_ref[C + E:C + 2 * E, :],
                          preferred_element_type=jnp.float32) + b_ref[1:2, :]
    bilstm_layer(wl_ref[C + 2 * E:C + 3 * E, :], seq1_ref)

    # ---- temporal attention, batched over all timesteps ----
    seq1 = seq1_ref[...]                                              # (T*B, E)
    ta1 = wh_ref[0:E, 0:E // 4]
    ta2 = wh_ref[E:E + E // 4, 0:1]
    tb1 = b_ref[2:3, 0:E // 4]
    tb2 = b_ref[3:4, 0:1]
    ha = jnp.maximum(
        jnp.dot(seq1, ta1, preferred_element_type=jnp.float32) + tb1, 0.0)
    aa = jax.nn.sigmoid(
        jnp.dot(ha, ta2, preferred_element_type=jnp.float32) + tb2)   # (T*B, 1)
    tattn_ref[...] = aa

    # ---- gated last timestep -> projection MLP -> LayerNorm ----
    a_last = tattn_ref[(T - 1) * B:T * B, :]                          # (B, 1)
    last = seq1_ref[(T - 1) * B:T * B, :]                             # (B, E)
    att_last = last * a_last
    pw1 = wh_ref[E + E // 4:2 * E + E // 4, :]
    pw2 = wh_ref[2 * E + E // 4:3 * E + E // 4, :]
    pb1 = b_ref[4:5, 0:E]
    pb2 = b_ref[5:6, 0:E]
    p1 = jnp.maximum(
        jnp.dot(att_last, pw1, preferred_element_type=jnp.float32) + pb1, 0.0)
    y = jnp.dot(p1, pw2, preferred_element_type=jnp.float32) + pb2    # (B, E)
    mu = jnp.mean(y, axis=-1, keepdims=True)
    var = jnp.mean((y - mu) ** 2, axis=-1, keepdims=True)
    yn = (y - mu) * jax.lax.rsqrt(var + 1e-5)
    emb_ref[...] = yn * b_ref[6:7, 0:E] + b_ref[7:8, 0:E]


# --------------------------------------------------------------------------
# Wrapper (JAX glue + pallas_calls)
# --------------------------------------------------------------------------
def earth_memory_encoder(x, params, *, embedding_dim):
    B, T, C, H, W = x.shape
    HW = H * W
    E = embedding_dim
    HL = E // 2
    p = params

    # (B, T, C, H, W) -> (B*T, C, HW): contiguous merge, no data movement.
    xs = x.reshape(B * T, C, HW)
    tap_mask = _tap_mask(H, W)

    spatial = partial(_spatial_kernel, n_img=T, width=W)
    pooled, sp_attn = pl.pallas_call(
        spatial,
        out_shape=(jax.ShapeDtypeStruct((B * C, T), jnp.float32),
                   jax.ShapeDtypeStruct((B * T, HW), jnp.float32)),
        grid=(B,),
        in_specs=[
            pl.BlockSpec((T, C, HW), lambda i: (i, 0, 0)),
            _full_spec(p['conv_w'].shape),
            _full_spec(p['conv_b'].shape),
            _full_spec(p['wa1'].shape),
            _full_spec(p['ba1'].shape),
            _full_spec(p['wa2'].shape),
            _full_spec(p['ba2'].shape),
            _full_spec(tap_mask.shape),
        ],
        out_specs=(pl.BlockSpec((C, T), lambda i: (i, 0)),
                   pl.BlockSpec((T, HW), lambda i: (i, 0))),
        compiler_params=pltpu.CompilerParams(
            dimension_semantics=("parallel",)),
    )(xs, p['conv_w'], p['conv_b'], p['wa1'], p['ba1'], p['wa2'], p['ba2'],
      tap_mask)

    # tiny (B*C*T element) reorder to time-major rows (t*B + b) for the LSTM
    xseq = jnp.transpose(pooled.reshape(B, C, T), (2, 0, 1)).reshape(T * B, C)

    temporal = partial(_temporal_kernel, n_time=T, n_batch=B, hidden=HL)
    emb, t_attn = pl.pallas_call(
        temporal,
        out_shape=(jax.ShapeDtypeStruct((B, E), jnp.float32),
                   jax.ShapeDtypeStruct((T * B, 1), jnp.float32)),
        grid=(1,),
        in_specs=[_full_spec(xseq.shape),
                  _full_spec(p['w_lstm'].shape),
                  _full_spec(p['w_head'].shape),
                  _full_spec(p['b_all'].shape)],
        out_specs=(_full_spec((B, E)), _full_spec((T * B, 1))),
        scratch_shapes=[pltpu.VMEM((T * B, 8 * HL), jnp.float32),
                        pltpu.VMEM((T * B, E), jnp.float32),
                        pltpu.VMEM((T * B, E), jnp.float32)],
        compiler_params=pltpu.CompilerParams(
            dimension_semantics=("arbitrary",)),
    )(xseq, p['w_lstm'], p['w_head'], p['b_all'])

    attention_maps = {
        # back to the PyTorch conventions
        'spatial': sp_attn.reshape(B * T, 1, H, W),
        'temporal': jnp.transpose(t_attn.reshape(T, B, 1), (1, 0, 2)),   # (B,T,1)
    }
    return emb, attention_maps


# --------------------------------------------------------------------------
# Deterministic synthetic parameters (packed, kernel-ready layouts)
# --------------------------------------------------------------------------
def init_params(key, *, channels, embedding_dim):
    CS, E = channels, embedding_dim
    HL = E // 2
    G8 = 8 * HL                      # fused fwd+rev gate width
    keys = iter(jax.random.split(key, 48))

    def nrm(shape, scale=0.1):
        return jax.random.normal(next(keys), shape, dtype=jnp.float32) * scale

    # ---- spatial residual conv stack (PyTorch layout (Cout, Cin, kh, kw)) ----
    conv_w_pt = nrm((3, CS, CS, 3, 3), 0.08)
    conv_b_pt = nrm((3, CS), 0.05)
    # eval-mode BatchNorm fold (default stats: gamma=1, beta=0, mean=0, var=1)
    gamma = jnp.ones((3, CS)); beta = jnp.zeros((3, CS))
    mean = jnp.zeros((3, CS)); var = jnp.ones((3, CS))
    scale = gamma / jnp.sqrt(var + 1e-5)
    conv_w_pt = conv_w_pt * scale[:, :, None, None, None]
    conv_b = (conv_b_pt - mean) * scale + beta
    # kernel layout: (layer, tap = kh*3 + kw, Cout, Cin), bf16 MXU operand
    conv_w = jnp.transpose(conv_w_pt, (0, 3, 4, 1, 2)).reshape(3, 9, CS, CS)
    conv_w = conv_w.astype(jnp.bfloat16)
    conv_b_col = conv_b.reshape(3 * CS, 1)                          # f32

    # ---- spatial attention 1x1 convs (PyTorch Conv2d weight (Cout, Cin)) ----
    wa1 = nrm((CS // 8, CS)).astype(jnp.bfloat16)
    ba1 = nrm((CS // 8, 1), 0.05)
    wa2 = nrm((1, CS // 8)).astype(jnp.bfloat16)
    ba2 = nrm((1, 1), 0.05)

    # ---- bidirectional 2-layer LSTM (PyTorch layouts), fused & packed ----
    def lstm_dir(in_dim):
        w_ih = nrm((4 * HL, in_dim))     # (4H, in)
        w_hh = nrm((4 * HL, HL))         # (4H, H)
        b = nrm((4 * HL,), 0.05)         # b_ih + b_hh pre-summed
        return w_ih, w_hh, b

    wih0f, whh0f, b0f = lstm_dir(CS)
    wih0r, whh0r, b0r = lstm_dir(CS)
    wih1f, whh1f, b1f = lstm_dir(E)      # layer-1 input = bidir concat (E)
    wih1r, whh1r, b1r = lstm_dir(E)

    def blockdiag(wf, wr):               # (H,4H),(H,4H) -> (2H, 8H)
        z = jnp.zeros_like(wf)
        return jnp.concatenate(
            [jnp.concatenate([wf, z], axis=1),
             jnp.concatenate([z, wr], axis=1)], axis=0)

    w_in0 = jnp.concatenate([wih0f.T, wih0r.T], axis=1)             # (CS, 8H)
    w_rec0 = blockdiag(whh0f.T, whh0r.T)                            # (2H, 8H)
    w_in1 = jnp.concatenate([wih1f.T, wih1r.T], axis=1)             # (2H, 8H)
    w_rec1 = blockdiag(whh1f.T, whh1r.T)
    w_lstm = jnp.concatenate([w_in0, w_rec0, w_in1, w_rec1],
                             axis=0).astype(jnp.bfloat16)           # (CS+6H, 8H)
    b0 = jnp.concatenate([b0f, b0r])                                # (8H,)
    b1 = jnp.concatenate([b1f, b1r])

    # ---- temporal attention + projection + LayerNorm (PyTorch Linear) ----
    ta1 = nrm((E // 4, E)); tb1 = nrm((E // 4,), 0.05)
    ta2 = nrm((1, E // 4)); tb2 = nrm((1,), 0.05)
    pw1 = nrm((E, E)); pb1 = nrm((E,), 0.05)
    pw2 = nrm((E, E)); pb2 = nrm((E,), 0.05)
    ln_g = jnp.ones((E,), jnp.float32)
    ln_b = jnp.zeros((E,), jnp.float32)

    def padc(a, w):
        return jnp.pad(a, ((0, 0), (0, w - a.shape[1])))
    # packed head weights (f32; rows: ta1 | ta2 | pw1 | pw2), width E
    w_head = jnp.concatenate(
        [padc(ta1.T, E), padc(ta2.T, E), pw1.T, pw2.T], axis=0)     # (3E+E//4, E)

    def row(v):
        return jnp.pad(v, (0, G8 - v.shape[0]))[None, :]
    # packed biases / LN params (8, 8H) f32
    b_all = jnp.concatenate([row(b0), row(b1), row(tb1), row(tb2),
                             row(pb1), row(pb2), row(ln_g), row(ln_b)], axis=0)

    return dict(conv_w=conv_w, conv_b=conv_b_col,
                wa1=wa1, ba1=ba1, wa2=wa2, ba2=ba2,
                w_lstm=w_lstm, w_head=w_head, b_all=b_all)


if __name__ == "__main__":
    B, T = 2, 8          # batch, temporal_window
    CS = 16              # input_channels == spatial conv width (scaled-down 256)
    H = W = 8            # spatial size
    E = 32               # embedding_dim (LSTM hidden = E // 2 per direction)

    key = jax.random.PRNGKey(0)
    kx, kp = jax.random.split(key)
    x = jax.random.normal(kx, (B, T, CS, H, W), dtype=jnp.float32)
    params = init_params(kp, channels=CS, embedding_dim=E)

    emb, attn = earth_memory_encoder(x, params, embedding_dim=E)
    emb = jax.block_until_ready(emb)
    jax.block_until_ready(attn['spatial'])
    jax.block_until_ready(attn['temporal'])

    assert emb.shape == (B, E)
    assert attn['spatial'].shape == (B * T, 1, H, W)
    assert attn['temporal'].shape == (B, T, 1)
    assert bool(jnp.all(jnp.isfinite(emb)))
    print("KERNEL_OK")
</pallas_src>

<mosaic_0001>
module attributes {stable_mosaic.version = 11 : i64} {
  func.func @_spatial_kernel(%arg0: i32, %arg1: memref<8x16x64xf32, #tpu.memory_space<vmem>>, %arg2: memref<3x9x16x16xbf16, #tpu.memory_space<vmem>>, %arg3: memref<48x1xf32, #tpu.memory_space<vmem>>, %arg4: memref<2x16xbf16, #tpu.memory_space<vmem>>, %arg5: memref<2x1xf32, #tpu.memory_space<vmem>>, %arg6: memref<1x2xbf16, #tpu.memory_space<vmem>>, %arg7: memref<1x1xf32, #tpu.memory_space<vmem>>, %arg8: memref<9x64xf32, #tpu.memory_space<vmem>>, %arg9: memref<16x8xf32, #tpu.memory_space<vmem>>, %arg10: memref<8x64xf32, #tpu.memory_space<vmem>>) attributes {dimension_semantics = [#tpu.dimension_semantics<parallel>], iteration_bounds = array<i64: 2>, scalar_prefetch = 0 : i64, scratch_operands = 0 : i64, tpu.core_type = #tpu.core_type<tc>, window_params = [{transform_indices = @transform_0, window_bounds = array<i64: 8, 16, 64>}, {pipeline_mode = #tpu.pipeline_mode<synchronous>, transform_indices = @transform_1, window_bounds = array<i64: 3, 9, 16, 16>}, {pipeline_mode = #tpu.pipeline_mode<synchronous>, transform_indices = @transform_2, window_bounds = array<i64: 48, 1>}, {pipeline_mode = #tpu.pipeline_mode<synchronous>, transform_indices = @transform_3, window_bounds = array<i64: 2, 16>}, {pipeline_mode = #tpu.pipeline_mode<synchronous>, transform_indices = @transform_4, window_bounds = array<i64: 2, 1>}, {pipeline_mode = #tpu.pipeline_mode<synchronous>, transform_indices = @transform_5, window_bounds = array<i64: 1, 2>}, {pipeline_mode = #tpu.pipeline_mode<synchronous>, transform_indices = @transform_6, window_bounds = array<i64: 1, 1>}, {pipeline_mode = #tpu.pipeline_mode<synchronous>, transform_indices = @transform_7, window_bounds = array<i64: 9, 64>}, {transform_indices = @transform_8, window_bounds = array<i64: 16, 8>}, {transform_indices = @transform_9, window_bounds = array<i64: 8, 64>}]} {
    %c0 = arith.constant 0 : index
    %c0_0 = arith.constant 0 : index
    %c0_1 = arith.constant 0 : index
    %c0_2 = arith.constant 0 : index
    %0 = vector.load %arg2[%c0, %c0_0, %c0_1, %c0_2] : memref<3x9x16x16xbf16, #tpu.memory_space<vmem>>, vector<1x1x16x16xbf16>
    %1 = vector.shape_cast %0 : vector<1x1x16x16xbf16> to vector<16x16xbf16>
    %c0_3 = arith.constant 0 : index
    %c1 = arith.constant 1 : index
    %c0_4 = arith.constant 0 : index
    %c0_5 = arith.constant 0 : index
    %2 = vector.load %arg2[%c0_3, %c1, %c0_4, %c0_5] : memref<3x9x16x16xbf16, #tpu.memory_space<vmem>>, vector<1x1x16x16xbf16>
    %3 = vector.shape_cast %2 : vector<1x1x16x16xbf16> to vector<16x16xbf16>
    %c0_6 = arith.constant 0 : index
    %c2 = arith.constant 2 : index
    %c0_7 = arith.constant 0 : index
    %c0_8 = arith.constant 0 : index
    %4 = vector.load %arg2[%c0_6, %c2, %c0_7, %c0_8] : memref<3x9x16x16xbf16, #tpu.memory_space<vmem>>, vector<1x1x16x16xbf16>
    %5 = vector.shape_cast %4 : vector<1x1x16x16xbf16> to vector<16x16xbf16>
    %c0_9 = arith.constant 0 : index
    %c3 = arith.constant 3 : index
    %c0_10 = arith.constant 0 : index
    %c0_11 = arith.constant 0 : index
    %6 = vector.load %arg2[%c0_9, %c3, %c0_10, %c0_11] : memref<3x9x16x16xbf16, #tpu.memory_space<vmem>>, vector<1x1x16x16xbf16>
    %7 = vector.shape_cast %6 : vector<1x1x16x16xbf16> to vector<16x16xbf16>
    %c0_12 = arith.constant 0 : index
    %c4 = arith.constant 4 : index
    %c0_13 = arith.constant 0 : index
    %c0_14 = arith.constant 0 : index
    %8 = vector.load %arg2[%c0_12, %c4, %c0_13, %c0_14] : memref<3x9x16x16xbf16, #tpu.memory_space<vmem>>, vector<1x1x16x16xbf16>
    %9 = vector.shape_cast %8 : vector<1x1x16x16xbf16> to vector<16x16xbf16>
    %c0_15 = arith.constant 0 : index
    %c5 = arith.constant 5 : index
    %c0_16 = arith.constant 0 : index
    %c0_17 = arith.constant 0 : index
    %10 = vector.load %arg2[%c0_15, %c5, %c0_16, %c0_17] : memref<3x9x16x16xbf16, #tpu.memory_space<vmem>>, vector<1x1x16x16xbf16>
    %11 = vector.shape_cast %10 : vector<1x1x16x16xbf16> to vector<16x16xbf16>
    %c0_18 = arith.constant 0 : index
    %c6 = arith.constant 6 : index
    %c0_19 = arith.constant 0 : index
    %c0_20 = arith.constant 0 : index
    %12 = vector.load %arg2[%c0_18, %c6, %c0_19, %c0_20] : memref<3x9x16x16xbf16, #tpu.memory_space<vmem>>, vector<1x1x16x16xbf16>
    %13 = vector.shape_cast %12 : vector<1x1x16x16xbf16> to vector<16x16xbf16>
    %c0_21 = arith.constant 0 : index
    %c7 = arith.constant 7 : index
    %c0_22 = arith.constant 0 : index
    %c0_23 = arith.constant 0 : index
    %14 = vector.load %arg2[%c0_21, %c7, %c0_22, %c0_23] : memref<3x9x16x16xbf16, #tpu.memory_space<vmem>>, vector<1x1x16x16xbf16>
    %15 = vector.shape_cast %14 : vector<1x1x16x16xbf16> to vector<16x16xbf16>
    %c0_24 = arith.constant 0 : index
    %c8 = arith.constant 8 : index
    %c0_25 = arith.constant 0 : index
    %c0_26 = arith.constant 0 : index
    %16 = vector.load %arg2[%c0_24, %c8, %c0_25, %c0_26] : memref<3x9x16x16xbf16, #tpu.memory_space<vmem>>, vector<1x1x16x16xbf16>
    %17 = vector.shape_cast %16 : vector<1x1x16x16xbf16> to vector<16x16xbf16>
    %c1_27 = arith.constant 1 : index
    %c0_28 = arith.constant 0 : index
    %c0_29 = arith.constant 0 : index
    %c0_30 = arith.constant 0 : index
    %18 = vector.load %arg2[%c1_27, %c0_28, %c0_29, %c0_30] : memref<3x9x16x16xbf16, #tpu.memory_space<vmem>>, vector<1x1x16x16xbf16>
    %19 = vector.shape_cast %18 : vector<1x1x16x16xbf16> to vector<16x16xbf16>
    %c1_31 = arith.constant 1 : index
    %c1_32 = arith.constant 1 : index
    %c0_33 = arith.constant 0 : index
    %c0_34 = arith.constant 0 : index
    %20 = vector.load %arg2[%c1_31, %c1_32, %c0_33, %c0_34] : memref<3x9x16x16xbf16, #tpu.memory_space<vmem>>, vector<1x1x16x16xbf16>
    %21 = vector.shape_cast %20 : vector<1x1x16x16xbf16> to vector<16x16xbf16>
    %c1_35 = arith.constant 1 : index
    %c2_36 = arith.constant 2 : index
    %c0_37 = arith.constant 0 : index
    %c0_38 = arith.constant 0 : index
    %22 = vector.load %arg2[%c1_35, %c2_36, %c0_37, %c0_38] : memref<3x9x16x16xbf16, #tpu.memory_space<vmem>>, vector<1x1x16x16xbf16>
    %23 = vector.shape_cast %22 : vector<1x1x16x16xbf16> to vector<16x16xbf16>
    %c1_39 = arith.constant 1 : index
    %c3_40 = arith.constant 3 : index
    %c0_41 = arith.constant 0 : index
    %c0_42 = arith.constant 0 : index
    %24 = vector.load %arg2[%c1_39, %c3_40, %c0_41, %c0_42] : memref<3x9x16x16xbf16, #tpu.memory_space<vmem>>, vector<1x1x16x16xbf16>
    %25 = vector.shape_cast %24 : vector<1x1x16x16xbf16> to vector<16x16xbf16>
    %c1_43 = arith.constant 1 : index
    %c4_44 = arith.constant 4 : index
    %c0_45 = arith.constant 0 : index
    %c0_46 = arith.constant 0 : index
    %26 = vector.load %arg2[%c1_43, %c4_44, %c0_45, %c0_46] : memref<3x9x16x16xbf16, #tpu.memory_space<vmem>>, vector<1x1x16x16xbf16>
    %27 = vector.shape_cast %26 : vector<1x1x16x16xbf16> to vector<16x16xbf16>
    %c1_47 = arith.constant 1 : index
    %c5_48 = arith.constant 5 : index
    %c0_49 = arith.constant 0 : index
    %c0_50 = arith.constant 0 : index
    %28 = vector.load %arg2[%c1_47, %c5_48, %c0_49, %c0_50] : memref<3x9x16x16xbf16, #tpu.memory_space<vmem>>, vector<1x1x16x16xbf16>
    %29 = vector.shape_cast %28 : vector<1x1x16x16xbf16> to vector<16x16xbf16>
    %c1_51 = arith.constant 1 : index
    %c6_52 = arith.constant 6 : index
    %c0_53 = arith.constant 0 : index
    %c0_54 = arith.constant 0 : index
    %30 = vector.load %arg2[%c1_51, %c6_52, %c0_53, %c0_54] : memref<3x9x16x16xbf16, #tpu.memory_space<vmem>>, vector<1x1x16x16xbf16>
    %31 = vector.shape_cast %30 : vector<1x1x16x16xbf16> to vector<16x16xbf16>
    %c1_55 = arith.constant 1 : index
    %c7_56 = arith.constant 7 : index
    %c0_57 = arith.constant 0 : index
    %c0_58 = arith.constant 0 : index
    %32 = vector.load %arg2[%c1_55, %c7_56, %c0_57, %c0_58] : memref<3x9x16x16xbf16, #tpu.memory_space<vmem>>, vector<1x1x16x16xbf16>
    %33 = vector.shape_cast %32 : vector<1x1x16x16xbf16> to vector<16x16xbf16>
    %c1_59 = arith.constant 1 : index
    %c8_60 = arith.constant 8 : index
    %c0_61 = arith.constant 0 : index
    %c0_62 = arith.constant 0 : index
    %34 = vector.load %arg2[%c1_59, %c8_60, %c0_61, %c0_62] : memref<3x9x16x16xbf16, #tpu.memory_space<vmem>>, vector<1x1x16x16xbf16>
    %35 = vector.shape_cast %34 : vector<1x1x16x16xbf16> to vector<16x16xbf16>
    %c2_63 = arith.constant 2 : index
    %c0_64 = arith.constant 0 : index
    %c0_65 = arith.constant 0 : index
    %c0_66 = arith.constant 0 : index
    %36 = vector.load %arg2[%c2_63, %c0_64, %c0_65, %c0_66] : memref<3x9x16x16xbf16, #tpu.memory_space<vmem>>, vector<1x1x16x16xbf16>
    %37 = vector.shape_cast %36 : vector<1x1x16x16xbf16> to vector<16x16xbf16>
    %c2_67 = arith.constant 2 : index
    %c1_68 = arith.constant 1 : index
    %c0_69 = arith.constant 0 : index
    %c0_70 = arith.constant 0 : index
    %38 = vector.load %arg2[%c2_67, %c1_68, %c0_69, %c0_70] : memref<3x9x16x16xbf16, #tpu.memory_space<vmem>>, vector<1x1x16x16xbf16>
    %39 = vector.shape_cast %38 : vector<1x1x16x16xbf16> to vector<16x16xbf16>
    %c2_71 = arith.constant 2 : index
    %c2_72 = arith.constant 2 : index
    %c0_73 = arith.constant 0 : index
    %c0_74 = arith.constant 0 : index
    %40 = vector.load %arg2[%c2_71, %c2_72, %c0_73, %c0_74] : memref<3x9x16x16xbf16, #tpu.memory_space<vmem>>, vector<1x1x16x16xbf16>
    %41 = vector.shape_cast %40 : vector<1x1x16x16xbf16> to vector<16x16xbf16>
    %c2_75 = arith.constant 2 : index
    %c3_76 = arith.constant 3 : index
    %c0_77 = arith.constant 0 : index
    %c0_78 = arith.constant 0 : index
    %42 = vector.load %arg2[%c2_75, %c3_76, %c0_77, %c0_78] : memref<3x9x16x16xbf16, #tpu.memory_space<vmem>>, vector<1x1x16x16xbf16>
    %43 = vector.shape_cast %42 : vector<1x1x16x16xbf16> to vector<16x16xbf16>
    %c2_79 = arith.constant 2 : index
    %c4_80 = arith.constant 4 : index
    %c0_81 = arith.constant 0 : index
    %c0_82 = arith.constant 0 : index
    %44 = vector.load %arg2[%c2_79, %c4_80, %c0_81, %c0_82] : memref<3x9x16x16xbf16, #tpu.memory_space<vmem>>, vector<1x1x16x16xbf16>
    %45 = vector.shape_cast %44 : vector<1x1x16x16xbf16> to vector<16x16xbf16>
    %c2_83 = arith.constant 2 : index
    %c5_84 = arith.constant 5 : index
    %c0_85 = arith.constant 0 : index
    %c0_86 = arith.constant 0 : index
    %46 = vector.load %arg2[%c2_83, %c5_84, %c0_85, %c0_86] : memref<3x9x16x16xbf16, #tpu.memory_space<vmem>>, vector<1x1x16x16xbf16>
    %47 = vector.shape_cast %46 : vector<1x1x16x16xbf16> to vector<16x16xbf16>
    %c2_87 = arith.constant 2 : index
    %c6_88 = arith.constant 6 : index
    %c0_89 = arith.constant 0 : index
    %c0_90 = arith.constant 0 : index
    %48 = vector.load %arg2[%c2_87, %c6_88, %c0_89, %c0_90] : memref<3x9x16x16xbf16, #tpu.memory_space<vmem>>, vector<1x1x16x16xbf16>
    %49 = vector.shape_cast %48 : vector<1x1x16x16xbf16> to vector<16x16xbf16>
    %c2_91 = arith.constant 2 : index
    %c7_92 = arith.constant 7 : index
    %c0_93 = arith.constant 0 : index
    %c0_94 = arith.constant 0 : index
    %50 = vector.load %arg2[%c2_91, %c7_92, %c0_93, %c0_94] : memref<3x9x16x16xbf16, #tpu.memory_space<vmem>>, vector<1x1x16x16xbf16>
    %51 = vector.shape_cast %50 : vector<1x1x16x16xbf16> to vector<16x16xbf16>
    %c2_95 = arith.constant 2 : index
    %c8_96 = arith.constant 8 : index
    %c0_97 = arith.constant 0 : index
    %c0_98 = arith.constant 0 : index
    %52 = vector.load %arg2[%c2_95, %c8_96, %c0_97, %c0_98] : memref<3x9x16x16xbf16, #tpu.memory_space<vmem>>, vector<1x1x16x16xbf16>
    %53 = vector.shape_cast %52 : vector<1x1x16x16xbf16> to vector<16x16xbf16>
    %c0_99 = arith.constant 0 : index
    %c0_100 = arith.constant 0 : index
    %54 = vector.load %arg3[%c0_99, %c0_100] : memref<48x1xf32, #tpu.memory_space<vmem>>, vector<16x1xf32>
    %c16 = arith.constant 16 : index
    %c0_101 = arith.constant 0 : index
    %55 = vector.load %arg3[%c16, %c0_101] : memref<48x1xf32, #tpu.memory_space<vmem>>, vector<16x1xf32>
    %c32 = arith.constant 32 : index
    %c0_102 = arith.constant 0 : index
    %56 = vector.load %arg3[%c32, %c0_102] : memref<48x1xf32, #tpu.memory_space<vmem>>, vector<16x1xf32>
    %c0_103 = arith.constant 0 : index
    %c0_104 = arith.constant 0 : index
    %57 = vector.load %arg8[%c0_103, %c0_104] : memref<9x64xf32, #tpu.memory_space<vmem>>, vector<1x64xf32>
    %c1_105 = arith.constant 1 : index
    %c0_106 = arith.constant 0 : index
    %58 = vector.load %arg8[%c1_105, %c0_106] : memref<9x64xf32, #tpu.memory_space<vmem>>, vector<1x64xf32>
    %c2_107 = arith.constant 2 : index
    %c0_108 = arith.constant 0 : index
    %59 = vector.load %arg8[%c2_107, %c0_108] : memref<9x64xf32, #tpu.memory_space<vmem>>, vector<1x64xf32>
    %c3_109 = arith.constant 3 : index
    %c0_110 = arith.constant 0 : index
    %60 = vector.load %arg8[%c3_109, %c0_110] : memref<9x64xf32, #tpu.memory_space<vmem>>, vector<1x64xf32>
    %c4_111 = arith.constant 4 : index
    %c0_112 = arith.constant 0 : index
    %61 = vector.load %arg8[%c4_111, %c0_112] : memref<9x64xf32, #tpu.memory_space<vmem>>, vector<1x64xf32>
    %c5_113 = arith.constant 5 : index
    %c0_114 = arith.constant 0 : index
    %62 = vector.load %arg8[%c5_113, %c0_114] : memref<9x64xf32, #tpu.memory_space<vmem>>, vector<1x64xf32>
    %c6_115 = arith.constant 6 : index
    %c0_116 = arith.constant 0 : index
    %63 = vector.load %arg8[%c6_115, %c0_116] : memref<9x64xf32, #tpu.memory_space<vmem>>, vector<1x64xf32>
    %c7_117 = arith.constant 7 : index
    %c0_118 = arith.constant 0 : index
    %64 = vector.load %arg8[%c7_117, %c0_118] : memref<9x64xf32, #tpu.memory_space<vmem>>, vector<1x64xf32>
    %c8_119 = arith.constant 8 : index
    %c0_120 = arith.constant 0 : index
    %65 = vector.load %arg8[%c8_119, %c0_120] : memref<9x64xf32, #tpu.memory_space<vmem>>, vector<1x64xf32>
    %c0_121 = arith.constant 0 : index
    %c0_122 = arith.constant 0 : index
    %66 = vector.load %arg4[%c0_121, %c0_122] : memref<2x16xbf16, #tpu.memory_space<vmem>>, vector<2x16xbf16>
    %c0_123 = arith.constant 0 : index
    %c0_124 = arith.constant 0 : index
    %67 = vector.load %arg5[%c0_123, %c0_124] : memref<2x1xf32, #tpu.memory_space<vmem>>, vector<2x1xf32>
    %c0_125 = arith.constant 0 : index
    %c0_126 = arith.constant 0 : index
    %68 = vector.load %arg6[%c0_125, %c0_126] : memref<1x2xbf16, #tpu.memory_space<vmem>>, vector<1x2xbf16>
    %c0_127 = arith.constant 0 : index
    %c0_128 = arith.constant 0 : index
    %69 = vector.load %arg7[%c0_127, %c0_128] : memref<1x1xf32, #tpu.memory_space<vmem>>, vector<1x1xf32>
    %c0_129 = arith.constant 0 : index
    %c0_130 = arith.constant 0 : index
    %c0_131 = arith.constant 0 : index
    %70 = vector.load %arg1[%c0_129, %c0_130, %c0_131] : memref<8x16x64xf32, #tpu.memory_space<vmem>>, vector<1x16x64xf32>
    %71 = vector.shape_cast %70 : vector<1x16x64xf32> to vector<16x64xf32>
    %cst = arith.constant 0.000000e+00 : f32
    %72 = vector.broadcast %cst : f32 to vector<16x64xf32>
    %c9_i32 = arith.constant 9 : i32
    %73 = tpu.dynamic_rotate %71 by %c9_i32 dim 1 : vector<16x64xf32>, i32 -> vector<16x64xf32>
    %74 = vector.broadcast %57 : vector<1x64xf32> to vector<16x64xf32>
    %75 = arith.mulf %73, %74 : vector<16x64xf32>
    %76 = arith.truncf %75 : vector<16x64xf32> to vector<16x64xbf16>
    %cst_132 = arith.constant dense<0.000000e+00> : vector<16x64xf32>
    %77 = tpu.matmul %1, %76, %cst_132 {dimension_numbers = #tpu.dot_dimension_numbers<[1], [0], [0], [1], [0, 0, 1, 1], [], []>} : vector<16x16xbf16>, vector<16x64xbf16>, vector<16x64xf32> -> vector<16x64xf32>
    %78 = arith.addf %72, %77 : vector<16x64xf32>
    %c8_i32 = arith.constant 8 : i32
    %79 = tpu.dynamic_rotate %71 by %c8_i32 dim 1 : vector<16x64xf32>, i32 -> vector<16x64xf32>
    %80 = vector.broadcast %58 : vector<1x64xf32> to vector<16x64xf32>
    %81 = arith.mulf %79, %80 : vector<16x64xf32>
    %82 = arith.truncf %81 : vector<16x64xf32> to vector<16x64xbf16>
    %cst_133 = arith.constant dense<0.000000e+00> : vector<16x64xf32>
    %83 = tpu.matmul %3, %82, %cst_133 {dimension_numbers = #tpu.dot_dimension_numbers<[1], [0], [0], [1], [0, 0, 1, 1], [], []>} : vector<16x16xbf16>, vector<16x64xbf16>, vector<16x64xf32> -> vector<16x64xf32>
    %84 = arith.addf %78, %83 : vector<16x64xf32>
    %c7_i32 = arith.constant 7 : i32
    %85 = tpu.dynamic_rotate %71 by %c7_i32 dim 1 : vector<16x64xf32>, i32 -> vector<16x64xf32>
    %86 = vector.broadcast %59 : vector<1x64xf32> to vector<16x64xf32>
    %87 = arith.mulf %85, %86 : vector<16x64xf32>
    %88 = arith.truncf %87 : vector<16x64xf32> to vector<16x64xbf16>
    %cst_134 = arith.constant dense<0.000000e+00> : vector<16x64xf32>
    %89 = tpu.matmul %5, %88, %cst_134 {dimension_numbers = #tpu.dot_dimension_numbers<[1], [0], [0], [1], [0, 0, 1, 1], [], []>} : vector<16x16xbf16>, vector<16x64xbf16>, vector<16x64xf32> -> vector<16x64xf32>
    %90 = arith.addf %84, %89 : vector<16x64xf32>
    %c1_i32 = arith.constant 1 : i32
    %91 = tpu.dynamic_rotate %71 by %c1_i32 dim 1 : vector<16x64xf32>, i32 -> vector<16x64xf32>
    %92 = vector.broadcast %60 : vector<1x64xf32> to vector<16x64xf32>
    %93 = arith.mulf %91, %92 : vector<16x64xf32>
    %94 = arith.truncf %93 : vector<16x64xf32> to vector<16x64xbf16>
    %cst_135 = arith.constant dense<0.000000e+00> : vector<16x64xf32>
    %95 = tpu.matmul %7, %94, %cst_135 {dimension_numbers = #tpu.dot_dimension_numbers<[1], [0], [0], [1], [0, 0, 1, 1], [], []>} : vector<16x16xbf16>, vector<16x64xbf16>, vector<16x64xf32> -> vector<16x64xf32>
    %96 = arith.addf %90, %95 : vector<16x64xf32>
    %97 = vector.broadcast %61 : vector<1x64xf32> to vector<16x64xf32>
    %98 = arith.mulf %71, %97 : vector<16x64xf32>
    %99 = arith.truncf %98 : vector<16x64xf32> to vector<16x64xbf16>
    %cst_136 = arith.constant dense<0.000000e+00> : vector<16x64xf32>
    %100 = tpu.matmul %9, %99, %cst_136 {dimension_numbers = #tpu.dot_dimension_numbers<[1], [0], [0], [1], [0, 0, 1, 1], [], []>} : vector<16x16xbf16>, vector<16x64xbf16>, vector<16x64xf32> -> vector<16x64xf32>
    %101 = arith.addf %96, %100 : vector<16x64xf32>
    %c63_i32 = arith.constant 63 : i32
    %102 = tpu.dynamic_rotate %71 by %c63_i32 dim 1 : vector<16x64xf32>, i32 -> vector<16x64xf32>
    %103 = vector.broadcast %62 : vector<1x64xf32> to vector<16x64xf32>
    %104 = arith.mulf %102, %103 : vector<16x64xf32>
    %105 = arith.truncf %104 : vector<16x64xf32> to vector<16x64xbf16>
    %cst_137 = arith.constant dense<0.000000e+00> : vector<16x64xf32>
    %106 = tpu.matmul %11, %105, %cst_137 {dimension_numbers = #tpu.dot_dimension_numbers<[1], [0], [0], [1], [0, 0, 1, 1], [], []>} : vector<16x16xbf16>, vector<16x64xbf16>, vector<16x64xf32> -> vector<16x64xf32>
    %107 = arith.addf %101, %106 : vector<16x64xf32>
    %c57_i32 = arith.constant 57 : i32
    %108 = tpu.dynamic_rotate %71 by %c57_i32 dim 1 : vector<16x64xf32>, i32 -> vector<16x64xf32>
    %109 = vector.broadcast %63 : vector<1x64xf32> to vector<16x64xf32>
    %110 = arith.mulf %108, %109 : vector<16x64xf32>
    %111 = arith.truncf %110 : vector<16x64xf32> to vector<16x64xbf16>
    %cst_138 = arith.constant dense<0.000000e+00> : vector<16x64xf32>
    %112 = tpu.matmul %13, %111, %cst_138 {dimension_numbers = #tpu.dot_dimension_numbers<[1], [0], [0], [1], [0, 0, 1, 1], [], []>} : vector<16x16xbf16>, vector<16x64xbf16>, vector<16x64xf32> -> vector<16x64xf32>
    %113 = arith.addf %107, %112 : vector<16x64xf32>
    %c56_i32 = arith.constant 56 : i32
    %114 = tpu.dynamic_rotate %71 by %c56_i32 dim 1 : vector<16x64xf32>, i32 -> vector<16x64xf32>
    %115 = vector.broadcast %64 : vector<1x64xf32> to vector<16x64xf32>
    %116 = arith.mulf %114, %115 : vector<16x64xf32>
    %117 = arith.truncf %116 : vector<16x64xf32> to vector<16x64xbf16>
    %cst_139 = arith.constant dense<0.000000e+00> : vector<16x64xf32>
    %118 = tpu.matmul %15, %117, %cst_139 {dimension_numbers = #tpu.dot_dimension_numbers<[1], [0], [0], [1], [0, 0, 1, 1], [], []>} : vector<16x16xbf16>, vector<16x64xbf16>, vector<16x64xf32> -> vector<16x64xf32>
    %119 = arith.addf %113, %118 : vector<16x64xf32>
    %c55_i32 = arith.constant 55 : i32
    %120 = tpu.dynamic_rotate %71 by %c55_i32 dim 1 : vector<16x64xf32>, i32 -> vector<16x64xf32>
    %121 = vector.broadcast %65 : vector<1x64xf32> to vector<16x64xf32>
    %122 = arith.mulf %120, %121 : vector<16x64xf32>
    %123 = arith.truncf %122 : vector<16x64xf32> to vector<16x64xbf16>
    %cst_140 = arith.constant dense<0.000000e+00> : vector<16x64xf32>
    %124 = tpu.matmul %17, %123, %cst_140 {dimension_numbers = #tpu.dot_dimension_numbers<[1], [0], [0], [1], [0, 0, 1, 1], [], []>} : vector<16x16xbf16>, vector<16x64xbf16>, vector<16x64xf32> -> vector<16x64xf32>
    %125 = arith.addf %119, %124 : vector<16x64xf32>
    %126 = vector.broadcast %54 : vector<16x1xf32> to vector<16x64xf32>
    %127 = arith.addf %125, %126 : vector<16x64xf32>
    %cst_141 = arith.constant 0.000000e+00 : f32
    %128 = vector.broadcast %cst_141 : f32 to vector<16x64xf32>
    %129 = arith.maximumf %127, %128 : vector<16x64xf32>
    %130 = arith.addf %129, %71 : vector<16x64xf32>
    %cst_142 = arith.constant 0.000000e+00 : f32
    %131 = vector.broadcast %cst_142 : f32 to vector<16x64xf32>
    %c9_i32_143 = arith.constant 9 : i32
    %132 = tpu.dynamic_rotate %130 by %c9_i32_143 dim 1 : vector<16x64xf32>, i32 -> vector<16x64xf32>
    %133 = vector.broadcast %57 : vector<1x64xf32> to vector<16x64xf32>
    %134 = arith.mulf %132, %133 : vector<16x64xf32>
    %135 = arith.truncf %134 : vector<16x64xf32> to vector<16x64xbf16>
    %cst_144 = arith.constant dense<0.000000e+00> : vector<16x64xf32>
    %136 = tpu.matmul %19, %135, %cst_144 {dimension_numbers = #tpu.dot_dimension_numbers<[1], [0], [0], [1], [0, 0, 1, 1], [], []>} : vector<16x16xbf16>, vector<16x64xbf16>, vector<16x64xf32> -> vector<16x64xf32>
    %137 = arith.addf %131, %136 : vector<16x64xf32>
    %c8_i32_145 = arith.constant 8 : i32
    %138 = tpu.dynamic_rotate %130 by %c8_i32_145 dim 1 : vector<16x64xf32>, i32 -> vector<16x64xf32>
    %139 = vector.broadcast %58 : vector<1x64xf32> to vector<16x64xf32>
    %140 = arith.mulf %138, %139 : vector<16x64xf32>
    %141 = arith.truncf %140 : vector<16x64xf32> to vector<16x64xbf16>
    %cst_146 = arith.constant dense<0.000000e+00> : vector<16x64xf32>
    %142 = tpu.matmul %21, %141, %cst_146 {dimension_numbers = #tpu.dot_dimension_numbers<[1], [0], [0], [1], [0, 0, 1, 1], [], []>} : vector<16x16xbf16>, vector<16x64xbf16>, vector<16x64xf32> -> vector<16x64xf32>
    %143 = arith.addf %137, %142 : vector<16x64xf32>
    %c7_i32_147 = arith.constant 7 : i32
    %144 = tpu.dynamic_rotate %130 by %c7_i32_147 dim 1 : vector<16x64xf32>, i32 -> vector<16x64xf32>
    %145 = vector.broadcast %59 : vector<1x64xf32> to vector<16x64xf32>
    %146 = arith.mulf %144, %145 : vector<16x64xf32>
    %147 = arith.truncf %146 : vector<16x64xf32> to vector<16x64xbf16>
    %cst_148 = arith.constant dense<0.000000e+00> : vector<16x64xf32>
    %148 = tpu.matmul %23, %147, %cst_148 {dimension_numbers = #tpu.dot_dimension_numbers<[1], [0], [0], [1], [0, 0, 1, 1], [], []>} : vector<16x16xbf16>, vector<16x64xbf16>, vector<16x64xf32> -> vector<16x64xf32>
    %149 = arith.addf %143, %148 : vector<16x64xf32>
    %c1_i32_149 = arith.constant 1 : i32
    %150 = tpu.dynamic_rotate %130 by %c1_i32_149 dim 1 : vector<16x64xf32>, i32 -> vector<16x64xf32>
    %151 = vector.broadcast %60 : vector<1x64xf32> to vector<16x64xf32>
    %152 = arith.mulf %150, %151 : vector<16x64xf32>
    %153 = arith.truncf %152 : vector<16x64xf32> to vector<16x64xbf16>
    %cst_150 = arith.constant dense<0.000000e+00> : vector<16x64xf32>
    %154 = tpu.matmul %25, %153, %cst_150 {dimension_numbers = #tpu.dot_dimension_numbers<[1], [0], [0], [1], [0, 0, 1, 1], [], []>} : vector<16x16xbf16>, vector<16x64xbf16>, vector<16x64xf32> -> vector<16x64xf32>
    %155 = arith.addf %149, %154 : vector<16x64xf32>
    %156 = vector.broadcast %61 : vector<1x64xf32> to vector<16x64xf32>
    %157 = arith.mulf %130, %156 : vector<16x64xf32>
    %158 = arith.truncf %157 : vector<16x64xf32> to vector<16x64xbf16>
    %cst_151 = arith.constant dense<0.000000e+00> : vector<16x64xf32>
    %159 = tpu.matmul %27, %158, %cst_151 {dimension_numbers = #tpu.dot_dimension_numbers<[1], [0], [0], [1], [0, 0, 1, 1], [], []>} : vector<16x16xbf16>, vector<16x64xbf16>, vector<16x64xf32> -> vector<16x64xf32>
    %160 = arith.addf %155, %159 : vector<16x64xf32>
    %c63_i32_152 = arith.constant 63 : i32
    %161 = tpu.dynamic_rotate %130 by %c63_i32_152 dim 1 : vector<16x64xf32>, i32 -> vector<16x64xf32>
    %162 = vector.broadcast %62 : vector<1x64xf32> to vector<16x64xf32>
    %163 = arith.mulf %161, %162 : vector<16x64xf32>
    %164 = arith.truncf %163 : vector<16x64xf32> to vector<16x64xbf16>
    %cst_153 = arith.constant dense<0.000000e+00> : vector<16x64xf32>
    %165 = tpu.matmul %29, %164, %cst_153 {dimension_numbers = #tpu.dot_dimension_numbers<[1], [0], [0], [1], [0, 0, 1, 1], [], []>} : vector<16x16xbf16>, vector<16x64xbf16>, vector<16x64xf32> -> vector<16x64xf32>
    %166 = arith.addf %160, %165 : vector<16x64xf32>
    %c57_i32_154 = arith.constant 57 : i32
    %167 = tpu.dynamic_rotate %130 by %c57_i32_154 dim 1 : vector<16x64xf32>, i32 -> vector<16x64xf32>
    %168 = vector.broadcast %63 : vector<1x64xf32> to vector<16x64xf32>
    %169 = arith.mulf %167, %168 : vector<16x64xf32>
    %170 = arith.truncf %169 : vector<16x64xf32> to vector<16x64xbf16>
    %cst_155 = arith.constant dense<0.000000e+00> : vector<16x64xf32>
    %171 = tpu.matmul %31, %170, %cst_155 {dimension_numbers = #tpu.dot_dimension_numbers<[1], [0], [0], [1], [0, 0, 1, 1], [], []>} : vector<16x16xbf16>, vector<16x64xbf16>, vector<16x64xf32> -> vector<16x64xf32>
    %172 = arith.addf %166, %171 : vector<16x64xf32>
    %c56_i32_156 = arith.constant 56 : i32
    %173 = tpu.dynamic_rotate %130 by %c56_i32_156 dim 1 : vector<16x64xf32>, i32 -> vector<16x64xf32>
    %174 = vector.broadcast %64 : vector<1x64xf32> to vector<16x64xf32>
    %175 = arith.mulf %173, %174 : vector<16x64xf32>
    %176 = arith.truncf %175 : vector<16x64xf32> to vector<16x64xbf16>
    %cst_157 = arith.constant dense<0.000000e+00> : vector<16x64xf32>
    %177 = tpu.matmul %33, %176, %cst_157 {dimension_numbers = #tpu.dot_dimension_numbers<[1], [0], [0], [1], [0, 0, 1, 1], [], []>} : vector<16x16xbf16>, vector<16x64xbf16>, vector<16x64xf32> -> vector<16x64xf32>
    %178 = arith.addf %172, %177 : vector<16x64xf32>
    %c55_i32_158 = arith.constant 55 : i32
    %179 = tpu.dynamic_rotate %130 by %c55_i32_158 dim 1 : vector<16x64xf32>, i32 -> vector<16x64xf32>
    %180 = vector.broadcast %65 : vector<1x64xf32> to vector<16x64xf32>
    %181 = arith.mulf %179, %180 : vector<16x64xf32>
    %182 = arith.truncf %181 : vector<16x64xf32> to vector<16x64xbf16>
    %cst_159 = arith.constant dense<0.000000e+00> : vector<16x64xf32>
    %183 = tpu.matmul %35, %182, %cst_159 {dimension_numbers = #tpu.dot_dimension_numbers<[1], [0], [0], [1], [0, 0, 1, 1], [], []>} : vector<16x16xbf16>, vector<16x64xbf16>, vector<16x64xf32> -> vector<16x64xf32>
    %184 = arith.addf %178, %183 : vector<16x64xf32>
    %185 = vector.broadcast %55 : vector<16x1xf32> to vector<16x64xf32>
    %186 = arith.addf %184, %185 : vector<16x64xf32>
    %cst_160 = arith.constant 0.000000e+00 : f32
    %187 = vector.broadcast %cst_160 : f32 to vector<16x64xf32>
    %188 = arith.maximumf %186, %187 : vector<16x64xf32>
    %189 = arith.addf %188, %130 : vector<16x64xf32>
    %cst_161 = arith.constant 0.000000e+00 : f32
    %190 = vector.broadcast %cst_161 : f32 to vector<16x64xf32>
    %c9_i32_162 = arith.constant 9 : i32
    %191 = tpu.dynamic_rotate %189 by %c9_i32_162 dim 1 : vector<16x64xf32>, i32 -> vector<16x64xf32>
    %192 = vector.broadcast %57 : vector<1x64xf32> to vector<16x64xf32>
    %193 = arith.mulf %191, %192 : vector<16x64xf32>
    %194 = arith.truncf %193 : vector<16x64xf32> to vector<16x64xbf16>
    %cst_163 = arith.constant dense<0.000000e+00> : vector<16x64xf32>
    %195 = tpu.matmul %37, %194, %cst_163 {dimension_numbers = #tpu.dot_dimension_numbers<[1], [0], [0], [1], [0, 0, 1, 1], [], []>} : vector<16x16xbf16>, vector<16x64xbf16>, vector<16x64xf32> -> vector<16x64xf32>
    %196 = arith.addf %190, %195 : vector<16x64xf32>
    %c8_i32_164 = arith.constant 8 : i32
    %197 = tpu.dynamic_rotate %189 by %c8_i32_164 dim 1 : vector<16x64xf32>, i32 -> vector<16x64xf32>
    %198 = vector.broadcast %58 : vector<1x64xf32> to vector<16x64xf32>
    %199 = arith.mulf %197, %198 : vector<16x64xf32>
    %200 = arith.truncf %199 : vector<16x64xf32> to vector<16x64xbf16>
    %cst_165 = arith.constant dense<0.000000e+00> : vector<16x64xf32>
    %201 = tpu.matmul %39, %200, %cst_165 {dimension_numbers = #tpu.dot_dimension_numbers<[1], [0], [0], [1], [0, 0, 1, 1], [], []>} : vector<16x16xbf16>, vector<16x64xbf16>, vector<16x64xf32> -> vector<16x64xf32>
    %202 = arith.addf %196, %201 : vector<16x64xf32>
    %c7_i32_166 = arith.constant 7 : i32
    %203 = tpu.dynamic_rotate %189 by %c7_i32_166 dim 1 : vector<16x64xf32>, i32 -> vector<16x64xf32>
    %204 = vector.broadcast %59 : vector<1x64xf32> to vector<16x64xf32>
    %205 = arith.mulf %203, %204 : vector<16x64xf32>
    %206 = arith.truncf %205 : vector<16x64xf32> to vector<16x64xbf16>
    %cst_167 = arith.constant dense<0.000000e+00> : vector<16x64xf32>
    %207 = tpu.matmul %41, %206, %cst_167 {dimension_numbers = #tpu.dot_dimension_numbers<[1], [0], [0], [1], [0, 0, 1, 1], [], []>} : vector<16x16xbf16>, vector<16x64xbf16>, vector<16x64xf32> -> vector<16x64xf32>
    %208 = arith.addf %202, %207 : vector<16x64xf32>
    %c1_i32_168 = arith.constant 1 : i32
    %209 = tpu.dynamic_rotate %189 by %c1_i32_168 dim 1 : vector<16x64xf32>, i32 -> vector<16x64xf32>
    %210 = vector.broadcast %60 : vector<1x64xf32> to vector<16x64xf32>
    %211 = arith.mulf %209, %210 : vector<16x64xf32>
    %212 = arith.truncf %211 : vector<16x64xf32> to vector<16x64xbf16>
    %cst_169 = arith.constant dense<0.000000e+00> : vector<16x64xf32>
    %213 = tpu.matmul %43, %212, %cst_169 {dimension_numbers = #tpu.dot_dimension_numbers<[1], [0], [0], [1], [0, 0, 1, 1], [], []>} : vector<16x16xbf16>, vector<16x64xbf16>, vector<16x64xf32> -> vector<16x64xf32>
    %214 = arith.addf %208, %213 : vector<16x64xf32>
    %215 = vector.broadcast %61 : vector<1x64xf32> to vector<16x64xf32>
    %216 = arith.mulf %189, %215 : vector<16x64xf32>
    %217 = arith.truncf %216 : vector<16x64xf32> to vector<16x64xbf16>
    %cst_170 = arith.constant dense<0.000000e+00> : vector<16x64xf32>
    %218 = tpu.matmul %45, %217, %cst_170 {dimension_numbers = #tpu.dot_dimension_numbers<[1], [0], [0], [1], [0, 0, 1, 1], [], []>} : vector<16x16xbf16>, vector<16x64xbf16>, vector<16x64xf32> -> vector<16x64xf32>
    %219 = arith.addf %214, %218 : vector<16x64xf32>
    %c63_i32_171 = arith.constant 63 : i32
    %220 = tpu.dynamic_rotate %189 by %c63_i32_171 dim 1 : vector<16x64xf32>, i32 -> vector<16x64xf32>
    %221 = vector.broadcast %62 : vector<1x64xf32> to vector<16x64xf32>
    %222 = arith.mulf %220, %221 : vector<16x64xf32>
    %223 = arith.truncf %222 : vector<16x64xf32> to vector<16x64xbf16>
    %cst_172 = arith.constant dense<0.000000e+00> : vector<16x64xf32>
    %224 = tpu.matmul %47, %223, %cst_172 {dimension_numbers = #tpu.dot_dimension_numbers<[1], [0], [0], [1], [0, 0, 1, 1], [], []>} : vector<16x16xbf16>, vector<16x64xbf16>, vector<16x64xf32> -> vector<16x64xf32>
    %225 = arith.addf %219, %224 : vector<16x64xf32>
    %c57_i32_173 = arith.constant 57 : i32
    %226 = tpu.dynamic_rotate %189 by %c57_i32_173 dim 1 : vector<16x64xf32>, i32 -> vector<16x64xf32>
    %227 = vector.broadcast %63 : vector<1x64xf32> to vector<16x64xf32>
    %228 = arith.mulf %226, %227 : vector<16x64xf32>
    %229 = arith.truncf %228 : vector<16x64xf32> to vector<16x64xbf16>
    %cst_174 = arith.constant dense<0.000000e+00> : vector<16x64xf32>
    %230 = tpu.matmul %49, %229, %cst_174 {dimension_numbers = #tpu.dot_dimension_numbers<[1], [0], [0], [1], [0, 0, 1, 1], [], []>} : vector<16x16xbf16>, vector<16x64xbf16>, vector<16x64xf32> -> vector<16x64xf32>
    %231 = arith.addf %225, %230 : vector<16x64xf32>
    %c56_i32_175 = arith.constant 56 : i32
    %232 = tpu.dynamic_rotate %189 by %c56_i32_175 dim 1 : vector<16x64xf32>, i32 -> vector<16x64xf32>
    %233 = vector.broadcast %64 : vector<1x64xf32> to vector<16x64xf32>
    %234 = arith.mulf %232, %233 : vector<16x64xf32>
    %235 = arith.truncf %234 : vector<16x64xf32> to vector<16x64xbf16>
    %cst_176 = arith.constant dense<0.000000e+00> : vector<16x64xf32>
    %236 = tpu.matmul %51, %235, %cst_176 {dimension_numbers = #tpu.dot_dimension_numbers<[1], [0], [0], [1], [0, 0, 1, 1], [], []>} : vector<16x16xbf16>, vector<16x64xbf16>, vector<16x64xf32> -> vector<16x64xf32>
    %237 = arith.addf %231, %236 : vector<16x64xf32>
    %c55_i32_177 = arith.constant 55 : i32
    %238 = tpu.dynamic_rotate %189 by %c55_i32_177 dim 1 : vector<16x64xf32>, i32 -> vector<16x64xf32>
    %239 = vector.broadcast %65 : vector<1x64xf32> to vector<16x64xf32>
    %240 = arith.mulf %238, %239 : vector<16x64xf32>
    %241 = arith.truncf %240 : vector<16x64xf32> to vector<16x64xbf16>
    %cst_178 = arith.constant dense<0.000000e+00> : vector<16x64xf32>
    %242 = tpu.matmul %53, %241, %cst_178 {dimension_numbers = #tpu.dot_dimension_numbers<[1], [0], [0], [1], [0, 0, 1, 1], [], []>} : vector<16x16xbf16>, vector<16x64xbf16>, vector<16x64xf32> -> vector<16x64xf32>
    %243 = arith.addf %237, %242 : vector<16x64xf32>
    %244 = vector.broadcast %56 : vector<16x1xf32> to vector<16x64xf32>
    %245 = arith.addf %243, %244 : vector<16x64xf32>
    %cst_179 = arith.constant 0.000000e+00 : f32
    %246 = vector.broadcast %cst_179 : f32 to vector<16x64xf32>
    %247 = arith.maximumf %245, %246 : vector<16x64xf32>
    %248 = arith.addf %247, %189 : vector<16x64xf32>
    %249 = arith.truncf %248 : vector<16x64xf32> to vector<16x64xbf16>
    %cst_180 = arith.constant dense<0.000000e+00> : vector<2x64xf32>
    %250 = tpu.matmul %66, %249, %cst_180 {dimension_numbers = #tpu.dot_dimension_numbers<[1], [0], [0], [1], [0, 0, 1, 1], [], []>} : vector<2x16xbf16>, vector<16x64xbf16>, vector<2x64xf32> -> vector<2x64xf32>
    %251 = vector.broadcast %67 : vector<2x1xf32> to vector<2x64xf32>
    %252 = arith.addf %250, %251 : vector<2x64xf32>
    %cst_181 = arith.constant 0.000000e+00 : f32
    %253 = vector.broadcast %cst_181 : f32 to vector<2x64xf32>
    %254 = arith.maximumf %252, %253 : vector<2x64xf32>
    %255 = arith.truncf %254 : vector<2x64xf32> to vector<2x64xbf16>
    %cst_182 = arith.constant dense<0.000000e+00> : vector<1x64xf32>
    %256 = tpu.matmul %68, %255, %cst_182 {dimension_numbers = #tpu.dot_dimension_numbers<[1], [0], [0], [1], [0, 0, 1, 1], [], []>} : vector<1x2xbf16>, vector<2x64xbf16>, vector<1x64xf32> -> vector<1x64xf32>
    %257 = vector.broadcast %69 : vector<1x1xf32> to vector<1x64xf32>
    %258 = arith.addf %256, %257 : vector<1x64xf32>
    %259 = arith.negf %258 : vector<1x64xf32>
    %260 = math.exp %259 : vector<1x64xf32>
    %cst_183 = arith.constant 1.000000e+00 : f32
    %261 = vector.broadcast %cst_183 : f32 to vector<1x64xf32>
    %262 = arith.addf %261, %260 : vector<1x64xf32>
    %263 = arith.divf %261, %262 : vector<1x64xf32>
    %264 = vector.broadcast %263 : vector<1x64xf32> to vector<16x64xf32>
    %265 = arith.mulf %248, %264 : vector<16x64xf32>
    %cst_184 = arith.constant dense<0.000000e+00> : vector<16xf32>
    %266 = vector.multi_reduction <add>, %265, %cst_184 [1] : vector<16x64xf32> to vector<16xf32>
    %267 = vector.shape_cast %266 : vector<16xf32> to vector<16x1xf32>
    %cst_185 = arith.constant 6.400000e+01 : f32
    %268 = vector.broadcast %cst_185 : f32 to vector<16x1xf32>
    %269 = arith.divf %267, %268 : vector<16x1xf32>
    %c1_186 = arith.constant 1 : index
    %c0_187 = arith.constant 0 : index
    %c0_188 = arith.constant 0 : index
    %270 = vector.load %arg1[%c1_186, %c0_187, %c0_188] : memref<8x16x64xf32, #tpu.memory_space<vmem>>, vector<1x16x64xf32>
    %271 = vector.shape_cast %270 : vector<1x16x64xf32> to vector<16x64xf32>
    %cst_189 = arith.constant 0.000000e+00 : f32
    %272 = vector.broadcast %cst_189 : f32 to vector<16x64xf32>
    %c9_i32_190 = arith.constant 9 : i32
    %273 = tpu.dynamic_rotate %271 by %c9_i32_190 dim 1 : vector<16x64xf32>, i32 -> vector<16x64xf32>
    %274 = vector.broadcast %57 : vector<1x64xf32> to vector<16x64xf32>
    %275 = arith.mulf %273, %274 : vector<16x64xf32>
    %276 = arith.truncf %275 : vector<16x64xf32> to vector<16x64xbf16>
    %cst_191 = arith.constant dense<0.000000e+00> : vector<16x64xf32>
    %277 = tpu.matmul %1, %276, %cst_191 {dimension_numbers = #tpu.dot_dimension_numbers<[1], [0], [0], [1], [0, 0, 1, 1], [], []>} : vector<16x16xbf16>, vector<16x64xbf16>, vector<16x64xf32> -> vector<16x64xf32>
    %278 = arith.addf %272, %277 : vector<16x64xf32>
    %c8_i32_192 = arith.constant 8 : i32
    %279 = tpu.dynamic_rotate %271 by %c8_i32_192 dim 1 : vector<16x64xf32>, i32 -> vector<16x64xf32>
    %280 = vector.broadcast %58 : vector<1x64xf32> to vector<16x64xf32>
    %281 = arith.mulf %279, %280 : vector<16x64xf32>
    %282 = arith.truncf %281 : vector<16x64xf32> to vector<16x64xbf16>
    %cst_193 = arith.constant dense<0.000000e+00> : vector<16x64xf32>
    %283 = tpu.matmul %3, %282, %cst_193 {dimension_numbers = #tpu.dot_dimension_numbers<[1], [0], [0], [1], [0, 0, 1, 1], [], []>} : vector<16x16xbf16>, vector<16x64xbf16>, vector<16x64xf32> -> vector<16x64xf32>
    %284 = arith.addf %278, %283 : vector<16x64xf32>
    %c7_i32_194 = arith.constant 7 : i32
    %285 = tpu.dynamic_rotate %271 by %c7_i32_194 dim 1 : vector<16x64xf32>, i32 -> vector<16x64xf32>
    %286 = vector.broadcast %59 : vector<1x64xf32> to vector<16x64xf32>
    %287 = arith.mulf %285, %286 : vector<16x64xf32>
    %288 = arith.truncf %287 : vector<16x64xf32> to vector<16x64xbf16>
    %cst_195 = arith.constant dense<0.000000e+00> : vector<16x64xf32>
    %289 = tpu.matmul %5, %288, %cst_195 {dimension_numbers = #tpu.dot_dimension_numbers<[1], [0], [0], [1], [0, 0, 1, 1], [], []>} : vector<16x16xbf16>, vector<16x64xbf16>, vector<16x64xf32> -> vector<16x64xf32>
    %290 = arith.addf %284, %289 : vector<16x64xf32>
    %c1_i32_196 = arith.constant 1 : i32
    %291 = tpu.dynamic_rotate %271 by %c1_i32_196 dim 1 : vector<16x64xf32>, i32 -> vector<16x64xf32>
    %292 = vector.broadcast %60 : vector<1x64xf32> to vector<16x64xf32>
    %293 = arith.mulf %291, %292 : vector<16x64xf32>
    %294 = arith.truncf %293 : vector<16x64xf32> to vector<16x64xbf16>
    %cst_197 = arith.constant dense<0.000000e+00> : vector<16x64xf32>
    %295 = tpu.matmul %7, %294, %cst_197 {dimension_numbers = #tpu.dot_dimension_numbers<[1], [0], [0], [1], [0, 0, 1, 1], [], []>} : vector<16x16xbf16>, vector<16x64xbf16>, vector<16x64xf32> -> vector<16x64xf32>
    %296 = arith.addf %290, %295 : vector<16x64xf32>
    %297 = vector.broadcast %61 : vector<1x64xf32> to vector<16x64xf32>
    %298 = arith.mulf %271, %297 : vector<16x64xf32>
    %299 = arith.truncf %298 : vector<16x64xf32> to vector<16x64xbf16>
    %cst_198 = arith.constant dense<0.000000e+00> : vector<16x64xf32>
    %300 = tpu.matmul %9, %299, %cst_198 {dimension_numbers = #tpu.dot_dimension_numbers<[1], [0], [0], [1], [0, 0, 1, 1], [], []>} : vector<16x16xbf16>, vector<16x64xbf16>, vector<16x64xf32> -> vector<16x64xf32>
    %301 = arith.addf %296, %300 : vector<16x64xf32>
    %c63_i32_199 = arith.constant 63 : i32
    %302 = tpu.dynamic_rotate %271 by %c63_i32_199 dim 1 : vector<16x64xf32>, i32 -> vector<16x64xf32>
    %303 = vector.broadcast %62 : vector<1x64xf32> to vector<16x64xf32>
    %304 = arith.mulf %302, %303 : vector<16x64xf32>
    %305 = arith.truncf %304 : vector<16x64xf32> to vector<16x64xbf16>
    %cst_200 = arith.constant dense<0.000000e+00> : vector<16x64xf32>
    %306 = tpu.matmul %11, %305, %cst_200 {dimension_numbers = #tpu.dot_dimension_numbers<[1], [0], [0], [1], [0, 0, 1, 1], [], []>} : vector<16x16xbf16>, vector<16x64xbf16>, vector<16x64xf32> -> vector<16x64xf32>
    %307 = arith.addf %301, %306 : vector<16x64xf32>
    %c57_i32_201 = arith.constant 57 : i32
    %308 = tpu.dynamic_rotate %271 by %c57_i32_201 dim 1 : vector<16x64xf32>, i32 -> vector<16x64xf32>
    %309 = vector.broadcast %63 : vector<1x64xf32> to vector<16x64xf32>
    %310 = arith.mulf %308, %309 : vector<16x64xf32>
    %311 = arith.truncf %310 : vector<16x64xf32> to vector<16x64xbf16>
    %cst_202 = arith.constant dense<0.000000e+00> : vector<16x64xf32>
    %312 = tpu.matmul %13, %311, %cst_202 {dimension_numbers = #tpu.dot_dimension_numbers<[1], [0], [0], [1], [0, 0, 1, 1], [], []>} : vector<16x16xbf16>, vector<16x64xbf16>, vector<16x64xf32> -> vector<16x64xf32>
    %313 = arith.addf %307, %312 : vector<16x64xf32>
    %c56_i32_203 = arith.constant 56 : i32
    %314 = tpu.dynamic_rotate %271 by %c56_i32_203 dim 1 : vector<16x64xf32>, i32 -> vector<16x64xf32>
    %315 = vector.broadcast %64 : vector<1x64xf32> to vector<16x64xf32>
    %316 = arith.mulf %314, %315 : vector<16x64xf32>
    %317 = arith.truncf %316 : vector<16x64xf32> to vector<16x64xbf16>
    %cst_204 = arith.constant dense<0.000000e+00> : vector<16x64xf32>
    %318 = tpu.matmul %15, %317, %cst_204 {dimension_numbers = #tpu.dot_dimension_numbers<[1], [0], [0], [1], [0, 0, 1, 1], [], []>} : vector<16x16xbf16>, vector<16x64xbf16>, vector<16x64xf32> -> vector<16x64xf32>
    %319 = arith.addf %313, %318 : vector<16x64xf32>
    %c55_i32_205 = arith.constant 55 : i32
    %320 = tpu.dynamic_rotate %271 by %c55_i32_205 dim 1 : vector<16x64xf32>, i32 -> vector<16x64xf32>
    %321 = vector.broadcast %65 : vector<1x64xf32> to vector<16x64xf32>
    %322 = arith.mulf %320, %321 : vector<16x64xf32>
    %323 = arith.truncf %322 : vector<16x64xf32> to vector<16x64xbf16>
    %cst_206 = arith.constant dense<0.000000e+00> : vector<16x64xf32>
    %324 = tpu.matmul %17, %323, %cst_206 {dimension_numbers = #tpu.dot_dimension_numbers<[1], [0], [0], [1], [0, 0, 1, 1], [], []>} : vector<16x16xbf16>, vector<16x64xbf16>, vector<16x64xf32> -> vector<16x64xf32>
    %325 = arith.addf %319, %324 : vector<16x64xf32>
    %326 = vector.broadcast %54 : vector<16x1xf32> to vector<16x64xf32>
    %327 = arith.addf %325, %326 : vector<16x64xf32>
    %cst_207 = arith.constant 0.000000e+00 : f32
    %328 = vector.broadcast %cst_207 : f32 to vector<16x64xf32>
    %329 = arith.maximumf %327, %328 : vector<16x64xf32>
    %330 = arith.addf %329, %271 : vector<16x64xf32>
    %cst_208 = arith.constant 0.000000e+00 : f32
    %331 = vector.broadcast %cst_208 : f32 to vector<16x64xf32>
    %c9_i32_209 = arith.constant 9 : i32
    %332 = tpu.dynamic_rotate %330 by %c9_i32_209 dim 1 : vector<16x64xf32>, i32 -> vector<16x64xf32>
    %333 = vector.broadcast %57 : vector<1x64xf32> to vector<16x64xf32>
    %334 = arith.mulf %332, %333 : vector<16x64xf32>
    %335 = arith.truncf %334 : vector<16x64xf32> to vector<16x64xbf16>
    %cst_210 = arith.constant dense<0.000000e+00> : vector<16x64xf32>
    %336 = tpu.matmul %19, %335, %cst_210 {dimension_numbers = #tpu.dot_dimension_numbers<[1], [0], [0], [1], [0, 0, 1, 1], [], []>} : vector<16x16xbf16>, vector<16x64xbf16>, vector<16x64xf32> -> vector<16x64xf32>
    %337 = arith.addf %331, %336 : vector<16x64xf32>
    %c8_i32_211 = arith.constant 8 : i32
    %338 = tpu.dynamic_rotate %330 by %c8_i32_211 dim 1 : vector<16x64xf32>, i32 -> vector<16x64xf32>
    %339 = vector.broadcast %58 : vector<1x64xf32> to vector<16x64xf32>
    %340 = arith.mulf %338, %339 : vector<16x64xf32>
    %341 = arith.truncf %340 : vector<16x64xf32> to vector<16x64xbf16>
    %cst_212 = arith.constant dense<0.000000e+00> : vector<16x64xf32>
    %342 = tpu.matmul %21, %341, %cst_212 {dimension_numbers = #tpu.dot_dimension_numbers<[1], [0], [0], [1], [0, 0, 1, 1], [], []>} : vector<16x16xbf16>, vector<16x64xbf16>, vector<16x64xf32> -> vector<16x64xf32>
    %343 = arith.addf %337, %342 : vector<16x64xf32>
    %c7_i32_213 = arith.constant 7 : i32
    %344 = tpu.dynamic_rotate %330 by %c7_i32_213 dim 1 : vector<16x64xf32>, i32 -> vector<16x64xf32>
    %345 = vector.broadcast %59 : vector<1x64xf32> to vector<16x64xf32>
    %346 = arith.mulf %344, %345 : vector<16x64xf32>
    %347 = arith.truncf %346 : vector<16x64xf32> to vector<16x64xbf16>
    %cst_214 = arith.constant dense<0.000000e+00> : vector<16x64xf32>
    %348 = tpu.matmul %23, %347, %cst_214 {dimension_numbers = #tpu.dot_dimension_numbers<[1], [0], [0], [1], [0, 0, 1, 1], [], []>} : vector<16x16xbf16>, vector<16x64xbf16>, vector<16x64xf32> -> vector<16x64xf32>
    %349 = arith.addf %343, %348 : vector<16x64xf32>
    %c1_i32_215 = arith.constant 1 : i32
    %350 = tpu.dynamic_rotate %330 by %c1_i32_215 dim 1 : vector<16x64xf32>, i32 -> vector<16x64xf32>
    %351 = vector.broadcast %60 : vector<1x64xf32> to vector<16x64xf32>
    %352 = arith.mulf %350, %351 : vector<16x64xf32>
    %353 = arith.truncf %352 : vector<16x64xf32> to vector<16x64xbf16>
    %cst_216 = arith.constant dense<0.000000e+00> : vector<16x64xf32>
    %354 = tpu.matmul %25, %353, %cst_216 {dimension_numbers = #tpu.dot_dimension_numbers<[1], [0], [0], [1], [0, 0, 1, 1], [], []>} : vector<16x16xbf16>, vector<16x64xbf16>, vector<16x64xf32> -> vector<16x64xf32>
    %355 = arith.addf %349, %354 : vector<16x64xf32>
    %356 = vector.broadcast %61 : vector<1x64xf32> to vector<16x64xf32>
    %357 = arith.mulf %330, %356 : vector<16x64xf32>
    %358 = arith.truncf %357 : vector<16x64xf32> to vector<16x64xbf16>
    %cst_217 = arith.constant dense<0.000000e+00> : vector<16x64xf32>
    %359 = tpu.matmul %27, %358, %cst_217 {dimension_numbers = #tpu.dot_dimension_numbers<[1], [0], [0], [1], [0, 0, 1, 1], [], []>} : vector<16x16xbf16>, vector<16x64xbf16>, vector<16x64xf32> -> vector<16x64xf32>
    %360 = arith.addf %355, %359 : vector<16x64xf32>
    %c63_i32_218 = arith.constant 63 : i32
    %361 = tpu.dynamic_rotate %330 by %c63_i32_218 dim 1 : vector<16x64xf32>, i32 -> vector<16x64xf32>
    %362 = vector.broadcast %62 : vector<1x64xf32> to vector<16x64xf32>
    %363 = arith.mulf %361, %362 : vector<16x64xf32>
    %364 = arith.truncf %363 : vector<16x64xf32> to vector<16x64xbf16>
    %cst_219 = arith.constant dense<0.000000e+00> : vector<16x64xf32>
    %365 = tpu.matmul %29, %364, %cst_219 {dimension_numbers = #tpu.dot_dimension_numbers<[1], [0], [0], [1], [0, 0, 1, 1], [], []>} : vector<16x16xbf16>, vector<16x64xbf16>, vector<16x64xf32> -> vector<16x64xf32>
    %366 = arith.addf %360, %365 : vector<16x64xf32>
    %c57_i32_220 = arith.constant 57 : i32
    %367 = tpu.dynamic_rotate %330 by %c57_i32_220 dim 1 : vector<16x64xf32>, i32 -> vector<16x64xf32>
    %368 = vector.broadcast %63 : vector<1x64xf32> to vector<16x64xf32>
    %369 = arith.mulf %367, %368 : vector<16x64xf32>
    %370 = arith.truncf %369 : vector<16x64xf32> to vector<16x64xbf16>
    %cst_221 = arith.constant dense<0.000000e+00> : vector<16x64xf32>
    %371 = tpu.matmul %31, %370, %cst_221 {dimension_numbers = #tpu.dot_dimension_numbers<[1], [0], [0], [1], [0, 0, 1, 1], [], []>} : vector<16x16xbf16>, vector<16x64xbf16>, vector<16x64xf32> -> vector<16x64xf32>
    %372 = arith.addf %366, %371 : vector<16x64xf32>
    %c56_i32_222 = arith.constant 56 : i32
    %373 = tpu.dynamic_rotate %330 by %c56_i32_222 dim 1 : vector<16x64xf32>, i32 -> vector<16x64xf32>
    %374 = vector.broadcast %64 : vector<1x64xf32> to vector<16x64xf32>
    %375 = arith.mulf %373, %374 : vector<16x64xf32>
    %376 = arith.truncf %375 : vector<16x64xf32> to vector<16x64xbf16>
    %cst_223 = arith.constant dense<0.000000e+00> : vector<16x64xf32>
    %377 = tpu.matmul %33, %376, %cst_223 {dimension_numbers = #tpu.dot_dimension_numbers<[1], [0], [0], [1], [0, 0, 1, 1], [], []>} : vector<16x16xbf16>, vector<16x64xbf16>, vector<16x64xf32> -> vector<16x64xf32>
    %378 = arith.addf %372, %377 : vector<16x64xf32>
    %c55_i32_224 = arith.constant 55 : i32
    %379 = tpu.dynamic_rotate %330 by %c55_i32_224 dim 1 : vector<16x64xf32>, i32 -> vector<16x64xf32>
    %380 = vector.broadcast %65 : vector<1x64xf32> to vector<16x64xf32>
    %381 = arith.mulf %379, %380 : vector<16x64xf32>
    %382 = arith.truncf %381 : vector<16x64xf32> to vector<16x64xbf16>
    %cst_225 = arith.constant dense<0.000000e+00> : vector<16x64xf32>
    %383 = tpu.matmul %35, %382, %cst_225 {dimension_numbers = #tpu.dot_dimension_numbers<[1], [0], [0], [1], [0, 0, 1, 1], [], []>} : vector<16x16xbf16>, vector<16x64xbf16>, vector<16x64xf32> -> vector<16x64xf32>
    %384 = arith.addf %378, %383 : vector<16x64xf32>
    %385 = vector.broadcast %55 : vector<16x1xf32> to vector<16x64xf32>
    %386 = arith.addf %384, %385 : vector<16x64xf32>
    %cst_226 = arith.constant 0.000000e+00 : f32
    %387 = vector.broadcast %cst_226 : f32 to vector<16x64xf32>
    %388 = arith.maximumf %386, %387 : vector<16x64xf32>
    %389 = arith.addf %388, %330 : vector<16x64xf32>
    %cst_227 = arith.constant 0.000000e+00 : f32
    %390 = vector.broadcast %cst_227 : f32 to vector<16x64xf32>
    %c9_i32_228 = arith.constant 9 : i32
    %391 = tpu.dynamic_rotate %389 by %c9_i32_228 dim 1 : vector<16x64xf32>, i32 -> vector<16x64xf32>
    %392 = vector.broadcast %57 : vector<1x64xf32> to vector<16x64xf32>
    %393 = arith.mulf %391, %392 : vector<16x64xf32>
    %394 = arith.truncf %393 : vector<16x64xf32> to vector<16x64xbf16>
    %cst_229 = arith.constant dense<0.000000e+00> : vector<16x64xf32>
    %395 = tpu.matmul %37, %394, %cst_229 {dimension_numbers = #tpu.dot_dimension_numbers<[1], [0], [0], [1], [0, 0, 1, 1], [], []>} : vector<16x16xbf16>, vector<16x64xbf16>, vector<16x64xf32> -> vector<16x64xf32>
    %396 = arith.addf %390, %395 : vector<16x64xf32>
    %c8_i32_230 = arith.constant 8 : i32
    %397 = tpu.dynamic_rotate %389 by %c8_i32_230 dim 1 : vector<16x64xf32>, i32 -> vector<16x64xf32>
    %398 = vector.broadcast %58 : vector<1x64xf32> to vector<16x64xf32>
    %399 = arith.mulf %397, %398 : vector<16x64xf32>
    %400 = arith.truncf %399 : vector<16x64xf32> to vector<16x64xbf16>
    %cst_231 = arith.constant dense<0.000000e+00> : vector<16x64xf32>
    %401 = tpu.matmul %39, %400, %cst_231 {dimension_numbers = #tpu.dot_dimension_numbers<[1], [0], [0], [1], [0, 0, 1, 1], [], []>} : vector<16x16xbf16>, vector<16x64xbf16>, vector<16x64xf32> -> vector<16x64xf32>
    %402 = arith.addf %396, %401 : vector<16x64xf32>
    %c7_i32_232 = arith.constant 7 : i32
    %403 = tpu.dynamic_rotate %389 by %c7_i32_232 dim 1 : vector<16x64xf32>, i32 -> vector<16x64xf32>
    %404 = vector.broadcast %59 : vector<1x64xf32> to vector<16x64xf32>
    %405 = arith.mulf %403, %404 : vector<16x64xf32>
    %406 = arith.truncf %405 : vector<16x64xf32> to vector<16x64xbf16>
    %cst_233 = arith.constant dense<0.000000e+00> : vector<16x64xf32>
    %407 = tpu.matmul %41, %406, %cst_233 {dimension_numbers = #tpu.dot_dimension_numbers<[1], [0], [0], [1], [0, 0, 1, 1], [], []>} : vector<16x16xbf16>, vector<16x64xbf16>, vector<16x64xf32> -> vector<16x64xf32>
    %408 = arith.addf %402, %407 : vector<16x64xf32>
    %c1_i32_234 = arith.constant 1 : i32
    %409 = tpu.dynamic_rotate %389 by %c1_i32_234 dim 1 : vector<16x64xf32>, i32 -> vector<16x64xf32>
    %410 = vector.broadcast %60 : vector<1x64xf32> to vector<16x64xf32>
    %411 = arith.mulf %409, %410 : vector<16x64xf32>
    %412 = arith.truncf %411 : vector<16x64xf32> to vector<16x64xbf16>
    %cst_235 = arith.constant dense<0.000000e+00> : vector<16x64xf32>
    %413 = tpu.matmul %43, %412, %cst_235 {dimension_numbers = #tpu.dot_dimension_numbers<[1], [0], [0], [1], [0, 0, 1, 1], [], []>} : vector<16x16xbf16>, vector<16x64xbf16>, vector<16x64xf32> -> vector<16x64xf32>
    %414 = arith.addf %408, %413 : vector<16x64xf32>
    %415 = vector.broadcast %61 : vector<1x64xf32> to vector<16x64xf32>
    %416 = arith.mulf %389, %415 : vector<16x64xf32>
    %417 = arith.truncf %416 : vector<16x64xf32> to vector<16x64xbf16>
    %cst_236 = arith.constant dense<0.000000e+00> : vector<16x64xf32>
    %418 = tpu.matmul %45, %417, %cst_236 {dimension_numbers = #tpu.dot_dimension_numbers<[1], [0], [0], [1], [0, 0, 1, 1], [], []>} : vector<16x16xbf16>, vector<16x64xbf16>, vector<16x64xf32> -> vector<16x64xf32>
    %419 = arith.addf %414, %418 : vector<16x64xf32>
    %c63_i32_237 = arith.constant 63 : i32
    %420 = tpu.dynamic_rotate %389 by %c63_i32_237 dim 1 : vector<16x64xf32>, i32 -> vector<16x64xf32>
    %421 = vector.broadcast %62 : vector<1x64xf32> to vector<16x64xf32>
    %422 = arith.mulf %420, %421 : vector<16x64xf32>
    %423 = arith.truncf %422 : vector<16x64xf32> to vector<16x64xbf16>
    %cst_238 = arith.constant dense<0.000000e+00> : vector<16x64xf32>
    %424 = tpu.matmul %47, %423, %cst_238 {dimension_numbers = #tpu.dot_dimension_numbers<[1], [0], [0], [1], [0, 0, 1, 1], [], []>} : vector<16x16xbf16>, vector<16x64xbf16>, vector<16x64xf32> -> vector<16x64xf32>
    %425 = arith.addf %419, %424 : vector<16x64xf32>
    %c57_i32_239 = arith.constant 57 : i32
    %426 = tpu.dynamic_rotate %389 by %c57_i32_239 dim 1 : vector<16x64xf32>, i32 -> vector<16x64xf32>
    %427 = vector.broadcast %63 : vector<1x64xf32> to vector<16x64xf32>
    %428 = arith.mulf %426, %427 : vector<16x64xf32>
    %429 = arith.truncf %428 : vector<16x64xf32> to vector<16x64xbf16>
    %cst_240 = arith.constant dense<0.000000e+00> : vector<16x64xf32>
    %430 = tpu.matmul %49, %429, %cst_240 {dimension_numbers = #tpu.dot_dimension_numbers<[1], [0], [0], [1], [0, 0, 1, 1], [], []>} : vector<16x16xbf16>, vector<16x64xbf16>, vector<16x64xf32> -> vector<16x64xf32>
    %431 = arith.addf %425, %430 : vector<16x64xf32>
    %c56_i32_241 = arith.constant 56 : i32
    %432 = tpu.dynamic_rotate %389 by %c56_i32_241 dim 1 : vector<16x64xf32>, i32 -> vector<16x64xf32>
    %433 = vector.broadcast %64 : vector<1x64xf32> to vector<16x64xf32>
    %434 = arith.mulf %432, %433 : vector<16x64xf32>
    %435 = arith.truncf %434 : vector<16x64xf32> to vector<16x64xbf16>
    %cst_242 = arith.constant dense<0.000000e+00> : vector<16x64xf32>
    %436 = tpu.matmul %51, %435, %cst_242 {dimension_numbers = #tpu.dot_dimension_numbers<[1], [0], [0], [1], [0, 0, 1, 1], [], []>} : vector<16x16xbf16>, vector<16x64xbf16>, vector<16x64xf32> -> vector<16x64xf32>
    %437 = arith.addf %431, %436 : vector<16x64xf32>
    %c55_i32_243 = arith.constant 55 : i32
    %438 = tpu.dynamic_rotate %389 by %c55_i32_243 dim 1 : vector<16x64xf32>, i32 -> vector<16x64xf32>
    %439 = vector.broadcast %65 : vector<1x64xf32> to vector<16x64xf32>
    %440 = arith.mulf %438, %439 : vector<16x64xf32>
    %441 = arith.truncf %440 : vector<16x64xf32> to vector<16x64xbf16>
    %cst_244 = arith.constant dense<0.000000e+00> : vector<16x64xf32>
    %442 = tpu.matmul %53, %441, %cst_244 {dimension_numbers = #tpu.dot_dimension_numbers<[1], [0], [0], [1], [0, 0, 1, 1], [], []>} : vector<16x16xbf16>, vector<16x64xbf16>, vector<16x64xf32> -> vector<16x64xf32>
    %443 = arith.addf %437, %442 : vector<16x64xf32>
    %444 = vector.broadcast %56 : vector<16x1xf32> to vector<16x64xf32>
    %445 = arith.addf %443, %444 : vector<16x64xf32>
    %cst_245 = arith.constant 0.000000e+00 : f32
    %446 = vector.broadcast %cst_245 : f32 to vector<16x64xf32>
    %447 = arith.maximumf %445, %446 : vector<16x64xf32>
    %448 = arith.addf %447, %389 : vector<16x64xf32>
    %449 = arith.truncf %448 : vector<16x64xf32> to vector<16x64xbf16>
    %cst_246 = arith.constant dense<0.000000e+00> : vector<2x64xf32>
    %450 = tpu.matmul %66, %449, %cst_246 {dimension_numbers = #tpu.dot_dimension_numbers<[1], [0], [0], [1], [0, 0, 1, 1], [], []>} : vector<2x16xbf16>, vector<16x64xbf16>, vector<2x64xf32> -> vector<2x64xf32>
    %451 = vector.broadcast %67 : vector<2x1xf32> to vector<2x64xf32>
    %452 = arith.addf %450, %451 : vector<2x64xf32>
    %cst_247 = arith.constant 0.000000e+00 : f32
    %453 = vector.broadcast %cst_247 : f32 to vector<2x64xf32>
    %454 = arith.maximumf %452, %453 : vector<2x64xf32>
    %455 = arith.truncf %454 : vector<2x64xf32> to vector<2x64xbf16>
    %cst_248 = arith.constant dense<0.000000e+00> : vector<1x64xf32>
    %456 = tpu.matmul %68, %455, %cst_248 {dimension_numbers = #tpu.dot_dimension_numbers<[1], [0], [0], [1], [0, 0, 1, 1], [], []>} : vector<1x2xbf16>, vector<2x64xbf16>, vector<1x64xf32> -> vector<1x64xf32>
    %457 = vector.broadcast %69 : vector<1x1xf32> to vector<1x64xf32>
    %458 = arith.addf %456, %457 : vector<1x64xf32>
    %459 = arith.negf %458 : vector<1x64xf32>
    %460 = math.exp %459 : vector<1x64xf32>
    %cst_249 = arith.constant 1.000000e+00 : f32
    %461 = vector.broadcast %cst_249 : f32 to vector<1x64xf32>
    %462 = arith.addf %461, %460 : vector<1x64xf32>
    %463 = arith.divf %461, %462 : vector<1x64xf32>
    %464 = vector.broadcast %463 : vector<1x64xf32> to vector<16x64xf32>
    %465 = arith.mulf %448, %464 : vector<16x64xf32>
    %cst_250 = arith.constant dense<0.000000e+00> : vector<16xf32>
    %466 = vector.multi_reduction <add>, %465, %cst_250 [1] : vector<16x64xf32> to vector<16xf32>
    %467 = vector.shape_cast %466 : vector<16xf32> to vector<16x1xf32>
    %cst_251 = arith.constant 6.400000e+01 : f32
    %468 = vector.broadcast %cst_251 : f32 to vector<16x1xf32>
    %469 = arith.divf %467, %468 : vector<16x1xf32>
    %c2_252 = arith.constant 2 : index
    %c0_253 = arith.constant 0 : index
    %c0_254 = arith.constant 0 : index
    %470 = vector.load %arg1[%c2_252, %c0_253, %c0_254] : memref<8x16x64xf32, #tpu.memory_space<vmem>>, vector<1x16x64xf32>
    %471 = vector.shape_cast %470 : vector<1x16x64xf32> to vector<16x64xf32>
    %cst_255 = arith.constant 0.000000e+00 : f32
    %472 = vector.broadcast %cst_255 : f32 to vector<16x64xf32>
    %c9_i32_256 = arith.constant 9 : i32
    %473 = tpu.dynamic_rotate %471 by %c9_i32_256 dim 1 : vector<16x64xf32>, i32 -> vector<16x64xf32>
    %474 = vector.broadcast %57 : vector<1x64xf32> to vector<16x64xf32>
    %475 = arith.mulf %473, %474 : vector<16x64xf32>
    %476 = arith.truncf %475 : vector<16x64xf32> to vector<16x64xbf16>
    %cst_257 = arith.constant dense<0.000000e+00> : vector<16x64xf32>
    %477 = tpu.matmul %1, %476, %cst_257 {dimension_numbers = #tpu.dot_dimension_numbers<[1], [0], [0], [1], [0, 0, 1, 1], [], []>} : vector<16x16xbf16>, vector<16x64xbf16>, vector<16x64xf32> -> vector<16x64xf32>
    %478 = arith.addf %472, %477 : vector<16x64xf32>
    %c8_i32_258 = arith.constant 8 : i32
    %479 = tpu.dynamic_rotate %471 by %c8_i32_258 dim 1 : vector<16x64xf32>, i32 -> vector<16x64xf32>
    %480 = vector.broadcast %58 : vector<1x64xf32> to vector<16x64xf32>
    %481 = arith.mulf %479, %480 : vector<16x64xf32>
    %482 = arith.truncf %481 : vector<16x64xf32> to vector<16x64xbf16>
    %cst_259 = arith.constant dense<0.000000e+00> : vector<16x64xf32>
    %483 = tpu.matmul %3, %482, %cst_259 {dimension_numbers = #tpu.dot_dimension_numbers<[1], [0], [0], [1], [0, 0, 1, 1], [], []>} : vector<16x16xbf16>, vector<16x64xbf16>, vector<16x64xf32> -> vector<16x64xf32>
    %484 = arith.addf %478, %483 : vector<16x64xf32>
    %c7_i32_260 = arith.constant 7 : i32
    %485 = tpu.dynamic_rotate %471 by %c7_i32_260 dim 1 : vector<16x64xf32>, i32 -> vector<16x64xf32>
    %486 = vector.broadcast %59 : vector<1x64xf32> to vector<16x64xf32>
    %487 = arith.mulf %485, %486 : vector<16x64xf32>
    %488 = arith.truncf %487 : vector<16x64xf32> to vector<16x64xbf16>
    %cst_261 = arith.constant dense<0.000000e+00> : vector<16x64xf32>
    %489 = tpu.matmul %5, %488, %cst_261 {dimension_numbers = #tpu.dot_dimension_numbers<[1], [0], [0], [1], [0, 0, 1, 1], [], []>} : vector<16x16xbf16>, vector<16x64xbf16>, vector<16x64xf32> -> vector<16x64xf32>
    %490 = arith.addf %484, %489 : vector<16x64xf32>
    %c1_i32_262 = arith.constant 1 : i32
    %491 = tpu.dynamic_rotate %471 by %c1_i32_262 dim 1 : vector<16x64xf32>, i32 -> vector<16x64xf32>
    %492 = vector.broadcast %60 : vector<1x64xf32> to vector<16x64xf32>
    %493 = arith.mulf %491, %492 : vector<16x64xf32>
    %494 = arith.truncf %493 : vector<16x64xf32> to vector<16x64xbf16>
    %cst_263 = arith.constant dense<0.000000e+00> : vector<16x64xf32>
    %495 = tpu.matmul %7, %494, %cst_263 {dimension_numbers = #tpu.dot_dimension_numbers<[1], [0], [0], [1], [0, 0, 1, 1], [], []>} : vector<16x16xbf16>, vector<16x64xbf16>, vector<16x64xf32> -> vector<16x64xf32>
    %496 = arith.addf %490, %495 : vector<16x64xf32>
    %497 = vector.broadcast %61 : vector<1x64xf32> to vector<16x64xf32>
    %498 = arith.mulf %471, %497 : vector<16x64xf32>
    %499 = arith.truncf %498 : vector<16x64xf32> to vector<16x64xbf16>
    %cst_264 = arith.constant dense<0.000000e+00> : vector<16x64xf32>
    %500 = tpu.matmul %9, %499, %cst_264 {dimension_numbers = #tpu.dot_dimension_numbers<[1], [0], [0], [1], [0, 0, 1, 1], [], []>} : vector<16x16xbf16>, vector<16x64xbf16>, vector<16x64xf32> -> vector<16x64xf32>
    %501 = arith.addf %496, %500 : vector<16x64xf32>
    %c63_i32_265 = arith.constant 63 : i32
    %502 = tpu.dynamic_rotate %471 by %c63_i32_265 dim 1 : vector<16x64xf32>, i32 -> vector<16x64xf32>
    %503 = vector.broadcast %62 : vector<1x64xf32> to vector<16x64xf32>
    %504 = arith.mulf %502, %503 : vector<16x64xf32>
    %505 = arith.truncf %504 : vector<16x64xf32> to vector<16x64xbf16>
    %cst_266 = arith.constant dense<0.000000e+00> : vector<16x64xf32>
    %506 = tpu.matmul %11, %505, %cst_266 {dimension_numbers = #tpu.dot_dimension_numbers<[1], [0], [0], [1], [0, 0, 1, 1], [], []>} : vector<16x16xbf16>, vector<16x64xbf16>, vector<16x64xf32> -> vector<16x64xf32>
    %507 = arith.addf %501, %506 : vector<16x64xf32>
    %c57_i32_267 = arith.constant 57 : i32
    %508 = tpu.dynamic_rotate %471 by %c57_i32_267 dim 1 : vector<16x64xf32>, i32 -> vector<16x64xf32>
    %509 = vector.broadcast %63 : vector<1x64xf32> to vector<16x64xf32>
    %510 = arith.mulf %508, %509 : vector<16x64xf32>
    %511 = arith.truncf %510 : vector<16x64xf32> to vector<16x64xbf16>
    %cst_268 = arith.constant dense<0.000000e+00> : vector<16x64xf32>
    %512 = tpu.matmul %13, %511, %cst_268 {dimension_numbers = #tpu.dot_dimension_numbers<[1], [0], [0], [1], [0, 0, 1, 1], [], []>} : vector<16x16xbf16>, vector<16x64xbf16>, vector<16x64xf32> -> vector<16x64xf32>
    %513 = arith.addf %507, %512 : vector<16x64xf32>
    %c56_i32_269 = arith.constant 56 : i32
    %514 = tpu.dynamic_rotate %471 by %c56_i32_269 dim 1 : vector<16x64xf32>, i32 -> vector<16x64xf32>
    %515 = vector.broadcast %64 : vector<1x64xf32> to vector<16x64xf32>
    %516 = arith.mulf %514, %515 : vector<16x64xf32>
    %517 = arith.truncf %516 : vector<16x64xf32> to vector<16x64xbf16>
    %cst_270 = arith.constant dense<0.000000e+00> : vector<16x64xf32>
    %518 = tpu.matmul %15, %517, %cst_270 {dimension_numbers = #tpu.dot_dimension_numbers<[1], [0], [0], [1], [0, 0, 1, 1], [], []>} : vector<16x16xbf16>, vector<16x64xbf16>, vector<16x64xf32> -> vector<16x64xf32>
    %519 = arith.addf %513, %518 : vector<16x64xf32>
    %c55_i32_271 = arith.constant 55 : i32
    %520 = tpu.dynamic_rotate %471 by %c55_i32_271 dim 1 : vector<16x64xf32>, i32 -> vector<16x64xf32>
    %521 = vector.broadcast %65 : vector<1x64xf32> to vector<16x64xf32>
    %522 = arith.mulf %520, %521 : vector<16x64xf32>
    %523 = arith.truncf %522 : vector<16x64xf32> to vector<16x64xbf16>
    %cst_272 = arith.constant dense<0.000000e+00> : vector<16x64xf32>
    %524 = tpu.matmul %17, %523, %cst_272 {dimension_numbers = #tpu.dot_dimension_numbers<[1], [0], [0], [1], [0, 0, 1, 1], [], []>} : vector<16x16xbf16>, vector<16x64xbf16>, vector<16x64xf32> -> vector<16x64xf32>
    %525 = arith.addf %519, %524 : vector<16x64xf32>
    %526 = vector.broadcast %54 : vector<16x1xf32> to vector<16x64xf32>
    %527 = arith.addf %525, %526 : vector<16x64xf32>
    %cst_273 = arith.constant 0.000000e+00 : f32
    %528 = vector.broadcast %cst_273 : f32 to vector<16x64xf32>
    %529 = arith.maximumf %527, %528 : vector<16x64xf32>
    %530 = arith.addf %529, %471 : vector<16x64xf32>
    %cst_274 = arith.constant 0.000000e+00 : f32
    %531 = vector.broadcast %cst_274 : f32 to vector<16x64xf32>
    %c9_i32_275 = arith.constant 9 : i32
    %532 = tpu.dynamic_rotate %530 by %c9_i32_275 dim 1 : vector<16x64xf32>, i32 -> vector<16x64xf32>
    %533 = vector.broadcast %57 : vector<1x64xf32> to vector<16x64xf32>
    %534 = arith.mulf %532, %533 : vector<16x64xf32>
    %535 = arith.truncf %534 : vector<16x64xf32> to vector<16x64xbf16>
    %cst_276 = arith.constant dense<0.000000e+00> : vector<16x64xf32>
    %536 = tpu.matmul %19, %535, %cst_276 {dimension_numbers = #tpu.dot_dimension_numbers<[1], [0], [0], [1], [0, 0, 1, 1], [], []>} : vector<16x16xbf16>, vector<16x64xbf16>, vector<16x64xf32> -> vector<16x64xf32>
    %537 = arith.addf %531, %536 : vector<16x64xf32>
    %c8_i32_277 = arith.constant 8 : i32
    %538 = tpu.dynamic_rotate %530 by %c8_i32_277 dim 1 : vector<16x64xf32>, i32 -> vector<16x64xf32>
    %539 = vector.broadcast %58 : vector<1x64xf32> to vector<16x64xf32>
    %540 = arith.mulf %538, %539 : vector<16x64xf32>
    %541 = arith.truncf %540 : vector<16x64xf32> to vector<16x64xbf16>
    %cst_278 = arith.constant dense<0.000000e+00> : vector<16x64xf32>
    %542 = tpu.matmul %21, %541, %cst_278 {dimension_numbers = #tpu.dot_dimension_numbers<[1], [0], [0], [1], [0, 0, 1, 1], [], []>} : vector<16x16xbf16>, vector<16x64xbf16>, vector<16x64xf32> -> vector<16x64xf32>
    %543 = arith.addf %537, %542 : vector<16x64xf32>
    %c7_i32_279 = arith.constant 7 : i32
    %544 = tpu.dynamic_rotate %530 by %c7_i32_279 dim 1 : vector<16x64xf32>, i32 -> vector<16x64xf32>
    %545 = vector.broadcast %59 : vector<1x64xf32> to vector<16x64xf32>
    %546 = arith.mulf %544, %545 : vector<16x64xf32>
    %547 = arith.truncf %546 : vector<16x64xf32> to vector<16x64xbf16>
    %cst_280 = arith.constant dense<0.000000e+00> : vector<16x64xf32>
    %548 = tpu.matmul %23, %547, %cst_280 {dimension_numbers = #tpu.dot_dimension_numbers<[1], [0], [0], [1], [0, 0, 1, 1], [], []>} : vector<16x16xbf16>, vector<16x64xbf16>, vector<16x64xf32> -> vector<16x64xf32>
    %549 = arith.addf %543, %548 : vector<16x64xf32>
    %c1_i32_281 = arith.constant 1 : i32
    %550 = tpu.dynamic_rotate %530 by %c1_i32_281 dim 1 : vector<16x64xf32>, i32 -> vector<16x64xf32>
    %551 = vector.broadcast %60 : vector<1x64xf32> to vector<16x64xf32>
    %552 = arith.mulf %550, %551 : vector<16x64xf32>
    %553 = arith.truncf %552 : vector<16x64xf32> to vector<16x64xbf16>
    %cst_282 = arith.constant dense<0.000000e+00> : vector<16x64xf32>
    %554 = tpu.matmul %25, %553, %cst_282 {dimension_numbers = #tpu.dot_dimension_numbers<[1], [0], [0], [1], [0, 0, 1, 1], [], []>} : vector<16x16xbf16>, vector<16x64xbf16>, vector<16x64xf32> -> vector<16x64xf32>
    %555 = arith.addf %549, %554 : vector<16x64xf32>
    %556 = vector.broadcast %61 : vector<1x64xf32> to vector<16x64xf32>
    %557 = arith.mulf %530, %556 : vector<16x64xf32>
    %558 = arith.truncf %557 : vector<16x64xf32> to vector<16x64xbf16>
    %cst_283 = arith.constant dense<0.000000e+00> : vector<16x64xf32>
    %559 = tpu.matmul %27, %558, %cst_283 {dimension_numbers = #tpu.dot_dimension_numbers<[1], [0], [0], [1], [0, 0, 1, 1], [], []>} : vector<16x16xbf16>, vector<16x64xbf16>, vector<16x64xf32> -> vector<16x64xf32>
    %560 = arith.addf %555, %559 : vector<16x64xf32>
    %c63_i32_284 = arith.constant 63 : i32
    %561 = tpu.dynamic_rotate %530 by %c63_i32_284 dim 1 : vector<16x64xf32>, i32 -> vector<16x64xf32>
    %562 = vector.broadcast %62 : vector<1x64xf32> to vector<16x64xf32>
    %563 = arith.mulf %561, %562 : vector<16x64xf32>
    %564 = arith.truncf %563 : vector<16x64xf32> to vector<16x64xbf16>
    %cst_285 = arith.constant dense<0.000000e+00> : vector<16x64xf32>
    %565 = tpu.matmul %29, %564, %cst_285 {dimension_numbers = #tpu.dot_dimension_numbers<[1], [0], [0], [1], [0, 0, 1, 1], [], []>} : vector<16x16xbf16>, vector<16x64xbf16>, vector<16x64xf32> -> vector<16x64xf32>
    %566 = arith.addf %560, %565 : vector<16x64xf32>
    %c57_i32_286 = arith.constant 57 : i32
    %567 = tpu.dynamic_rotate %530 by %c57_i32_286 dim 1 : vector<16x64xf32>, i32 -> vector<16x64xf32>
    %568 = vector.broadcast %63 : vector<1x64xf32> to vector<16x64xf32>
    %569 = arith.mulf %567, %568 : vector<16x64xf32>
    %570 = arith.truncf %569 : vector<16x64xf32> to vector<16x64xbf16>
    %cst_287 = arith.constant dense<0.000000e+00> : vector<16x64xf32>
    %571 = tpu.matmul %31, %570, %cst_287 {dimension_numbers = #tpu.dot_dimension_numbers<[1], [0], [0], [1], [0, 0, 1, 1], [], []>} : vector<16x16xbf16>, vector<16x64xbf16>, vector<16x64xf32> -> vector<16x64xf32>
    %572 = arith.addf %566, %571 : vector<16x64xf32>
    %c56_i32_288 = arith.constant 56 : i32
    %573 = tpu.dynamic_rotate %530 by %c56_i32_288 dim 1 : vector<16x64xf32>, i32 -> vector<16x64xf32>
    %574 = vector.broadcast %64 : vector<1x64xf32> to vector<16x64xf32>
    %575 = arith.mulf %573, %574 : vector<16x64xf32>
    %576 = arith.truncf %575 : vector<16x64xf32> to vector<16x64xbf16>
    %cst_289 = arith.constant dense<0.000000e+00> : vector<16x64xf32>
    %577 = tpu.matmul %33, %576, %cst_289 {dimension_numbers = #tpu.dot_dimension_numbers<[1], [0], [0], [1], [0, 0, 1, 1], [], []>} : vector<16x16xbf16>, vector<16x64xbf16>, vector<16x64xf32> -> vector<16x64xf32>
    %578 = arith.addf %572, %577 : vector<16x64xf32>
    %c55_i32_290 = arith.constant 55 : i32
    %579 = tpu.dynamic_rotate %530 by %c55_i32_290 dim 1 : vector<16x64xf32>, i32 -> vector<16x64xf32>
    %580 = vector.broadcast %65 : vector<1x64xf32> to vector<16x64xf32>
    %581 = arith.mulf %579, %580 : vector<16x64xf32>
    %582 = arith.truncf %581 : vector<16x64xf32> to vector<16x64xbf16>
    %cst_291 = arith.constant dense<0.000000e+00> : vector<16x64xf32>
    %583 = tpu.matmul %35, %582, %cst_291 {dimension_numbers = #tpu.dot_dimension_numbers<[1], [0], [0], [1], [0, 0, 1, 1], [], []>} : vector<16x16xbf16>, vector<16x64xbf16>, vector<16x64xf32> -> vector<16x64xf32>
    %584 = arith.addf %578, %583 : vector<16x64xf32>
    %585 = vector.broadcast %55 : vector<16x1xf32> to vector<16x64xf32>
    %586 = arith.addf %584, %585 : vector<16x64xf32>
    %cst_292 = arith.constant 0.000000e+00 : f32
    %587 = vector.broadcast %cst_292 : f32 to vector<16x64xf32>
    %588 = arith.maximumf %586, %587 : vector<16x64xf32>
    %589 = arith.addf %588, %530 : vector<16x64xf32>
    %cst_293 = arith.constant 0.000000e+00 : f32
    %590 = vector.broadcast %cst_293 : f32 to vector<16x64xf32>
    %c9_i32_294 = arith.constant 9 : i32
    %591 = tpu.dynamic_rotate %589 by %c9_i32_294 dim 1 : vector<16x64xf32>, i32 -> vector<16x64xf32>
    %592 = vector.broadcast %57 : vector<1x64xf32> to vector<16x64xf32>
    %593 = arith.mulf %591, %592 : vector<16x64xf32>
    %594 = arith.truncf %593 : vector<16x64xf32> to vector<16x64xbf16>
    %cst_295 = arith.constant dense<0.000000e+00> : vector<16x64xf32>
    %595 = tpu.matmul %37, %594, %cst_295 {dimension_numbers = #tpu.dot_dimension_numbers<[1], [0], [0], [1], [0, 0, 1, 1], [], []>} : vector<16x16xbf16>, vector<16x64xbf16>, vector<16x64xf32> -> vector<16x64xf32>
    %596 = arith.addf %590, %595 : vector<16x64xf32>
    %c8_i32_296 = arith.constant 8 : i32
    %597 = tpu.dynamic_rotate %589 by %c8_i32_296 dim 1 : vector<16x64xf32>, i32 -> vector<16x64xf32>
    %598 = vector.broadcast %58 : vector<1x64xf32> to vector<16x64xf32>
    %599 = arith.mulf %597, %598 : vector<16x64xf32>
    %600 = arith.truncf %599 : vector<16x64xf32> to vector<16x64xbf16>
    %cst_297 = arith.constant dense<0.000000e+00> : vector<16x64xf32>
    %601 = tpu.matmul %39, %600, %cst_297 {dimension_numbers = #tpu.dot_dimension_numbers<[1], [0], [0], [1], [0, 0, 1, 1], [], []>} : vector<16x16xbf16>, vector<16x64xbf16>, vector<16x64xf32> -> vector<16x64xf32>
    %602 = arith.addf %596, %601 : vector<16x64xf32>
    %c7_i32_298 = arith.constant 7 : i32
    %603 = tpu.dynamic_rotate %589 by %c7_i32_298 dim 1 : vector<16x64xf32>, i32 -> vector<16x64xf32>
    %604 = vector.broadcast %59 : vector<1x64xf32> to vector<16x64xf32>
    %605 = arith.mulf %603, %604 : vector<16x64xf32>
    %606 = arith.truncf %605 : vector<16x64xf32> to vector<16x64xbf16>
    %cst_299 = arith.constant dense<0.000000e+00> : vector<16x64xf32>
    %607 = tpu.matmul %41, %606, %cst_299 {dimension_numbers = #tpu.dot_dimension_numbers<[1], [0], [0], [1], [0, 0, 1, 1], [], []>} : vector<16x16xbf16>, vector<16x64xbf16>, vector<16x64xf32> -> vector<16x64xf32>
    %608 = arith.addf %602, %607 : vector<16x64xf32>
    %c1_i32_300 = arith.constant 1 : i32
    %609 = tpu.dynamic_rotate %589 by %c1_i32_300 dim 1 : vector<16x64xf32>, i32 -> vector<16x64xf32>
    %610 = vector.broadcast %60 : vector<1x64xf32> to vector<16x64xf32>
    %611 = arith.mulf %609, %610 : vector<16x64xf32>
    %612 = arith.truncf %611 : vector<16x64xf32> to vector<16x64xbf16>
    %cst_301 = arith.constant dense<0.000000e+00> : vector<16x64xf32>
    %613 = tpu.matmul %43, %612, %cst_301 {dimension_numbers = #tpu.dot_dimension_numbers<[1], [0], [0], [1], [0, 0, 1, 1], [], []>} : vector<16x16xbf16>, vector<16x64xbf16>, vector<16x64xf32> -> vector<16x64xf32>
    %614 = arith.addf %608, %613 : vector<16x64xf32>
    %615 = vector.broadcast %61 : vector<1x64xf32> to vector<16x64xf32>
    %616 = arith.mulf %589, %615 : vector<16x64xf32>
    %617 = arith.truncf %616 : vector<16x64xf32> to vector<16x64xbf16>
    %cst_302 = arith.constant dense<0.000000e+00> : vector<16x64xf32>
    %618 = tpu.matmul %45, %617, %cst_302 {dimension_numbers = #tpu.dot_dimension_numbers<[1], [0], [0], [1], [0, 0, 1, 1], [], []>} : vector<16x16xbf16>, vector<16x64xbf16>, vector<16x64xf32> -> vector<16x64xf32>
    %619 = arith.addf %614, %618 : vector<16x64xf32>
    %c63_i32_303 = arith.constant 63 : i32
    %620 = tpu.dynamic_rotate %589 by %c63_i32_303 dim 1 : vector<16x64xf32>, i32 -> vector<16x64xf32>
    %621 = vector.broadcast %62 : vector<1x64xf32> to vector<16x64xf32>
    %622 = arith.mulf %620, %621 : vector<16x64xf32>
    %623 = arith.truncf %622 : vector<16x64xf32> to vector<16x64xbf16>
    %cst_304 = arith.constant dense<0.000000e+00> : vector<16x64xf32>
    %624 = tpu.matmul %47, %623, %cst_304 {dimension_numbers = #tpu.dot_dimension_numbers<[1], [0], [0], [1], [0, 0, 1, 1], [], []>} : vector<16x16xbf16>, vector<16x64xbf16>, vector<16x64xf32> -> vector<16x64xf32>
    %625 = arith.addf %619, %624 : vector<16x64xf32>
    %c57_i32_305 = arith.constant 57 : i32
    %626 = tpu.dynamic_rotate %589 by %c57_i32_305 dim 1 : vector<16x64xf32>, i32 -> vector<16x64xf32>
    %627 = vector.broadcast %63 : vector<1x64xf32> to vector<16x64xf32>
    %628 = arith.mulf %626, %627 : vector<16x64xf32>
    %629 = arith.truncf %628 : vector<16x64xf32> to vector<16x64xbf16>
    %cst_306 = arith.constant dense<0.000000e+00> : vector<16x64xf32>
    %630 = tpu.matmul %49, %629, %cst_306 {dimension_numbers = #tpu.dot_dimension_numbers<[1], [0], [0], [1], [0, 0, 1, 1], [], []>} : vector<16x16xbf16>, vector<16x64xbf16>, vector<16x64xf32> -> vector<16x64xf32>
    %631 = arith.addf %625, %630 : vector<16x64xf32>
    %c56_i32_307 = arith.constant 56 : i32
    %632 = tpu.dynamic_rotate %589 by %c56_i32_307 dim 1 : vector<16x64xf32>, i32 -> vector<16x64xf32>
    %633 = vector.broadcast %64 : vector<1x64xf32> to vector<16x64xf32>
    %634 = arith.mulf %632, %633 : vector<16x64xf32>
    %635 = arith.truncf %634 : vector<16x64xf32> to vector<16x64xbf16>
    %cst_308 = arith.constant dense<0.000000e+00> : vector<16x64xf32>
    %636 = tpu.matmul %51, %635, %cst_308 {dimension_numbers = #tpu.dot_dimension_numbers<[1], [0], [0], [1], [0, 0, 1, 1], [], []>} : vector<16x16xbf16>, vector<16x64xbf16>, vector<16x64xf32> -> vector<16x64xf32>
    %637 = arith.addf %631, %636 : vector<16x64xf32>
    %c55_i32_309 = arith.constant 55 : i32
    %638 = tpu.dynamic_rotate %589 by %c55_i32_309 dim 1 : vector<16x64xf32>, i32 -> vector<16x64xf32>
    %639 = vector.broadcast %65 : vector<1x64xf32> to vector<16x64xf32>
    %640 = arith.mulf %638, %639 : vector<16x64xf32>
    %641 = arith.truncf %640 : vector<16x64xf32> to vector<16x64xbf16>
    %cst_310 = arith.constant dense<0.000000e+00> : vector<16x64xf32>
    %642 = tpu.matmul %53, %641, %cst_310 {dimension_numbers = #tpu.dot_dimension_numbers<[1], [0], [0], [1], [0, 0, 1, 1], [], []>} : vector<16x16xbf16>, vector<16x64xbf16>, vector<16x64xf32> -> vector<16x64xf32>
    %643 = arith.addf %637, %642 : vector<16x64xf32>
    %644 = vector.broadcast %56 : vector<16x1xf32> to vector<16x64xf32>
    %645 = arith.addf %643, %644 : vector<16x64xf32>
    %cst_311 = arith.constant 0.000000e+00 : f32
    %646 = vector.broadcast %cst_311 : f32 to vector<16x64xf32>
    %647 = arith.maximumf %645, %646 : vector<16x64xf32>
    %648 = arith.addf %647, %589 : vector<16x64xf32>
    %649 = arith.truncf %648 : vector<16x64xf32> to vector<16x64xbf16>
    %cst_312 = arith.constant dense<0.000000e+00> : vector<2x64xf32>
    %650 = tpu.matmul %66, %649, %cst_312 {dimension_numbers = #tpu.dot_dimension_numbers<[1], [0], [0], [1], [0, 0, 1, 1], [], []>} : vector<2x16xbf16>, vector<16x64xbf16>, vector<2x64xf32> -> vector<2x64xf32>
    %651 = vector.broadcast %67 : vector<2x1xf32> to vector<2x64xf32>
    %652 = arith.addf %650, %651 : vector<2x64xf32>
    %cst_313 = arith.constant 0.000000e+00 : f32
    %653 = vector.broadcast %cst_313 : f32 to vector<2x64xf32>
    %654 = arith.maximumf %652, %653 : vector<2x64xf32>
    %655 = arith.truncf %654 : vector<2x64xf32> to vector<2x64xbf16>
    %cst_314 = arith.constant dense<0.000000e+00> : vector<1x64xf32>
    %656 = tpu.matmul %68, %655, %cst_314 {dimension_numbers = #tpu.dot_dimension_numbers<[1], [0], [0], [1], [0, 0, 1, 1], [], []>} : vector<1x2xbf16>, vector<2x64xbf16>, vector<1x64xf32> -> vector<1x64xf32>
    %657 = vector.broadcast %69 : vector<1x1xf32> to vector<1x64xf32>
    %658 = arith.addf %656, %657 : vector<1x64xf32>
    %659 = arith.negf %658 : vector<1x64xf32>
    %660 = math.exp %659 : vector<1x64xf32>
    %cst_315 = arith.constant 1.000000e+00 : f32
    %661 = vector.broadcast %cst_315 : f32 to vector<1x64xf32>
    %662 = arith.addf %661, %660 : vector<1x64xf32>
    %663 = arith.divf %661, %662 : vector<1x64xf32>
    %664 = vector.broadcast %663 : vector<1x64xf32> to vector<16x64xf32>
    %665 = arith.mulf %648, %664 : vector<16x64xf32>
    %cst_316 = arith.constant dense<0.000000e+00> : vector<16xf32>
    %666 = vector.multi_reduction <add>, %665, %cst_316 [1] : vector<16x64xf32> to vector<16xf32>
    %667 = vector.shape_cast %666 : vector<16xf32> to vector<16x1xf32>
    %cst_317 = arith.constant 6.400000e+01 : f32
    %668 = vector.broadcast %cst_317 : f32 to vector<16x1xf32>
    %669 = arith.divf %667, %668 : vector<16x1xf32>
    %c3_318 = arith.constant 3 : index
    %c0_319 = arith.constant 0 : index
    %c0_320 = arith.constant 0 : index
    %670 = vector.load %arg1[%c3_318, %c0_319, %c0_320] : memref<8x16x64xf32, #tpu.memory_space<vmem>>, vector<1x16x64xf32>
    %671 = vector.shape_cast %670 : vector<1x16x64xf32> to vector<16x64xf32>
    %cst_321 = arith.constant 0.000000e+00 : f32
    %672 = vector.broadcast %cst_321 : f32 to vector<16x64xf32>
    %c9_i32_322 = arith.constant 9 : i32
    %673 = tpu.dynamic_rotate %671 by %c9_i32_322 dim 1 : vector<16x64xf32>, i32 -> vector<16x64xf32>
    %674 = vector.broadcast %57 : vector<1x64xf32> to vector<16x64xf32>
    %675 = arith.mulf %673, %674 : vector<16x64xf32>
    %676 = arith.truncf %675 : vector<16x64xf32> to vector<16x64xbf16>
    %cst_323 = arith.constant dense<0.000000e+00> : vector<16x64xf32>
    %677 = tpu.matmul %1, %676, %cst_323 {dimension_numbers = #tpu.dot_dimension_numbers<[1], [0], [0], [1], [0, 0, 1, 1], [], []>} : vector<16x16xbf16>, vector<16x64xbf16>, vector<16x64xf32> -> vector<16x64xf32>
    %678 = arith.addf %672, %677 : vector<16x64xf32>
    %c8_i32_324 = arith.constant 8 : i32
    %679 = tpu.dynamic_rotate %671 by %c8_i32_324 dim 1 : vector<16x64xf32>, i32 -> vector<16x64xf32>
    %680 = vector.broadcast %58 : vector<1x64xf32> to vector<16x64xf32>
    %681 = arith.mulf %679, %680 : vector<16x64xf32>
    %682 = arith.truncf %681 : vector<16x64xf32> to vector<16x64xbf16>
    %cst_325 = arith.constant dense<0.000000e+00> : vector<16x64xf32>
    %683 = tpu.matmul %3, %682, %cst_325 {dimension_numbers = #tpu.dot_dimension_numbers<[1], [0], [0], [1], [0, 0, 1, 1], [], []>} : vector<16x16xbf16>, vector<16x64xbf16>, vector<16x64xf32> -> vector<16x64xf32>
    %684 = arith.addf %678, %683 : vector<16x64xf32>
    %c7_i32_326 = arith.constant 7 : i32
    %685 = tpu.dynamic_rotate %671 by %c7_i32_326 dim 1 : vector<16x64xf32>, i32 -> vector<16x64xf32>
    %686 = vector.broadcast %59 : vector<1x64xf32> to vector<16x64xf32>
    %687 = arith.mulf %685, %686 : vector<16x64xf32>
    %688 = arith.truncf %687 : vector<16x64xf32> to vector<16x64xbf16>
    %cst_327 = arith.constant dense<0.000000e+00> : vector<16x64xf32>
    %689 = tpu.matmul %5, %688, %cst_327 {dimension_numbers = #tpu.dot_dimension_numbers<[1], [0], [0], [1], [0, 0, 1, 1], [], []>} : vector<16x16xbf16>, vector<16x64xbf16>, vector<16x64xf32> -> vector<16x64xf32>
    %690 = arith.addf %684, %689 : vector<16x64xf32>
    %c1_i32_328 = arith.constant 1 : i32
    %691 = tpu.dynamic_rotate %671 by %c1_i32_328 dim 1 : vector<16x64xf32>, i32 -> vector<16x64xf32>
    %692 = vector.broadcast %60 : vector<1x64xf32> to vector<16x64xf32>
    %693 = arith.mulf %691, %692 : vector<16x64xf32>
    %694 = arith.truncf %693 : vector<16x64xf32> to vector<16x64xbf16>
    %cst_329 = arith.constant dense<0.000000e+00> : vector<16x64xf32>
    %695 = tpu.matmul %7, %694, %cst_329 {dimension_numbers = #tpu.dot_dimension_numbers<[1], [0], [0], [1], [0, 0, 1, 1], [], []>} : vector<16x16xbf16>, vector<16x64xbf16>, vector<16x64xf32> -> vector<16x64xf32>
    %696 = arith.addf %690, %695 : vector<16x64xf32>
    %697 = vector.broadcast %61 : vector<1x64xf32> to vector<16x64xf32>
    %698 = arith.mulf %671, %697 : vector<16x64xf32>
    %699 = arith.truncf %698 : vector<16x64xf32> to vector<16x64xbf16>
    %cst_330 = arith.constant dense<0.000000e+00> : vector<16x64xf32>
    %700 = tpu.matmul %9, %699, %cst_330 {dimension_numbers = #tpu.dot_dimension_numbers<[1], [0], [0], [1], [0, 0, 1, 1], [], []>} : vector<16x16xbf16>, vector<16x64xbf16>, vector<16x64xf32> -> vector<16x64xf32>
    %701 = arith.addf %696, %700 : vector<16x64xf32>
    %c63_i32_331 = arith.constant 63 : i32
    %702 = tpu.dynamic_rotate %671 by %c63_i32_331 dim 1 : vector<16x64xf32>, i32 -> vector<16x64xf32>
    %703 = vector.broadcast %62 : vector<1x64xf32> to vector<16x64xf32>
    %704 = arith.mulf %702, %703 : vector<16x64xf32>
    %705 = arith.truncf %704 : vector<16x64xf32> to vector<16x64xbf16>
    %cst_332 = arith.constant dense<0.000000e+00> : vector<16x64xf32>
    %706 = tpu.matmul %11, %705, %cst_332 {dimension_numbers = #tpu.dot_dimension_numbers<[1], [0], [0], [1], [0, 0, 1, 1], [], []>} : vector<16x16xbf16>, vector<16x64xbf16>, vector<16x64xf32> -> vector<16x64xf32>
    %707 = arith.addf %701, %706 : vector<16x64xf32>
    %c57_i32_333 = arith.constant 57 : i32
    %708 = tpu.dynamic_rotate %671 by %c57_i32_333 dim 1 : vector<16x64xf32>, i32 -> vector<16x64xf32>
    %709 = vector.broadcast %63 : vector<1x64xf32> to vector<16x64xf32>
    %710 = arith.mulf %708, %709 : vector<16x64xf32>
    %711 = arith.truncf %710 : vector<16x64xf32> to vector<16x64xbf16>
    %cst_334 = arith.constant dense<0.000000e+00> : vector<16x64xf32>
    %712 = tpu.matmul %13, %711, %cst_334 {dimension_numbers = #tpu.dot_dimension_numbers<[1], [0], [0], [1], [0, 0, 1, 1], [], []>} : vector<16x16xbf16>, vector<16x64xbf16>, vector<16x64xf32> -> vector<16x64xf32>
    %713 = arith.addf %707, %712 : vector<16x64xf32>
    %c56_i32_335 = arith.constant 56 : i32
    %714 = tpu.dynamic_rotate %671 by %c56_i32_335 dim 1 : vector<16x64xf32>, i32 -> vector<16x64xf32>
    %715 = vector.broadcast %64 : vector<1x64xf32> to vector<16x64xf32>
    %716 = arith.mulf %714, %715 : vector<16x64xf32>
    %717 = arith.truncf %716 : vector<16x64xf32> to vector<16x64xbf16>
    %cst_336 = arith.constant dense<0.000000e+00> : vector<16x64xf32>
    %718 = tpu.matmul %15, %717, %cst_336 {dimension_numbers = #tpu.dot_dimension_numbers<[1], [0], [0], [1], [0, 0, 1, 1], [], []>} : vector<16x16xbf16>, vector<16x64xbf16>, vector<16x64xf32> -> vector<16x64xf32>
    %719 = arith.addf %713, %718 : vector<16x64xf32>
    %c55_i32_337 = arith.constant 55 : i32
    %720 = tpu.dynamic_rotate %671 by %c55_i32_337 dim 1 : vector<16x64xf32>, i32 -> vector<16x64xf32>
    %721 = vector.broadcast %65 : vector<1x64xf32> to vector<16x64xf32>
    %722 = arith.mulf %720, %721 : vector<16x64xf32>
    %723 = arith.truncf %722 : vector<16x64xf32> to vector<16x64xbf16>
    %cst_338 = arith.constant dense<0.000000e+00> : vector<16x64xf32>
    %724 = tpu.matmul %17, %723, %cst_338 {dimension_numbers = #tpu.dot_dimension_numbers<[1], [0], [0], [1], [0, 0, 1, 1], [], []>} : vector<16x16xbf16>, vector<16x64xbf16>, vector<16x64xf32> -> vector<16x64xf32>
    %725 = arith.addf %719, %724 : vector<16x64xf32>
    %726 = vector.broadcast %54 : vector<16x1xf32> to vector<16x64xf32>
    %727 = arith.addf %725, %726 : vector<16x64xf32>
    %cst_339 = arith.constant 0.000000e+00 : f32
    %728 = vector.broadcast %cst_339 : f32 to vector<16x64xf32>
    %729 = arith.maximumf %727, %728 : vector<16x64xf32>
    %730 = arith.addf %729, %671 : vector<16x64xf32>
    %cst_340 = arith.constant 0.000000e+00 : f32
    %731 = vector.broadcast %cst_340 : f32 to vector<16x64xf32>
    %c9_i32_341 = arith.constant 9 : i32
    %732 = tpu.dynamic_rotate %730 by %c9_i32_341 dim 1 : vector<16x64xf32>, i32 -> vector<16x64xf32>
    %733 = vector.broadcast %57 : vector<1x64xf32> to vector<16x64xf32>
    %734 = arith.mulf %732, %733 : vector<16x64xf32>
    %735 = arith.truncf %734 : vector<16x64xf32> to vector<16x64xbf16>
    %cst_342 = arith.constant dense<0.000000e+00> : vector<16x64xf32>
    %736 = tpu.matmul %19, %735, %cst_342 {dimension_numbers = #tpu.dot_dimension_numbers<[1], [0], [0], [1], [0, 0, 1, 1], [], []>} : vector<16x16xbf16>, vector<16x64xbf16>, vector<16x64xf32> -> vector<16x64xf32>
    %737 = arith.addf %731, %736 : vector<16x64xf32>
    %c8_i32_343 = arith.constant 8 : i32
    %738 = tpu.dynamic_rotate %730 by %c8_i32_343 dim 1 : vector<16x64xf32>, i32 -> vector<16x64xf32>
    %739 = vector.broadcast %58 : vector<1x64xf32> to vector<16x64xf32>
    %740 = arith.mulf %738, %739 : vector<16x64xf32>
    %741 = arith.truncf %740 : vector<16x64xf32> to vector<16x64xbf16>
    %cst_344 = arith.constant dense<0.000000e+00> : vector<16x64xf32>
    %742 = tpu.matmul %21, %741, %cst_344 {dimension_numbers = #tpu.dot_dimension_numbers<[1], [0], [0], [1], [0, 0, 1, 1], [], []>} : vector<16x16xbf16>, vector<16x64xbf16>, vector<16x64xf32> -> vector<16x64xf32>
    %743 = arith.addf %737, %742 : vector<16x64xf32>
    %c7_i32_345 = arith.constant 7 : i32
    %744 = tpu.dynamic_rotate %730 by %c7_i32_345 dim 1 : vector<16x64xf32>, i32 -> vector<16x64xf32>
    %745 = vector.broadcast %59 : vector<1x64xf32> to vector<16x64xf32>
    %746 = arith.mulf %744, %745 : vector<16x64xf32>
    %747 = arith.truncf %746 : vector<16x64xf32> to vector<16x64xbf16>
    %cst_346 = arith.constant dense<0.000000e+00> : vector<16x64xf32>
    %748 = tpu.matmul %23, %747, %cst_346 {dimension_numbers = #tpu.dot_dimension_numbers<[1], [0], [0], [1], [0, 0, 1, 1], [], []>} : vector<16x16xbf16>, vector<16x64xbf16>, vector<16x64xf32> -> vector<16x64xf32>
    %749 = arith.addf %743, %748 : vector<16x64xf32>
    %c1_i32_347 = arith.constant 1 : i32
    %750 = tpu.dynamic_rotate %730 by %c1_i32_347 dim 1 : vector<16x64xf32>, i32 -> vector<16x64xf32>
    %751 = vector.broadcast %60 : vector<1x64xf32> to vector<16x64xf32>
    %752 = arith.mulf %750, %751 : vector<16x64xf32>
    %753 = arith.truncf %752 : vector<16x64xf32> to vector<16x64xbf16>
    %cst_348 = arith.constant dense<0.000000e+00> : vector<16x64xf32>
    %754 = tpu.matmul %25, %753, %cst_348 {dimension_numbers = #tpu.dot_dimension_numbers<[1], [0], [0], [1], [0, 0, 1, 1], [], []>} : vector<16x16xbf16>, vector<16x64xbf16>, vector<16x64xf32> -> vector<16x64xf32>
    %755 = arith.addf %749, %754 : vector<16x64xf32>
    %756 = vector.broadcast %61 : vector<1x64xf32> to vector<16x64xf32>
    %757 = arith.mulf %730, %756 : vector<16x64xf32>
    %758 = arith.truncf %757 : vector<16x64xf32> to vector<16x64xbf16>
    %cst_349 = arith.constant dense<0.000000e+00> : vector<16x64xf32>
    %759 = tpu.matmul %27, %758, %cst_349 {dimension_numbers = #tpu.dot_dimension_numbers<[1], [0], [0], [1], [0, 0, 1, 1], [], []>} : vector<16x16xbf16>, vector<16x64xbf16>, vector<16x64xf32> -> vector<16x64xf32>
    %760 = arith.addf %755, %759 : vector<16x64xf32>
    %c63_i32_350 = arith.constant 63 : i32
    %761 = tpu.dynamic_rotate %730 by %c63_i32_350 dim 1 : vector<16x64xf32>, i32 -> vector<16x64xf32>
    %762 = vector.broadcast %62 : vector<1x64xf32> to vector<16x64xf32>
    %763 = arith.mulf %761, %762 : vector<16x64xf32>
    %764 = arith.truncf %763 : vector<16x64xf32> to vector<16x64xbf16>
    %cst_351 = arith.constant dense<0.000000e+00> : vector<16x64xf32>
    %765 = tpu.matmul %29, %764, %cst_351 {dimension_numbers = #tpu.dot_dimension_numbers<[1], [0], [0], [1], [0, 0, 1, 1], [], []>} : vector<16x16xbf16>, vector<16x64xbf16>, vector<16x64xf32> -> vector<16x64xf32>
    %766 = arith.addf %760, %765 : vector<16x64xf32>
    %c57_i32_352 = arith.constant 57 : i32
    %767 = tpu.dynamic_rotate %730 by %c57_i32_352 dim 1 : vector<16x64xf32>, i32 -> vector<16x64xf32>
    %768 = vector.broadcast %63 : vector<1x64xf32> to vector<16x64xf32>
    %769 = arith.mulf %767, %768 : vector<16x64xf32>
    %770 = arith.truncf %769 : vector<16x64xf32> to vector<16x64xbf16>
    %cst_353 = arith.constant dense<0.000000e+00> : vector<16x64xf32>
    %771 = tpu.matmul %31, %770, %cst_353 {dimension_numbers = #tpu.dot_dimension_numbers<[1], [0], [0], [1], [0, 0, 1, 1], [], []>} : vector<16x16xbf16>, vector<16x64xbf16>, vector<16x64xf32> -> vector<16x64xf32>
    %772 = arith.addf %766, %771 : vector<16x64xf32>
    %c56_i32_354 = arith.constant 56 : i32
    %773 = tpu.dynamic_rotate %730 by %c56_i32_354 dim 1 : vector<16x64xf32>, i32 -> vector<16x64xf32>
    %774 = vector.broadcast %64 : vector<1x64xf32> to vector<16x64xf32>
    %775 = arith.mulf %773, %774 : vector<16x64xf32>
    %776 = arith.truncf %775 : vector<16x64xf32> to vector<16x64xbf16>
    %cst_355 = arith.constant dense<0.000000e+00> : vector<16x64xf32>
    %777 = tpu.matmul %33, %776, %cst_355 {dimension_numbers = #tpu.dot_dimension_numbers<[1], [0], [0], [1], [0, 0, 1, 1], [], []>} : vector<16x16xbf16>, vector<16x64xbf16>, vector<16x64xf32> -> vector<16x64xf32>
    %778 = arith.addf %772, %777 : vector<16x64xf32>
    %c55_i32_356 = arith.constant 55 : i32
    %779 = tpu.dynamic_rotate %730 by %c55_i32_356 dim 1 : vector<16x64xf32>, i32 -> vector<16x64xf32>
    %780 = vector.broadcast %65 : vector<1x64xf32> to vector<16x64xf32>
    %781 = arith.mulf %779, %780 : vector<16x64xf32>
    %782 = arith.truncf %781 : vector<16x64xf32> to vector<16x64xbf16>
    %cst_357 = arith.constant dense<0.000000e+00> : vector<16x64xf32>
    %783 = tpu.matmul %35, %782, %cst_357 {dimension_numbers = #tpu.dot_dimension_numbers<[1], [0], [0], [1], [0, 0, 1, 1], [], []>} : vector<16x16xbf16>, vector<16x64xbf16>, vector<16x64xf32> -> vector<16x64xf32>
    %784 = arith.addf %778, %783 : vector<16x64xf32>
    %785 = vector.broadcast %55 : vector<16x1xf32> to vector<16x64xf32>
    %786 = arith.addf %784, %785 : vector<16x64xf32>
    %cst_358 = arith.constant 0.000000e+00 : f32
    %787 = vector.broadcast %cst_358 : f32 to vector<16x64xf32>
    %788 = arith.maximumf %786, %787 : vector<16x64xf32>
    %789 = arith.addf %788, %730 : vector<16x64xf32>
    %cst_359 = arith.constant 0.000000e+00 : f32
    %790 = vector.broadcast %cst_359 : f32 to vector<16x64xf32>
    %c9_i32_360 = arith.constant 9 : i32
    %791 = tpu.dynamic_rotate %789 by %c9_i32_360 dim 1 : vector<16x64xf32>, i32 -> vector<16x64xf32>
    %792 = vector.broadcast %57 : vector<1x64xf32> to vector<16x64xf32>
    %793 = arith.mulf %791, %792 : vector<16x64xf32>
    %794 = arith.truncf %793 : vector<16x64xf32> to vector<16x64xbf16>
    %cst_361 = arith.constant dense<0.000000e+00> : vector<16x64xf32>
    %795 = tpu.matmul %37, %794, %cst_361 {dimension_numbers = #tpu.dot_dimension_numbers<[1], [0], [0], [1], [0, 0, 1, 1], [], []>} : vector<16x16xbf16>, vector<16x64xbf16>, vector<16x64xf32> -> vector<16x64xf32>
    %796 = arith.addf %790, %795 : vector<16x64xf32>
    %c8_i32_362 = arith.constant 8 : i32
    %797 = tpu.dynamic_rotate %789 by %c8_i32_362 dim 1 : vector<16x64xf32>, i32 -> vector<16x64xf32>
    %798 = vector.broadcast %58 : vector<1x64xf32> to vector<16x64xf32>
    %799 = arith.mulf %797, %798 : vector<16x64xf32>
    %800 = arith.truncf %799 : vector<16x64xf32> to vector<16x64xbf16>
    %cst_363 = arith.constant dense<0.000000e+00> : vector<16x64xf32>
    %801 = tpu.matmul %39, %800, %cst_363 {dimension_numbers = #tpu.dot_dimension_numbers<[1], [0], [0], [1], [0, 0, 1, 1], [], []>} : vector<16x16xbf16>, vector<16x64xbf16>, vector<16x64xf32> -> vector<16x64xf32>
    %802 = arith.addf %796, %801 : vector<16x64xf32>
    %c7_i32_364 = arith.constant 7 : i32
    %803 = tpu.dynamic_rotate %789 by %c7_i32_364 dim 1 : vector<16x64xf32>, i32 -> vector<16x64xf32>
    %804 = vector.broadcast %59 : vector<1x64xf32> to vector<16x64xf32>
    %805 = arith.mulf %803, %804 : vector<16x64xf32>
    %806 = arith.truncf %805 : vector<16x64xf32> to vector<16x64xbf16>
    %cst_365 = arith.constant dense<0.000000e+00> : vector<16x64xf32>
    %807 = tpu.matmul %41, %806, %cst_365 {dimension_numbers = #tpu.dot_dimension_numbers<[1], [0], [0], [1], [0, 0, 1, 1], [], []>} : vector<16x16xbf16>, vector<16x64xbf16>, vector<16x64xf32> -> vector<16x64xf32>
    %808 = arith.addf %802, %807 : vector<16x64xf32>
    %c1_i32_366 = arith.constant 1 : i32
    %809 = tpu.dynamic_rotate %789 by %c1_i32_366 dim 1 : vector<16x64xf32>, i32 -> vector<16x64xf32>
    %810 = vector.broadcast %60 : vector<1x64xf32> to vector<16x64xf32>
    %811 = arith.mulf %809, %810 : vector<16x64xf32>
    %812 = arith.truncf %811 : vector<16x64xf32> to vector<16x64xbf16>
    %cst_367 = arith.constant dense<0.000000e+00> : vector<16x64xf32>
    %813 = tpu.matmul %43, %812, %cst_367 {dimension_numbers = #tpu.dot_dimension_numbers<[1], [0], [0], [1], [0, 0, 1, 1], [], []>} : vector<16x16xbf16>, vector<16x64xbf16>, vector<16x64xf32> -> vector<16x64xf32>
    %814 = arith.addf %808, %813 : vector<16x64xf32>
    %815 = vector.broadcast %61 : vector<1x64xf32> to vector<16x64xf32>
    %816 = arith.mulf %789, %815 : vector<16x64xf32>
    %817 = arith.truncf %816 : vector<16x64xf32> to vector<16x64xbf16>
    %cst_368 = arith.constant dense<0.000000e+00> : vector<16x64xf32>
    %818 = tpu.matmul %45, %817, %cst_368 {dimension_numbers = #tpu.dot_dimension_numbers<[1], [0], [0], [1], [0, 0, 1, 1], [], []>} : vector<16x16xbf16>, vector<16x64xbf16>, vector<16x64xf32> -> vector<16x64xf32>
    %819 = arith.addf %814, %818 : vector<16x64xf32>
    %c63_i32_369 = arith.constant 63 : i32
    %820 = tpu.dynamic_rotate %789 by %c63_i32_369 dim 1 : vector<16x64xf32>, i32 -> vector<16x64xf32>
    %821 = vector.broadcast %62 : vector<1x64xf32> to vector<16x64xf32>
    %822 = arith.mulf %820, %821 : vector<16x64xf32>
    %823 = arith.truncf %822 : vector<16x64xf32> to vector<16x64xbf16>
    %cst_370 = arith.constant dense<0.000000e+00> : vector<16x64xf32>
    %824 = tpu.matmul %47, %823, %cst_370 {dimension_numbers = #tpu.dot_dimension_numbers<[1], [0], [0], [1], [0, 0, 1, 1], [], []>} : vector<16x16xbf16>, vector<16x64xbf16>, vector<16x64xf32> -> vector<16x64xf32>
    %825 = arith.addf %819, %824 : vector<16x64xf32>
    %c57_i32_371 = arith.constant 57 : i32
    %826 = tpu.dynamic_rotate %789 by %c57_i32_371 dim 1 : vector<16x64xf32>, i32 -> vector<16x64xf32>
    %827 = vector.broadcast %63 : vector<1x64xf32> to vector<16x64xf32>
    %828 = arith.mulf %826, %827 : vector<16x64xf32>
    %829 = arith.truncf %828 : vector<16x64xf32> to vector<16x64xbf16>
    %cst_372 = arith.constant dense<0.000000e+00> : vector<16x64xf32>
    %830 = tpu.matmul %49, %829, %cst_372 {dimension_numbers = #tpu.dot_dimension_numbers<[1], [0], [0], [1], [0, 0, 1, 1], [], []>} : vector<16x16xbf16>, vector<16x64xbf16>, vector<16x64xf32> -> vector<16x64xf32>
    %831 = arith.addf %825, %830 : vector<16x64xf32>
    %c56_i32_373 = arith.constant 56 : i32
    %832 = tpu.dynamic_rotate %789 by %c56_i32_373 dim 1 : vector<16x64xf32>, i32 -> vector<16x64xf32>
    %833 = vector.broadcast %64 : vector<1x64xf32> to vector<16x64xf32>
    %834 = arith.mulf %832, %833 : vector<16x64xf32>
    %835 = arith.truncf %834 : vector<16x64xf32> to vector<16x64xbf16>
    %cst_374 = arith.constant dense<0.000000e+00> : vector<16x64xf32>
    %836 = tpu.matmul %51, %835, %cst_374 {dimension_numbers = #tpu.dot_dimension_numbers<[1], [0], [0], [1], [0, 0, 1, 1], [], []>} : vector<16x16xbf16>, vector<16x64xbf16>, vector<16x64xf32> -> vector<16x64xf32>
    %837 = arith.addf %831, %836 : vector<16x64xf32>
    %c55_i32_375 = arith.constant 55 : i32
    %838 = tpu.dynamic_rotate %789 by %c55_i32_375 dim 1 : vector<16x64xf32>, i32 -> vector<16x64xf32>
    %839 = vector.broadcast %65 : vector<1x64xf32> to vector<16x64xf32>
    %840 = arith.mulf %838, %839 : vector<16x64xf32>
    %841 = arith.truncf %840 : vector<16x64xf32> to vector<16x64xbf16>
    %cst_376 = arith.constant dense<0.000000e+00> : vector<16x64xf32>
    %842 = tpu.matmul %53, %841, %cst_376 {dimension_numbers = #tpu.dot_dimension_numbers<[1], [0], [0], [1], [0, 0, 1, 1], [], []>} : vector<16x16xbf16>, vector<16x64xbf16>, vector<16x64xf32> -> vector<16x64xf32>
    %843 = arith.addf %837, %842 : vector<16x64xf32>
    %844 = vector.broadcast %56 : vector<16x1xf32> to vector<16x64xf32>
    %845 = arith.addf %843, %844 : vector<16x64xf32>
    %cst_377 = arith.constant 0.000000e+00 : f32
    %846 = vector.broadcast %cst_377 : f32 to vector<16x64xf32>
    %847 = arith.maximumf %845, %846 : vector<16x64xf32>
    %848 = arith.addf %847, %789 : vector<16x64xf32>
    %849 = arith.truncf %848 : vector<16x64xf32> to vector<16x64xbf16>
    %cst_378 = arith.constant dense<0.000000e+00> : vector<2x64xf32>
    %850 = tpu.matmul %66, %849, %cst_378 {dimension_numbers = #tpu.dot_dimension_numbers<[1], [0], [0], [1], [0, 0, 1, 1], [], []>} : vector<2x16xbf16>, vector<16x64xbf16>, vector<2x64xf32> -> vector<2x64xf32>
    %851 = vector.broadcast %67 : vector<2x1xf32> to vector<2x64xf32>
    %852 = arith.addf %850, %851 : vector<2x64xf32>
    %cst_379 = arith.constant 0.000000e+00 : f32
    %853 = vector.broadcast %cst_379 : f32 to vector<2x64xf32>
    %854 = arith.maximumf %852, %853 : vector<2x64xf32>
    %855 = arith.truncf %854 : vector<2x64xf32> to vector<2x64xbf16>
    %cst_380 = arith.constant dense<0.000000e+00> : vector<1x64xf32>
    %856 = tpu.matmul %68, %855, %cst_380 {dimension_numbers = #tpu.dot_dimension_numbers<[1], [0], [0], [1], [0, 0, 1, 1], [], []>} : vector<1x2xbf16>, vector<2x64xbf16>, vector<1x64xf32> -> vector<1x64xf32>
    %857 = vector.broadcast %69 : vector<1x1xf32> to vector<1x64xf32>
    %858 = arith.addf %856, %857 : vector<1x64xf32>
    %859 = arith.negf %858 : vector<1x64xf32>
    %860 = math.exp %859 : vector<1x64xf32>
    %cst_381 = arith.constant 1.000000e+00 : f32
    %861 = vector.broadcast %cst_381 : f32 to vector<1x64xf32>
    %862 = arith.addf %861, %860 : vector<1x64xf32>
    %863 = arith.divf %861, %862 : vector<1x64xf32>
    %864 = vector.broadcast %863 : vector<1x64xf32> to vector<16x64xf32>
    %865 = arith.mulf %848, %864 : vector<16x64xf32>
    %cst_382 = arith.constant dense<0.000000e+00> : vector<16xf32>
    %866 = vector.multi_reduction <add>, %865, %cst_382 [1] : vector<16x64xf32> to vector<16xf32>
    %867 = vector.shape_cast %866 : vector<16xf32> to vector<16x1xf32>
    %cst_383 = arith.constant 6.400000e+01 : f32
    %868 = vector.broadcast %cst_383 : f32 to vector<16x1xf32>
    %869 = arith.divf %867, %868 : vector<16x1xf32>
    %c4_384 = arith.constant 4 : index
    %c0_385 = arith.constant 0 : index
    %c0_386 = arith.constant 0 : index
    %870 = vector.load %arg1[%c4_384, %c0_385, %c0_386] : memref<8x16x64xf32, #tpu.memory_space<vmem>>, vector<1x16x64xf32>
    %871 = vector.shape_cast %870 : vector<1x16x64xf32> to vector<16x64xf32>
    %cst_387 = arith.constant 0.000000e+00 : f32
    %872 = vector.broadcast %cst_387 : f32 to vector<16x64xf32>
    %c9_i32_388 = arith.constant 9 : i32
    %873 = tpu.dynamic_rotate %871 by %c9_i32_388 dim 1 : vector<16x64xf32>, i32 -> vector<16x64xf32>
    %874 = vector.broadcast %57 : vector<1x64xf32> to vector<16x64xf32>
    %875 = arith.mulf %873, %874 : vector<16x64xf32>
    %876 = arith.truncf %875 : vector<16x64xf32> to vector<16x64xbf16>
    %cst_389 = arith.constant dense<0.000000e+00> : vector<16x64xf32>
    %877 = tpu.matmul %1, %876, %cst_389 {dimension_numbers = #tpu.dot_dimension_numbers<[1], [0], [0], [1], [0, 0, 1, 1], [], []>} : vector<16x16xbf16>, vector<16x64xbf16>, vector<16x64xf32> -> vector<16x64xf32>
    %878 = arith.addf %872, %877 : vector<16x64xf32>
    %c8_i32_390 = arith.constant 8 : i32
    %879 = tpu.dynamic_rotate %871 by %c8_i32_390 dim 1 : vector<16x64xf32>, i32 -> vector<16x64xf32>
    %880 = vector.broadcast %58 : vector<1x64xf32> to vector<16x64xf32>
    %881 = arith.mulf %879, %880 : vector<16x64xf32>
    %882 = arith.truncf %881 : vector<16x64xf32> to vector<16x64xbf16>
    %cst_391 = arith.constant dense<0.000000e+00> : vector<16x64xf32>
    %883 = tpu.matmul %3, %882, %cst_391 {dimension_numbers = #tpu.dot_dimension_numbers<[1], [0], [0], [1], [0, 0, 1, 1], [], []>} : vector<16x16xbf16>, vector<16x64xbf16>, vector<16x64xf32> -> vector<16x64xf32>
    %884 = arith.addf %878, %883 : vector<16x64xf32>
    %c7_i32_392 = arith.constant 7 : i32
    %885 = tpu.dynamic_rotate %871 by %c7_i32_392 dim 1 : vector<16x64xf32>, i32 -> vector<16x64xf32>
    %886 = vector.broadcast %59 : vector<1x64xf32> to vector<16x64xf32>
    %887 = arith.mulf %885, %886 : vector<16x64xf32>
    %888 = arith.truncf %887 : vector<16x64xf32> to vector<16x64xbf16>
    %cst_393 = arith.constant dense<0.000000e+00> : vector<16x64xf32>
    %889 = tpu.matmul %5, %888, %cst_393 {dimension_numbers = #tpu.dot_dimension_numbers<[1], [0], [0], [1], [0, 0, 1, 1], [], []>} : vector<16x16xbf16>, vector<16x64xbf16>, vector<16x64xf32> -> vector<16x64xf32>
    %890 = arith.addf %884, %889 : vector<16x64xf32>
    %c1_i32_394 = arith.constant 1 : i32
    %891 = tpu.dynamic_rotate %871 by %c1_i32_394 dim 1 : vector<16x64xf32>, i32 -> vector<16x64xf32>
    %892 = vector.broadcast %60 : vector<1x64xf32> to vector<16x64xf32>
    %893 = arith.mulf %891, %892 : vector<16x64xf32>
    %894 = arith.truncf %893 : vector<16x64xf32> to vector<16x64xbf16>
    %cst_395 = arith.constant dense<0.000000e+00> : vector<16x64xf32>
    %895 = tpu.matmul %7, %894, %cst_395 {dimension_numbers = #tpu.dot_dimension_numbers<[1], [0], [0], [1], [0, 0, 1, 1], [], []>} : vector<16x16xbf16>, vector<16x64xbf16>, vector<16x64xf32> -> vector<16x64xf32>
    %896 = arith.addf %890, %895 : vector<16x64xf32>
    %897 = vector.broadcast %61 : vector<1x64xf32> to vector<16x64xf32>
    %898 = arith.mulf %871, %897 : vector<16x64xf32>
    %899 = arith.truncf %898 : vector<16x64xf32> to vector<16x64xbf16>
    %cst_396 = arith.constant dense<0.000000e+00> : vector<16x64xf32>
    %900 = tpu.matmul %9, %899, %cst_396 {dimension_numbers = #tpu.dot_dimension_numbers<[1], [0], [0], [1], [0, 0, 1, 1], [], []>} : vector<16x16xbf16>, vector<16x64xbf16>, vector<16x64xf32> -> vector<16x64xf32>
    %901 = arith.addf %896, %900 : vector<16x64xf32>
    %c63_i32_397 = arith.constant 63 : i32
    %902 = tpu.dynamic_rotate %871 by %c63_i32_397 dim 1 : vector<16x64xf32>, i32 -> vector<16x64xf32>
    %903 = vector.broadcast %62 : vector<1x64xf32> to vector<16x64xf32>
    %904 = arith.mulf %902, %903 : vector<16x64xf32>
    %905 = arith.truncf %904 : vector<16x64xf32> to vector<16x64xbf16>
    %cst_398 = arith.constant dense<0.000000e+00> : vector<16x64xf32>
    %906 = tpu.matmul %11, %905, %cst_398 {dimension_numbers = #tpu.dot_dimension_numbers<[1], [0], [0], [1], [0, 0, 1, 1], [], []>} : vector<16x16xbf16>, vector<16x64xbf16>, vector<16x64xf32> -> vector<16x64xf32>
    %907 = arith.addf %901, %906 : vector<16x64xf32>
    %c57_i32_399 = arith.constant 57 : i32
    %908 = tpu.dynamic_rotate %871 by %c57_i32_399 dim 1 : vector<16x64xf32>, i32 -> vector<16x64xf32>
    %909 = vector.broadcast %63 : vector<1x64xf32> to vector<16x64xf32>
    %910 = arith.mulf %908, %909 : vector<16x64xf32>
    %911 = arith.truncf %910 : vector<16x64xf32> to vector<16x64xbf16>
    %cst_400 = arith.constant dense<0.000000e+00> : vector<16x64xf32>
    %912 = tpu.matmul %13, %911, %cst_400 {dimension_numbers = #tpu.dot_dimension_numbers<[1], [0], [0], [1], [0, 0, 1, 1], [], []>} : vector<16x16xbf16>, vector<16x64xbf16>, vector<16x64xf32> -> vector<16x64xf32>
    %913 = arith.addf %907, %912 : vector<16x64xf32>
    %c56_i32_401 = arith.constant 56 : i32
    %914 = tpu.dynamic_rotate %871 by %c56_i32_401 dim 1 : vector<16x64xf32>, i32 -> vector<16x64xf32>
    %915 = vector.broadcast %64 : vector<1x64xf32> to vector<16x64xf32>
    %916 = arith.mulf %914, %915 : vector<16x64xf32>
    %917 = arith.truncf %916 : vector<16x64xf32> to vector<16x64xbf16>
    %cst_402 = arith.constant dense<0.000000e+00> : vector<16x64xf32>
    %918 = tpu.matmul %15, %917, %cst_402 {dimension_numbers = #tpu.dot_dimension_numbers<[1], [0], [0], [1], [0, 0, 1, 1], [], []>} : vector<16x16xbf16>, vector<16x64xbf16>, vector<16x64xf32> -> vector<16x64xf32>
    %919 = arith.addf %913, %918 : vector<16x64xf32>
    %c55_i32_403 = arith.constant 55 : i32
    %920 = tpu.dynamic_rotate %871 by %c55_i32_403 dim 1 : vector<16x64xf32>, i32 -> vector<16x64xf32>
    %921 = vector.broadcast %65 : vector<1x64xf32> to vector<16x64xf32>
    %922 = arith.mulf %920, %921 : vector<16x64xf32>
    %923 = arith.truncf %922 : vector<16x64xf32> to vector<16x64xbf16>
    %cst_404 = arith.constant dense<0.000000e+00> : vector<16x64xf32>
    %924 = tpu.matmul %17, %923, %cst_404 {dimension_numbers = #tpu.dot_dimension_numbers<[1], [0], [0], [1], [0, 0, 1, 1], [], []>} : vector<16x16xbf16>, vector<16x64xbf16>, vector<16x64xf32> -> vector<16x64xf32>
    %925 = arith.addf %919, %924 : vector<16x64xf32>
    %926 = vector.broadcast %54 : vector<16x1xf32> to vector<16x64xf32>
    %927 = arith.addf %925, %926 : vector<16x64xf32>
    %cst_405 = arith.constant 0.000000e+00 : f32
    %928 = vector.broadcast %cst_405 : f32 to vector<16x64xf32>
    %929 = arith.maximumf %927, %928 : vector<16x64xf32>
    %930 = arith.addf %929, %871 : vector<16x64xf32>
    %cst_406 = arith.constant 0.000000e+00 : f32
    %931 = vector.broadcast %cst_406 : f32 to vector<16x64xf32>
    %c9_i32_407 = arith.constant 9 : i32
    %932 = tpu.dynamic_rotate %930 by %c9_i32_407 dim 1 : vector<16x64xf32>, i32 -> vector<16x64xf32>
    %933 = vector.broadcast %57 : vector<1x64xf32> to vector<16x64xf32>
    %934 = arith.mulf %932, %933 : vector<16x64xf32>
    %935 = arith.truncf %934 : vector<16x64xf32> to vector<16x64xbf16>
    %cst_408 = arith.constant dense<0.000000e+00> : vector<16x64xf32>
    %936 = tpu.matmul %19, %935, %cst_408 {dimension_numbers = #tpu.dot_dimension_numbers<[1], [0], [0], [1], [0, 0, 1, 1], [], []>} : vector<16x16xbf16>, vector<16x64xbf16>, vector<16x64xf32> -> vector<16x64xf32>
    %937 = arith.addf %931, %936 : vector<16x64xf32>
    %c8_i32_409 = arith.constant 8 : i32
    %938 = tpu.dynamic_rotate %930 by %c8_i32_409 dim 1 : vector<16x64xf32>, i32 -> vector<16x64xf32>
    %939 = vector.broadcast %58 : vector<1x64xf32> to vector<16x64xf32>
    %940 = arith.mulf %938, %939 : vector<16x64xf32>
    %941 = arith.truncf %940 : vector<16x64xf32> to vector<16x64xbf16>
    %cst_410 = arith.constant dense<0.000000e+00> : vector<16x64xf32>
    %942 = tpu.matmul %21, %941, %cst_410 {dimension_numbers = #tpu.dot_dimension_numbers<[1], [0], [0], [1], [0, 0, 1, 1], [], []>} : vector<16x16xbf16>, vector<16x64xbf16>, vector<16x64xf32> -> vector<16x64xf32>
    %943 = arith.addf %937, %942 : vector<16x64xf32>
    %c7_i32_411 = arith.constant 7 : i32
    %944 = tpu.dynamic_rotate %930 by %c7_i32_411 dim 1 : vector<16x64xf32>, i32 -> vector<16x64xf32>
    %945 = vector.broadcast %59 : vector<1x64xf32> to vector<16x64xf32>
    %946 = arith.mulf %944, %945 : vector<16x64xf32>
    %947 = arith.truncf %946 : vector<16x64xf32> to vector<16x64xbf16>
    %cst_412 = arith.constant dense<0.000000e+00> : vector<16x64xf32>
    %948 = tpu.matmul %23, %947, %cst_412 {dimension_numbers = #tpu.dot_dimension_numbers<[1], [0], [0], [1], [0, 0, 1, 1], [], []>} : vector<16x16xbf16>, vector<16x64xbf16>, vector<16x64xf32> -> vector<16x64xf32>
    %949 = arith.addf %943, %948 : vector<16x64xf32>
    %c1_i32_413 = arith.constant 1 : i32
    %950 = tpu.dynamic_rotate %930 by %c1_i32_413 dim 1 : vector<16x64xf32>, i32 -> vector<16x64xf32>
    %951 = vector.broadcast %60 : vector<1x64xf32> to vector<16x64xf32>
    %952 = arith.mulf %950, %951 : vector<16x64xf32>
    %953 = arith.truncf %952 : vector<16x64xf32> to vector<16x64xbf16>
    %cst_414 = arith.constant dense<0.000000e+00> : vector<16x64xf32>
    %954 = tpu.matmul %25, %953, %cst_414 {dimension_numbers = #tpu.dot_dimension_numbers<[1], [0], [0], [1], [0, 0, 1, 1], [], []>} : vector<16x16xbf16>, vector<16x64xbf16>, vector<16x64xf32> -> vector<16x64xf32>
    %955 = arith.addf %949, %954 : vector<16x64xf32>
    %956 = vector.broadcast %61 : vector<1x64xf32> to vector<16x64xf32>
    %957 = arith.mulf %930, %956 : vector<16x64xf32>
    %958 = arith.truncf %957 : vector<16x64xf32> to vector<16x64xbf16>
    %cst_415 = arith.constant dense<0.000000e+00> : vector<16x64xf32>
    %959 = tpu.matmul %27, %958, %cst_415 {dimension_numbers = #tpu.dot_dimension_numbers<[1], [0], [0], [1], [0, 0, 1, 1], [], []>} : vector<16x16xbf16>, vector<16x64xbf16>, vector<16x64xf32> -> vector<16x64xf32>
    %960 = arith.addf %955, %959 : vector<16x64xf32>
    %c63_i32_416 = arith.constant 63 : i32
    %961 = tpu.dynamic_rotate %930 by %c63_i32_416 dim 1 : vector<16x64xf32>, i32 -> vector<16x64xf32>
    %962 = vector.broadcast %62 : vector<1x64xf32> to vector<16x64xf32>
    %963 = arith.mulf %961, %962 : vector<16x64xf32>
    %964 = arith.truncf %963 : vector<16x64xf32> to vector<16x64xbf16>
    %cst_417 = arith.constant dense<0.000000e+00> : vector<16x64xf32>
    %965 = tpu.matmul %29, %964, %cst_417 {dimension_numbers = #tpu.dot_dimension_numbers<[1], [0], [0], [1], [0, 0, 1, 1], [], []>} : vector<16x16xbf16>, vector<16x64xbf16>, vector<16x64xf32> -> vector<16x64xf32>
    %966 = arith.addf %960, %965 : vector<16x64xf32>
    %c57_i32_418 = arith.constant 57 : i32
    %967 = tpu.dynamic_rotate %930 by %c57_i32_418 dim 1 : vector<16x64xf32>, i32 -> vector<16x64xf32>
    %968 = vector.broadcast %63 : vector<1x64xf32> to vector<16x64xf32>
    %969 = arith.mulf %967, %968 : vector<16x64xf32>
    %970 = arith.truncf %969 : vector<16x64xf32> to vector<16x64xbf16>
    %cst_419 = arith.constant dense<0.000000e+00> : vector<16x64xf32>
    %971 = tpu.matmul %31, %970, %cst_419 {dimension_numbers = #tpu.dot_dimension_numbers<[1], [0], [0], [1], [0, 0, 1, 1], [], []>} : vector<16x16xbf16>, vector<16x64xbf16>, vector<16x64xf32> -> vector<16x64xf32>
    %972 = arith.addf %966, %971 : vector<16x64xf32>
    %c56_i32_420 = arith.constant 56 : i32
    %973 = tpu.dynamic_rotate %930 by %c56_i32_420 dim 1 : vector<16x64xf32>, i32 -> vector<16x64xf32>
    %974 = vector.broadcast %64 : vector<1x64xf32> to vector<16x64xf32>
    %975 = arith.mulf %973, %974 : vector<16x64xf32>
    %976 = arith.truncf %975 : vector<16x64xf32> to vector<16x64xbf16>
    %cst_421 = arith.constant dense<0.000000e+00> : vector<16x64xf32>
    %977 = tpu.matmul %33, %976, %cst_421 {dimension_numbers = #tpu.dot_dimension_numbers<[1], [0], [0], [1], [0, 0, 1, 1], [], []>} : vector<16x16xbf16>, vector<16x64xbf16>, vector<16x64xf32> -> vector<16x64xf32>
    %978 = arith.addf %972, %977 : vector<16x64xf32>
    %c55_i32_422 = arith.constant 55 : i32
    %979 = tpu.dynamic_rotate %930 by %c55_i32_422 dim 1 : vector<16x64xf32>, i32 -> vector<16x64xf32>
    %980 = vector.broadcast %65 : vector<1x64xf32> to vector<16x64xf32>
    %981 = arith.mulf %979, %980 : vector<16x64xf32>
    %982 = arith.truncf %981 : vector<16x64xf32> to vector<16x64xbf16>
    %cst_423 = arith.constant dense<0.000000e+00> : vector<16x64xf32>
    %983 = tpu.matmul %35, %982, %cst_423 {dimension_numbers = #tpu.dot_dimension_numbers<[1], [0], [0], [1], [0, 0, 1, 1], [], []>} : vector<16x16xbf16>, vector<16x64xbf16>, vector<16x64xf32> -> vector<16x64xf32>
    %984 = arith.addf %978, %983 : vector<16x64xf32>
    %985 = vector.broadcast %55 : vector<16x1xf32> to vector<16x64xf32>
    %986 = arith.addf %984, %985 : vector<16x64xf32>
    %cst_424 = arith.constant 0.000000e+00 : f32
    %987 = vector.broadcast %cst_424 : f32 to vector<16x64xf32>
    %988 = arith.maximumf %986, %987 : vector<16x64xf32>
    %989 = arith.addf %988, %930 : vector<16x64xf32>
    %cst_425 = arith.constant 0.000000e+00 : f32
    %990 = vector.broadcast %cst_425 : f32 to vector<16x64xf32>
    %c9_i32_426 = arith.constant 9 : i32
    %991 = tpu.dynamic_rotate %989 by %c9_i32_426 dim 1 : vector<16x64xf32>, i32 -> vector<16x64xf32>
    %992 = vector.broadcast %57 : vector<1x64xf32> to vector<16x64xf32>
    %993 = arith.mulf %991, %992 : vector<16x64xf32>
    %994 = arith.truncf %993 : vector<16x64xf32> to vector<16x64xbf16>
    %cst_427 = arith.constant dense<0.000000e+00> : vector<16x64xf32>
    %995 = tpu.matmul %37, %994, %cst_427 {dimension_numbers = #tpu.dot_dimension_numbers<[1], [0], [0], [1], [0, 0, 1, 1], [], []>} : vector<16x16xbf16>, vector<16x64xbf16>, vector<16x64xf32> -> vector<16x64xf32>
    %996 = arith.addf %990, %995 : vector<16x64xf32>
    %c8_i32_428 = arith.constant 8 : i32
    %997 = tpu.dynamic_rotate %989 by %c8_i32_428 dim 1 : vector<16x64xf32>, i32 -> vector<16x64xf32>
    %998 = vector.broadcast %58 : vector<1x64xf32> to vector<16x64xf32>
    %999 = arith.mulf %997, %998 : vector<16x64xf32>
    %1000 = arith.truncf %999 : vector<16x64xf32> to vector<16x64xbf16>
    %cst_429 = arith.constant dense<0.000000e+00> : vector<16x64xf32>
    %1001 = tpu.matmul %39, %1000, %cst_429 {dimension_numbers = #tpu.dot_dimension_numbers<[1], [0], [0], [1], [0, 0, 1, 1], [], []>} : vector<16x16xbf16>, vector<16x64xbf16>, vector<16x64xf32> -> vector<16x64xf32>
    %1002 = arith.addf %996, %1001 : vector<16x64xf32>
    %c7_i32_430 = arith.constant 7 : i32
    %1003 = tpu.dynamic_rotate %989 by %c7_i32_430 dim 1 : vector<16x64xf32>, i32 -> vector<16x64xf32>
    %1004 = vector.broadcast %59 : vector<1x64xf32> to vector<16x64xf32>
    %1005 = arith.mulf %1003, %1004 : vector<16x64xf32>
    %1006 = arith.truncf %1005 : vector<16x64xf32> to vector<16x64xbf16>
    %cst_431 = arith.constant dense<0.000000e+00> : vector<16x64xf32>
    %1007 = tpu.matmul %41, %1006, %cst_431 {dimension_numbers = #tpu.dot_dimension_numbers<[1], [0], [0], [1], [0, 0, 1, 1], [], []>} : vector<16x16xbf16>, vector<16x64xbf16>, vector<16x64xf32> -> vector<16x64xf32>
    %1008 = arith.addf %1002, %1007 : vector<16x64xf32>
    %c1_i32_432 = arith.constant 1 : i32
    %1009 = tpu.dynamic_rotate %989 by %c1_i32_432 dim 1 : vector<16x64xf32>, i32 -> vector<16x64xf32>
    %1010 = vector.broadcast %60 : vector<1x64xf32> to vector<16x64xf32>
    %1011 = arith.mulf %1009, %1010 : vector<16x64xf32>
    %1012 = arith.truncf %1011 : vector<16x64xf32> to vector<16x64xbf16>
    %cst_433 = arith.constant dense<0.000000e+00> : vector<16x64xf32>
    %1013 = tpu.matmul %43, %1012, %cst_433 {dimension_numbers = #tpu.dot_dimension_numbers<[1], [0], [0], [1], [0, 0, 1, 1], [], []>} : vector<16x16xbf16>, vector<16x64xbf16>, vector<16x64xf32> -> vector<16x64xf32>
    %1014 = arith.addf %1008, %1013 : vector<16x64xf32>
    %1015 = vector.broadcast %61 : vector<1x64xf32> to vector<16x64xf32>
    %1016 = arith.mulf %989, %1015 : vector<16x64xf32>
    %1017 = arith.truncf %1016 : vector<16x64xf32> to vector<16x64xbf16>
    %cst_434 = arith.constant dense<0.000000e+00> : vector<16x64xf32>
    %1018 = tpu.matmul %45, %1017, %cst_434 {dimension_numbers = #tpu.dot_dimension_numbers<[1], [0], [0], [1], [0, 0, 1, 1], [], []>} : vector<16x16xbf16>, vector<16x64xbf16>, vector<16x64xf32> -> vector<16x64xf32>
    %1019 = arith.addf %1014, %1018 : vector<16x64xf32>
    %c63_i32_435 = arith.constant 63 : i32
    %1020 = tpu.dynamic_rotate %989 by %c63_i32_435 dim 1 : vector<16x64xf32>, i32 -> vector<16x64xf32>
    %1021 = vector.broadcast %62 : vector<1x64xf32> to vector<16x64xf32>
    %1022 = arith.mulf %1020, %1021 : vector<16x64xf32>
    %1023 = arith.truncf %1022 : vector<16x64xf32> to vector<16x64xbf16>
    %cst_436 = arith.constant dense<0.000000e+00> : vector<16x64xf32>
    %1024 = tpu.matmul %47, %1023, %cst_436 {dimension_numbers = #tpu.dot_dimension_numbers<[1], [0], [0], [1], [0, 0, 1, 1], [], []>} : vector<16x16xbf16>, vector<16x64xbf16>, vector<16x64xf32> -> vector<16x64xf32>
    %1025 = arith.addf %1019, %1024 : vector<16x64xf32>
    %c57_i32_437 = arith.constant 57 : i32
    %1026 = tpu.dynamic_rotate %989 by %c57_i32_437 dim 1 : vector<16x64xf32>, i32 -> vector<16x64xf32>
    %1027 = vector.broadcast %63 : vector<1x64xf32> to vector<16x64xf32>
    %1028 = arith.mulf %1026, %1027 : vector<16x64xf32>
    %1029 = arith.truncf %1028 : vector<16x64xf32> to vector<16x64xbf16>
    %cst_438 = arith.constant dense<0.000000e+00> : vector<16x64xf32>
    %1030 = tpu.matmul %49, %1029, %cst_438 {dimension_numbers = #tpu.dot_dimension_numbers<[1], [0], [0], [1], [0, 0, 1, 1], [], []>} : vector<16x16xbf16>, vector<16x64xbf16>, vector<16x64xf32> -> vector<16x64xf32>
    %1031 = arith.addf %1025, %1030 : vector<16x64xf32>
    %c56_i32_439 = arith.constant 56 : i32
    %1032 = tpu.dynamic_rotate %989 by %c56_i32_439 dim 1 : vector<16x64xf32>, i32 -> vector<16x64xf32>
    %1033 = vector.broadcast %64 : vector<1x64xf32> to vector<16x64xf32>
    %1034 = arith.mulf %1032, %1033 : vector<16x64xf32>
    %1035 = arith.truncf %1034 : vector<16x64xf32> to vector<16x64xbf16>
    %cst_440 = arith.constant dense<0.000000e+00> : vector<16x64xf32>
    %1036 = tpu.matmul %51, %1035, %cst_440 {dimension_numbers = #tpu.dot_dimension_numbers<[1], [0], [0], [1], [0, 0, 1, 1], [], []>} : vector<16x16xbf16>, vector<16x64xbf16>, vector<16x64xf32> -> vector<16x64xf32>
    %1037 = arith.addf %1031, %1036 : vector<16x64xf32>
    %c55_i32_441 = arith.constant 55 : i32
    %1038 = tpu.dynamic_rotate %989 by %c55_i32_441 dim 1 : vector<16x64xf32>, i32 -> vector<16x64xf32>
    %1039 = vector.broadcast %65 : vector<1x64xf32> to vector<16x64xf32>
    %1040 = arith.mulf %1038, %1039 : vector<16x64xf32>
    %1041 = arith.truncf %1040 : vector<16x64xf32> to vector<16x64xbf16>
    %cst_442 = arith.constant dense<0.000000e+00> : vector<16x64xf32>
    %1042 = tpu.matmul %53, %1041, %cst_442 {dimension_numbers = #tpu.dot_dimension_numbers<[1], [0], [0], [1], [0, 0, 1, 1], [], []>} : vector<16x16xbf16>, vector<16x64xbf16>, vector<16x64xf32> -> vector<16x64xf32>
    %1043 = arith.addf %1037, %1042 : vector<16x64xf32>
    %1044 = vector.broadcast %56 : vector<16x1xf32> to vector<16x64xf32>
    %1045 = arith.addf %1043, %1044 : vector<16x64xf32>
    %cst_443 = arith.constant 0.000000e+00 : f32
    %1046 = vector.broadcast %cst_443 : f32 to vector<16x64xf32>
    %1047 = arith.maximumf %1045, %1046 : vector<16x64xf32>
    %1048 = arith.addf %1047, %989 : vector<16x64xf32>
    %1049 = arith.truncf %1048 : vector<16x64xf32> to vector<16x64xbf16>
    %cst_444 = arith.constant dense<0.000000e+00> : vector<2x64xf32>
    %1050 = tpu.matmul %66, %1049, %cst_444 {dimension_numbers = #tpu.dot_dimension_numbers<[1], [0], [0], [1], [0, 0, 1, 1], [], []>} : vector<2x16xbf16>, vector<16x64xbf16>, vector<2x64xf32> -> vector<2x64xf32>
    %1051 = vector.broadcast %67 : vector<2x1xf32> to vector<2x64xf32>
    %1052 = arith.addf %1050, %1051 : vector<2x64xf32>
    %cst_445 = arith.constant 0.000000e+00 : f32
    %1053 = vector.broadcast %cst_445 : f32 to vector<2x64xf32>
    %1054 = arith.maximumf %1052, %1053 : vector<2x64xf32>
    %1055 = arith.truncf %1054 : vector<2x64xf32> to vector<2x64xbf16>
    %cst_446 = arith.constant dense<0.000000e+00> : vector<1x64xf32>
    %1056 = tpu.matmul %68, %1055, %cst_446 {dimension_numbers = #tpu.dot_dimension_numbers<[1], [0], [0], [1], [0, 0, 1, 1], [], []>} : vector<1x2xbf16>, vector<2x64xbf16>, vector<1x64xf32> -> vector<1x64xf32>
    %1057 = vector.broadcast %69 : vector<1x1xf32> to vector<1x64xf32>
    %1058 = arith.addf %1056, %1057 : vector<1x64xf32>
    %1059 = arith.negf %1058 : vector<1x64xf32>
    %1060 = math.exp %1059 : vector<1x64xf32>
    %cst_447 = arith.constant 1.000000e+00 : f32
    %1061 = vector.broadcast %cst_447 : f32 to vector<1x64xf32>
    %1062 = arith.addf %1061, %1060 : vector<1x64xf32>
    %1063 = arith.divf %1061, %1062 : vector<1x64xf32>
    %1064 = vector.broadcast %1063 : vector<1x64xf32> to vector<16x64xf32>
    %1065 = arith.mulf %1048, %1064 : vector<16x64xf32>
    %cst_448 = arith.constant dense<0.000000e+00> : vector<16xf32>
    %1066 = vector.multi_reduction <add>, %1065, %cst_448 [1] : vector<16x64xf32> to vector<16xf32>
    %1067 = vector.shape_cast %1066 : vector<16xf32> to vector<16x1xf32>
    %cst_449 = arith.constant 6.400000e+01 : f32
    %1068 = vector.broadcast %cst_449 : f32 to vector<16x1xf32>
    %1069 = arith.divf %1067, %1068 : vector<16x1xf32>
    %c5_450 = arith.constant 5 : index
    %c0_451 = arith.constant 0 : index
    %c0_452 = arith.constant 0 : index
    %1070 = vector.load %arg1[%c5_450, %c0_451, %c0_452] : memref<8x16x64xf32, #tpu.memory_space<vmem>>, vector<1x16x64xf32>
    %1071 = vector.shape_cast %1070 : vector<1x16x64xf32> to vector<16x64xf32>
    %cst_453 = arith.constant 0.000000e+00 : f32
    %1072 = vector.broadcast %cst_453 : f32 to vector<16x64xf32>
    %c9_i32_454 = arith.constant 9 : i32
    %1073 = tpu.dynamic_rotate %1071 by %c9_i32_454 dim 1 : vector<16x64xf32>, i32 -> vector<16x64xf32>
    %1074 = vector.broadcast %57 : vector<1x64xf32> to vector<16x64xf32>
    %1075 = arith.mulf %1073, %1074 : vector<16x64xf32>
    %1076 = arith.truncf %1075 : vector<16x64xf32> to vector<16x64xbf16>
    %cst_455 = arith.constant dense<0.000000e+00> : vector<16x64xf32>
    %1077 = tpu.matmul %1, %1076, %cst_455 {dimension_numbers = #tpu.dot_dimension_numbers<[1], [0], [0], [1], [0, 0, 1, 1], [], []>} : vector<16x16xbf16>, vector<16x64xbf16>, vector<16x64xf32> -> vector<16x64xf32>
    %1078 = arith.addf %1072, %1077 : vector<16x64xf32>
    %c8_i32_456 = arith.constant 8 : i32
    %1079 = tpu.dynamic_rotate %1071 by %c8_i32_456 dim 1 : vector<16x64xf32>, i32 -> vector<16x64xf32>
    %1080 = vector.broadcast %58 : vector<1x64xf32> to vector<16x64xf32>
    %1081 = arith.mulf %1079, %1080 : vector<16x64xf32>
    %1082 = arith.truncf %1081 : vector<16x64xf32> to vector<16x64xbf16>
    %cst_457 = arith.constant dense<0.000000e+00> : vector<16x64xf32>
    %1083 = tpu.matmul %3, %1082, %cst_457 {dimension_numbers = #tpu.dot_dimension_numbers<[1], [0], [0], [1], [0, 0, 1, 1], [], []>} : vector<16x16xbf16>, vector<16x64xbf16>, vector<16x64xf32> -> vector<16x64xf32>
    %1084 = arith.addf %1078, %1083 : vector<16x64xf32>
    %c7_i32_458 = arith.constant 7 : i32
    %1085 = tpu.dynamic_rotate %1071 by %c7_i32_458 dim 1 : vector<16x64xf32>, i32 -> vector<16x64xf32>
    %1086 = vector.broadcast %59 : vector<1x64xf32> to vector<16x64xf32>
    %1087 = arith.mulf %1085, %1086 : vector<16x64xf32>
    %1088 = arith.truncf %1087 : vector<16x64xf32> to vector<16x64xbf16>
    %cst_459 = arith.constant dense<0.000000e+00> : vector<16x64xf32>
    %1089 = tpu.matmul %5, %1088, %cst_459 {dimension_numbers = #tpu.dot_dimension_numbers<[1], [0], [0], [1], [0, 0, 1, 1], [], []>} : vector<16x16xbf16>, vector<16x64xbf16>, vector<16x64xf32> -> vector<16x64xf32>
    %1090 = arith.addf %1084, %1089 : vector<16x64xf32>
    %c1_i32_460 = arith.constant 1 : i32
    %1091 = tpu.dynamic_rotate %1071 by %c1_i32_460 dim 1 : vector<16x64xf32>, i32 -> vector<16x64xf32>
    %1092 = vector.broadcast %60 : vector<1x64xf32> to vector<16x64xf32>
    %1093 = arith.mulf %1091, %1092 : vector<16x64xf32>
    %1094 = arith.truncf %1093 : vector<16x64xf32> to vector<16x64xbf16>
    %cst_461 = arith.constant dense<0.000000e+00> : vector<16x64xf32>
    %1095 = tpu.matmul %7, %1094, %cst_461 {dimension_numbers = #tpu.dot_dimension_numbers<[1], [0], [0], [1], [0, 0, 1, 1], [], []>} : vector<16x16xbf16>, vector<16x64xbf16>, vector<16x64xf32> -> vector<16x64xf32>
    %1096 = arith.addf %1090, %1095 : vector<16x64xf32>
    %1097 = vector.broadcast %61 : vector<1x64xf32> to vector<16x64xf32>
    %1098 = arith.mulf %1071, %1097 : vector<16x64xf32>
    %1099 = arith.truncf %1098 : vector<16x64xf32> to vector<16x64xbf16>
    %cst_462 = arith.constant dense<0.000000e+00> : vector<16x64xf32>
    %1100 = tpu.matmul %9, %1099, %cst_462 {dimension_numbers = #tpu.dot_dimension_numbers<[1], [0], [0], [1], [0, 0, 1, 1], [], []>} : vector<16x16xbf16>, vector<16x64xbf16>, vector<16x64xf32> -> vector<16x64xf32>
    %1101 = arith.addf %1096, %1100 : vector<16x64xf32>
    %c63_i32_463 = arith.constant 63 : i32
    %1102 = tpu.dynamic_rotate %1071 by %c63_i32_463 dim 1 : vector<16x64xf32>, i32 -> vector<16x64xf32>
    %1103 = vector.broadcast %62 : vector<1x64xf32> to vector<16x64xf32>
    %1104 = arith.mulf %1102, %1103 : vector<16x64xf32>
    %1105 = arith.truncf %1104 : vector<16x64xf32> to vector<16x64xbf16>
    %cst_464 = arith.constant dense<0.000000e+00> : vector<16x64xf32>
    %1106 = tpu.matmul %11, %1105, %cst_464 {dimension_numbers = #tpu.dot_dimension_numbers<[1], [0], [0], [1], [0, 0, 1, 1], [], []>} : vector<16x16xbf16>, vector<16x64xbf16>, vector<16x64xf32> -> vector<16x64xf32>
    %1107 = arith.addf %1101, %1106 : vector<16x64xf32>
    %c57_i32_465 = arith.constant 57 : i32
    %1108 = tpu.dynamic_rotate %1071 by %c57_i32_465 dim 1 : vector<16x64xf32>, i32 -> vector<16x64xf32>
    %1109 = vector.broadcast %63 : vector<1x64xf32> to vector<16x64xf32>
    %1110 = arith.mulf %1108, %1109 : vector<16x64xf32>
    %1111 = arith.truncf %1110 : vector<16x64xf32> to vector<16x64xbf16>
    %cst_466 = arith.constant dense<0.000000e+00> : vector<16x64xf32>
    %1112 = tpu.matmul %13, %1111, %cst_466 {dimension_numbers = #tpu.dot_dimension_numbers<[1], [0], [0], [1], [0, 0, 1, 1], [], []>} : vector<16x16xbf16>, vector<16x64xbf16>, vector<16x64xf32> -> vector<16x64xf32>
    %1113 = arith.addf %1107, %1112 : vector<16x64xf32>
    %c56_i32_467 = arith.constant 56 : i32
    %1114 = tpu.dynamic_rotate %1071 by %c56_i32_467 dim 1 : vector<16x64xf32>, i32 -> vector<16x64xf32>
    %1115 = vector.broadcast %64 : vector<1x64xf32> to vector<16x64xf32>
    %1116 = arith.mulf %1114, %1115 : vector<16x64xf32>
    %1117 = arith.truncf %1116 : vector<16x64xf32> to vector<16x64xbf16>
    %cst_468 = arith.constant dense<0.000000e+00> : vector<16x64xf32>
    %1118 = tpu.matmul %15, %1117, %cst_468 {dimension_numbers = #tpu.dot_dimension_numbers<[1], [0], [0], [1], [0, 0, 1, 1], [], []>} : vector<16x16xbf16>, vector<16x64xbf16>, vector<16x64xf32> -> vector<16x64xf32>
    %1119 = arith.addf %1113, %1118 : vector<16x64xf32>
    %c55_i32_469 = arith.constant 55 : i32
    %1120 = tpu.dynamic_rotate %1071 by %c55_i32_469 dim 1 : vector<16x64xf32>, i32 -> vector<16x64xf32>
    %1121 = vector.broadcast %65 : vector<1x64xf32> to vector<16x64xf32>
    %1122 = arith.mulf %1120, %1121 : vector<16x64xf32>
    %1123 = arith.truncf %1122 : vector<16x64xf32> to vector<16x64xbf16>
    %cst_470 = arith.constant dense<0.000000e+00> : vector<16x64xf32>
    %1124 = tpu.matmul %17, %1123, %cst_470 {dimension_numbers = #tpu.dot_dimension_numbers<[1], [0], [0], [1], [0, 0, 1, 1], [], []>} : vector<16x16xbf16>, vector<16x64xbf16>, vector<16x64xf32> -> vector<16x64xf32>
    %1125 = arith.addf %1119, %1124 : vector<16x64xf32>
    %1126 = vector.broadcast %54 : vector<16x1xf32> to vector<16x64xf32>
    %1127 = arith.addf %1125, %1126 : vector<16x64xf32>
    %cst_471 = arith.constant 0.000000e+00 : f32
    %1128 = vector.broadcast %cst_471 : f32 to vector<16x64xf32>
    %1129 = arith.maximumf %1127, %1128 : vector<16x64xf32>
    %1130 = arith.addf %1129, %1071 : vector<16x64xf32>
    %cst_472 = arith.constant 0.000000e+00 : f32
    %1131 = vector.broadcast %cst_472 : f32 to vector<16x64xf32>
    %c9_i32_473 = arith.constant 9 : i32
    %1132 = tpu.dynamic_rotate %1130 by %c9_i32_473 dim 1 : vector<16x64xf32>, i32 -> vector<16x64xf32>
    %1133 = vector.broadcast %57 : vector<1x64xf32> to vector<16x64xf32>
    %1134 = arith.mulf %1132, %1133 : vector<16x64xf32>
    %1135 = arith.truncf %1134 : vector<16x64xf32> to vector<16x64xbf16>
    %cst_474 = arith.constant dense<0.000000e+00> : vector<16x64xf32>
    %1136 = tpu.matmul %19, %1135, %cst_474 {dimension_numbers = #tpu.dot_dimension_numbers<[1], [0], [0], [1], [0, 0, 1, 1], [], []>} : vector<16x16xbf16>, vector<16x64xbf16>, vector<16x64xf32> -> vector<16x64xf32>
    %1137 = arith.addf %1131, %1136 : vector<16x64xf32>
    %c8_i32_475 = arith.constant 8 : i32
    %1138 = tpu.dynamic_rotate %1130 by %c8_i32_475 dim 1 : vector<16x64xf32>, i32 -> vector<16x64xf32>
    %1139 = vector.broadcast %58 : vector<1x64xf32> to vector<16x64xf32>
    %1140 = arith.mulf %1138, %1139 : vector<16x64xf32>
    %1141 = arith.truncf %1140 : vector<16x64xf32> to vector<16x64xbf16>
    %cst_476 = arith.constant dense<0.000000e+00> : vector<16x64xf32>
    %1142 = tpu.matmul %21, %1141, %cst_476 {dimension_numbers = #tpu.dot_dimension_numbers<[1], [0], [0], [1], [0, 0, 1, 1], [], []>} : vector<16x16xbf16>, vector<16x64xbf16>, vector<16x64xf32> -> vector<16x64xf32>
    %1143 = arith.addf %1137, %1142 : vector<16x64xf32>
    %c7_i32_477 = arith.constant 7 : i32
    %1144 = tpu.dynamic_rotate %1130 by %c7_i32_477 dim 1 : vector<16x64xf32>, i32 -> vector<16x64xf32>
    %1145 = vector.broadcast %59 : vector<1x64xf32> to vector<16x64xf32>
    %1146 = arith.mulf %1144, %1145 : vector<16x64xf32>
    %1147 = arith.truncf %1146 : vector<16x64xf32> to vector<16x64xbf16>
    %cst_478 = arith.constant dense<0.000000e+00> : vector<16x64xf32>
    %1148 = tpu.matmul %23, %1147, %cst_478 {dimension_numbers = #tpu.dot_dimension_numbers<[1], [0], [0], [1], [0, 0, 1, 1], [], []>} : vector<16x16xbf16>, vector<16x64xbf16>, vector<16x64xf32> -> vector<16x64xf32>
    %1149 = arith.addf %1143, %1148 : vector<16x64xf32>
    %c1_i32_479 = arith.constant 1 : i32
    %1150 = tpu.dynamic_rotate %1130 by %c1_i32_479 dim 1 : vector<16x64xf32>, i32 -> vector<16x64xf32>
    %1151 = vector.broadcast %60 : vector<1x64xf32> to vector<16x64xf32>
    %1152 = arith.mulf %1150, %1151 : vector<16x64xf32>
    %1153 = arith.truncf %1152 : vector<16x64xf32> to vector<16x64xbf16>
    %cst_480 = arith.constant dense<0.000000e+00> : vector<16x64xf32>
    %1154 = tpu.matmul %25, %1153, %cst_480 {dimension_numbers = #tpu.dot_dimension_numbers<[1], [0], [0], [1], [0, 0, 1, 1], [], []>} : vector<16x16xbf16>, vector<16x64xbf16>, vector<16x64xf32> -> vector<16x64xf32>
    %1155 = arith.addf %1149, %1154 : vector<16x64xf32>
    %1156 = vector.broadcast %61 : vector<1x64xf32> to vector<16x64xf32>
    %1157 = arith.mulf %1130, %1156 : vector<16x64xf32>
    %1158 = arith.truncf %1157 : vector<16x64xf32> to vector<16x64xbf16>
    %cst_481 = arith.constant dense<0.000000e+00> : vector<16x64xf32>
    %1159 = tpu.matmul %27, %1158, %cst_481 {dimension_numbers = #tpu.dot_dimension_numbers<[1], [0], [0], [1], [0, 0, 1, 1], [], []>} : vector<16x16xbf16>, vector<16x64xbf16>, vector<16x64xf32> -> vector<16x64xf32>
    %1160 = arith.addf %1155, %1159 : vector<16x64xf32>
    %c63_i32_482 = arith.constant 63 : i32
    %1161 = tpu.dynamic_rotate %1130 by %c63_i32_482 dim 1 : vector<16x64xf32>, i32 -> vector<16x64xf32>
    %1162 = vector.broadcast %62 : vector<1x64xf32> to vector<16x64xf32>
    %1163 = arith.mulf %1161, %1162 : vector<16x64xf32>
    %1164 = arith.truncf %1163 : vector<16x64xf32> to vector<16x64xbf16>
    %cst_483 = arith.constant dense<0.000000e+00> : vector<16x64xf32>
    %1165 = tpu.matmul %29, %1164, %cst_483 {dimension_numbers = #tpu.dot_dimension_numbers<[1], [0], [0], [1], [0, 0, 1, 1], [], []>} : vector<16x16xbf16>, vector<16x64xbf16>, vector<16x64xf32> -> vector<16x64xf32>
    %1166 = arith.addf %1160, %1165 : vector<16x64xf32>
    %c57_i32_484 = arith.constant 57 : i32
    %1167 = tpu.dynamic_rotate %1130 by %c57_i32_484 dim 1 : vector<16x64xf32>, i32 -> vector<16x64xf32>
    %1168 = vector.broadcast %63 : vector<1x64xf32> to vector<16x64xf32>
    %1169 = arith.mulf %1167, %1168 : vector<16x64xf32>
    %1170 = arith.truncf %1169 : vector<16x64xf32> to vector<16x64xbf16>
    %cst_485 = arith.constant dense<0.000000e+00> : vector<16x64xf32>
    %1171 = tpu.matmul %31, %1170, %cst_485 {dimension_numbers = #tpu.dot_dimension_numbers<[1], [0], [0], [1], [0, 0, 1, 1], [], []>} : vector<16x16xbf16>, vector<16x64xbf16>, vector<16x64xf32> -> vector<16x64xf32>
    %1172 = arith.addf %1166, %1171 : vector<16x64xf32>
    %c56_i32_486 = arith.constant 56 : i32
    %1173 = tpu.dynamic_rotate %1130 by %c56_i32_486 dim 1 : vector<16x64xf32>, i32 -> vector<16x64xf32>
    %1174 = vector.broadcast %64 : vector<1x64xf32> to vector<16x64xf32>
    %1175 = arith.mulf %1173, %1174 : vector<16x64xf32>
    %1176 = arith.truncf %1175 : vector<16x64xf32> to vector<16x64xbf16>
    %cst_487 = arith.constant dense<0.000000e+00> : vector<16x64xf32>
    %1177 = tpu.matmul %33, %1176, %cst_487 {dimension_numbers = #tpu.dot_dimension_numbers<[1], [0], [0], [1], [0, 0, 1, 1], [], []>} : vector<16x16xbf16>, vector<16x64xbf16>, vector<16x64xf32> -> vector<16x64xf32>
    %1178 = arith.addf %1172, %1177 : vector<16x64xf32>
    %c55_i32_488 = arith.constant 55 : i32
    %1179 = tpu.dynamic_rotate %1130 by %c55_i32_488 dim 1 : vector<16x64xf32>, i32 -> vector<16x64xf32>
    %1180 = vector.broadcast %65 : vector<1x64xf32> to vector<16x64xf32>
    %1181 = arith.mulf %1179, %1180 : vector<16x64xf32>
    %1182 = arith.truncf %1181 : vector<16x64xf32> to vector<16x64xbf16>
    %cst_489 = arith.constant dense<0.000000e+00> : vector<16x64xf32>
    %1183 = tpu.matmul %35, %1182, %cst_489 {dimension_numbers = #tpu.dot_dimension_numbers<[1], [0], [0], [1], [0, 0, 1, 1], [], []>} : vector<16x16xbf16>, vector<16x64xbf16>, vector<16x64xf32> -> vector<16x64xf32>
    %1184 = arith.addf %1178, %1183 : vector<16x64xf32>
    %1185 = vector.broadcast %55 : vector<16x1xf32> to vector<16x64xf32>
    %1186 = arith.addf %1184, %1185 : vector<16x64xf32>
    %cst_490 = arith.constant 0.000000e+00 : f32
    %1187 = vector.broadcast %cst_490 : f32 to vector<16x64xf32>
    %1188 = arith.maximumf %1186, %1187 : vector<16x64xf32>
    %1189 = arith.addf %1188, %1130 : vector<16x64xf32>
    %cst_491 = arith.constant 0.000000e+00 : f32
    %1190 = vector.broadcast %cst_491 : f32 to vector<16x64xf32>
    %c9_i32_492 = arith.constant 9 : i32
    %1191 = tpu.dynamic_rotate %1189 by %c9_i32_492 dim 1 : vector<16x64xf32>, i32 -> vector<16x64xf32>
    %1192 = vector.broadcast %57 : vector<1x64xf32> to vector<16x64xf32>
    %1193 = arith.mulf %1191, %1192 : vector<16x64xf32>
    %1194 = arith.truncf %1193 : vector<16x64xf32> to vector<16x64xbf16>
    %cst_493 = arith.constant dense<0.000000e+00> : vector<16x64xf32>
    %1195 = tpu.matmul %37, %1194, %cst_493 {dimension_numbers = #tpu.dot_dimension_numbers<[1], [0], [0], [1], [0, 0, 1, 1], [], []>} : vector<16x16xbf16>, vector<16x64xbf16>, vector<16x64xf32> -> vector<16x64xf32>
    %1196 = arith.addf %1190, %1195 : vector<16x64xf32>
    %c8_i32_494 = arith.constant 8 : i32
    %1197 = tpu.dynamic_rotate %1189 by %c8_i32_494 dim 1 : vector<16x64xf32>, i32 -> vector<16x64xf32>
    %1198 = vector.broadcast %58 : vector<1x64xf32> to vector<16x64xf32>
    %1199 = arith.mulf %1197, %1198 : vector<16x64xf32>
    %1200 = arith.truncf %1199 : vector<16x64xf32> to vector<16x64xbf16>
    %cst_495 = arith.constant dense<0.000000e+00> : vector<16x64xf32>
    %1201 = tpu.matmul %39, %1200, %cst_495 {dimension_numbers = #tpu.dot_dimension_numbers<[1], [0], [0], [1], [0, 0, 1, 1], [], []>} : vector<16x16xbf16>, vector<16x64xbf16>, vector<16x64xf32> -> vector<16x64xf32>
    %1202 = arith.addf %1196, %1201 : vector<16x64xf32>
    %c7_i32_496 = arith.constant 7 : i32
    %1203 = tpu.dynamic_rotate %1189 by %c7_i32_496 dim 1 : vector<16x64xf32>, i32 -> vector<16x64xf32>
    %1204 = vector.broadcast %59 : vector<1x64xf32> to vector<16x64xf32>
    %1205 = arith.mulf %1203, %1204 : vector<16x64xf32>
    %1206 = arith.truncf %1205 : vector<16x64xf32> to vector<16x64xbf16>
    %cst_497 = arith.constant dense<0.000000e+00> : vector<16x64xf32>
    %1207 = tpu.matmul %41, %1206, %cst_497 {dimension_numbers = #tpu.dot_dimension_numbers<[1], [0], [0], [1], [0, 0, 1, 1], [], []>} : vector<16x16xbf16>, vector<16x64xbf16>, vector<16x64xf32> -> vector<16x64xf32>
    %1208 = arith.addf %1202, %1207 : vector<16x64xf32>
    %c1_i32_498 = arith.constant 1 : i32
    %1209 = tpu.dynamic_rotate %1189 by %c1_i32_498 dim 1 : vector<16x64xf32>, i32 -> vector<16x64xf32>
    %1210 = vector.broadcast %60 : vector<1x64xf32> to vector<16x64xf32>
    %1211 = arith.mulf %1209, %1210 : vector<16x64xf32>
    %1212 = arith.truncf %1211 : vector<16x64xf32> to vector<16x64xbf16>
    %cst_499 = arith.constant dense<0.000000e+00> : vector<16x64xf32>
    %1213 = tpu.matmul %43, %1212, %cst_499 {dimension_numbers = #tpu.dot_dimension_numbers<[1], [0], [0], [1], [0, 0, 1, 1], [], []>} : vector<16x16xbf16>, vector<16x64xbf16>, vector<16x64xf32> -> vector<16x64xf32>
    %1214 = arith.addf %1208, %1213 : vector<16x64xf32>
    %1215 = vector.broadcast %61 : vector<1x64xf32> to vector<16x64xf32>
    %1216 = arith.mulf %1189, %1215 : vector<16x64xf32>
    %1217 = arith.truncf %1216 : vector<16x64xf32> to vector<16x64xbf16>
    %cst_500 = arith.constant dense<0.000000e+00> : vector<16x64xf32>
    %1218 = tpu.matmul %45, %1217, %cst_500 {dimension_numbers = #tpu.dot_dimension_numbers<[1], [0], [0], [1], [0, 0, 1, 1], [], []>} : vector<16x16xbf16>, vector<16x64xbf16>, vector<16x64xf32> -> vector<16x64xf32>
    %1219 = arith.addf %1214, %1218 : vector<16x64xf32>
    %c63_i32_501 = arith.constant 63 : i32
    %1220 = tpu.dynamic_rotate %1189 by %c63_i32_501 dim 1 : vector<16x64xf32>, i32 -> vector<16x64xf32>
    %1221 = vector.broadcast %62 : vector<1x64xf32> to vector<16x64xf32>
    %1222 = arith.mulf %1220, %1221 : vector<16x64xf32>
    %1223 = arith.truncf %1222 : vector<16x64xf32> to vector<16x64xbf16>
    %cst_502 = arith.constant dense<0.000000e+00> : vector<16x64xf32>
    %1224 = tpu.matmul %47, %1223, %cst_502 {dimension_numbers = #tpu.dot_dimension_numbers<[1], [0], [0], [1], [0, 0, 1, 1], [], []>} : vector<16x16xbf16>, vector<16x64xbf16>, vector<16x64xf32> -> vector<16x64xf32>
    %1225 = arith.addf %1219, %1224 : vector<16x64xf32>
    %c57_i32_503 = arith.constant 57 : i32
    %1226 = tpu.dynamic_rotate %1189 by %c57_i32_503 dim 1 : vector<16x64xf32>, i32 -> vector<16x64xf32>
    %1227 = vector.broadcast %63 : vector<1x64xf32> to vector<16x64xf32>
    %1228 = arith.mulf %1226, %1227 : vector<16x64xf32>
    %1229 = arith.truncf %1228 : vector<16x64xf32> to vector<16x64xbf16>
    %cst_504 = arith.constant dense<0.000000e+00> : vector<16x64xf32>
    %1230 = tpu.matmul %49, %1229, %cst_504 {dimension_numbers = #tpu.dot_dimension_numbers<[1], [0], [0], [1], [0, 0, 1, 1], [], []>} : vector<16x16xbf16>, vector<16x64xbf16>, vector<16x64xf32> -> vector<16x64xf32>
    %1231 = arith.addf %1225, %1230 : vector<16x64xf32>
    %c56_i32_505 = arith.constant 56 : i32
    %1232 = tpu.dynamic_rotate %1189 by %c56_i32_505 dim 1 : vector<16x64xf32>, i32 -> vector<16x64xf32>
    %1233 = vector.broadcast %64 : vector<1x64xf32> to vector<16x64xf32>
    %1234 = arith.mulf %1232, %1233 : vector<16x64xf32>
    %1235 = arith.truncf %1234 : vector<16x64xf32> to vector<16x64xbf16>
    %cst_506 = arith.constant dense<0.000000e+00> : vector<16x64xf32>
    %1236 = tpu.matmul %51, %1235, %cst_506 {dimension_numbers = #tpu.dot_dimension_numbers<[1], [0], [0], [1], [0, 0, 1, 1], [], []>} : vector<16x16xbf16>, vector<16x64xbf16>, vector<16x64xf32> -> vector<16x64xf32>
    %1237 = arith.addf %1231, %1236 : vector<16x64xf32>
    %c55_i32_507 = arith.constant 55 : i32
    %1238 = tpu.dynamic_rotate %1189 by %c55_i32_507 dim 1 : vector<16x64xf32>, i32 -> vector<16x64xf32>
    %1239 = vector.broadcast %65 : vector<1x64xf32> to vector<16x64xf32>
    %1240 = arith.mulf %1238, %1239 : vector<16x64xf32>
    %1241 = arith.truncf %1240 : vector<16x64xf32> to vector<16x64xbf16>
    %cst_508 = arith.constant dense<0.000000e+00> : vector<16x64xf32>
    %1242 = tpu.matmul %53, %1241, %cst_508 {dimension_numbers = #tpu.dot_dimension_numbers<[1], [0], [0], [1], [0, 0, 1, 1], [], []>} : vector<16x16xbf16>, vector<16x64xbf16>, vector<16x64xf32> -> vector<16x64xf32>
    %1243 = arith.addf %1237, %1242 : vector<16x64xf32>
    %1244 = vector.broadcast %56 : vector<16x1xf32> to vector<16x64xf32>
    %1245 = arith.addf %1243, %1244 : vector<16x64xf32>
    %cst_509 = arith.constant 0.000000e+00 : f32
    %1246 = vector.broadcast %cst_509 : f32 to vector<16x64xf32>
    %1247 = arith.maximumf %1245, %1246 : vector<16x64xf32>
    %1248 = arith.addf %1247, %1189 : vector<16x64xf32>
    %1249 = arith.truncf %1248 : vector<16x64xf32> to vector<16x64xbf16>
    %cst_510 = arith.constant dense<0.000000e+00> : vector<2x64xf32>
    %1250 = tpu.matmul %66, %1249, %cst_510 {dimension_numbers = #tpu.dot_dimension_numbers<[1], [0], [0], [1], [0, 0, 1, 1], [], []>} : vector<2x16xbf16>, vector<16x64xbf16>, vector<2x64xf32> -> vector<2x64xf32>
    %1251 = vector.broadcast %67 : vector<2x1xf32> to vector<2x64xf32>
    %1252 = arith.addf %1250, %1251 : vector<2x64xf32>
    %cst_511 = arith.constant 0.000000e+00 : f32
    %1253 = vector.broadcast %cst_511 : f32 to vector<2x64xf32>
    %1254 = arith.maximumf %1252, %1253 : vector<2x64xf32>
    %1255 = arith.truncf %1254 : vector<2x64xf32> to vector<2x64xbf16>
    %cst_512 = arith.constant dense<0.000000e+00> : vector<1x64xf32>
    %1256 = tpu.matmul %68, %1255, %cst_512 {dimension_numbers = #tpu.dot_dimension_numbers<[1], [0], [0], [1], [0, 0, 1, 1], [], []>} : vector<1x2xbf16>, vector<2x64xbf16>, vector<1x64xf32> -> vector<1x64xf32>
    %1257 = vector.broadcast %69 : vector<1x1xf32> to vector<1x64xf32>
    %1258 = arith.addf %1256, %1257 : vector<1x64xf32>
    %1259 = arith.negf %1258 : vector<1x64xf32>
    %1260 = math.exp %1259 : vector<1x64xf32>
    %cst_513 = arith.constant 1.000000e+00 : f32
    %1261 = vector.broadcast %cst_513 : f32 to vector<1x64xf32>
    %1262 = arith.addf %1261, %1260 : vector<1x64xf32>
    %1263 = arith.divf %1261, %1262 : vector<1x64xf32>
    %1264 = vector.broadcast %1263 : vector<1x64xf32> to vector<16x64xf32>
    %1265 = arith.mulf %1248, %1264 : vector<16x64xf32>
    %cst_514 = arith.constant dense<0.000000e+00> : vector<16xf32>
    %1266 = vector.multi_reduction <add>, %1265, %cst_514 [1] : vector<16x64xf32> to vector<16xf32>
    %1267 = vector.shape_cast %1266 : vector<16xf32> to vector<16x1xf32>
    %cst_515 = arith.constant 6.400000e+01 : f32
    %1268 = vector.broadcast %cst_515 : f32 to vector<16x1xf32>
    %1269 = arith.divf %1267, %1268 : vector<16x1xf32>
    %c6_516 = arith.constant 6 : index
    %c0_517 = arith.constant 0 : index
    %c0_518 = arith.constant 0 : index
    %1270 = vector.load %arg1[%c6_516, %c0_517, %c0_518] : memref<8x16x64xf32, #tpu.memory_space<vmem>>, vector<1x16x64xf32>
    %1271 = vector.shape_cast %1270 : vector<1x16x64xf32> to vector<16x64xf32>
    %cst_519 = arith.constant 0.000000e+00 : f32
    %1272 = vector.broadcast %cst_519 : f32 to vector<16x64xf32>
    %c9_i32_520 = arith.constant 9 : i32
    %1273 = tpu.dynamic_rotate %1271 by %c9_i32_520 dim 1 : vector<16x64xf32>, i32 -> vector<16x64xf32>
    %1274 = vector.broadcast %57 : vector<1x64xf32> to vector<16x64xf32>
    %1275 = arith.mulf %1273, %1274 : vector<16x64xf32>
    %1276 = arith.truncf %1275 : vector<16x64xf32> to vector<16x64xbf16>
    %cst_521 = arith.constant dense<0.000000e+00> : vector<16x64xf32>
    %1277 = tpu.matmul %1, %1276, %cst_521 {dimension_numbers = #tpu.dot_dimension_numbers<[1], [0], [0], [1], [0, 0, 1, 1], [], []>} : vector<16x16xbf16>, vector<16x64xbf16>, vector<16x64xf32> -> vector<16x64xf32>
    %1278 = arith.addf %1272, %1277 : vector<16x64xf32>
    %c8_i32_522 = arith.constant 8 : i32
    %1279 = tpu.dynamic_rotate %1271 by %c8_i32_522 dim 1 : vector<16x64xf32>, i32 -> vector<16x64xf32>
    %1280 = vector.broadcast %58 : vector<1x64xf32> to vector<16x64xf32>
    %1281 = arith.mulf %1279, %1280 : vector<16x64xf32>
    %1282 = arith.truncf %1281 : vector<16x64xf32> to vector<16x64xbf16>
    %cst_523 = arith.constant dense<0.000000e+00> : vector<16x64xf32>
    %1283 = tpu.matmul %3, %1282, %cst_523 {dimension_numbers = #tpu.dot_dimension_numbers<[1], [0], [0], [1], [0, 0, 1, 1], [], []>} : vector<16x16xbf16>, vector<16x64xbf16>, vector<16x64xf32> -> vector<16x64xf32>
    %1284 = arith.addf %1278, %1283 : vector<16x64xf32>
    %c7_i32_524 = arith.constant 7 : i32
    %1285 = tpu.dynamic_rotate %1271 by %c7_i32_524 dim 1 : vector<16x64xf32>, i32 -> vector<16x64xf32>
    %1286 = vector.broadcast %59 : vector<1x64xf32> to vector<16x64xf32>
    %1287 = arith.mulf %1285, %1286 : vector<16x64xf32>
    %1288 = arith.truncf %1287 : vector<16x64xf32> to vector<16x64xbf16>
    %cst_525 = arith.constant dense<0.000000e+00> : vector<16x64xf32>
    %1289 = tpu.matmul %5, %1288, %cst_525 {dimension_numbers = #tpu.dot_dimension_numbers<[1], [0], [0], [1], [0, 0, 1, 1], [], []>} : vector<16x16xbf16>, vector<16x64xbf16>, vector<16x64xf32> -> vector<16x64xf32>
    %1290 = arith.addf %1284, %1289 : vector<16x64xf32>
    %c1_i32_526 = arith.constant 1 : i32
    %1291 = tpu.dynamic_rotate %1271 by %c1_i32_526 dim 1 : vector<16x64xf32>, i32 -> vector<16x64xf32>
    %1292 = vector.broadcast %60 : vector<1x64xf32> to vector<16x64xf32>
    %1293 = arith.mulf %1291, %1292 : vector<16x64xf32>
    %1294 = arith.truncf %1293 : vector<16x64xf32> to vector<16x64xbf16>
    %cst_527 = arith.constant dense<0.000000e+00> : vector<16x64xf32>
    %1295 = tpu.matmul %7, %1294, %cst_527 {dimension_numbers = #tpu.dot_dimension_numbers<[1], [0], [0], [1], [0, 0, 1, 1], [], []>} : vector<16x16xbf16>, vector<16x64xbf16>, vector<16x64xf32> -> vector<16x64xf32>
    %1296 = arith.addf %1290, %1295 : vector<16x64xf32>
    %1297 = vector.broadcast %61 : vector<1x64xf32> to vector<16x64xf32>
    %1298 = arith.mulf %1271, %1297 : vector<16x64xf32>
    %1299 = arith.truncf %1298 : vector<16x64xf32> to vector<16x64xbf16>
    %cst_528 = arith.constant dense<0.000000e+00> : vector<16x64xf32>
    %1300 = tpu.matmul %9, %1299, %cst_528 {dimension_numbers = #tpu.dot_dimension_numbers<[1], [0], [0], [1], [0, 0, 1, 1], [], []>} : vector<16x16xbf16>, vector<16x64xbf16>, vector<16x64xf32> -> vector<16x64xf32>
    %1301 = arith.addf %1296, %1300 : vector<16x64xf32>
    %c63_i32_529 = arith.constant 63 : i32
    %1302 = tpu.dynamic_rotate %1271 by %c63_i32_529 dim 1 : vector<16x64xf32>, i32 -> vector<16x64xf32>
    %1303 = vector.broadcast %62 : vector<1x64xf32> to vector<16x64xf32>
    %1304 = arith.mulf %1302, %1303 : vector<16x64xf32>
    %1305 = arith.truncf %1304 : vector<16x64xf32> to vector<16x64xbf16>
    %cst_530 = arith.constant dense<0.000000e+00> : vector<16x64xf32>
    %1306 = tpu.matmul %11, %1305, %cst_530 {dimension_numbers = #tpu.dot_dimension_numbers<[1], [0], [0], [1], [0, 0, 1, 1], [], []>} : vector<16x16xbf16>, vector<16x64xbf16>, vector<16x64xf32> -> vector<16x64xf32>
    %1307 = arith.addf %1301, %1306 : vector<16x64xf32>
    %c57_i32_531 = arith.constant 57 : i32
    %1308 = tpu.dynamic_rotate %1271 by %c57_i32_531 dim 1 : vector<16x64xf32>, i32 -> vector<16x64xf32>
    %1309 = vector.broadcast %63 : vector<1x64xf32> to vector<16x64xf32>
    %1310 = arith.mulf %1308, %1309 : vector<16x64xf32>
    %1311 = arith.truncf %1310 : vector<16x64xf32> to vector<16x64xbf16>
    %cst_532 = arith.constant dense<0.000000e+00> : vector<16x64xf32>
    %1312 = tpu.matmul %13, %1311, %cst_532 {dimension_numbers = #tpu.dot_dimension_numbers<[1], [0], [0], [1], [0, 0, 1, 1], [], []>} : vector<16x16xbf16>, vector<16x64xbf16>, vector<16x64xf32> -> vector<16x64xf32>
    %1313 = arith.addf %1307, %1312 : vector<16x64xf32>
    %c56_i32_533 = arith.constant 56 : i32
    %1314 = tpu.dynamic_rotate %1271 by %c56_i32_533 dim 1 : vector<16x64xf32>, i32 -> vector<16x64xf32>
    %1315 = vector.broadcast %64 : vector<1x64xf32> to vector<16x64xf32>
    %1316 = arith.mulf %1314, %1315 : vector<16x64xf32>
    %1317 = arith.truncf %1316 : vector<16x64xf32> to vector<16x64xbf16>
    %cst_534 = arith.constant dense<0.000000e+00> : vector<16x64xf32>
    %1318 = tpu.matmul %15, %1317, %cst_534 {dimension_numbers = #tpu.dot_dimension_numbers<[1], [0], [0], [1], [0, 0, 1, 1], [], []>} : vector<16x16xbf16>, vector<16x64xbf16>, vector<16x64xf32> -> vector<16x64xf32>
    %1319 = arith.addf %1313, %1318 : vector<16x64xf32>
    %c55_i32_535 = arith.constant 55 : i32
    %1320 = tpu.dynamic_rotate %1271 by %c55_i32_535 dim 1 : vector<16x64xf32>, i32 -> vector<16x64xf32>
    %1321 = vector.broadcast %65 : vector<1x64xf32> to vector<16x64xf32>
    %1322 = arith.mulf %1320, %1321 : vector<16x64xf32>
    %1323 = arith.truncf %1322 : vector<16x64xf32> to vector<16x64xbf16>
    %cst_536 = arith.constant dense<0.000000e+00> : vector<16x64xf32>
    %1324 = tpu.matmul %17, %1323, %cst_536 {dimension_numbers = #tpu.dot_dimension_numbers<[1], [0], [0], [1], [0, 0, 1, 1], [], []>} : vector<16x16xbf16>, vector<16x64xbf16>, vector<16x64xf32> -> vector<16x64xf32>
    %1325 = arith.addf %1319, %1324 : vector<16x64xf32>
    %1326 = vector.broadcast %54 : vector<16x1xf32> to vector<16x64xf32>
    %1327 = arith.addf %1325, %1326 : vector<16x64xf32>
    %cst_537 = arith.constant 0.000000e+00 : f32
    %1328 = vector.broadcast %cst_537 : f32 to vector<16x64xf32>
    %1329 = arith.maximumf %1327, %1328 : vector<16x64xf32>
    %1330 = arith.addf %1329, %1271 : vector<16x64xf32>
    %cst_538 = arith.constant 0.000000e+00 : f32
    %1331 = vector.broadcast %cst_538 : f32 to vector<16x64xf32>
    %c9_i32_539 = arith.constant 9 : i32
    %1332 = tpu.dynamic_rotate %1330 by %c9_i32_539 dim 1 : vector<16x64xf32>, i32 -> vector<16x64xf32>
    %1333 = vector.broadcast %57 : vector<1x64xf32> to vector<16x64xf32>
    %1334 = arith.mulf %1332, %1333 : vector<16x64xf32>
    %1335 = arith.truncf %1334 : vector<16x64xf32> to vector<16x64xbf16>
    %cst_540 = arith.constant dense<0.000000e+00> : vector<16x64xf32>
    %1336 = tpu.matmul %19, %1335, %cst_540 {dimension_numbers = #tpu.dot_dimension_numbers<[1], [0], [0], [1], [0, 0, 1, 1], [], []>} : vector<16x16xbf16>, vector<16x64xbf16>, vector<16x64xf32> -> vector<16x64xf32>
    %1337 = arith.addf %1331, %1336 : vector<16x64xf32>
    %c8_i32_541 = arith.constant 8 : i32
    %1338 = tpu.dynamic_rotate %1330 by %c8_i32_541 dim 1 : vector<16x64xf32>, i32 -> vector<16x64xf32>
    %1339 = vector.broadcast %58 : vector<1x64xf32> to vector<16x64xf32>
    %1340 = arith.mulf %1338, %1339 : vector<16x64xf32>
    %1341 = arith.truncf %1340 : vector<16x64xf32> to vector<16x64xbf16>
    %cst_542 = arith.constant dense<0.000000e+00> : vector<16x64xf32>
    %1342 = tpu.matmul %21, %1341, %cst_542 {dimension_numbers = #tpu.dot_dimension_numbers<[1], [0], [0], [1], [0, 0, 1, 1], [], []>} : vector<16x16xbf16>, vector<16x64xbf16>, vector<16x64xf32> -> vector<16x64xf32>
    %1343 = arith.addf %1337, %1342 : vector<16x64xf32>
    %c7_i32_543 = arith.constant 7 : i32
    %1344 = tpu.dynamic_rotate %1330 by %c7_i32_543 dim 1 : vector<16x64xf32>, i32 -> vector<16x64xf32>
    %1345 = vector.broadcast %59 : vector<1x64xf32> to vector<16x64xf32>
    %1346 = arith.mulf %1344, %1345 : vector<16x64xf32>
    %1347 = arith.truncf %1346 : vector<16x64xf32> to vector<16x64xbf16>
    %cst_544 = arith.constant dense<0.000000e+00> : vector<16x64xf32>
    %1348 = tpu.matmul %23, %1347, %cst_544 {dimension_numbers = #tpu.dot_dimension_numbers<[1], [0], [0], [1], [0, 0, 1, 1], [], []>} : vector<16x16xbf16>, vector<16x64xbf16>, vector<16x64xf32> -> vector<16x64xf32>
    %1349 = arith.addf %1343, %1348 : vector<16x64xf32>
    %c1_i32_545 = arith.constant 1 : i32
    %1350 = tpu.dynamic_rotate %1330 by %c1_i32_545 dim 1 : vector<16x64xf32>, i32 -> vector<16x64xf32>
    %1351 = vector.broadcast %60 : vector<1x64xf32> to vector<16x64xf32>
    %1352 = arith.mulf %1350, %1351 : vector<16x64xf32>
    %1353 = arith.truncf %1352 : vector<16x64xf32> to vector<16x64xbf16>
    %cst_546 = arith.constant dense<0.000000e+00> : vector<16x64xf32>
    %1354 = tpu.matmul %25, %1353, %cst_546 {dimension_numbers = #tpu.dot_dimension_numbers<[1], [0], [0], [1], [0, 0, 1, 1], [], []>} : vector<16x16xbf16>, vector<16x64xbf16>, vector<16x64xf32> -> vector<16x64xf32>
    %1355 = arith.addf %1349, %1354 : vector<16x64xf32>
    %1356 = vector.broadcast %61 : vector<1x64xf32> to vector<16x64xf32>
    %1357 = arith.mulf %1330, %1356 : vector<16x64xf32>
    %1358 = arith.truncf %1357 : vector<16x64xf32> to vector<16x64xbf16>
    %cst_547 = arith.constant dense<0.000000e+00> : vector<16x64xf32>
    %1359 = tpu.matmul %27, %1358, %cst_547 {dimension_numbers = #tpu.dot_dimension_numbers<[1], [0], [0], [1], [0, 0, 1, 1], [], []>} : vector<16x16xbf16>, vector<16x64xbf16>, vector<16x64xf32> -> vector<16x64xf32>
    %1360 = arith.addf %1355, %1359 : vector<16x64xf32>
    %c63_i32_548 = arith.constant 63 : i32
    %1361 = tpu.dynamic_rotate %1330 by %c63_i32_548 dim 1 : vector<16x64xf32>, i32 -> vector<16x64xf32>
    %1362 = vector.broadcast %62 : vector<1x64xf32> to vector<16x64xf32>
    %1363 = arith.mulf %1361, %1362 : vector<16x64xf32>
    %1364 = arith.truncf %1363 : vector<16x64xf32> to vector<16x64xbf16>
    %cst_549 = arith.constant dense<0.000000e+00> : vector<16x64xf32>
    %1365 = tpu.matmul %29, %1364, %cst_549 {dimension_numbers = #tpu.dot_dimension_numbers<[1], [0], [0], [1], [0, 0, 1, 1], [], []>} : vector<16x16xbf16>, vector<16x64xbf16>, vector<16x64xf32> -> vector<16x64xf32>
    %1366 = arith.addf %1360, %1365 : vector<16x64xf32>
    %c57_i32_550 = arith.constant 57 : i32
    %1367 = tpu.dynamic_rotate %1330 by %c57_i32_550 dim 1 : vector<16x64xf32>, i32 -> vector<16x64xf32>
    %1368 = vector.broadcast %63 : vector<1x64xf32> to vector<16x64xf32>
    %1369 = arith.mulf %1367, %1368 : vector<16x64xf32>
    %1370 = arith.truncf %1369 : vector<16x64xf32> to vector<16x64xbf16>
    %cst_551 = arith.constant dense<0.000000e+00> : vector<16x64xf32>
    %1371 = tpu.matmul %31, %1370, %cst_551 {dimension_numbers = #tpu.dot_dimension_numbers<[1], [0], [0], [1], [0, 0, 1, 1], [], []>} : vector<16x16xbf16>, vector<16x64xbf16>, vector<16x64xf32> -> vector<16x64xf32>
    %1372 = arith.addf %1366, %1371 : vector<16x64xf32>
    %c56_i32_552 = arith.constant 56 : i32
    %1373 = tpu.dynamic_rotate %1330 by %c56_i32_552 dim 1 : vector<16x64xf32>, i32 -> vector<16x64xf32>
    %1374 = vector.broadcast %64 : vector<1x64xf32> to vector<16x64xf32>
    %1375 = arith.mulf %1373, %1374 : vector<16x64xf32>
    %1376 = arith.truncf %1375 : vector<16x64xf32> to vector<16x64xbf16>
    %cst_553 = arith.constant dense<0.000000e+00> : vector<16x64xf32>
    %1377 = tpu.matmul %33, %1376, %cst_553 {dimension_numbers = #tpu.dot_dimension_numbers<[1], [0], [0], [1], [0, 0, 1, 1], [], []>} : vector<16x16xbf16>, vector<16x64xbf16>, vector<16x64xf32> -> vector<16x64xf32>
    %1378 = arith.addf %1372, %1377 : vector<16x64xf32>
    %c55_i32_554 = arith.constant 55 : i32
    %1379 = tpu.dynamic_rotate %1330 by %c55_i32_554 dim 1 : vector<16x64xf32>, i32 -> vector<16x64xf32>
    %1380 = vector.broadcast %65 : vector<1x64xf32> to vector<16x64xf32>
    %1381 = arith.mulf %1379, %1380 : vector<16x64xf32>
    %1382 = arith.truncf %1381 : vector<16x64xf32> to vector<16x64xbf16>
    %cst_555 = arith.constant dense<0.000000e+00> : vector<16x64xf32>
    %1383 = tpu.matmul %35, %1382, %cst_555 {dimension_numbers = #tpu.dot_dimension_numbers<[1], [0], [0], [1], [0, 0, 1, 1], [], []>} : vector<16x16xbf16>, vector<16x64xbf16>, vector<16x64xf32> -> vector<16x64xf32>
    %1384 = arith.addf %1378, %1383 : vector<16x64xf32>
    %1385 = vector.broadcast %55 : vector<16x1xf32> to vector<16x64xf32>
    %1386 = arith.addf %1384, %1385 : vector<16x64xf32>
    %cst_556 = arith.constant 0.000000e+00 : f32
    %1387 = vector.broadcast %cst_556 : f32 to vector<16x64xf32>
    %1388 = arith.maximumf %1386, %1387 : vector<16x64xf32>
    %1389 = arith.addf %1388, %1330 : vector<16x64xf32>
    %cst_557 = arith.constant 0.000000e+00 : f32
    %1390 = vector.broadcast %cst_557 : f32 to vector<16x64xf32>
    %c9_i32_558 = arith.constant 9 : i32
    %1391 = tpu.dynamic_rotate %1389 by %c9_i32_558 dim 1 : vector<16x64xf32>, i32 -> vector<16x64xf32>
    %1392 = vector.broadcast %57 : vector<1x64xf32> to vector<16x64xf32>
    %1393 = arith.mulf %1391, %1392 : vector<16x64xf32>
    %1394 = arith.truncf %1393 : vector<16x64xf32> to vector<16x64xbf16>
    %cst_559 = arith.constant dense<0.000000e+00> : vector<16x64xf32>
    %1395 = tpu.matmul %37, %1394, %cst_559 {dimension_numbers = #tpu.dot_dimension_numbers<[1], [0], [0], [1], [0, 0, 1, 1], [], []>} : vector<16x16xbf16>, vector<16x64xbf16>, vector<16x64xf32> -> vector<16x64xf32>
    %1396 = arith.addf %1390, %1395 : vector<16x64xf32>
    %c8_i32_560 = arith.constant 8 : i32
    %1397 = tpu.dynamic_rotate %1389 by %c8_i32_560 dim 1 : vector<16x64xf32>, i32 -> vector<16x64xf32>
    %1398 = vector.broadcast %58 : vector<1x64xf32> to vector<16x64xf32>
    %1399 = arith.mulf %1397, %1398 : vector<16x64xf32>
    %1400 = arith.truncf %1399 : vector<16x64xf32> to vector<16x64xbf16>
    %cst_561 = arith.constant dense<0.000000e+00> : vector<16x64xf32>
    %1401 = tpu.matmul %39, %1400, %cst_561 {dimension_numbers = #tpu.dot_dimension_numbers<[1], [0], [0], [1], [0, 0, 1, 1], [], []>} : vector<16x16xbf16>, vector<16x64xbf16>, vector<16x64xf32> -> vector<16x64xf32>
    %1402 = arith.addf %1396, %1401 : vector<16x64xf32>
    %c7_i32_562 = arith.constant 7 : i32
    %1403 = tpu.dynamic_rotate %1389 by %c7_i32_562 dim 1 : vector<16x64xf32>, i32 -> vector<16x64xf32>
    %1404 = vector.broadcast %59 : vector<1x64xf32> to vector<16x64xf32>
    %1405 = arith.mulf %1403, %1404 : vector<16x64xf32>
    %1406 = arith.truncf %1405 : vector<16x64xf32> to vector<16x64xbf16>
    %cst_563 = arith.constant dense<0.000000e+00> : vector<16x64xf32>
    %1407 = tpu.matmul %41, %1406, %cst_563 {dimension_numbers = #tpu.dot_dimension_numbers<[1], [0], [0], [1], [0, 0, 1, 1], [], []>} : vector<16x16xbf16>, vector<16x64xbf16>, vector<16x64xf32> -> vector<16x64xf32>
    %1408 = arith.addf %1402, %1407 : vector<16x64xf32>
    %c1_i32_564 = arith.constant 1 : i32
    %1409 = tpu.dynamic_rotate %1389 by %c1_i32_564 dim 1 : vector<16x64xf32>, i32 -> vector<16x64xf32>
    %1410 = vector.broadcast %60 : vector<1x64xf32> to vector<16x64xf32>
    %1411 = arith.mulf %1409, %1410 : vector<16x64xf32>
    %1412 = arith.truncf %1411 : vector<16x64xf32> to vector<16x64xbf16>
    %cst_565 = arith.constant dense<0.000000e+00> : vector<16x64xf32>
    %1413 = tpu.matmul %43, %1412, %cst_565 {dimension_numbers = #tpu.dot_dimension_numbers<[1], [0], [0], [1], [0, 0, 1, 1], [], []>} : vector<16x16xbf16>, vector<16x64xbf16>, vector<16x64xf32> -> vector<16x64xf32>
    %1414 = arith.addf %1408, %1413 : vector<16x64xf32>
    %1415 = vector.broadcast %61 : vector<1x64xf32> to vector<16x64xf32>
    %1416 = arith.mulf %1389, %1415 : vector<16x64xf32>
    %1417 = arith.truncf %1416 : vector<16x64xf32> to vector<16x64xbf16>
    %cst_566 = arith.constant dense<0.000000e+00> : vector<16x64xf32>
    %1418 = tpu.matmul %45, %1417, %cst_566 {dimension_numbers = #tpu.dot_dimension_numbers<[1], [0], [0], [1], [0, 0, 1, 1], [], []>} : vector<16x16xbf16>, vector<16x64xbf16>, vector<16x64xf32> -> vector<16x64xf32>
    %1419 = arith.addf %1414, %1418 : vector<16x64xf32>
    %c63_i32_567 = arith.constant 63 : i32
    %1420 = tpu.dynamic_rotate %1389 by %c63_i32_567 dim 1 : vector<16x64xf32>, i32 -> vector<16x64xf32>
    %1421 = vector.broadcast %62 : vector<1x64xf32> to vector<16x64xf32>
    %1422 = arith.mulf %1420, %1421 : vector<16x64xf32>
    %1423 = arith.truncf %1422 : vector<16x64xf32> to vector<16x64xbf16>
    %cst_568 = arith.constant dense<0.000000e+00> : vector<16x64xf32>
    %1424 = tpu.matmul %47, %1423, %cst_568 {dimension_numbers = #tpu.dot_dimension_numbers<[1], [0], [0], [1], [0, 0, 1, 1], [], []>} : vector<16x16xbf16>, vector<16x64xbf16>, vector<16x64xf32> -> vector<16x64xf32>
    %1425 = arith.addf %1419, %1424 : vector<16x64xf32>
    %c57_i32_569 = arith.constant 57 : i32
    %1426 = tpu.dynamic_rotate %1389 by %c57_i32_569 dim 1 : vector<16x64xf32>, i32 -> vector<16x64xf32>
    %1427 = vector.broadcast %63 : vector<1x64xf32> to vector<16x64xf32>
    %1428 = arith.mulf %1426, %1427 : vector<16x64xf32>
    %1429 = arith.truncf %1428 : vector<16x64xf32> to vector<16x64xbf16>
    %cst_570 = arith.constant dense<0.000000e+00> : vector<16x64xf32>
    %1430 = tpu.matmul %49, %1429, %cst_570 {dimension_numbers = #tpu.dot_dimension_numbers<[1], [0], [0], [1], [0, 0, 1, 1], [], []>} : vector<16x16xbf16>, vector<16x64xbf16>, vector<16x64xf32> -> vector<16x64xf32>
    %1431 = arith.addf %1425, %1430 : vector<16x64xf32>
    %c56_i32_571 = arith.constant 56 : i32
    %1432 = tpu.dynamic_rotate %1389 by %c56_i32_571 dim 1 : vector<16x64xf32>, i32 -> vector<16x64xf32>
    %1433 = vector.broadcast %64 : vector<1x64xf32> to vector<16x64xf32>
    %1434 = arith.mulf %1432, %1433 : vector<16x64xf32>
    %1435 = arith.truncf %1434 : vector<16x64xf32> to vector<16x64xbf16>
    %cst_572 = arith.constant dense<0.000000e+00> : vector<16x64xf32>
    %1436 = tpu.matmul %51, %1435, %cst_572 {dimension_numbers = #tpu.dot_dimension_numbers<[1], [0], [0], [1], [0, 0, 1, 1], [], []>} : vector<16x16xbf16>, vector<16x64xbf16>, vector<16x64xf32> -> vector<16x64xf32>
    %1437 = arith.addf %1431, %1436 : vector<16x64xf32>
    %c55_i32_573 = arith.constant 55 : i32
    %1438 = tpu.dynamic_rotate %1389 by %c55_i32_573 dim 1 : vector<16x64xf32>, i32 -> vector<16x64xf32>
    %1439 = vector.broadcast %65 : vector<1x64xf32> to vector<16x64xf32>
    %1440 = arith.mulf %1438, %1439 : vector<16x64xf32>
    %1441 = arith.truncf %1440 : vector<16x64xf32> to vector<16x64xbf16>
    %cst_574 = arith.constant dense<0.000000e+00> : vector<16x64xf32>
    %1442 = tpu.matmul %53, %1441, %cst_574 {dimension_numbers = #tpu.dot_dimension_numbers<[1], [0], [0], [1], [0, 0, 1, 1], [], []>} : vector<16x16xbf16>, vector<16x64xbf16>, vector<16x64xf32> -> vector<16x64xf32>
    %1443 = arith.addf %1437, %1442 : vector<16x64xf32>
    %1444 = vector.broadcast %56 : vector<16x1xf32> to vector<16x64xf32>
    %1445 = arith.addf %1443, %1444 : vector<16x64xf32>
    %cst_575 = arith.constant 0.000000e+00 : f32
    %1446 = vector.broadcast %cst_575 : f32 to vector<16x64xf32>
    %1447 = arith.maximumf %1445, %1446 : vector<16x64xf32>
    %1448 = arith.addf %1447, %1389 : vector<16x64xf32>
    %1449 = arith.truncf %1448 : vector<16x64xf32> to vector<16x64xbf16>
    %cst_576 = arith.constant dense<0.000000e+00> : vector<2x64xf32>
    %1450 = tpu.matmul %66, %1449, %cst_576 {dimension_numbers = #tpu.dot_dimension_numbers<[1], [0], [0], [1], [0, 0, 1, 1], [], []>} : vector<2x16xbf16>, vector<16x64xbf16>, vector<2x64xf32> -> vector<2x64xf32>
    %1451 = vector.broadcast %67 : vector<2x1xf32> to vector<2x64xf32>
    %1452 = arith.addf %1450, %1451 : vector<2x64xf32>
    %cst_577 = arith.constant 0.000000e+00 : f32
    %1453 = vector.broadcast %cst_577 : f32 to vector<2x64xf32>
    %1454 = arith.maximumf %1452, %1453 : vector<2x64xf32>
    %1455 = arith.truncf %1454 : vector<2x64xf32> to vector<2x64xbf16>
    %cst_578 = arith.constant dense<0.000000e+00> : vector<1x64xf32>
    %1456 = tpu.matmul %68, %1455, %cst_578 {dimension_numbers = #tpu.dot_dimension_numbers<[1], [0], [0], [1], [0, 0, 1, 1], [], []>} : vector<1x2xbf16>, vector<2x64xbf16>, vector<1x64xf32> -> vector<1x64xf32>
    %1457 = vector.broadcast %69 : vector<1x1xf32> to vector<1x64xf32>
    %1458 = arith.addf %1456, %1457 : vector<1x64xf32>
    %1459 = arith.negf %1458 : vector<1x64xf32>
    %1460 = math.exp %1459 : vector<1x64xf32>
    %cst_579 = arith.constant 1.000000e+00 : f32
    %1461 = vector.broadcast %cst_579 : f32 to vector<1x64xf32>
    %1462 = arith.addf %1461, %1460 : vector<1x64xf32>
    %1463 = arith.divf %1461, %1462 : vector<1x64xf32>
    %1464 = vector.broadcast %1463 : vector<1x64xf32> to vector<16x64xf32>
    %1465 = arith.mulf %1448, %1464 : vector<16x64xf32>
    %cst_580 = arith.constant dense<0.000000e+00> : vector<16xf32>
    %1466 = vector.multi_reduction <add>, %1465, %cst_580 [1] : vector<16x64xf32> to vector<16xf32>
    %1467 = vector.shape_cast %1466 : vector<16xf32> to vector<16x1xf32>
    %cst_581 = arith.constant 6.400000e+01 : f32
    %1468 = vector.broadcast %cst_581 : f32 to vector<16x1xf32>
    %1469 = arith.divf %1467, %1468 : vector<16x1xf32>
    %c7_582 = arith.constant 7 : index
    %c0_583 = arith.constant 0 : index
    %c0_584 = arith.constant 0 : index
    %1470 = vector.load %arg1[%c7_582, %c0_583, %c0_584] : memref<8x16x64xf32, #tpu.memory_space<vmem>>, vector<1x16x64xf32>
    %1471 = vector.shape_cast %1470 : vector<1x16x64xf32> to vector<16x64xf32>
    %cst_585 = arith.constant 0.000000e+00 : f32
    %1472 = vector.broadcast %cst_585 : f32 to vector<16x64xf32>
    %c9_i32_586 = arith.constant 9 : i32
    %1473 = tpu.dynamic_rotate %1471 by %c9_i32_586 dim 1 : vector<16x64xf32>, i32 -> vector<16x64xf32>
    %1474 = vector.broadcast %57 : vector<1x64xf32> to vector<16x64xf32>
    %1475 = arith.mulf %1473, %1474 : vector<16x64xf32>
    %1476 = arith.truncf %1475 : vector<16x64xf32> to vector<16x64xbf16>
    %cst_587 = arith.constant dense<0.000000e+00> : vector<16x64xf32>
    %1477 = tpu.matmul %1, %1476, %cst_587 {dimension_numbers = #tpu.dot_dimension_numbers<[1], [0], [0], [1], [0, 0, 1, 1], [], []>} : vector<16x16xbf16>, vector<16x64xbf16>, vector<16x64xf32> -> vector<16x64xf32>
    %1478 = arith.addf %1472, %1477 : vector<16x64xf32>
    %c8_i32_588 = arith.constant 8 : i32
    %1479 = tpu.dynamic_rotate %1471 by %c8_i32_588 dim 1 : vector<16x64xf32>, i32 -> vector<16x64xf32>
    %1480 = vector.broadcast %58 : vector<1x64xf32> to vector<16x64xf32>
    %1481 = arith.mulf %1479, %1480 : vector<16x64xf32>
    %1482 = arith.truncf %1481 : vector<16x64xf32> to vector<16x64xbf16>
    %cst_589 = arith.constant dense<0.000000e+00> : vector<16x64xf32>
    %1483 = tpu.matmul %3, %1482, %cst_589 {dimension_numbers = #tpu.dot_dimension_numbers<[1], [0], [0], [1], [0, 0, 1, 1], [], []>} : vector<16x16xbf16>, vector<16x64xbf16>, vector<16x64xf32> -> vector<16x64xf32>
    %1484 = arith.addf %1478, %1483 : vector<16x64xf32>
    %c7_i32_590 = arith.constant 7 : i32
    %1485 = tpu.dynamic_rotate %1471 by %c7_i32_590 dim 1 : vector<16x64xf32>, i32 -> vector<16x64xf32>
    %1486 = vector.broadcast %59 : vector<1x64xf32> to vector<16x64xf32>
    %1487 = arith.mulf %1485, %1486 : vector<16x64xf32>
    %1488 = arith.truncf %1487 : vector<16x64xf32> to vector<16x64xbf16>
    %cst_591 = arith.constant dense<0.000000e+00> : vector<16x64xf32>
    %1489 = tpu.matmul %5, %1488, %cst_591 {dimension_numbers = #tpu.dot_dimension_numbers<[1], [0], [0], [1], [0, 0, 1, 1], [], []>} : vector<16x16xbf16>, vector<16x64xbf16>, vector<16x64xf32> -> vector<16x64xf32>
    %1490 = arith.addf %1484, %1489 : vector<16x64xf32>
    %c1_i32_592 = arith.constant 1 : i32
    %1491 = tpu.dynamic_rotate %1471 by %c1_i32_592 dim 1 : vector<16x64xf32>, i32 -> vector<16x64xf32>
    %1492 = vector.broadcast %60 : vector<1x64xf32> to vector<16x64xf32>
    %1493 = arith.mulf %1491, %1492 : vector<16x64xf32>
    %1494 = arith.truncf %1493 : vector<16x64xf32> to vector<16x64xbf16>
    %cst_593 = arith.constant dense<0.000000e+00> : vector<16x64xf32>
    %1495 = tpu.matmul %7, %1494, %cst_593 {dimension_numbers = #tpu.dot_dimension_numbers<[1], [0], [0], [1], [0, 0, 1, 1], [], []>} : vector<16x16xbf16>, vector<16x64xbf16>, vector<16x64xf32> -> vector<16x64xf32>
    %1496 = arith.addf %1490, %1495 : vector<16x64xf32>
    %1497 = vector.broadcast %61 : vector<1x64xf32> to vector<16x64xf32>
    %1498 = arith.mulf %1471, %1497 : vector<16x64xf32>
    %1499 = arith.truncf %1498 : vector<16x64xf32> to vector<16x64xbf16>
    %cst_594 = arith.constant dense<0.000000e+00> : vector<16x64xf32>
    %1500 = tpu.matmul %9, %1499, %cst_594 {dimension_numbers = #tpu.dot_dimension_numbers<[1], [0], [0], [1], [0, 0, 1, 1], [], []>} : vector<16x16xbf16>, vector<16x64xbf16>, vector<16x64xf32> -> vector<16x64xf32>
    %1501 = arith.addf %1496, %1500 : vector<16x64xf32>
    %c63_i32_595 = arith.constant 63 : i32
    %1502 = tpu.dynamic_rotate %1471 by %c63_i32_595 dim 1 : vector<16x64xf32>, i32 -> vector<16x64xf32>
    %1503 = vector.broadcast %62 : vector<1x64xf32> to vector<16x64xf32>
    %1504 = arith.mulf %1502, %1503 : vector<16x64xf32>
    %1505 = arith.truncf %1504 : vector<16x64xf32> to vector<16x64xbf16>
    %cst_596 = arith.constant dense<0.000000e+00> : vector<16x64xf32>
    %1506 = tpu.matmul %11, %1505, %cst_596 {dimension_numbers = #tpu.dot_dimension_numbers<[1], [0], [0], [1], [0, 0, 1, 1], [], []>} : vector<16x16xbf16>, vector<16x64xbf16>, vector<16x64xf32> -> vector<16x64xf32>
    %1507 = arith.addf %1501, %1506 : vector<16x64xf32>
    %c57_i32_597 = arith.constant 57 : i32
    %1508 = tpu.dynamic_rotate %1471 by %c57_i32_597 dim 1 : vector<16x64xf32>, i32 -> vector<16x64xf32>
    %1509 = vector.broadcast %63 : vector<1x64xf32> to vector<16x64xf32>
    %1510 = arith.mulf %1508, %1509 : vector<16x64xf32>
    %1511 = arith.truncf %1510 : vector<16x64xf32> to vector<16x64xbf16>
    %cst_598 = arith.constant dense<0.000000e+00> : vector<16x64xf32>
    %1512 = tpu.matmul %13, %1511, %cst_598 {dimension_numbers = #tpu.dot_dimension_numbers<[1], [0], [0], [1], [0, 0, 1, 1], [], []>} : vector<16x16xbf16>, vector<16x64xbf16>, vector<16x64xf32> -> vector<16x64xf32>
    %1513 = arith.addf %1507, %1512 : vector<16x64xf32>
    %c56_i32_599 = arith.constant 56 : i32
    %1514 = tpu.dynamic_rotate %1471 by %c56_i32_599 dim 1 : vector<16x64xf32>, i32 -> vector<16x64xf32>
    %1515 = vector.broadcast %64 : vector<1x64xf32> to vector<16x64xf32>
    %1516 = arith.mulf %1514, %1515 : vector<16x64xf32>
    %1517 = arith.truncf %1516 : vector<16x64xf32> to vector<16x64xbf16>
    %cst_600 = arith.constant dense<0.000000e+00> : vector<16x64xf32>
    %1518 = tpu.matmul %15, %1517, %cst_600 {dimension_numbers = #tpu.dot_dimension_numbers<[1], [0], [0], [1], [0, 0, 1, 1], [], []>} : vector<16x16xbf16>, vector<16x64xbf16>, vector<16x64xf32> -> vector<16x64xf32>
    %1519 = arith.addf %1513, %1518 : vector<16x64xf32>
    %c55_i32_601 = arith.constant 55 : i32
    %1520 = tpu.dynamic_rotate %1471 by %c55_i32_601 dim 1 : vector<16x64xf32>, i32 -> vector<16x64xf32>
    %1521 = vector.broadcast %65 : vector<1x64xf32> to vector<16x64xf32>
    %1522 = arith.mulf %1520, %1521 : vector<16x64xf32>
    %1523 = arith.truncf %1522 : vector<16x64xf32> to vector<16x64xbf16>
    %cst_602 = arith.constant dense<0.000000e+00> : vector<16x64xf32>
    %1524 = tpu.matmul %17, %1523, %cst_602 {dimension_numbers = #tpu.dot_dimension_numbers<[1], [0], [0], [1], [0, 0, 1, 1], [], []>} : vector<16x16xbf16>, vector<16x64xbf16>, vector<16x64xf32> -> vector<16x64xf32>
    %1525 = arith.addf %1519, %1524 : vector<16x64xf32>
    %1526 = vector.broadcast %54 : vector<16x1xf32> to vector<16x64xf32>
    %1527 = arith.addf %1525, %1526 : vector<16x64xf32>
    %cst_603 = arith.constant 0.000000e+00 : f32
    %1528 = vector.broadcast %cst_603 : f32 to vector<16x64xf32>
    %1529 = arith.maximumf %1527, %1528 : vector<16x64xf32>
    %1530 = arith.addf %1529, %1471 : vector<16x64xf32>
    %cst_604 = arith.constant 0.000000e+00 : f32
    %1531 = vector.broadcast %cst_604 : f32 to vector<16x64xf32>
    %c9_i32_605 = arith.constant 9 : i32
    %1532 = tpu.dynamic_rotate %1530 by %c9_i32_605 dim 1 : vector<16x64xf32>, i32 -> vector<16x64xf32>
    %1533 = vector.broadcast %57 : vector<1x64xf32> to vector<16x64xf32>
    %1534 = arith.mulf %1532, %1533 : vector<16x64xf32>
    %1535 = arith.truncf %1534 : vector<16x64xf32> to vector<16x64xbf16>
    %cst_606 = arith.constant dense<0.000000e+00> : vector<16x64xf32>
    %1536 = tpu.matmul %19, %1535, %cst_606 {dimension_numbers = #tpu.dot_dimension_numbers<[1], [0], [0], [1], [0, 0, 1, 1], [], []>} : vector<16x16xbf16>, vector<16x64xbf16>, vector<16x64xf32> -> vector<16x64xf32>
    %1537 = arith.addf %1531, %1536 : vector<16x64xf32>
    %c8_i32_607 = arith.constant 8 : i32
    %1538 = tpu.dynamic_rotate %1530 by %c8_i32_607 dim 1 : vector<16x64xf32>, i32 -> vector<16x64xf32>
    %1539 = vector.broadcast %58 : vector<1x64xf32> to vector<16x64xf32>
    %1540 = arith.mulf %1538, %1539 : vector<16x64xf32>
    %1541 = arith.truncf %1540 : vector<16x64xf32> to vector<16x64xbf16>
    %cst_608 = arith.constant dense<0.000000e+00> : vector<16x64xf32>
    %1542 = tpu.matmul %21, %1541, %cst_608 {dimension_numbers = #tpu.dot_dimension_numbers<[1], [0], [0], [1], [0, 0, 1, 1], [], []>} : vector<16x16xbf16>, vector<16x64xbf16>, vector<16x64xf32> -> vector<16x64xf32>
    %1543 = arith.addf %1537, %1542 : vector<16x64xf32>
    %c7_i32_609 = arith.constant 7 : i32
    %1544 = tpu.dynamic_rotate %1530 by %c7_i32_609 dim 1 : vector<16x64xf32>, i32 -> vector<16x64xf32>
    %1545 = vector.broadcast %59 : vector<1x64xf32> to vector<16x64xf32>
    %1546 = arith.mulf %1544, %1545 : vector<16x64xf32>
    %1547 = arith.truncf %1546 : vector<16x64xf32> to vector<16x64xbf16>
    %cst_610 = arith.constant dense<0.000000e+00> : vector<16x64xf32>
    %1548 = tpu.matmul %23, %1547, %cst_610 {dimension_numbers = #tpu.dot_dimension_numbers<[1], [0], [0], [1], [0, 0, 1, 1], [], []>} : vector<16x16xbf16>, vector<16x64xbf16>, vector<16x64xf32> -> vector<16x64xf32>
    %1549 = arith.addf %1543, %1548 : vector<16x64xf32>
    %c1_i32_611 = arith.constant 1 : i32
    %1550 = tpu.dynamic_rotate %1530 by %c1_i32_611 dim 1 : vector<16x64xf32>, i32 -> vector<16x64xf32>
    %1551 = vector.broadcast %60 : vector<1x64xf32> to vector<16x64xf32>
    %1552 = arith.mulf %1550, %1551 : vector<16x64xf32>
    %1553 = arith.truncf %1552 : vector<16x64xf32> to vector<16x64xbf16>
    %cst_612 = arith.constant dense<0.000000e+00> : vector<16x64xf32>
    %1554 = tpu.matmul %25, %1553, %cst_612 {dimension_numbers = #tpu.dot_dimension_numbers<[1], [0], [0], [1], [0, 0, 1, 1], [], []>} : vector<16x16xbf16>, vector<16x64xbf16>, vector<16x64xf32> -> vector<16x64xf32>
    %1555 = arith.addf %1549, %1554 : vector<16x64xf32>
    %1556 = vector.broadcast %61 : vector<1x64xf32> to vector<16x64xf32>
    %1557 = arith.mulf %1530, %1556 : vector<16x64xf32>
    %1558 = arith.truncf %1557 : vector<16x64xf32> to vector<16x64xbf16>
    %cst_613 = arith.constant dense<0.000000e+00> : vector<16x64xf32>
    %1559 = tpu.matmul %27, %1558, %cst_613 {dimension_numbers = #tpu.dot_dimension_numbers<[1], [0], [0], [1], [0, 0, 1, 1], [], []>} : vector<16x16xbf16>, vector<16x64xbf16>, vector<16x64xf32> -> vector<16x64xf32>
    %1560 = arith.addf %1555, %1559 : vector<16x64xf32>
    %c63_i32_614 = arith.constant 63 : i32
    %1561 = tpu.dynamic_rotate %1530 by %c63_i32_614 dim 1 : vector<16x64xf32>, i32 -> vector<16x64xf32>
    %1562 = vector.broadcast %62 : vector<1x64xf32> to vector<16x64xf32>
    %1563 = arith.mulf %1561, %1562 : vector<16x64xf32>
    %1564 = arith.truncf %1563 : vector<16x64xf32> to vector<16x64xbf16>
    %cst_615 = arith.constant dense<0.000000e+00> : vector<16x64xf32>
    %1565 = tpu.matmul %29, %1564, %cst_615 {dimension_numbers = #tpu.dot_dimension_numbers<[1], [0], [0], [1], [0, 0, 1, 1], [], []>} : vector<16x16xbf16>, vector<16x64xbf16>, vector<16x64xf32> -> vector<16x64xf32>
    %1566 = arith.addf %1560, %1565 : vector<16x64xf32>
    %c57_i32_616 = arith.constant 57 : i32
    %1567 = tpu.dynamic_rotate %1530 by %c57_i32_616 dim 1 : vector<16x64xf32>, i32 -> vector<16x64xf32>
    %1568 = vector.broadcast %63 : vector<1x64xf32> to vector<16x64xf32>
    %1569 = arith.mulf %1567, %1568 : vector<16x64xf32>
    %1570 = arith.truncf %1569 : vector<16x64xf32> to vector<16x64xbf16>
    %cst_617 = arith.constant dense<0.000000e+00> : vector<16x64xf32>
    %1571 = tpu.matmul %31, %1570, %cst_617 {dimension_numbers = #tpu.dot_dimension_numbers<[1], [0], [0], [1], [0, 0, 1, 1], [], []>} : vector<16x16xbf16>, vector<16x64xbf16>, vector<16x64xf32> -> vector<16x64xf32>
    %1572 = arith.addf %1566, %1571 : vector<16x64xf32>
    %c56_i32_618 = arith.constant 56 : i32
    %1573 = tpu.dynamic_rotate %1530 by %c56_i32_618 dim 1 : vector<16x64xf32>, i32 -> vector<16x64xf32>
    %1574 = vector.broadcast %64 : vector<1x64xf32> to vector<16x64xf32>
    %1575 = arith.mulf %1573, %1574 : vector<16x64xf32>
    %1576 = arith.truncf %1575 : vector<16x64xf32> to vector<16x64xbf16>
    %cst_619 = arith.constant dense<0.000000e+00> : vector<16x64xf32>
    %1577 = tpu.matmul %33, %1576, %cst_619 {dimension_numbers = #tpu.dot_dimension_numbers<[1], [0], [0], [1], [0, 0, 1, 1], [], []>} : vector<16x16xbf16>, vector<16x64xbf16>, vector<16x64xf32> -> vector<16x64xf32>
    %1578 = arith.addf %1572, %1577 : vector<16x64xf32>
    %c55_i32_620 = arith.constant 55 : i32
    %1579 = tpu.dynamic_rotate %1530 by %c55_i32_620 dim 1 : vector<16x64xf32>, i32 -> vector<16x64xf32>
    %1580 = vector.broadcast %65 : vector<1x64xf32> to vector<16x64xf32>
    %1581 = arith.mulf %1579, %1580 : vector<16x64xf32>
    %1582 = arith.truncf %1581 : vector<16x64xf32> to vector<16x64xbf16>
    %cst_621 = arith.constant dense<0.000000e+00> : vector<16x64xf32>
    %1583 = tpu.matmul %35, %1582, %cst_621 {dimension_numbers = #tpu.dot_dimension_numbers<[1], [0], [0], [1], [0, 0, 1, 1], [], []>} : vector<16x16xbf16>, vector<16x64xbf16>, vector<16x64xf32> -> vector<16x64xf32>
    %1584 = arith.addf %1578, %1583 : vector<16x64xf32>
    %1585 = vector.broadcast %55 : vector<16x1xf32> to vector<16x64xf32>
    %1586 = arith.addf %1584, %1585 : vector<16x64xf32>
    %cst_622 = arith.constant 0.000000e+00 : f32
    %1587 = vector.broadcast %cst_622 : f32 to vector<16x64xf32>
    %1588 = arith.maximumf %1586, %1587 : vector<16x64xf32>
    %1589 = arith.addf %1588, %1530 : vector<16x64xf32>
    %cst_623 = arith.constant 0.000000e+00 : f32
    %1590 = vector.broadcast %cst_623 : f32 to vector<16x64xf32>
    %c9_i32_624 = arith.constant 9 : i32
    %1591 = tpu.dynamic_rotate %1589 by %c9_i32_624 dim 1 : vector<16x64xf32>, i32 -> vector<16x64xf32>
    %1592 = vector.broadcast %57 : vector<1x64xf32> to vector<16x64xf32>
    %1593 = arith.mulf %1591, %1592 : vector<16x64xf32>
    %1594 = arith.truncf %1593 : vector<16x64xf32> to vector<16x64xbf16>
    %cst_625 = arith.constant dense<0.000000e+00> : vector<16x64xf32>
    %1595 = tpu.matmul %37, %1594, %cst_625 {dimension_numbers = #tpu.dot_dimension_numbers<[1], [0], [0], [1], [0, 0, 1, 1], [], []>} : vector<16x16xbf16>, vector<16x64xbf16>, vector<16x64xf32> -> vector<16x64xf32>
    %1596 = arith.addf %1590, %1595 : vector<16x64xf32>
    %c8_i32_626 = arith.constant 8 : i32
    %1597 = tpu.dynamic_rotate %1589 by %c8_i32_626 dim 1 : vector<16x64xf32>, i32 -> vector<16x64xf32>
    %1598 = vector.broadcast %58 : vector<1x64xf32> to vector<16x64xf32>
    %1599 = arith.mulf %1597, %1598 : vector<16x64xf32>
    %1600 = arith.truncf %1599 : vector<16x64xf32> to vector<16x64xbf16>
    %cst_627 = arith.constant dense<0.000000e+00> : vector<16x64xf32>
    %1601 = tpu.matmul %39, %1600, %cst_627 {dimension_numbers = #tpu.dot_dimension_numbers<[1], [0], [0], [1], [0, 0, 1, 1], [], []>} : vector<16x16xbf16>, vector<16x64xbf16>, vector<16x64xf32> -> vector<16x64xf32>
    %1602 = arith.addf %1596, %1601 : vector<16x64xf32>
    %c7_i32_628 = arith.constant 7 : i32
    %1603 = tpu.dynamic_rotate %1589 by %c7_i32_628 dim 1 : vector<16x64xf32>, i32 -> vector<16x64xf32>
    %1604 = vector.broadcast %59 : vector<1x64xf32> to vector<16x64xf32>
    %1605 = arith.mulf %1603, %1604 : vector<16x64xf32>
    %1606 = arith.truncf %1605 : vector<16x64xf32> to vector<16x64xbf16>
    %cst_629 = arith.constant dense<0.000000e+00> : vector<16x64xf32>
    %1607 = tpu.matmul %41, %1606, %cst_629 {dimension_numbers = #tpu.dot_dimension_numbers<[1], [0], [0], [1], [0, 0, 1, 1], [], []>} : vector<16x16xbf16>, vector<16x64xbf16>, vector<16x64xf32> -> vector<16x64xf32>
    %1608 = arith.addf %1602, %1607 : vector<16x64xf32>
    %c1_i32_630 = arith.constant 1 : i32
    %1609 = tpu.dynamic_rotate %1589 by %c1_i32_630 dim 1 : vector<16x64xf32>, i32 -> vector<16x64xf32>
    %1610 = vector.broadcast %60 : vector<1x64xf32> to vector<16x64xf32>
    %1611 = arith.mulf %1609, %1610 : vector<16x64xf32>
    %1612 = arith.truncf %1611 : vector<16x64xf32> to vector<16x64xbf16>
    %cst_631 = arith.constant dense<0.000000e+00> : vector<16x64xf32>
    %1613 = tpu.matmul %43, %1612, %cst_631 {dimension_numbers = #tpu.dot_dimension_numbers<[1], [0], [0], [1], [0, 0, 1, 1], [], []>} : vector<16x16xbf16>, vector<16x64xbf16>, vector<16x64xf32> -> vector<16x64xf32>
    %1614 = arith.addf %1608, %1613 : vector<16x64xf32>
    %1615 = vector.broadcast %61 : vector<1x64xf32> to vector<16x64xf32>
    %1616 = arith.mulf %1589, %1615 : vector<16x64xf32>
    %1617 = arith.truncf %1616 : vector<16x64xf32> to vector<16x64xbf16>
    %cst_632 = arith.constant dense<0.000000e+00> : vector<16x64xf32>
    %1618 = tpu.matmul %45, %1617, %cst_632 {dimension_numbers = #tpu.dot_dimension_numbers<[1], [0], [0], [1], [0, 0, 1, 1], [], []>} : vector<16x16xbf16>, vector<16x64xbf16>, vector<16x64xf32> -> vector<16x64xf32>
    %1619 = arith.addf %1614, %1618 : vector<16x64xf32>
    %c63_i32_633 = arith.constant 63 : i32
    %1620 = tpu.dynamic_rotate %1589 by %c63_i32_633 dim 1 : vector<16x64xf32>, i32 -> vector<16x64xf32>
    %1621 = vector.broadcast %62 : vector<1x64xf32> to vector<16x64xf32>
    %1622 = arith.mulf %1620, %1621 : vector<16x64xf32>
    %1623 = arith.truncf %1622 : vector<16x64xf32> to vector<16x64xbf16>
    %cst_634 = arith.constant dense<0.000000e+00> : vector<16x64xf32>
    %1624 = tpu.matmul %47, %1623, %cst_634 {dimension_numbers = #tpu.dot_dimension_numbers<[1], [0], [0], [1], [0, 0, 1, 1], [], []>} : vector<16x16xbf16>, vector<16x64xbf16>, vector<16x64xf32> -> vector<16x64xf32>
    %1625 = arith.addf %1619, %1624 : vector<16x64xf32>
    %c57_i32_635 = arith.constant 57 : i32
    %1626 = tpu.dynamic_rotate %1589 by %c57_i32_635 dim 1 : vector<16x64xf32>, i32 -> vector<16x64xf32>
    %1627 = vector.broadcast %63 : vector<1x64xf32> to vector<16x64xf32>
    %1628 = arith.mulf %1626, %1627 : vector<16x64xf32>
    %1629 = arith.truncf %1628 : vector<16x64xf32> to vector<16x64xbf16>
    %cst_636 = arith.constant dense<0.000000e+00> : vector<16x64xf32>
    %1630 = tpu.matmul %49, %1629, %cst_636 {dimension_numbers = #tpu.dot_dimension_numbers<[1], [0], [0], [1], [0, 0, 1, 1], [], []>} : vector<16x16xbf16>, vector<16x64xbf16>, vector<16x64xf32> -> vector<16x64xf32>
    %1631 = arith.addf %1625, %1630 : vector<16x64xf32>
    %c56_i32_637 = arith.constant 56 : i32
    %1632 = tpu.dynamic_rotate %1589 by %c56_i32_637 dim 1 : vector<16x64xf32>, i32 -> vector<16x64xf32>
    %1633 = vector.broadcast %64 : vector<1x64xf32> to vector<16x64xf32>
    %1634 = arith.mulf %1632, %1633 : vector<16x64xf32>
    %1635 = arith.truncf %1634 : vector<16x64xf32> to vector<16x64xbf16>
    %cst_638 = arith.constant dense<0.000000e+00> : vector<16x64xf32>
    %1636 = tpu.matmul %51, %1635, %cst_638 {dimension_numbers = #tpu.dot_dimension_numbers<[1], [0], [0], [1], [0, 0, 1, 1], [], []>} : vector<16x16xbf16>, vector<16x64xbf16>, vector<16x64xf32> -> vector<16x64xf32>
    %1637 = arith.addf %1631, %1636 : vector<16x64xf32>
    %c55_i32_639 = arith.constant 55 : i32
    %1638 = tpu.dynamic_rotate %1589 by %c55_i32_639 dim 1 : vector<16x64xf32>, i32 -> vector<16x64xf32>
    %1639 = vector.broadcast %65 : vector<1x64xf32> to vector<16x64xf32>
    %1640 = arith.mulf %1638, %1639 : vector<16x64xf32>
    %1641 = arith.truncf %1640 : vector<16x64xf32> to vector<16x64xbf16>
    %cst_640 = arith.constant dense<0.000000e+00> : vector<16x64xf32>
    %1642 = tpu.matmul %53, %1641, %cst_640 {dimension_numbers = #tpu.dot_dimension_numbers<[1], [0], [0], [1], [0, 0, 1, 1], [], []>} : vector<16x16xbf16>, vector<16x64xbf16>, vector<16x64xf32> -> vector<16x64xf32>
    %1643 = arith.addf %1637, %1642 : vector<16x64xf32>
    %1644 = vector.broadcast %56 : vector<16x1xf32> to vector<16x64xf32>
    %1645 = arith.addf %1643, %1644 : vector<16x64xf32>
    %cst_641 = arith.constant 0.000000e+00 : f32
    %1646 = vector.broadcast %cst_641 : f32 to vector<16x64xf32>
    %1647 = arith.maximumf %1645, %1646 : vector<16x64xf32>
    %1648 = arith.addf %1647, %1589 : vector<16x64xf32>
    %1649 = arith.truncf %1648 : vector<16x64xf32> to vector<16x64xbf16>
    %cst_642 = arith.constant dense<0.000000e+00> : vector<2x64xf32>
    %1650 = tpu.matmul %66, %1649, %cst_642 {dimension_numbers = #tpu.dot_dimension_numbers<[1], [0], [0], [1], [0, 0, 1, 1], [], []>} : vector<2x16xbf16>, vector<16x64xbf16>, vector<2x64xf32> -> vector<2x64xf32>
    %1651 = vector.broadcast %67 : vector<2x1xf32> to vector<2x64xf32>
    %1652 = arith.addf %1650, %1651 : vector<2x64xf32>
    %cst_643 = arith.constant 0.000000e+00 : f32
    %1653 = vector.broadcast %cst_643 : f32 to vector<2x64xf32>
    %1654 = arith.maximumf %1652, %1653 : vector<2x64xf32>
    %1655 = arith.truncf %1654 : vector<2x64xf32> to vector<2x64xbf16>
    %cst_644 = arith.constant dense<0.000000e+00> : vector<1x64xf32>
    %1656 = tpu.matmul %68, %1655, %cst_644 {dimension_numbers = #tpu.dot_dimension_numbers<[1], [0], [0], [1], [0, 0, 1, 1], [], []>} : vector<1x2xbf16>, vector<2x64xbf16>, vector<1x64xf32> -> vector<1x64xf32>
    %1657 = vector.broadcast %69 : vector<1x1xf32> to vector<1x64xf32>
    %1658 = arith.addf %1656, %1657 : vector<1x64xf32>
    %1659 = arith.negf %1658 : vector<1x64xf32>
    %1660 = math.exp %1659 : vector<1x64xf32>
    %cst_645 = arith.constant 1.000000e+00 : f32
    %1661 = vector.broadcast %cst_645 : f32 to vector<1x64xf32>
    %1662 = arith.addf %1661, %1660 : vector<1x64xf32>
    %1663 = arith.divf %1661, %1662 : vector<1x64xf32>
    %1664 = vector.broadcast %1663 : vector<1x64xf32> to vector<16x64xf32>
    %1665 = arith.mulf %1648, %1664 : vector<16x64xf32>
    %cst_646 = arith.constant dense<0.000000e+00> : vector<16xf32>
    %1666 = vector.multi_reduction <add>, %1665, %cst_646 [1] : vector<16x64xf32> to vector<16xf32>
    %1667 = vector.shape_cast %1666 : vector<16xf32> to vector<16x1xf32>
    %cst_647 = arith.constant 6.400000e+01 : f32
    %1668 = vector.broadcast %cst_647 : f32 to vector<16x1xf32>
    %1669 = arith.divf %1667, %1668 : vector<16x1xf32>
    %1670 = tpu.concatenate %269, %469, %669, %869, %1069, %1269, %1469, %1669 in 1 : vector<16x1xf32>, vector<16x1xf32>, vector<16x1xf32>, vector<16x1xf32>, vector<16x1xf32>, vector<16x1xf32>, vector<16x1xf32>, vector<16x1xf32> -> vector<16x8xf32>
    %c0_648 = arith.constant 0 : index
    %c0_649 = arith.constant 0 : index
    %1671 = vector.load %arg9[%c0_648, %c0_649] : memref<16x8xf32, #tpu.memory_space<vmem>>, vector<16x8xf32>
    tpu.vector_store %arg9[%c0_648, %c0_649], %1670 {strides = array<i32>} : memref<16x8xf32, #tpu.memory_space<vmem>>, vector<16x8xf32>,
    %1672 = tpu.concatenate %263, %463, %663, %863, %1063, %1263, %1463, %1663 in 0 : vector<1x64xf32>, vector<1x64xf32>, vector<1x64xf32>, vector<1x64xf32>, vector<1x64xf32>, vector<1x64xf32>, vector<1x64xf32>, vector<1x64xf32> -> vector<8x64xf32>
    %c0_650 = arith.constant 0 : index
    %c0_651 = arith.constant 0 : index
    %1673 = vector.load %arg10[%c0_650, %c0_651] : memref<8x64xf32, #tpu.memory_space<vmem>>, vector<8x64xf32>
    tpu.vector_store %arg10[%c0_650, %c0_651], %1672 {strides = array<i32>} : memref<8x64xf32, #tpu.memory_space<vmem>>, vector<8x64xf32>,
    return
  }
  func.func @transform_0(%arg0: i32) -> (i32, i32, i32) {
    %c0_i32 = arith.constant 0 : i32
    %c0_i32_0 = arith.constant 0 : i32
    %c0_i32_1 = arith.constant 0 : i32
    return %arg0, %c0_i32, %c0_i32_0 : i32, i32, i32
  }
  func.func @transform_1(%arg0: i32) -> (i32, i32, i32, i32) {
    %c0_i32 = arith.constant 0 : i32
    %c0_i32_0 = arith.constant 0 : i32
    %c0_i32_1 = arith.constant 0 : i32
    %c0_i32_2 = arith.constant 0 : i32
    %c0_i32_3 = arith.constant 0 : i32
    return %c0_i32, %c0_i32_0, %c0_i32_1, %c0_i32_2 : i32, i32, i32, i32
  }
  func.func @transform_2(%arg0: i32) -> (i32, i32) {
    %c0_i32 = arith.constant 0 : i32
    %c0_i32_0 = arith.constant 0 : i32
    %c0_i32_1 = arith.constant 0 : i32
    return %c0_i32, %c0_i32_0 : i32, i32
  }
  func.func @transform_3(%arg0: i32) -> (i32, i32) {
    %c0_i32 = arith.constant 0 : i32
    %c0_i32_0 = arith.constant 0 : i32
    %c0_i32_1 = arith.constant 0 : i32
    return %c0_i32, %c0_i32_0 : i32, i32
  }
  func.func @transform_4(%arg0: i32) -> (i32, i32) {
    %c0_i32 = arith.constant 0 : i32
    %c0_i32_0 = arith.constant 0 : i32
    %c0_i32_1 = arith.constant 0 : i32
    return %c0_i32, %c0_i32_0 : i32, i32
  }
  func.func @transform_5(%arg0: i32) -> (i32, i32) {
    %c0_i32 = arith.constant 0 : i32
    %c0_i32_0 = arith.constant 0 : i32
    %c0_i32_1 = arith.constant 0 : i32
    return %c0_i32, %c0_i32_0 : i32, i32
  }
  func.func @transform_6(%arg0: i32) -> (i32, i32) {
    %c0_i32 = arith.constant 0 : i32
    %c0_i32_0 = arith.constant 0 : i32
    %c0_i32_1 = arith.constant 0 : i32
    return %c0_i32, %c0_i32_0 : i32, i32
  }
  func.func @transform_7(%arg0: i32) -> (i32, i32) {
    %c0_i32 = arith.constant 0 : i32
    %c0_i32_0 = arith.constant 0 : i32
    %c0_i32_1 = arith.constant 0 : i32
    return %c0_i32, %c0_i32_0 : i32, i32
  }
  func.func @transform_8(%arg0: i32) -> (i32, i32) {
    %c0_i32 = arith.constant 0 : i32
    %c0_i32_0 = arith.constant 0 : i32
    return %arg0, %c0_i32 : i32, i32
  }
  func.func @transform_9(%arg0: i32) -> (i32, i32) {
    %c0_i32 = arith.constant 0 : i32
    %c0_i32_0 = arith.constant 0 : i32
    return %arg0, %c0_i32 : i32, i32
  }
}

</mosaic_0001>

<llo_original>
// kernel: tpu_custom_call.1
$region0: #{tpu_custom_call.1}
  #allocation0 [shape = 'u32[]', space=smem, size = 0x4, offset = 0x4, fixed_abs, tag = 'smem constant byte address 0x4 - core index']
  #allocation1 [shape = 'u32[72,128]{1,0:T(1,128)}', space=vmem, size = 0x9000, scoped, tag = 'internal scratch']
  #allocation2 [shape = 'f32[1,1]{1,0:T(1,128)S(1)}', space=vmem, size = 0x200, scoped, tag = 'scoped memory for tpu_custom_call.1']
  %s0 = inlined_call_operand.hbm [shape: f32[16,16,64], index: 0, kind: input, shape index: {}]
  %s1 = inlined_call_operand.hbm [shape: bf16[3,9,16,16], index: 1, kind: input, shape index: {}]
  %s2 = inlined_call_operand.vmem [shape: f32[48,1], index: 2, kind: input, shape index: {}]
  %s3 = inlined_call_operand.vmem [shape: bf16[2,16], index: 3, kind: input, shape index: {}]
  %s4 = inlined_call_operand.vmem [shape: f32[2,1], index: 4, kind: input, shape index: {}]
  %s5 = inlined_call_operand.vmem [shape: bf16[1,2], index: 5, kind: input, shape index: {}]
  %s6 = inlined_call_operand.<no memory space> [shape: f32[1,1], index: 6, kind: input, shape index: {}]
  %s7 = inlined_call_operand.vmem [shape: f32[9,64], index: 7, kind: input, shape index: {}]
  %s8 = inlined_call_operand.vmem [shape: f32[32,8], index: 8, kind: output, shape index: {0}]
  %s9 = inlined_call_operand.hbm [shape: f32[16,64], index: 9, kind: output, shape index: {1}]
  %10 = xla_tuple %s8, %s9
  %s11 = sld [smem:[#allocation0]]
  $region81: #{tpu_custom_call.1} parent=0
    _
  %s13 = ssub.s32 1, %s11
  %s14 = scalar_select 0, %s13, %s11
  %v15 = vstv %s6
  %16 = vst [vmem:[#allocation2] sm:$0x1] %v15
  $region1: #{tpu_custom_call.1} parent=0
    #allocation3 [shape = 'u8[131072]{0}', space=vmem, size = 0x20000, scoped, tag = 'input window, operand 0']
    #allocation4 [shape = 's32[2]{0}', space=sflag, size = 0x8, scoped, tag = 'scoped memory for tpu_custom_call.1']
    #allocation5 [shape = 's32[2]{0}', space=sflag, size = 0x8, scoped, tag = 'scoped memory for tpu_custom_call.1']
    #allocation6 [shape = 'u8[110592]{0}', space=vmem, size = 0x1b000, scoped, tag = 'input window, operand 1, single buffered']
    #allocation7 [shape = 's32[1]{0}', space=sflag, size = 0x4, scoped, tag = 'scoped memory for tpu_custom_call.1']
    #allocation8 [shape = 'u8[8192]{0}', space=vmem, size = 0x2000, scoped, tag = 'output window, operand 1']
    %17 = vsyncpa [#allocation4], 0
    %s18 = scalar_lea.sflag [#allocation4], 1
    %19 = vsyncpa %s18, 0
    %20 = vsyncpa [#allocation7], 0
    %21 = vsyncpa [#allocation5], 0
    %s22 = scalar_lea.sflag [#allocation5], 1
    %23 = vsyncpa %s22, 0
    loop: start=0, step=1, limit=4
    $region2: #{tpu_custom_call.1} parent=1 // loop_pre_header
      _
    $region3: #{tpu_custom_call.1} parent=1 // loop_header
      %s25 = sphi 0, %s29
      %p26 = scmp.ge.s32.totalorder %s25, 4
      %s35 = sphi 0, %s37
      %s38 = sphi 0, %s35
      %s39 = sphi 0, %s38
      %s55 = sphi 0, %s39
      %s59 = sphi 0, %s59
      %s61 = sphi 0, %s59
      %s62 = sphi 0, %s61
      %s76 = sphi 0, %s62
      %s80 = sphi 0, %s80
      %s82 = sphi 0, %s80
      %s83 = sphi 0, %s82
      %s97 = sphi 0, %s83
      %s101 = sphi 0, %s101
      %s103 = sphi 0, %s101
      %s104 = sphi 0, %s103
      %s118 = sphi 0, %s104
      %s122 = sphi 0, %s122
      %s124 = sphi 0, %s122
      %s125 = sphi 0, %s124
      %s139 = sphi 0, %s125
      %s143 = sphi 0, %s143
      %s145 = sphi 0, %s143
      %s146 = sphi 0, %s145
      %s160 = sphi 0, %s146
      %s164 = sphi 0, %s164
      %s166 = sphi 0, %s164
      %s167 = sphi 0, %s166
      %s181 = sphi 0, %s167
      %s185 = sphi 0, %s185
      %s187 = sphi 0, %s185
      %s188 = sphi 0, %s187
      %s202 = sphi 0, %s188
      %s208 = sphi 0, %s210
      %s211 = sphi 0, %s208
      %s212 = sphi 0, %s211
      %s228 = sphi 0, %s212
      %s234 = sphi 0, %s236
      %s237 = sphi 0, %s234
      %s238 = sphi 0, %s237
      %s254 = sphi 0, %s238
    $region4: #{tpu_custom_call.1} parent=1 // loop_header_branch
      %28 = sbr.rel (%p26) target = $region8
    $region5: #{tpu_custom_call.1} parent=1 // loop_body
      %s30 = ssub.s32 %s25, 1
      %s31 = ssub.s32 %s25, 2
      %s32 = sadd.s32 %s25, 1
      %s33 = ssub.s32 %s25, %s32
      %p34 = scmp.eq.s32.totalorder %s33, 0
      %s36 = sadd.s32 %s35, 1
      %s37 = scalar_select %p34, %s35, %s36
      %p40 = pneg %p34
      %p41 = scmp.eq.s32.totalorder %s25, 1
      %p42 = por %p40, %p41
      %p43 = scmp.ne.s32.totalorder %s35, %s38
      %p44 = scmp.eq.s32.totalorder %s25, 0
      %p45 = por %p43, %p44
      %p46 = scmp.ne.s32.totalorder %s35, %s38
      %p47 = scmp.eq.s32.totalorder %s30, 1
      %p48 = por %p46, %p47
      %p49 = scmp.ne.s32.totalorder %s38, %s39
      %p50 = scmp.eq.s32.totalorder %s30, 0
      %p51 = por %p49, %p50
      %p52 = scmp.ne.s32.totalorder %s38, %s39
      %p53 = scmp.eq.s32.totalorder %s31, 1
      %p54 = por %p52, %p53
      %p56 = scmp.ne.s32.totalorder %s39, %s55
      %p57 = scmp.eq.s32.totalorder %s31, 0
      %p58 = por %p56, %p57
      %s60 = sadd.s32 %s59, 1
      %p63 = scmp.eq.s32.totalorder %s25, 1
      %p64 = scmp.ne.s32.totalorder %s59, %s61
      %p65 = scmp.eq.s32.totalorder %s25, 0
      %p66 = por %p64, %p65
      %p67 = scmp.ne.s32.totalorder %s59, %s61
      %p68 = scmp.eq.s32.totalorder %s30, 1
      %p69 = por %p67, %p68
      %p70 = scmp.ne.s32.totalorder %s61, %s62
      %p71 = scmp.eq.s32.totalorder %s30, 0
      %p72 = por %p70, %p71
      %p73 = scmp.ne.s32.totalorder %s61, %s62
      %p74 = scmp.eq.s32.totalorder %s31, 1
      %p75 = por %p73, %p74
      %p77 = scmp.ne.s32.totalorder %s62, %s76
      %p78 = scmp.eq.s32.totalorder %s31, 0
      %p79 = por %p77, %p78
      %s81 = sadd.s32 %s80, 1
      %p84 = scmp.eq.s32.totalorder %s25, 1
      %p85 = scmp.ne.s32.totalorder %s80, %s82
      %p86 = scmp.eq.s32.totalorder %s25, 0
      %p87 = por %p85, %p86
      %p88 = scmp.ne.s32.totalorder %s80, %s82
      %p89 = scmp.eq.s32.totalorder %s30, 1
      %p90 = por %p88, %p89
      %p91 = scmp.ne.s32.totalorder %s82, %s83
      %p92 = scmp.eq.s32.totalorder %s30, 0
      %p93 = por %p91, %p92
      %p94 = scmp.ne.s32.totalorder %s82, %s83
      %p95 = scmp.eq.s32.totalorder %s31, 1
      %p96 = por %p94, %p95
      %p98 = scmp.ne.s32.totalorder %s83, %s97
      %p99 = scmp.eq.s32.totalorder %s31, 0
      %p100 = por %p98, %p99
      %s102 = sadd.s32 %s101, 1
      %p105 = scmp.eq.s32.totalorder %s25, 1
      %p106 = scmp.ne.s32.totalorder %s101, %s103
      %p107 = scmp.eq.s32.totalorder %s25, 0
      %p108 = por %p106, %p107
      %p109 = scmp.ne.s32.totalorder %s101, %s103
      %p110 = scmp.eq.s32.totalorder %s30, 1
      %p111 = por %p109, %p110
      %p112 = scmp.ne.s32.totalorder %s103, %s104
      %p113 = scmp.eq.s32.totalorder %s30, 0
      %p114 = por %p112, %p113
      %p115 = scmp.ne.s32.totalorder %s103, %s104
      %p116 = scmp.eq.s32.totalorder %s31, 1
      %p117 = por %p115, %p116
      %p119 = scmp.ne.s32.totalorder %s104, %s118
      %p120 = scmp.eq.s32.totalorder %s31, 0
      %p121 = por %p119, %p120
      %s123 = sadd.s32 %s122, 1
      %p126 = scmp.eq.s32.totalorder %s25, 1
      %p127 = scmp.ne.s32.totalorder %s122, %s124
      %p128 = scmp.eq.s32.totalorder %s25, 0
      %p129 = por %p127, %p128
      %p130 = scmp.ne.s32.totalorder %s122, %s124
      %p131 = scmp.eq.s32.totalorder %s30, 1
      %p132 = por %p130, %p131
      %p133 = scmp.ne.s32.totalorder %s124, %s125
      %p134 = scmp.eq.s32.totalorder %s30, 0
      %p135 = por %p133, %p134
      %p136 = scmp.ne.s32.totalorder %s124, %s125
      %p137 = scmp.eq.s32.totalorder %s31, 1
      %p138 = por %p136, %p137
      %p140 = scmp.ne.s32.totalorder %s125, %s139
      %p141 = scmp.eq.s32.totalorder %s31, 0
      %p142 = por %p140, %p141
      %s144 = sadd.s32 %s143, 1
      %p147 = scmp.eq.s32.totalorder %s25, 1
      %p148 = scmp.ne.s32.totalorder %s143, %s145
      %p149 = scmp.eq.s32.totalorder %s25, 0
      %p150 = por %p148, %p149
      %p151 = scmp.ne.s32.totalorder %s143, %s145
      %p152 = scmp.eq.s32.totalorder %s30, 1
      %p153 = por %p151, %p152
      %p154 = scmp.ne.s32.totalorder %s145, %s146
      %p155 = scmp.eq.s32.totalorder %s30, 0
      %p156 = por %p154, %p155
      %p157 = scmp.ne.s32.totalorder %s145, %s146
      %p158 = scmp.eq.s32.totalorder %s31, 1
      %p159 = por %p157, %p158
      %p161 = scmp.ne.s32.totalorder %s146, %s160
      %p162 = scmp.eq.s32.totalorder %s31, 0
      %p163 = por %p161, %p162
      %s165 = sadd.s32 %s164, 1
      %p168 = scmp.eq.s32.totalorder %s25, 1
      %p169 = scmp.ne.s32.totalorder %s164, %s166
      %p170 = scmp.eq.s32.totalorder %s25, 0
      %p171 = por %p169, %p170
      %p172 = scmp.ne.s32.totalorder %s164, %s166
      %p173 = scmp.eq.s32.totalorder %s30, 1
      %p174 = por %p172, %p173
      %p175 = scmp.ne.s32.totalorder %s166, %s167
      %p176 = scmp.eq.s32.totalorder %s30, 0
      %p177 = por %p175, %p176
      %p178 = scmp.ne.s32.totalorder %s166, %s167
      %p179 = scmp.eq.s32.totalorder %s31, 1
      %p180 = por %p178, %p179
      %p182 = scmp.ne.s32.totalorder %s167, %s181
      %p183 = scmp.eq.s32.totalorder %s31, 0
      %p184 = por %p182, %p183
      %s186 = sadd.s32 %s185, 1
      %p189 = scmp.eq.s32.totalorder %s25, 1
      %p190 = scmp.ne.s32.totalorder %s185, %s187
      %p191 = scmp.eq.s32.totalorder %s25, 0
      %p192 = por %p190, %p191
      %p193 = scmp.ne.s32.totalorder %s185, %s187
      %p194 = scmp.eq.s32.totalorder %s30, 1
      %p195 = por %p193, %p194
      %p196 = scmp.ne.s32.totalorder %s187, %s188
      %p197 = scmp.eq.s32.totalorder %s30, 0
      %p198 = por %p196, %p197
      %p199 = scmp.ne.s32.totalorder %s187, %s188
      %p200 = scmp.eq.s32.totalorder %s31, 1
      %p201 = por %p199, %p200
      %p203 = scmp.ne.s32.totalorder %s188, %s202
      %p204 = scmp.eq.s32.totalorder %s31, 0
      %p205 = por %p203, %p204
      %s206 = ssub.s32 %s25, %s32
      %p207 = scmp.eq.s32.totalorder %s206, 0
      %s209 = sadd.s32 %s208, 1
      %s210 = scalar_select %p207, %s208, %s209
      %p213 = pneg %p207
      %p214 = scmp.eq.s32.totalorder %s25, 1
      %p215 = por %p213, %p214
      %p216 = scmp.ne.s32.totalorder %s208, %s211
      %p217 = scmp.eq.s32.totalorder %s25, 0
      %p218 = por %p216, %p217
      %p219 = scmp.ne.s32.totalorder %s208, %s211
      %p220 = scmp.eq.s32.totalorder %s30, 1
      %p221 = por %p219, %p220
      %p222 = scmp.ne.s32.totalorder %s211, %s212
      %p223 = scmp.eq.s32.totalorder %s30, 0
      %p224 = por %p222, %p223
      %p225 = scmp.ne.s32.totalorder %s211, %s212
      %p226 = scmp.eq.s32.totalorder %s31, 1
      %p227 = por %p225, %p226
      %p229 = scmp.ne.s32.totalorder %s212, %s228
      %p230 = scmp.eq.s32.totalorder %s31, 0
      %p231 = por %p229, %p230
      %s232 = ssub.s32 %s25, %s32
      %p233 = scmp.eq.s32.totalorder %s232, 0
      %s235 = sadd.s32 %s234, 1
      %s236 = scalar_select %p233, %s234, %s235
      %p239 = pneg %p233
      %p240 = scmp.eq.s32.totalorder %s25, 1
      %p241 = por %p239, %p240
      %p242 = scmp.ne.s32.totalorder %s234, %s237
      %p243 = scmp.eq.s32.totalorder %s25, 0
      %p244 = por %p242, %p243
      %p245 = scmp.ne.s32.totalorder %s234, %s237
      %p246 = scmp.eq.s32.totalorder %s30, 1
      %p247 = por %p245, %p246
      %p248 = scmp.ne.s32.totalorder %s237, %s238
      %p249 = scmp.eq.s32.totalorder %s30, 0
      %p250 = por %p248, %p249
      %p251 = scmp.ne.s32.totalorder %s237, %s238
      %p252 = scmp.eq.s32.totalorder %s31, 1
      %p253 = por %p251, %p252
      %p255 = scmp.ne.s32.totalorder %s238, %s254
      %p256 = scmp.eq.s32.totalorder %s31, 0
      %p257 = por %p255, %p256
      %p258 = scmp.le.s32.totalorder 1, %s25
      %p259 = scmp.lt.s32.totalorder %s25, 3
      %p260 = pnand %p258, %p259
      %p261 = pneg %p260
      // Predicated region
      $region9: #{tpu_custom_call.1} parent=5 // pred_check
        _
      $region10: #{tpu_custom_call.1} parent=5 // pred_check_branch
        %263 = sbr.rel (%p260) target = $region12
      $region11: #{tpu_custom_call.1} parent=5 // pred_region
        %s264 = ssub.s32 %s25, 1
        // Predicated region
        $region13: #{tpu_custom_call.1} parent=11 // pred_check
          %p265 = pneg %p72
        $region14: #{tpu_custom_call.1} parent=11 // pred_check_branch
          %267 = sbr.rel (%p265) target = $region16
        $region15: #{tpu_custom_call.1} parent=11 // pred_region
          %269 = vsyncadd [#allocation7], 0
          %s270 = sshll.u32 %s1, 4
          %s271 = int_to_ptr.hbm [resolvable:$true] %s270
          %s272 = sshll.u32 [#allocation6], 4
          %s273 = int_to_ptr.vmem [resolvable:$true] %s272
          %278 = dma.hbm_to_vmem [thread:$0]  %s271, 3456, %s273, [#allocation7], 64, 64, 4
        $region16: #{tpu_custom_call.1} parent=11 // pred_fallthru
          _
        // Predicated region
        $region17: #{tpu_custom_call.1} parent=11 // pred_check
          %p279 = pneg %p93
        $region18: #{tpu_custom_call.1} parent=11 // pred_check_branch
          %281 = sbr.rel (%p279) target = $region20
        $region19: #{tpu_custom_call.1} parent=11 // pred_region
          _
        $region20: #{tpu_custom_call.1} parent=11 // pred_fallthru
          _
        // Predicated region
        $region21: #{tpu_custom_call.1} parent=11 // pred_check
          %p282 = pneg %p114
        $region22: #{tpu_custom_call.1} parent=11 // pred_check_branch
          %284 = sbr.rel (%p282) target = $region24
        $region23: #{tpu_custom_call.1} parent=11 // pred_region
          _
        $region24: #{tpu_custom_call.1} parent=11 // pred_fallthru
          _
        // Predicated region
        $region25: #{tpu_custom_call.1} parent=11 // pred_check
          %p285 = pneg %p135
        $region26: #{tpu_custom_call.1} parent=11 // pred_check_branch
          %287 = sbr.rel (%p285) target = $region28
        $region27: #{tpu_custom_call.1} parent=11 // pred_region
          _
        $region28: #{tpu_custom_call.1} parent=11 // pred_fallthru
          _
        // Predicated region
        $region29: #{tpu_custom_call.1} parent=11 // pred_check
          %p288 = pneg %p156
        $region30: #{tpu_custom_call.1} parent=11 // pred_check_branch
          %290 = sbr.rel (%p288) target = $region32
        $region31: #{tpu_custom_call.1} parent=11 // pred_region
          _
        $region32: #{tpu_custom_call.1} parent=11 // pred_fallthru
          _
        // Predicated region
        $region33: #{tpu_custom_call.1} parent=11 // pred_check
          %p291 = pneg %p177
        $region34: #{tpu_custom_call.1} parent=11 // pred_check_branch
          %293 = sbr.rel (%p291) target = $region36
        $region35: #{tpu_custom_call.1} parent=11 // pred_region
          _
        $region36: #{tpu_custom_call.1} parent=11 // pred_fallthru
          _
        // Predicated region
        $region37: #{tpu_custom_call.1} parent=11 // pred_check
          %p294 = pneg %p198
        $region38: #{tpu_custom_call.1} parent=11 // pred_check_branch
          %296 = sbr.rel (%p294) target = $region40
        $region39: #{tpu_custom_call.1} parent=11 // pred_region
          _
        $region40: #{tpu_custom_call.1} parent=11 // pred_fallthru
          _
      $region12: #{tpu_custom_call.1} parent=5 // pred_fallthru
        _
      %p297 = scmp.lt.s32.totalorder %s25, 2
      // Predicated region
      $region41: #{tpu_custom_call.1} parent=5 // pred_check
        %p298 = pneg %p297
      $region42: #{tpu_custom_call.1} parent=5 // pred_check_branch
        %300 = sbr.rel (%p298) target = $region44
      $region43: #{tpu_custom_call.1} parent=5 // pred_region
        // Predicated region
        $region45: #{tpu_custom_call.1} parent=43 // pred_check
          %p301 = pneg %p45
        $region46: #{tpu_custom_call.1} parent=43 // pred_check_branch
          %303 = sbr.rel (%p301) target = $region48
        $region47: #{tpu_custom_call.1} parent=43 // pred_region
          %s304 = sand.u32 %s35, 1
          %s305 = scalar_lea.sflag [#allocation4], %s304
          %s306 = sand.u32 %s35, 1
          %s307 = smul.addr %s306, 128
          %s308 = scalar_lea.vmem [#allocation3], %s307
          %s309 = smul.u32 8, %s25
          %311 = vsyncadd %s305, 0
          %s312 = smul.addr %s309, 2
          %s313 = smul.addr %s312, 8
          %s314 = scalar_lea.hbm %s0, %s313
          %s315 = sshll.u32 %s314, 4
          %s316 = int_to_ptr.hbm [resolvable:$true] %s315
          %s317 = sshll.u32 %s308, 4
          %s318 = int_to_ptr.vmem [resolvable:$true] %s317
          %323 = dma.hbm_to_vmem [thread:$0]  %s316, 2048, %s318, %s305, 128, 128, 8
        $region48: #{tpu_custom_call.1} parent=43 // pred_fallthru
          _
      $region44: #{tpu_custom_call.1} parent=5 // pred_fallthru
        _
      %p324 = scmp.le.s32.totalorder 1, %s25
      %p325 = scmp.lt.s32.totalorder %s25, 3
      %p326 = pnand %p324, %p325
      %p327 = pneg %p326
      // Predicated region
      $region49: #{tpu_custom_call.1} parent=5 // pred_check
        _
      $region50: #{tpu_custom_call.1} parent=5 // pred_check_branch
        %329 = sbr.rel (%p326) target = $region52
      $region51: #{tpu_custom_call.1} parent=5 // pred_region
        %s330 = ssub.s32 %s25, 1
        %s331 = sand.u32 %s38, 1
        %s332 = scalar_lea.sflag [#allocation4], %s331
        %s333 = sand.u32 %s38, 1
        %s334 = smul.addr %s333, 128
        %s335 = scalar_lea.vmem [#allocation3], %s334
        // Predicated region
        $region53: #{tpu_custom_call.1} parent=51 // pred_check
          %p336 = pneg %p51
        $region54: #{tpu_custom_call.1} parent=51 // pred_check_branch
          %338 = sbr.rel (%p336) target = $region56
        $region55: #{tpu_custom_call.1} parent=51 // pred_region
          %340 = dma.done %s332, 2048
        $region56: #{tpu_custom_call.1} parent=51 // pred_fallthru
          _
        // Predicated region
        $region57: #{tpu_custom_call.1} parent=51 // pred_check
          %p341 = pneg %p72
        $region58: #{tpu_custom_call.1} parent=51 // pred_check_branch
          %343 = sbr.rel (%p341) target = $region60
        $region59: #{tpu_custom_call.1} parent=51 // pred_region
          %345 = dma.done [#allocation7], 3456
        $region60: #{tpu_custom_call.1} parent=51 // pred_fallthru
          _
        %s346 = sand.u32 %s38, 1
        %s347 = scalar_lea.sflag [#allocation4], %s346
        %s348 = sand.u32 %s38, 1
        %s349 = smul.addr %s348, 128
        %s350 = scalar_lea.vmem [#allocation3], %s349
        %p351 = pneg %p51
        %p352 = pneg %p48
        %p353 = pneg %p72
        %p354 = pneg %p69
        %p355 = pneg %p93
        %p356 = pneg %p90
        %p357 = pneg %p114
        %p358 = pneg %p111
        %p359 = pneg %p135
        %p360 = pneg %p132
        %p361 = pneg %p156
        %p362 = pneg %p153
        %p363 = pneg %p177
        %p364 = pneg %p174
        %p365 = pneg %p198
        %p366 = pneg %p195
        %p367 = pneg %p224
        %p368 = pneg %p221
        %s369 = smul.u32 2, %s30
        %p370 = scmp.lt.s32.totalorder %s369, 3
        %s371 = scalar_select %p370, %s369, 3
        %s372 = smul.addr %s371, 8
        %s373 = scalar_lea.vmem %s8, %s372
        %p374 = pneg %p250
        %p375 = pneg %p247
        %s376 = sand.u32 %s237, 1
        %s377 = scalar_lea.sflag [#allocation5], %s376
        %s378 = sand.u32 %s237, 1
        %s379 = smul.addr %s378, 8
        %s380 = scalar_lea.vmem [#allocation8], %s379
        %s381 = smul.u32 8, %s30
        %s382 = smul.u32 2, %s30
        %p383 = scmp.lt.s32.totalorder %s382, 3
        %s384 = scalar_select %p383, %s382, 3
        %s385 = smul.addr %s384, 8
        %s386 = scalar_lea.vmem %s8, %s385
        %s387 = smul.u32 2, %s30
        %v389 = vld [vmem:[#allocation6] sm:$0xf]
        %v390 = vld [vmem:[#allocation6 + $0x4] sm:$0xf]
        %s391 = scalar_lea.vmem [#allocation6], 8
        %v392 = vld [vmem:[%s391] sm:$0xf]
        %v393 = vld [vmem:[%s391 + $0x4] sm:$0xf]
        %s394 = scalar_lea.vmem [#allocation6], 16
        %v395 = vld [vmem:[%s394] sm:$0xf]
        %v396 = vld [vmem:[%s394 + $0x4] sm:$0xf]
        %s397 = scalar_lea.vmem [#allocation6], 24
        %v398 = vld [vmem:[%s397] sm:$0xf]
        %v399 = vld [vmem:[%s397 + $0x4] sm:$0xf]
        %s400 = scalar_lea.vmem [#allocation6], 32
        %v401 = vld [vmem:[%s400] sm:$0xf]
        %v402 = vld [vmem:[%s400 + $0x4] sm:$0xf]
        %s403 = scalar_lea.vmem [#allocation6], 40
        %v404 = vld [vmem:[%s403] sm:$0xf]
        %v405 = vld [vmem:[%s403 + $0x4] sm:$0xf]
        %s406 = scalar_lea.vmem [#allocation6], 48
        %v407 = vld [vmem:[%s406] sm:$0xf]
        %v408 = vld [vmem:[%s406 + $0x4] sm:$0xf]
        %s409 = scalar_lea.vmem [#allocation6], 56
        %v410 = vld [vmem:[%s409] sm:$0xf]
        %v411 = vld [vmem:[%s409 + $0x4] sm:$0xf]
        %s412 = scalar_lea.vmem [#allocation6], 64
        %v413 = vld [vmem:[%s412] sm:$0xf]
        %v414 = vld [vmem:[%s412 + $0x4] sm:$0xf]
        %s415 = scalar_lea.vmem [#allocation6], 72
        %v416 = vld [vmem:[%s415] sm:$0xf]
        %v417 = vld [vmem:[%s415 + $0x4] sm:$0xf]
        %s418 = scalar_lea.vmem [#allocation6], 80
        %v419 = vld [vmem:[%s418] sm:$0xf]
        %v420 = vld [vmem:[%s418 + $0x4] sm:$0xf]
        %s421 = scalar_lea.vmem [#allocation6], 88
        %v422 = vld [vmem:[%s421] sm:$0xf]
        %v423 = vld [vmem:[%s421 + $0x4] sm:$0xf]
        %s424 = scalar_lea.vmem [#allocation6], 96
        %v425 = vld [vmem:[%s424] sm:$0xf]
        %v426 = vld [vmem:[%s424 + $0x4] sm:$0xf]
        %s427 = scalar_lea.vmem [#allocation6], 104
        %v428 = vld [vmem:[%s427] sm:$0xf]
        %v429 = vld [vmem:[%s427 + $0x4] sm:$0xf]
        %s430 = scalar_lea.vmem [#allocation6], 112
        %v431 = vld [vmem:[%s430] sm:$0xf]
        %v432 = vld [vmem:[%s430 + $0x4] sm:$0xf]
        %s433 = scalar_lea.vmem [#allocation6], 120
        %v434 = vld [vmem:[%s433] sm:$0xf]
        %v435 = vld [vmem:[%s433 + $0x4] sm:$0xf]
        %s436 = scalar_lea.vmem [#allocation6], 128
        %v437 = vld [vmem:[%s436] sm:$0xf]
        %v438 = vld [vmem:[%s436 + $0x4] sm:$0xf]
        %s439 = scalar_lea.vmem [#allocation6], 136
        %v440 = vld [vmem:[%s439] sm:$0xf]
        %v441 = vld [vmem:[%s439 + $0x4] sm:$0xf]
        %s442 = scalar_lea.vmem [#allocation6], 144
        %v443 = vld [vmem:[%s442] sm:$0xf]
        %v444 = vld [vmem:[%s442 + $0x4] sm:$0xf]
        %s445 = scalar_lea.vmem [#allocation6], 152
        %v446 = vld [vmem:[%s445] sm:$0xf]
        %v447 = vld [vmem:[%s445 + $0x4] sm:$0xf]
        %s448 = scalar_lea.vmem [#allocation6], 160
        %v449 = vld [vmem:[%s448] sm:$0xf]
        %v450 = vld [vmem:[%s448 + $0x4] sm:$0xf]
        %s451 = scalar_lea.vmem [#allocation6], 168
        %v452 = vld [vmem:[%s451] sm:$0xf]
        %v453 = vld [vmem:[%s451 + $0x4] sm:$0xf]
        %s454 = scalar_lea.vmem [#allocation6], 176
        %v455 = vld [vmem:[%s454] sm:$0xf]
        %v456 = vld [vmem:[%s454 + $0x4] sm:$0xf]
        %s457 = scalar_lea.vmem [#allocation6], 184
        %v458 = vld [vmem:[%s457] sm:$0xf]
        %v459 = vld [vmem:[%s457 + $0x4] sm:$0xf]
        %s460 = scalar_lea.vmem [#allocation6], 192
        %v461 = vld [vmem:[%s460] sm:$0xf]
        %v462 = vld [vmem:[%s460 + $0x4] sm:$0xf]
        %s463 = scalar_lea.vmem [#allocation6], 200
        %v464 = vld [vmem:[%s463] sm:$0xf]
        %v465 = vld [vmem:[%s463 + $0x4] sm:$0xf]
        %s466 = scalar_lea.vmem [#allocation6], 208
        %v467 = vld [vmem:[%s466] sm:$0xf]
        %v468 = vld [vmem:[%s466 + $0x4] sm:$0xf]
        %v469 = vld [vmem:[%s2] sm:$0xff]
        %v470 = vld [vmem:[%s2 + $0x8] sm:$0xff]
        %v471 = vld [vmem:[%s2 + $0x10] sm:$0xff]
        %v472 = vld [vmem:[%s2 + $0x18] sm:$0xff]
        %v473 = vld [vmem:[%s2 + $0x20] sm:$0xff]
        %v474 = vld [vmem:[%s2 + $0x28] sm:$0xff]
        %v475 = vld [vmem:[%s7] sm:$0x1]
        %v476 = vld [vmem:[%s7 + $0x1] sm:$0x1]
        %v477 = vld [vmem:[%s7 + $0x2] sm:$0x1]
        %v478 = vld [vmem:[%s7 + $0x3] sm:$0x1]
        %v479 = vld [vmem:[%s7 + $0x4] sm:$0x1]
        %v480 = vld [vmem:[%s7 + $0x5] sm:$0x1]
        %v481 = vld [vmem:[%s7 + $0x6] sm:$0x1]
        %v482 = vld [vmem:[%s7 + $0x7] sm:$0x1]
        %v483 = vld [vmem:[%s7 + $0x8] sm:$0x1]
        %v484 = vld [vmem:[%s3] sm:$0x1]
        %v485 = vld [vmem:[%s4] sm:$0x3]
        %v486 = vld [vmem:[%s5] sm:$0x1]
        %v487 = vld [vmem:[#allocation2] sm:$0x1]
        %v488 = vld [vmem:[%s335] sm:$0xff]
        %v489 = vld [vmem:[%s335 + $0x8] sm:$0xff]
        %vm490 = vcmask 1048064
        %491 = vrot.lane.b32.xlu0 %v488, 64
        %v492 = vpop.permute.xlu0 %491
        %v493 = vsel %vm490, %v492, %v488
        %494 = vrot.lane.b32.xlu0 %v489, 64
        %v495 = vpop.permute.xlu0 %494
        %v496 = vsel %vm490, %v495, %v489
        %497 = vrot.lane.b32.xlu0 %v493, 64
        %v498 = vpop.permute.xlu0 %497
        %499 = vrot.lane.b32.xlu0 %v496, 64
        %v500 = vpop.permute.xlu0 %499
        %v501 = vsel %vm490, %v498, %v488
        %v502 = vsel %vm490, %v500, %v489
        %v503 = vperm.slane %v475, 0
        %505 = vrot.lane.b32.xlu0 %v503, 55
        %v506 = vpop.permute.xlu0 %505
        %v508 = vmul.f32 %v501, %v506
        %v509 = vmul.f32 %v502, %v506
        %v510 = vpack.c.bf16 %v509, %v508
        %v511 = vperm.slane %v476, 0
        %513 = vrot.lane.b32.xlu0 %v511, 56
        %v514 = vpop.permute.xlu0 %513
        %v516 = vmul.f32 %v501, %v514
        %v517 = vmul.f32 %v502, %v514
        %v518 = vpack.c.bf16 %v517, %v516
        %v521 = vunpack.c.l.b16 %v392
        %v522 = vunpack.c.l.b16 %v393
        %v523 = vpack.c.b16 %v522, %v521
        %525 = vrot.lane.b32.xlu0 %v518, 72
        %v526 = vpop.permute.xlu0 %525
        %vm528 = vcmask 130048
        %v530 = vsel %vm528, %v523, 0
        %532 = vmatpush.bf16.msra.mxu0 0
        %533 = vmatpush.bf16.msra.mxu0 0
        %534 = vmatpush.bf16.msra.mxu0 0
        %535 = vmatpush.bf16.msra.mxu0 0
        %536 = vmatpush.bf16.msra.mxu0 0
        %537 = vmatpush.bf16.msra.mxu0 0
        %538 = vmatpush.bf16.msra.mxu0 0
        %539 = vmatpush.bf16.msra.mxu0 %v526
        %540 = vmatmul.bf16.gmra.mxu0 %v530
        %v541 = vpop.f32.mrf.mxu0
        %v542 = vadd.f32 0.0, %v541
        %v543 = vpop.f32.mrf.mxu0
        %v544 = vadd.f32 0.0, %v543
        %545 = vdwg.mxu0
        %v548 = vunpack.c.l.b16 %v389
        %v549 = vunpack.c.l.b16 %v390
        %v550 = vpack.c.b16 %v549, %v548
        %552 = vrot.lane.b32.xlu0 %v510, 73
        %v553 = vpop.permute.xlu0 %552
        %v556 = vsel %vm528, %v550, 0
        %558 = vmatpush.bf16.msra.mxu0 0
        %559 = vmatpush.bf16.msra.mxu0 0
        %560 = vmatpush.bf16.msra.mxu0 0
        %561 = vmatpush.bf16.msra.mxu0 0
        %562 = vmatpush.bf16.msra.mxu0 0
        %563 = vmatpush.bf16.msra.mxu0 0
        %564 = vmatpush.bf16.msra.mxu0 0
        %565 = vmatpush.bf16.msra.mxu0 %v553
        %566 = vmatmul.bf16.gmra.mxu0 %v556
        %v567 = vpop.f32.mrf.mxu0
        %v568 = vadd.f32 %v542, %v567
        %v569 = vpop.f32.mrf.mxu0
        %v570 = vadd.f32 %v544, %v569
        %571 = vdwg.mxu0
        %v572 = vperm.slane %v477, 0
        %574 = vrot.lane.b32.xlu0 %v572, 57
        %v575 = vpop.permute.xlu0 %574
        %v577 = vmul.f32 %v501, %v575
        %v578 = vmul.f32 %v502, %v575
        %v579 = vpack.c.bf16 %v578, %v577
        %v582 = vunpack.c.l.b16 %v395
        %v583 = vunpack.c.l.b16 %v396
        %v584 = vpack.c.b16 %v583, %v582
        %586 = vrot.lane.b32.xlu0 %v579, 71
        %v587 = vpop.permute.xlu0 %586
        %v590 = vsel %vm528, %v584, 0
        %592 = vmatpush.bf16.msra.mxu0 0
        %593 = vmatpush.bf16.msra.mxu0 0
        %594 = vmatpush.bf16.msra.mxu0 0
        %595 = vmatpush.bf16.msra.mxu0 0
        %596 = vmatpush.bf16.msra.mxu0 0
        %597 = vmatpush.bf16.msra.mxu0 0
        %598 = vmatpush.bf16.msra.mxu0 0
        %599 = vmatpush.bf16.msra.mxu0 %v587
        %600 = vmatmul.bf16.gmra.mxu0 %v590
        %v601 = vpop.f32.mrf.mxu0
        %v602 = vadd.f32 0.0, %v601
        %v603 = vpop.f32.mrf.mxu0
        %v604 = vadd.f32 0.0, %v603
        %605 = vdwg.mxu0
        %v606 = vadd.f32 %v568, %v602
        %v607 = vadd.f32 %v570, %v604
        %v608 = vperm.slane %v478, 0
        %610 = vrot.lane.b32.xlu0 %v608, 63
        %v611 = vpop.permute.xlu0 %610
        %v613 = vmul.f32 %v501, %v611
        %v614 = vmul.f32 %v502, %v611
        %v615 = vpack.c.bf16 %v614, %v613
        %v618 = vunpack.c.l.b16 %v398
        %v619 = vunpack.c.l.b16 %v399
        %v620 = vpack.c.b16 %v619, %v618
        %622 = vrot.lane.b32.xlu0 %v615, 65
        %v623 = vpop.permute.xlu0 %622
        %v626 = vsel %vm528, %v620, 0
        %628 = vmatpush.bf16.msra.mxu0 0
        %629 = vmatpush.bf16.msra.mxu0 0
        %630 = vmatpush.bf16.msra.mxu0 0
        %631 = vmatpush.bf16.msra.mxu0 0
        %632 = vmatpush.bf16.msra.mxu0 0
        %633 = vmatpush.bf16.msra.mxu0 0
        %634 = vmatpush.bf16.msra.mxu0 0
        %635 = vmatpush.bf16.msra.mxu0 %v623
        %636 = vmatmul.bf16.gmra.mxu0 %v626
        %v637 = vpop.f32.mrf.mxu0
        %v638 = vadd.f32 0.0, %v637
        %v639 = vpop.f32.mrf.mxu0
        %v640 = vadd.f32 0.0, %v639
        %641 = vdwg.mxu0
        %v642 = vadd.f32 %v606, %v638
        %v643 = vadd.f32 %v607, %v640
        %v644 = vperm.slane %v479, 0
        %v645 = vmul.f32 %v488, %v644
        %v646 = vmul.f32 %v489, %v644
        %v647 = vpack.c.bf16 %v646, %v645
        %v650 = vunpack.c.l.b16 %v401
        %v651 = vunpack.c.l.b16 %v402
        %v652 = vpack.c.b16 %v651, %v650
        %v654 = vsel %vm528, %v652, 0
        %656 = vmatpush.bf16.msra.mxu0 0
        %657 = vmatpush.bf16.msra.mxu0 0
        %658 = vmatpush.bf16.msra.mxu0 0
        %659 = vmatpush.bf16.msra.mxu0 0
        %660 = vmatpush.bf16.msra.mxu0 0
        %661 = vmatpush.bf16.msra.mxu0 0
        %662 = vmatpush.bf16.msra.mxu0 0
        %663 = vmatpush.bf16.msra.mxu0 %v647
        %664 = vmatmul.bf16.gmra.mxu0 %v654
        %v665 = vpop.f32.mrf.mxu0
        %v666 = vadd.f32 0.0, %v665
        %v667 = vpop.f32.mrf.mxu0
        %v668 = vadd.f32 0.0, %v667
        %669 = vdwg.mxu0
        %v670 = vadd.f32 %v642, %v666
        %v671 = vadd.f32 %v643, %v668
        %v672 = vperm.slane %v480, 0
        %674 = vrot.lane.b32.xlu0 %v672, 1
        %v675 = vpop.permute.xlu0 %674
        %v677 = vmul.f32 %v501, %v675
        %v678 = vmul.f32 %v502, %v675
        %v679 = vpack.c.bf16 %v678, %v677
        %v682 = vunpack.c.l.b16 %v404
        %v683 = vunpack.c.l.b16 %v405
        %v684 = vpack.c.b16 %v683, %v682
        %686 = vrot.lane.b32.xlu0 %v679, 127
        %v687 = vpop.permute.xlu0 %686
        %v690 = vsel %vm528, %v684, 0
        %692 = vmatpush.bf16.msra.mxu0 0
        %693 = vmatpush.bf16.msra.mxu0 0
        %694 = vmatpush.bf16.msra.mxu0 0
        %695 = vmatpush.bf16.msra.mxu0 0
        %696 = vmatpush.bf16.msra.mxu0 0
        %697 = vmatpush.bf16.msra.mxu0 0
        %698 = vmatpush.bf16.msra.mxu0 0
        %699 = vmatpush.bf16.msra.mxu0 %v687
        %700 = vmatmul.bf16.gmra.mxu0 %v690
        %v701 = vpop.f32.mrf.mxu0
        %v702 = vadd.f32 0.0, %v701
        %v703 = vpop.f32.mrf.mxu0
        %v704 = vadd.f32 0.0, %v703
        %705 = vdwg.mxu0
        %v706 = vadd.f32 %v670, %v702
        %v707 = vadd.f32 %v671, %v704
        %v708 = vperm.slane %v481, 0
        %710 = vrot.lane.b32.xlu0 %v708, 7
        %v711 = vpop.permute.xlu0 %710
        %v713 = vmul.f32 %v501, %v711
        %v714 = vmul.f32 %v502, %v711
        %v715 = vpack.c.bf16 %v714, %v713
        %v718 = vunpack.c.l.b16 %v407
        %v719 = vunpack.c.l.b16 %v408
        %v720 = vpack.c.b16 %v719, %v718
        %722 = vrot.lane.b32.xlu0 %v715, 121
        %v723 = vpop.permute.xlu0 %722
        %v726 = vsel %vm528, %v720, 0
        %728 = vmatpush.bf16.msra.mxu0 0
        %729 = vmatpush.bf16.msra.mxu0 0
        %730 = vmatpush.bf16.msra.mxu0 0
        %731 = vmatpush.bf16.msra.mxu0 0
        %732 = vmatpush.bf16.msra.mxu0 0
        %733 = vmatpush.bf16.msra.mxu0 0
        %734 = vmatpush.bf16.msra.mxu0 0
        %735 = vmatpush.bf16.msra.mxu0 %v723
        %736 = vmatmul.bf16.gmra.mxu0 %v726
        %v737 = vpop.f32.mrf.mxu0
        %v738 = vadd.f32 0.0, %v737
        %v739 = vpop.f32.mrf.mxu0
        %v740 = vadd.f32 0.0, %v739
        %741 = vdwg.mxu0
        %v742 = vadd.f32 %v706, %v738
        %v743 = vadd.f32 %v707, %v740
        %v744 = vperm.slane %v482, 0
        %746 = vrot.lane.b32.xlu0 %v744, 8
        %v747 = vpop.permute.xlu0 %746
        %v749 = vmul.f32 %v501, %v747
        %v750 = vmul.f32 %v502, %v747
        %v751 = vpack.c.bf16 %v750, %v749
        %v754 = vunpack.c.l.b16 %v410
        %v755 = vunpack.c.l.b16 %v411
        %v756 = vpack.c.b16 %v755, %v754
        %758 = vrot.lane.b32.xlu0 %v751, 120
        %v759 = vpop.permute.xlu0 %758
        %v762 = vsel %vm528, %v756, 0
        %764 = vmatpush.bf16.msra.mxu0 0
        %765 = vmatpush.bf16.msra.mxu0 0
        %766 = vmatpush.bf16.msra.mxu0 0
        %767 = vmatpush.bf16.msra.mxu0 0
        %768 = vmatpush.bf16.msra.mxu0 0
        %769 = vmatpush.bf16.msra.mxu0 0
        %770 = vmatpush.bf16.msra.mxu0 0
        %771 = vmatpush.bf16.msra.mxu0 %v759
        %772 = vmatmul.bf16.gmra.mxu0 %v762
        %v773 = vpop.f32.mrf.mxu0
        %v774 = vadd.f32 0.0, %v773
        %v775 = vpop.f32.mrf.mxu0
        %v776 = vadd.f32 0.0, %v775
        %777 = vdwg.mxu0
        %v778 = vadd.f32 %v742, %v774
        %v779 = vadd.f32 %v743, %v776
        %v780 = vperm.slane %v483, 0
        %782 = vrot.lane.b32.xlu0 %v780, 9
        %v783 = vpop.permute.xlu0 %782
        %v785 = vmul.f32 %v501, %v783
        %v786 = vmul.f32 %v502, %v783
        %v787 = vpack.c.bf16 %v786, %v785
        %v790 = vunpack.c.l.b16 %v413
        %v791 = vunpack.c.l.b16 %v414
        %v792 = vpack.c.b16 %v791, %v790
        %794 = vrot.lane.b32.xlu0 %v787, 119
        %v795 = vpop.permute.xlu0 %794
        %v798 = vsel %vm528, %v792, 0
        %800 = vmatpush.bf16.msra.mxu0 0
        %801 = vmatpush.bf16.msra.mxu0 0
        %802 = vmatpush.bf16.msra.mxu0 0
        %803 = vmatpush.bf16.msra.mxu0 0
        %804 = vmatpush.bf16.msra.mxu0 0
        %805 = vmatpush.bf16.msra.mxu0 0
        %806 = vmatpush.bf16.msra.mxu0 0
        %807 = vmatpush.bf16.msra.mxu0 %v795
        %808 = vmatmul.bf16.gmra.mxu0 %v798
        %v809 = vpop.f32.mrf.mxu0
        %v810 = vadd.f32 0.0, %v809
        %v811 = vpop.f32.mrf.mxu0
        %v812 = vadd.f32 0.0, %v811
        %813 = vdwg.mxu0
        %v814 = vadd.f32 %v778, %v810
        %v815 = vadd.f32 %v779, %v812
        %817 = vset.pattern.permute.xlu0 0
        %818 = vperm.xlu0 %817, %v469
        %v819 = vpop.permute.xlu0 %818
        %822 = vset.pattern.permute.xlu0 0
        %823 = vperm.xlu0 %822, %v470
        %v824 = vpop.permute.xlu0 %823
        %v826 = vadd.f32 %v814, %v819
        %v827 = vadd.f32 %v815, %v824
        %v828 = vmax.f32 %v826, 0.0
        %v829 = vmax.f32 %v827, 0.0
        %v830 = vadd.f32 %v828, %v488
        %v831 = vadd.f32 %v829, %v489
        %832 = vrot.lane.b32.xlu0 %v830, 64
        %v833 = vpop.permute.xlu0 %832
        %v834 = vsel %vm490, %v833, %v830
        %835 = vrot.lane.b32.xlu0 %v831, 64
        %v836 = vpop.permute.xlu0 %835
        %v837 = vsel %vm490, %v836, %v831
        %838 = vrot.lane.b32.xlu0 %v834, 64
        %v839 = vpop.permute.xlu0 %838
        %840 = vrot.lane.b32.xlu0 %v837, 64
        %v841 = vpop.permute.xlu0 %840
        %v842 = vsel %vm490, %v839, %v830
        %v843 = vsel %vm490, %v841, %v831
        %v844 = vmul.f32 %v842, %v506
        %v845 = vmul.f32 %v843, %v506
        %v846 = vpack.c.bf16 %v845, %v844
        %v847 = vmul.f32 %v842, %v514
        %v848 = vmul.f32 %v843, %v514
        %v849 = vpack.c.bf16 %v848, %v847
        %v852 = vunpack.c.l.b16 %v419
        %v853 = vunpack.c.l.b16 %v420
        %v854 = vpack.c.b16 %v853, %v852
        %856 = vrot.lane.b32.xlu0 %v849, 72
        %v857 = vpop.permute.xlu0 %856
        %v860 = vsel %vm528, %v854, 0
        %862 = vmatpush.bf16.msra.mxu0 0
        %863 = vmatpush.bf16.msra.mxu0 0
        %864 = vmatpush.bf16.msra.mxu0 0
        %865 = vmatpush.bf16.msra.mxu0 0
        %866 = vmatpush.bf16.msra.mxu0 0
        %867 = vmatpush.bf16.msra.mxu0 0
        %868 = vmatpush.bf16.msra.mxu0 0
        %869 = vmatpush.bf16.msra.mxu0 %v857
        %870 = vmatmul.bf16.gmra.mxu0 %v860
        %v871 = vpop.f32.mrf.mxu0
        %v872 = vadd.f32 0.0, %v871
        %v873 = vpop.f32.mrf.mxu0
        %v874 = vadd.f32 0.0, %v873
        %875 = vdwg.mxu0
        %v878 = vunpack.c.l.b16 %v416
        %v879 = vunpack.c.l.b16 %v417
        %v880 = vpack.c.b16 %v879, %v878
        %882 = vrot.lane.b32.xlu0 %v846, 73
        %v883 = vpop.permute.xlu0 %882
        %v886 = vsel %vm528, %v880, 0
        %888 = vmatpush.bf16.msra.mxu0 0
        %889 = vmatpush.bf16.msra.mxu0 0
        %890 = vmatpush.bf16.msra.mxu0 0
        %891 = vmatpush.bf16.msra.mxu0 0
        %892 = vmatpush.bf16.msra.mxu0 0
        %893 = vmatpush.bf16.msra.mxu0 0
        %894 = vmatpush.bf16.msra.mxu0 0
        %895 = vmatpush.bf16.msra.mxu0 %v883
        %896 = vmatmul.bf16.gmra.mxu0 %v886
        %v897 = vpop.f32.mrf.mxu0
        %v898 = vadd.f32 %v872, %v897
        %v899 = vpop.f32.mrf.mxu0
        %v900 = vadd.f32 %v874, %v899
        %901 = vdwg.mxu0
        %v902 = vmul.f32 %v842, %v575
        %v903 = vmul.f32 %v843, %v575
        %v904 = vpack.c.bf16 %v903, %v902
        %v907 = vunpack.c.l.b16 %v422
        %v908 = vunpack.c.l.b16 %v423
        %v909 = vpack.c.b16 %v908, %v907
        %911 = vrot.lane.b32.xlu0 %v904, 71
        %v912 = vpop.permute.xlu0 %911
        %v915 = vsel %vm528, %v909, 0
        %917 = vmatpush.bf16.msra.mxu0 0
        %918 = vmatpush.bf16.msra.mxu0 0
        %919 = vmatpush.bf16.msra.mxu0 0
        %920 = vmatpush.bf16.msra.mxu0 0
        %921 = vmatpush.bf16.msra.mxu0 0
        %922 = vmatpush.bf16.msra.mxu0 0
        %923 = vmatpush.bf16.msra.mxu0 0
        %924 = vmatpush.bf16.msra.mxu0 %v912
        %925 = vmatmul.bf16.gmra.mxu0 %v915
        %v926 = vpop.f32.mrf.mxu0
        %v927 = vadd.f32 0.0, %v926
        %v928 = vpop.f32.mrf.mxu0
        %v929 = vadd.f32 0.0, %v928
        %930 = vdwg.mxu0
        %v931 = vadd.f32 %v898, %v927
        %v932 = vadd.f32 %v900, %v929
        %v933 = vmul.f32 %v842, %v611
        %v934 = vmul.f32 %v843, %v611
        %v935 = vpack.c.bf16 %v934, %v933
        %v938 = vunpack.c.l.b16 %v425
        %v939 = vunpack.c.l.b16 %v426
        %v940 = vpack.c.b16 %v939, %v938
        %942 = vrot.lane.b32.xlu0 %v935, 65
        %v943 = vpop.permute.xlu0 %942
        %v946 = vsel %vm528, %v940, 0
        %948 = vmatpush.bf16.msra.mxu0 0
        %949 = vmatpush.bf16.msra.mxu0 0
        %950 = vmatpush.bf16.msra.mxu0 0
        %951 = vmatpush.bf16.msra.mxu0 0
        %952 = vmatpush.bf16.msra.mxu0 0
        %953 = vmatpush.bf16.msra.mxu0 0
        %954 = vmatpush.bf16.msra.mxu0 0
        %955 = vmatpush.bf16.msra.mxu0 %v943
        %956 = vmatmul.bf16.gmra.mxu0 %v946
        %v957 = vpop.f32.mrf.mxu0
        %v958 = vadd.f32 0.0, %v957
        %v959 = vpop.f32.mrf.mxu0
        %v960 = vadd.f32 0.0, %v959
        %961 = vdwg.mxu0
        %v962 = vadd.f32 %v931, %v958
        %v963 = vadd.f32 %v932, %v960
        %v964 = vmul.f32 %v830, %v644
        %v965 = vmul.f32 %v831, %v644
        %v966 = vpack.c.bf16 %v965, %v964
        %v969 = vunpack.c.l.b16 %v428
        %v970 = vunpack.c.l.b16 %v429
        %v971 = vpack.c.b16 %v970, %v969
        %v973 = vsel %vm528, %v971, 0
        %975 = vmatpush.bf16.msra.mxu0 0
        %976 = vmatpush.bf16.msra.mxu0 0
        %977 = vmatpush.bf16.msra.mxu0 0
        %978 = vmatpush.bf16.msra.mxu0 0
        %979 = vmatpush.bf16.msra.mxu0 0
        %980 = vmatpush.bf16.msra.mxu0 0
        %981 = vmatpush.bf16.msra.mxu0 0
        %982 = vmatpush.bf16.msra.mxu0 %v966
        %983 = vmatmul.bf16.gmra.mxu0 %v973
        %v984 = vpop.f32.mrf.mxu0
        %v985 = vadd.f32 0.0, %v984
        %v986 = vpop.f32.mrf.mxu0
        %v987 = vadd.f32 0.0, %v986
        %988 = vdwg.mxu0
        %v989 = vadd.f32 %v962, %v985
        %v990 = vadd.f32 %v963, %v987
        %v991 = vmul.f32 %v842, %v675
        %v992 = vmul.f32 %v843, %v675
        %v993 = vpack.c.bf16 %v992, %v991
        %v996 = vunpack.c.l.b16 %v431
        %v997 = vunpack.c.l.b16 %v432
        %v998 = vpack.c.b16 %v997, %v996
        %1000 = vrot.lane.b32.xlu0 %v993, 127
        %v1001 = vpop.permute.xlu0 %1000
        %v1004 = vsel %vm528, %v998, 0
        %1006 = vmatpush.bf16.msra.mxu0 0
        %1007 = vmatpush.bf16.msra.mxu0 0
        %1008 = vmatpush.bf16.msra.mxu0 0
        %1009 = vmatpush.bf16.msra.mxu0 0
        %1010 = vmatpush.bf16.msra.mxu0 0
        %1011 = vmatpush.bf16.msra.mxu0 0
        %1012 = vmatpush.bf16.msra.mxu0 0
        %1013 = vmatpush.bf16.msra.mxu0 %v1001
        %1014 = vmatmul.bf16.gmra.mxu0 %v1004
        %v1015 = vpop.f32.mrf.mxu0
        %v1016 = vadd.f32 0.0, %v1015
        %v1017 = vpop.f32.mrf.mxu0
        %v1018 = vadd.f32 0.0, %v1017
        %1019 = vdwg.mxu0
        %v1020 = vadd.f32 %v989, %v1016
        %v1021 = vadd.f32 %v990, %v1018
        %v1022 = vmul.f32 %v842, %v711
        %v1023 = vmul.f32 %v843, %v711
        %v1024 = vpack.c.bf16 %v1023, %v1022
        %v1027 = vunpack.c.l.b16 %v434
        %v1028 = vunpack.c.l.b16 %v435
        %v1029 = vpack.c.b16 %v1028, %v1027
        %1031 = vrot.lane.b32.xlu0 %v1024, 121
        %v1032 = vpop.permute.xlu0 %1031
        %v1035 = vsel %vm528, %v1029, 0
        %1037 = vmatpush.bf16.msra.mxu0 0
        %1038 = vmatpush.bf16.msra.mxu0 0
        %1039 = vmatpush.bf16.msra.mxu0 0
        %1040 = vmatpush.bf16.msra.mxu0 0
        %1041 = vmatpush.bf16.msra.mxu0 0
        %1042 = vmatpush.bf16.msra.mxu0 0
        %1043 = vmatpush.bf16.msra.mxu0 0
        %1044 = vmatpush.bf16.msra.mxu0 %v1032
        %1045 = vmatmul.bf16.gmra.mxu0 %v1035
        %v1046 = vpop.f32.mrf.mxu0
        %v1047 = vadd.f32 0.0, %v1046
        %v1048 = vpop.f32.mrf.mxu0
        %v1049 = vadd.f32 0.0, %v1048
        %1050 = vdwg.mxu0
        %v1051 = vadd.f32 %v1020, %v1047
        %v1052 = vadd.f32 %v1021, %v1049
        %v1053 = vmul.f32 %v842, %v747
        %v1054 = vmul.f32 %v843, %v747
        %v1055 = vpack.c.bf16 %v1054, %v1053
        %v1058 = vunpack.c.l.b16 %v437
        %v1059 = vunpack.c.l.b16 %v438
        %v1060 = vpack.c.b16 %v1059, %v1058
        %1062 = vrot.lane.b32.xlu0 %v1055, 120
        %v1063 = vpop.permute.xlu0 %1062
        %v1066 = vsel %vm528, %v1060, 0
        %1068 = vmatpush.bf16.msra.mxu0 0
        %1069 = vmatpush.bf16.msra.mxu0 0
        %1070 = vmatpush.bf16.msra.mxu0 0
        %1071 = vmatpush.bf16.msra.mxu0 0
        %1072 = vmatpush.bf16.msra.mxu0 0
        %1073 = vmatpush.bf16.msra.mxu0 0
        %1074 = vmatpush.bf16.msra.mxu0 0
        %1075 = vmatpush.bf16.msra.mxu0 %v1063
        %1076 = vmatmul.bf16.gmra.mxu0 %v1066
        %v1077 = vpop.f32.mrf.mxu0
        %v1078 = vadd.f32 0.0, %v1077
        %v1079 = vpop.f32.mrf.mxu0
        %v1080 = vadd.f32 0.0, %v1079
        %1081 = vdwg.mxu0
        %v1082 = vadd.f32 %v1051, %v1078
        %v1083 = vadd.f32 %v1052, %v1080
        %v1084 = vmul.f32 %v842, %v783
        %v1085 = vmul.f32 %v843, %v783
        %v1086 = vpack.c.bf16 %v1085, %v1084
        %v1089 = vunpack.c.l.b16 %v440
        %v1090 = vunpack.c.l.b16 %v441
        %v1091 = vpack.c.b16 %v1090, %v1089
        %1093 = vrot.lane.b32.xlu0 %v1086, 119
        %v1094 = vpop.permute.xlu0 %1093
        %v1097 = vsel %vm528, %v1091, 0
        %1099 = vmatpush.bf16.msra.mxu0 0
        %1100 = vmatpush.bf16.msra.mxu0 0
        %1101 = vmatpush.bf16.msra.mxu0 0
        %1102 = vmatpush.bf16.msra.mxu0 0
        %1103 = vmatpush.bf16.msra.mxu0 0
        %1104 = vmatpush.bf16.msra.mxu0 0
        %1105 = vmatpush.bf16.msra.mxu0 0
        %1106 = vmatpush.bf16.msra.mxu0 %v1094
        %1107 = vmatmul.bf16.gmra.mxu0 %v1097
        %v1108 = vpop.f32.mrf.mxu0
        %v1109 = vadd.f32 0.0, %v1108
        %v1110 = vpop.f32.mrf.mxu0
        %v1111 = vadd.f32 0.0, %v1110
        %1112 = vdwg.mxu0
        %v1113 = vadd.f32 %v1082, %v1109
        %v1114 = vadd.f32 %v1083, %v1111
        %1116 = vset.pattern.permute.xlu0 0
        %1117 = vperm.xlu0 %1116, %v471
        %v1118 = vpop.permute.xlu0 %1117
        %1121 = vset.pattern.permute.xlu0 0
        %1122 = vperm.xlu0 %1121, %v472
        %v1123 = vpop.permute.xlu0 %1122
        %v1125 = vadd.f32 %v1113, %v1118
        %v1126 = vadd.f32 %v1114, %v1123
        %v1127 = vmax.f32 %v1125, 0.0
        %v1128 = vmax.f32 %v1126, 0.0
        %v1129 = vadd.f32 %v1127, %v830
        %v1130 = vadd.f32 %v1128, %v831
        %1131 = vrot.lane.b32.xlu0 %v1129, 64
        %v1132 = vpop.permute.xlu0 %1131
        %v1133 = vsel %vm490, %v1132, %v1129
        %1134 = vrot.lane.b32.xlu0 %v1130, 64
        %v1135 = vpop.permute.xlu0 %1134
        %v1136 = vsel %vm490, %v1135, %v1130
        %1137 = vrot.lane.b32.xlu0 %v1133, 64
        %v1138 = vpop.permute.xlu0 %1137
        %1139 = vrot.lane.b32.xlu0 %v1136, 64
        %v1140 = vpop.permute.xlu0 %1139
        %v1141 = vsel %vm490, %v1138, %v1129
        %v1142 = vsel %vm490, %v1140, %v1130
        %v1143 = vmul.f32 %v1141, %v506
        %v1144 = vmul.f32 %v1142, %v506
        %v1145 = vpack.c.bf16 %v1144, %v1143
        %v1146 = vmul.f32 %v1141, %v514
        %v1147 = vmul.f32 %v1142, %v514
        %v1148 = vpack.c.bf16 %v1147, %v1146
        %v1151 = vunpack.c.l.b16 %v446
        %v1152 = vunpack.c.l.b16 %v447
        %v1153 = vpack.c.b16 %v1152, %v1151
        %1155 = vrot.lane.b32.xlu0 %v1148, 72
        %v1156 = vpop.permute.xlu0 %1155
        %v1159 = vsel %vm528, %v1153, 0
        %1161 = vmatpush.bf16.msra.mxu0 0
        %1162 = vmatpush.bf16.msra.mxu0 0
        %1163 = vmatpush.bf16.msra.mxu0 0
        %1164 = vmatpush.bf16.msra.mxu0 0
        %1165 = vmatpush.bf16.msra.mxu0 0
        %1166 = vmatpush.bf16.msra.mxu0 0
        %1167 = vmatpush.bf16.msra.mxu0 0
        %1168 = vmatpush.bf16.msra.mxu0 %v1156
        %1169 = vmatmul.bf16.gmra.mxu0 %v1159
        %v1170 = vpop.f32.mrf.mxu0
        %v1171 = vadd.f32 0.0, %v1170
        %v1172 = vpop.f32.mrf.mxu0
        %v1173 = vadd.f32 0.0, %v1172
        %1174 = vdwg.mxu0
        %v1177 = vunpack.c.l.b16 %v443
        %v1178 = vunpack.c.l.b16 %v444
        %v1179 = vpack.c.b16 %v1178, %v1177
        %1181 = vrot.lane.b32.xlu0 %v1145, 73
        %v1182 = vpop.permute.xlu0 %1181
        %v1185 = vsel %vm528, %v1179, 0
        %1187 = vmatpush.bf16.msra.mxu0 0
        %1188 = vmatpush.bf16.msra.mxu0 0
        %1189 = vmatpush.bf16.msra.mxu0 0
        %1190 = vmatpush.bf16.msra.mxu0 0
        %1191 = vmatpush.bf16.msra.mxu0 0
        %1192 = vmatpush.bf16.msra.mxu0 0
        %1193 = vmatpush.bf16.msra.mxu0 0
        %1194 = vmatpush.bf16.msra.mxu0 %v1182
        %1195 = vmatmul.bf16.gmra.mxu0 %v1185
        %v1196 = vpop.f32.mrf.mxu0
        %v1197 = vadd.f32 %v1171, %v1196
        %v1198 = vpop.f32.mrf.mxu0
        %v1199 = vadd.f32 %v1173, %v1198
        %1200 = vdwg.mxu0
        %v1201 = vmul.f32 %v1141, %v575
        %v1202 = vmul.f32 %v1142, %v575
        %v1203 = vpack.c.bf16 %v1202, %v1201
        %v1206 = vunpack.c.l.b16 %v449
        %v1207 = vunpack.c.l.b16 %v450
        %v1208 = vpack.c.b16 %v1207, %v1206
        %1210 = vrot.lane.b32.xlu0 %v1203, 71
        %v1211 = vpop.permute.xlu0 %1210
        %v1214 = vsel %vm528, %v1208, 0
        %1216 = vmatpush.bf16.msra.mxu0 0
        %1217 = vmatpush.bf16.msra.mxu0 0
        %1218 = vmatpush.bf16.msra.mxu0 0
        %1219 = vmatpush.bf16.msra.mxu0 0
        %1220 = vmatpush.bf16.msra.mxu0 0
        %1221 = vmatpush.bf16.msra.mxu0 0
        %1222 = vmatpush.bf16.msra.mxu0 0
        %1223 = vmatpush.bf16.msra.mxu0 %v1211
        %1224 = vmatmul.bf16.gmra.mxu0 %v1214
        %v1225 = vpop.f32.mrf.mxu0
        %v1226 = vadd.f32 0.0, %v1225
        %v1227 = vpop.f32.mrf.mxu0
        %v1228 = vadd.f32 0.0, %v1227
        %1229 = vdwg.mxu0
        %v1230 = vadd.f32 %v1197, %v1226
        %v1231 = vadd.f32 %v1199, %v1228
        %v1232 = vmul.f32 %v1141, %v611
        %v1233 = vmul.f32 %v1142, %v611
        %v1234 = vpack.c.bf16 %v1233, %v1232
        %v1237 = vunpack.c.l.b16 %v452
        %v1238 = vunpack.c.l.b16 %v453
        %v1239 = vpack.c.b16 %v1238, %v1237
        %1241 = vrot.lane.b32.xlu0 %v1234, 65
        %v1242 = vpop.permute.xlu0 %1241
        %v1245 = vsel %vm528, %v1239, 0
        %1247 = vmatpush.bf16.msra.mxu0 0
        %1248 = vmatpush.bf16.msra.mxu0 0
        %1249 = vmatpush.bf16.msra.mxu0 0
        %1250 = vmatpush.bf16.msra.mxu0 0
        %1251 = vmatpush.bf16.msra.mxu0 0
        %1252 = vmatpush.bf16.msra.mxu0 0
        %1253 = vmatpush.bf16.msra.mxu0 0
        %1254 = vmatpush.bf16.msra.mxu0 %v1242
        %1255 = vmatmul.bf16.gmra.mxu0 %v1245
        %v1256 = vpop.f32.mrf.mxu0
        %v1257 = vadd.f32 0.0, %v1256
        %v1258 = vpop.f32.mrf.mxu0
        %v1259 = vadd.f32 0.0, %v1258
        %1260 = vdwg.mxu0
        %v1261 = vadd.f32 %v1230, %v1257
        %v1262 = vadd.f32 %v1231, %v1259
        %v1263 = vmul.f32 %v1129, %v644
        %v1264 = vmul.f32 %v1130, %v644
        %v1265 = vpack.c.bf16 %v1264, %v1263
        %v1268 = vunpack.c.l.b16 %v455
        %v1269 = vunpack.c.l.b16 %v456
        %v1270 = vpack.c.b16 %v1269, %v1268
        %v1272 = vsel %vm528, %v1270, 0
        %1274 = vmatpush.bf16.msra.mxu0 0
        %1275 = vmatpush.bf16.msra.mxu0 0
        %1276 = vmatpush.bf16.msra.mxu0 0
        %1277 = vmatpush.bf16.msra.mxu0 0
        %1278 = vmatpush.bf16.msra.mxu0 0
        %1279 = vmatpush.bf16.msra.mxu0 0
        %1280 = vmatpush.bf16.msra.mxu0 0
        %1281 = vmatpush.bf16.msra.mxu0 %v1265
        %1282 = vmatmul.bf16.gmra.mxu0 %v1272
        %v1283 = vpop.f32.mrf.mxu0
        %v1284 = vadd.f32 0.0, %v1283
        %v1285 = vpop.f32.mrf.mxu0
        %v1286 = vadd.f32 0.0, %v1285
        %1287 = vdwg.mxu0
        %v1288 = vadd.f32 %v1261, %v1284
        %v1289 = vadd.f32 %v1262, %v1286
        %v1290 = vmul.f32 %v1141, %v675
        %v1291 = vmul.f32 %v1142, %v675
        %v1292 = vpack.c.bf16 %v1291, %v1290
        %v1295 = vunpack.c.l.b16 %v458
        %v1296 = vunpack.c.l.b16 %v459
        %v1297 = vpack.c.b16 %v1296, %v1295
        %1299 = vrot.lane.b32.xlu0 %v1292, 127
        %v1300 = vpop.permute.xlu0 %1299
        %v1303 = vsel %vm528, %v1297, 0
        %1305 = vmatpush.bf16.msra.mxu0 0
        %1306 = vmatpush.bf16.msra.mxu0 0
        %1307 = vmatpush.bf16.msra.mxu0 0
        %1308 = vmatpush.bf16.msra.mxu0 0
        %1309 = vmatpush.bf16.msra.mxu0 0
        %1310 = vmatpush.bf16.msra.mxu0 0
        %1311 = vmatpush.bf16.msra.mxu0 0
        %1312 = vmatpush.bf16.msra.mxu0 %v1300
        %1313 = vmatmul.bf16.gmra.mxu0 %v1303
        %v1314 = vpop.f32.mrf.mxu0
        %v1315 = vadd.f32 0.0, %v1314
        %v1316 = vpop.f32.mrf.mxu0
        %v1317 = vadd.f32 0.0, %v1316
        %1318 = vdwg.mxu0
        %v1319 = vadd.f32 %v1288, %v1315
        %v1320 = vadd.f32 %v1289, %v1317
        %v1321 = vmul.f32 %v1141, %v711
        %v1322 = vmul.f32 %v1142, %v711
        %v1323 = vpack.c.bf16 %v1322, %v1321
        %v1326 = vunpack.c.l.b16 %v461
        %v1327 = vunpack.c.l.b16 %v462
        %v1328 = vpack.c.b16 %v1327, %v1326
        %1330 = vrot.lane.b32.xlu0 %v1323, 121
        %v1331 = vpop.permute.xlu0 %1330
        %v1334 = vsel %vm528, %v1328, 0
        %1336 = vmatpush.bf16.msra.mxu0 0
        %1337 = vmatpush.bf16.msra.mxu0 0
        %1338 = vmatpush.bf16.msra.mxu0 0
        %1339 = vmatpush.bf16.msra.mxu0 0
        %1340 = vmatpush.bf16.msra.mxu0 0
        %1341 = vmatpush.bf16.msra.mxu0 0
        %1342 = vmatpush.bf16.msra.mxu0 0
        %1343 = vmatpush.bf16.msra.mxu0 %v1331
        %1344 = vmatmul.bf16.gmra.mxu0 %v1334
        %v1345 = vpop.f32.mrf.mxu0
        %v1346 = vadd.f32 0.0, %v1345
        %v1347 = vpop.f32.mrf.mxu0
        %v1348 = vadd.f32 0.0, %v1347
        %1349 = vdwg.mxu0
        %v1350 = vadd.f32 %v1319, %v1346
        %v1351 = vadd.f32 %v1320, %v1348
        %v1352 = vmul.f32 %v1141, %v747
        %v1353 = vmul.f32 %v1142, %v747
        %v1354 = vpack.c.bf16 %v1353, %v1352
        %v1357 = vunpack.c.l.b16 %v464
        %v1358 = vunpack.c.l.b16 %v465
        %v1359 = vpack.c.b16 %v1358, %v1357
        %1361 = vrot.lane.b32.xlu0 %v1354, 120
        %v1362 = vpop.permute.xlu0 %1361
        %v1365 = vsel %vm528, %v1359, 0
        %1367 = vmatpush.bf16.msra.mxu0 0
        %1368 = vmatpush.bf16.msra.mxu0 0
        %1369 = vmatpush.bf16.msra.mxu0 0
        %1370 = vmatpush.bf16.msra.mxu0 0
        %1371 = vmatpush.bf16.msra.mxu0 0
        %1372 = vmatpush.bf16.msra.mxu0 0
        %1373 = vmatpush.bf16.msra.mxu0 0
        %1374 = vmatpush.bf16.msra.mxu0 %v1362
        %1375 = vmatmul.bf16.gmra.mxu0 %v1365
        %v1376 = vpop.f32.mrf.mxu0
        %v1377 = vadd.f32 0.0, %v1376
        %v1378 = vpop.f32.mrf.mxu0
        %v1379 = vadd.f32 0.0, %v1378
        %1380 = vdwg.mxu0
        %v1381 = vadd.f32 %v1350, %v1377
        %v1382 = vadd.f32 %v1351, %v1379
        %v1383 = vmul.f32 %v1141, %v783
        %v1384 = vmul.f32 %v1142, %v783
        %v1385 = vpack.c.bf16 %v1384, %v1383
        %v1388 = vunpack.c.l.b16 %v467
        %v1389 = vunpack.c.l.b16 %v468
        %v1390 = vpack.c.b16 %v1389, %v1388
        %1392 = vrot.lane.b32.xlu0 %v1385, 119
        %v1393 = vpop.permute.xlu0 %1392
        %v1396 = vsel %vm528, %v1390, 0
        %1398 = vmatpush.bf16.msra.mxu0 0
        %1399 = vmatpush.bf16.msra.mxu0 0
        %1400 = vmatpush.bf16.msra.mxu0 0
        %1401 = vmatpush.bf16.msra.mxu0 0
        %1402 = vmatpush.bf16.msra.mxu0 0
        %1403 = vmatpush.bf16.msra.mxu0 0
        %1404 = vmatpush.bf16.msra.mxu0 0
        %1405 = vmatpush.bf16.msra.mxu0 %v1393
        %1406 = vmatmul.bf16.gmra.mxu0 %v1396
        %v1407 = vpop.f32.mrf.mxu0
        %v1408 = vadd.f32 0.0, %v1407
        %v1409 = vpop.f32.mrf.mxu0
        %v1410 = vadd.f32 0.0, %v1409
        %1411 = vdwg.mxu0
        %v1412 = vadd.f32 %v1381, %v1408
        %v1413 = vadd.f32 %v1382, %v1410
        %1415 = vset.pattern.permute.xlu0 0
        %1416 = vperm.xlu0 %1415, %v473
        %v1417 = vpop.permute.xlu0 %1416
        %1420 = vset.pattern.permute.xlu0 0
        %1421 = vperm.xlu0 %1420, %v474
        %v1422 = vpop.permute.xlu0 %1421
        %v1424 = vadd.f32 %v1412, %v1417
        %v1425 = vadd.f32 %v1413, %v1422
        %v1426 = vmax.f32 %v1424, 0.0
        %v1427 = vmax.f32 %v1425, 0.0
        %v1428 = vadd.f32 %v1426, %v1129
        %v1429 = vadd.f32 %v1427, %v1130
        %v1430 = vpack.c.bf16 %v1429, %v1428
        %1432 = vset.pattern.permute.xlu0 0
        %1433 = vperm.xlu0 %1432, %v485
        %v1434 = vpop.permute.xlu0 %1433
        %v1437 = vsel %vm528, %v484, 0
        %1439 = vmatpush.bf16.msra.mxu0 0
        %1440 = vmatpush.bf16.msra.mxu0 0
        %1441 = vmatpush.bf16.msra.mxu0 0
        %1442 = vmatpush.bf16.msra.mxu0 0
        %1443 = vmatpush.bf16.msra.mxu0 0
        %1444 = vmatpush.bf16.msra.mxu0 0
        %1445 = vmatpush.bf16.msra.mxu0 0
        %1446 = vmatpush.bf16.msra.mxu0 %v1430
        %1447 = vmatmul.bf16.gmra.mxu0 %v1437
        %v1448 = vpop.f32.mrf.mxu0
        %v1449 = vadd.f32 %v1434, %v1448
        %v1450 = vpop.f32.mrf.mxu0
        %1451 = vdwg.mxu0
        %v1452 = vmax.f32 %v1449, 0.0
        %v1453 = vpack.c.bf16 %v1452, %v1452
        %1455 = vset.pattern.permute.xlu0 0
        %1456 = vperm.xlu0 %1455, %v487
        %v1457 = vpop.permute.xlu0 %1456
        %v1459 = vperm.slane %v1457, 0
        %vm1460 = vcmask 15360
        %v1462 = vsel %vm1460, %v486, 0
        %vm1464 = vcmask 1040384
        %v1466 = vsel %vm1464, %v1453, 0
        %1468 = vmatpush.bf16.msra.mxu0 0
        %1469 = vmatpush.bf16.msra.mxu0 0
        %1470 = vmatpush.bf16.msra.mxu0 0
        %1471 = vmatpush.bf16.msra.mxu0 0
        %1472 = vmatpush.bf16.msra.mxu0 0
        %1473 = vmatpush.bf16.msra.mxu0 0
        %1474 = vmatpush.bf16.msra.mxu0 0
        %1475 = vmatpush.bf16.msra.mxu0 %v1466
        %1476 = vmatmul.bf16.gmra.mxu0 %v1462
        %v1477 = vpop.f32.mrf.mxu0
        %v1478 = vadd.f32 %v1459, %v1477
        %v1479 = vpop.f32.mrf.mxu0
        %1480 = vdwg.mxu0
        %v1481 = vxor.u32 %v1478, 2147483648
        %v1482 = vmul.f32 %v1481, 1.442695
        %v1483 = vpow.pop %v1482
        %v1484 = vadd.f32 %v1483, 1.0
        %v1485 = vrcp.pop %v1484
        %v1486 = vmul.f32 %v1484, %v1485
        %v1487 = vsub.f32 1.0, %v1486
        %v1488 = vmul.f32 %v1485, %v1487
        %v1489 = vadd.f32 %v1485, %v1488
        %vm1490 = vweird.f32 %v1484
        %vm1491 = vweird.f32 %v1485
        %vm1492 = vmor %vm1490, %vm1491
        %v1493 = vsel %vm1492, %v1485, %v1489
        %v1494 = vand.u32 2147483647, %v1484
        %vm1495 = vcmp.eq.f32.partialorder %v1494, 8.507059e+37
        %v1496 = vand.u32 %v1484, 2147483648
        %v1497 = vor.u32 1.1754944e-38, %v1496
        %v1498 = vsel %vm1495, %v1497, %v1493
        %v1499 = vmul.f32 1.0, %v1498
        %v1500 = vperm.slane %v1499, 0
        %v1501 = vmul.f32 %v1428, %v1500
        %v1502 = vmul.f32 %v1429, %v1500
        %vm1503 = vcmask 523264
        %v1504 = vsel %vm1503, %v1501, 0.0
        %1505 = vadd.xlane.f32.xlu0 %v1504
        %v1506 = vpop.xlane.xlu0 %1505
        %v1507 = vsel %vm1503, %v1502, 0.0
        %1508 = vadd.xlane.f32.xlu0 %v1507
        %v1509 = vpop.xlane.xlu0 %1508
        %v1510 = vrcp.pop 64.0
        %v1511 = vmul.f32 64.0, %v1510
        %v1512 = vsub.f32 1.0, %v1511
        %v1513 = vmul.f32 %v1510, %v1512
        %v1514 = vadd.f32 %v1510, %v1513
        %vm1515 = vweird.f32 %v1510
        %v1516 = vsel %vm1515, %v1510, %v1514
        %v1517 = vmul.f32 %v1506, %v1516
        %v1518 = vmul.f32 %v1509, %v1516
        %s1519 = scalar_lea.vmem %s335, 16 [#allocation3]
        %v1520 = vld [vmem:[%s1519] sm:$0xff]
        %v1521 = vld [vmem:[%s1519 + $0x8] sm:$0xff]
        %1522 = vrot.lane.b32.xlu0 %v1520, 64
        %v1523 = vpop.permute.xlu0 %1522
        %v1524 = vsel %vm490, %v1523, %v1520
        %1525 = vrot.lane.b32.xlu0 %v1521, 64
        %v1526 = vpop.permute.xlu0 %1525
        %v1527 = vsel %vm490, %v1526, %v1521
        %1528 = vrot.lane.b32.xlu0 %v1524, 64
        %v1529 = vpop.permute.xlu0 %1528
        %1530 = vrot.lane.b32.xlu0 %v1527, 64
        %v1531 = vpop.permute.xlu0 %1530
        %v1532 = vsel %vm490, %v1529, %v1520
        %v1533 = vsel %vm490, %v1531, %v1521
        %v1534 = vmul.f32 %v1532, %v506
        %v1535 = vmul.f32 %v1533, %v506
        %v1536 = vpack.c.bf16 %v1535, %v1534
        %v1537 = vmul.f32 %v1532, %v514
        %v1538 = vmul.f32 %v1533, %v514
        %v1539 = vpack.c.bf16 %v1538, %v1537
        %1541 = vrot.lane.b32.xlu0 %v1539, 72
        %v1542 = vpop.permute.xlu0 %1541
        %1544 = vmatpush.bf16.msra.mxu0 0
        %1545 = vmatpush.bf16.msra.mxu0 0
        %1546 = vmatpush.bf16.msra.mxu0 0
        %1547 = vmatpush.bf16.msra.mxu0 0
        %1548 = vmatpush.bf16.msra.mxu0 0
        %1549 = vmatpush.bf16.msra.mxu0 0
        %1550 = vmatpush.bf16.msra.mxu0 0
        %1551 = vmatpush.bf16.msra.mxu0 %v1542
        %1552 = vmatmul.bf16.gmra.mxu0 %v530
        %v1553 = vpop.f32.mrf.mxu0
        %v1554 = vadd.f32 0.0, %v1553
        %v1555 = vpop.f32.mrf.mxu0
        %v1556 = vadd.f32 0.0, %v1555
        %1557 = vdwg.mxu0
        %1559 = vrot.lane.b32.xlu0 %v1536, 73
        %v1560 = vpop.permute.xlu0 %1559
        %1562 = vmatpush.bf16.msra.mxu0 0
        %1563 = vmatpush.bf16.msra.mxu0 0
        %1564 = vmatpush.bf16.msra.mxu0 0
        %1565 = vmatpush.bf16.msra.mxu0 0
        %1566 = vmatpush.bf16.msra.mxu0 0
        %1567 = vmatpush.bf16.msra.mxu0 0
        %1568 = vmatpush.bf16.msra.mxu0 0
        %1569 = vmatpush.bf16.msra.mxu0 %v1560
        %1570 = vmatmul.bf16.gmra.mxu0 %v556
        %v1571 = vpop.f32.mrf.mxu0
        %v1572 = vadd.f32 %v1554, %v1571
        %v1573 = vpop.f32.mrf.mxu0
        %v1574 = vadd.f32 %v1556, %v1573
        %1575 = vdwg.mxu0
        %v1576 = vmul.f32 %v1532, %v575
        %v1577 = vmul.f32 %v1533, %v575
        %v1578 = vpack.c.bf16 %v1577, %v1576
        %1580 = vrot.lane.b32.xlu0 %v1578, 71
        %v1581 = vpop.permute.xlu0 %1580
        %1583 = vmatpush.bf16.msra.mxu0 0
        %1584 = vmatpush.bf16.msra.mxu0 0
        %1585 = vmatpush.bf16.msra.mxu0 0
        %1586 = vmatpush.bf16.msra.mxu0 0
        %1587 = vmatpush.bf16.msra.mxu0 0
        %1588 = vmatpush.bf16.msra.mxu0 0
        %1589 = vmatpush.bf16.msra.mxu0 0
        %1590 = vmatpush.bf16.msra.mxu0 %v1581
        %1591 = vmatmul.bf16.gmra.mxu0 %v590
        %v1592 = vpop.f32.mrf.mxu0
        %v1593 = vadd.f32 0.0, %v1592
        %v1594 = vpop.f32.mrf.mxu0
        %v1595 = vadd.f32 0.0, %v1594
        %1596 = vdwg.mxu0
        %v1597 = vadd.f32 %v1572, %v1593
        %v1598 = vadd.f32 %v1574, %v1595
        %v1599 = vmul.f32 %v1532, %v611
        %v1600 = vmul.f32 %v1533, %v611
        %v1601 = vpack.c.bf16 %v1600, %v1599
        %1603 = vrot.lane.b32.xlu0 %v1601, 65
        %v1604 = vpop.permute.xlu0 %1603
        %1606 = vmatpush.bf16.msra.mxu0 0
        %1607 = vmatpush.bf16.msra.mxu0 0
        %1608 = vmatpush.bf16.msra.mxu0 0
        %1609 = vmatpush.bf16.msra.mxu0 0
        %1610 = vmatpush.bf16.msra.mxu0 0
        %1611 = vmatpush.bf16.msra.mxu0 0
        %1612 = vmatpush.bf16.msra.mxu0 0
        %1613 = vmatpush.bf16.msra.mxu0 %v1604
        %1614 = vmatmul.bf16.gmra.mxu0 %v626
        %v1615 = vpop.f32.mrf.mxu0
        %v1616 = vadd.f32 0.0, %v1615
        %v1617 = vpop.f32.mrf.mxu0
        %v1618 = vadd.f32 0.0, %v1617
        %1619 = vdwg.mxu0
        %v1620 = vadd.f32 %v1597, %v1616
        %v1621 = vadd.f32 %v1598, %v1618
        %v1622 = vmul.f32 %v1520, %v644
        %v1623 = vmul.f32 %v1521, %v644
        %v1624 = vpack.c.bf16 %v1623, %v1622
        %1625 = vmatpush.bf16.msra.mxu0 0
        %1626 = vmatpush.bf16.msra.mxu0 0
        %1627 = vmatpush.bf16.msra.mxu0 0
        %1628 = vmatpush.bf16.msra.mxu0 0
        %1629 = vmatpush.bf16.msra.mxu0 0
        %1630 = vmatpush.bf16.msra.mxu0 0
        %1631 = vmatpush.bf16.msra.mxu0 0
        %1632 = vmatpush.bf16.msra.mxu0 %v1624
        %1633 = vmatmul.bf16.gmra.mxu0 %v654
        %v1634 = vpop.f32.mrf.mxu0
        %v1635 = vadd.f32 0.0, %v1634
        %v1636 = vpop.f32.mrf.mxu0
        %v1637 = vadd.f32 0.0, %v1636
        %1638 = vdwg.mxu0
        %v1639 = vadd.f32 %v1620, %v1635
        %v1640 = vadd.f32 %v1621, %v1637
        %v1641 = vmul.f32 %v1532, %v675
        %v1642 = vmul.f32 %v1533, %v675
        %v1643 = vpack.c.bf16 %v1642, %v1641
        %1645 = vrot.lane.b32.xlu0 %v1643, 127
        %v1646 = vpop.permute.xlu0 %1645
        %1648 = vmatpush.bf16.msra.mxu0 0
        %1649 = vmatpush.bf16.msra.mxu0 0
        %1650 = vmatpush.bf16.msra.mxu0 0
        %1651 = vmatpush.bf16.msra.mxu0 0
        %1652 = vmatpush.bf16.msra.mxu0 0
        %1653 = vmatpush.bf16.msra.mxu0 0
        %1654 = vmatpush.bf16.msra.mxu0 0
        %1655 = vmatpush.bf16.msra.mxu0 %v1646
        %1656 = vmatmul.bf16.gmra.mxu0 %v690
        %v1657 = vpop.f32.mrf.mxu0
        %v1658 = vadd.f32 0.0, %v1657
        %v1659 = vpop.f32.mrf.mxu0
        %v1660 = vadd.f32 0.0, %v1659
        %1661 = vdwg.mxu0
        %v1662 = vadd.f32 %v1639, %v1658
        %v1663 = vadd.f32 %v1640, %v1660
        %v1664 = vmul.f32 %v1532, %v711
        %v1665 = vmul.f32 %v1533, %v711
        %v1666 = vpack.c.bf16 %v1665, %v1664
        %1668 = vrot.lane.b32.xlu0 %v1666, 121
        %v1669 = vpop.permute.xlu0 %1668
        %1671 = vmatpush.bf16.msra.mxu0 0
        %1672 = vmatpush.bf16.msra.mxu0 0
        %1673 = vmatpush.bf16.msra.mxu0 0
        %1674 = vmatpush.bf16.msra.mxu0 0
        %1675 = vmatpush.bf16.msra.mxu0 0
        %1676 = vmatpush.bf16.msra.mxu0 0
        %1677 = vmatpush.bf16.msra.mxu0 0
        %1678 = vmatpush.bf16.msra.mxu0 %v1669
        %1679 = vmatmul.bf16.gmra.mxu0 %v726
        %v1680 = vpop.f32.mrf.mxu0
        %v1681 = vadd.f32 0.0, %v1680
        %v1682 = vpop.f32.mrf.mxu0
        %v1683 = vadd.f32 0.0, %v1682
        %1684 = vdwg.mxu0
        %v1685 = vadd.f32 %v1662, %v1681
        %v1686 = vadd.f32 %v1663, %v1683
        %v1687 = vmul.f32 %v1532, %v747
        %v1688 = vmul.f32 %v1533, %v747
        %v1689 = vpack.c.bf16 %v1688, %v1687
        %1691 = vrot.lane.b32.xlu0 %v1689, 120
        %v1692 = vpop.permute.xlu0 %1691
        %1694 = vmatpush.bf16.msra.mxu0 0
        %1695 = vmatpush.bf16.msra.mxu0 0
        %1696 = vmatpush.bf16.msra.mxu0 0
        %1697 = vmatpush.bf16.msra.mxu0 0
        %1698 = vmatpush.bf16.msra.mxu0 0
        %1699 = vmatpush.bf16.msra.mxu0 0
        %1700 = vmatpush.bf16.msra.mxu0 0
        %1701 = vmatpush.bf16.msra.mxu0 %v1692
        %1702 = vmatmul.bf16.gmra.mxu0 %v762
        %v1703 = vpop.f32.mrf.mxu0
        %v1704 = vadd.f32 0.0, %v1703
        %v1705 = vpop.f32.mrf.mxu0
        %v1706 = vadd.f32 0.0, %v1705
        %1707 = vdwg.mxu0
        %v1708 = vadd.f32 %v1685, %v1704
        %v1709 = vadd.f32 %v1686, %v1706
        %v1710 = vmul.f32 %v1532, %v783
        %v1711 = vmul.f32 %v1533, %v783
        %v1712 = vpack.c.bf16 %v1711, %v1710
        %1714 = vrot.lane.b32.xlu0 %v1712, 119
        %v1715 = vpop.permute.xlu0 %1714
        %1717 = vmatpush.bf16.msra.mxu0 0
        %1718 = vmatpush.bf16.msra.mxu0 0
        %1719 = vmatpush.bf16.msra.mxu0 0
        %1720 = vmatpush.bf16.msra.mxu0 0
        %1721 = vmatpush.bf16.msra.mxu0 0
        %1722 = vmatpush.bf16.msra.mxu0 0
        %1723 = vmatpush.bf16.msra.mxu0 0
        %1724 = vmatpush.bf16.msra.mxu0 %v1715
        %1725 = vmatmul.bf16.gmra.mxu0 %v798
        %v1726 = vpop.f32.mrf.mxu0
        %v1727 = vadd.f32 0.0, %v1726
        %v1728 = vpop.f32.mrf.mxu0
        %v1729 = vadd.f32 0.0, %v1728
        %1730 = vdwg.mxu0
        %v1731 = vadd.f32 %v1708, %v1727
        %v1732 = vadd.f32 %v1709, %v1729
        %v1733 = vadd.f32 %v1731, %v819
        %v1734 = vadd.f32 %v1732, %v824
        %v1735 = vmax.f32 %v1733, 0.0
        %v1736 = vmax.f32 %v1734, 0.0
        %v1737 = vadd.f32 %v1735, %v1520
        %v1738 = vadd.f32 %v1736, %v1521
        %1739 = vrot.lane.b32.xlu0 %v1737, 64
        %v1740 = vpop.permute.xlu0 %1739
        %v1741 = vsel %vm490, %v1740, %v1737
        %1742 = vrot.lane.b32.xlu0 %v1738, 64
        %v1743 = vpop.permute.xlu0 %1742
        %v1744 = vsel %vm490, %v1743, %v1738
        %1745 = vrot.lane.b32.xlu0 %v1741, 64
        %v1746 = vpop.permute.xlu0 %1745
        %1747 = vrot.lane.b32.xlu0 %v1744, 64
        %v1748 = vpop.permute.xlu0 %1747
        %v1749 = vsel %vm490, %v1746, %v1737
        %v1750 = vsel %vm490, %v1748, %v1738
        %v1751 = vmul.f32 %v1749, %v506
        %v1752 = vmul.f32 %v1750, %v506
        %v1753 = vpack.c.bf16 %v1752, %v1751
        %v1754 = vmul.f32 %v1749, %v514
        %v1755 = vmul.f32 %v1750, %v514
        %v1756 = vpack.c.bf16 %v1755, %v1754
        %1758 = vrot.lane.b32.xlu0 %v1756, 72
        %v1759 = vpop.permute.xlu0 %1758
        %1761 = vmatpush.bf16.msra.mxu0 0
        %1762 = vmatpush.bf16.msra.mxu0 0
        %1763 = vmatpush.bf16.msra.mxu0 0
        %1764 = vmatpush.bf16.msra.mxu0 0
        %1765 = vmatpush.bf16.msra.mxu0 0
        %1766 = vmatpush.bf16.msra.mxu0 0
        %1767 = vmatpush.bf16.msra.mxu0 0
        %1768 = vmatpush.bf16.msra.mxu0 %v1759
        %1769 = vmatmul.bf16.gmra.mxu0 %v860
        %v1770 = vpop.f32.mrf.mxu0
        %v1771 = vadd.f32 0.0, %v1770
        %v1772 = vpop.f32.mrf.mxu0
        %v1773 = vadd.f32 0.0, %v1772
        %1774 = vdwg.mxu0
        %1776 = vrot.lane.b32.xlu0 %v1753, 73
        %v1777 = vpop.permute.xlu0 %1776
        %1779 = vmatpush.bf16.msra.mxu0 0
        %1780 = vmatpush.bf16.msra.mxu0 0
        %1781 = vmatpush.bf16.msra.mxu0 0
        %1782 = vmatpush.bf16.msra.mxu0 0
        %1783 = vmatpush.bf16.msra.mxu0 0
        %1784 = vmatpush.bf16.msra.mxu0 0
        %1785 = vmatpush.bf16.msra.mxu0 0
        %1786 = vmatpush.bf16.msra.mxu0 %v1777
        %1787 = vmatmul.bf16.gmra.mxu0 %v886
        %v1788 = vpop.f32.mrf.mxu0
        %v1789 = vadd.f32 %v1771, %v1788
        %v1790 = vpop.f32.mrf.mxu0
        %v1791 = vadd.f32 %v1773, %v1790
        %1792 = vdwg.mxu0
        %v1793 = vmul.f32 %v1749, %v575
        %v1794 = vmul.f32 %v1750, %v575
        %v1795 = vpack.c.bf16 %v1794, %v1793
        %1797 = vrot.lane.b32.xlu0 %v1795, 71
        %v1798 = vpop.permute.xlu0 %1797
        %1800 = vmatpush.bf16.msra.mxu0 0
        %1801 = vmatpush.bf16.msra.mxu0 0
        %1802 = vmatpush.bf16.msra.mxu0 0
        %1803 = vmatpush.bf16.msra.mxu0 0
        %1804 = vmatpush.bf16.msra.mxu0 0
        %1805 = vmatpush.bf16.msra.mxu0 0
        %1806 = vmatpush.bf16.msra.mxu0 0
        %1807 = vmatpush.bf16.msra.mxu0 %v1798
        %1808 = vmatmul.bf16.gmra.mxu0 %v915
        %v1809 = vpop.f32.mrf.mxu0
        %v1810 = vadd.f32 0.0, %v1809
        %v1811 = vpop.f32.mrf.mxu0
        %v1812 = vadd.f32 0.0, %v1811
        %1813 = vdwg.mxu0
        %v1814 = vadd.f32 %v1789, %v1810
        %v1815 = vadd.f32 %v1791, %v1812
        %v1816 = vmul.f32 %v1749, %v611
        %v1817 = vmul.f32 %v1750, %v611
        %v1818 = vpack.c.bf16 %v1817, %v1816
        %1820 = vrot.lane.b32.xlu0 %v1818, 65
        %v1821 = vpop.permute.xlu0 %1820
        %1823 = vmatpush.bf16.msra.mxu0 0
        %1824 = vmatpush.bf16.msra.mxu0 0
        %1825 = vmatpush.bf16.msra.mxu0 0
        %1826 = vmatpush.bf16.msra.mxu0 0
        %1827 = vmatpush.bf16.msra.mxu0 0
        %1828 = vmatpush.bf16.msra.mxu0 0
        %1829 = vmatpush.bf16.msra.mxu0 0
        %1830 = vmatpush.bf16.msra.mxu0 %v1821
        %1831 = vmatmul.bf16.gmra.mxu0 %v946
        %v1832 = vpop.f32.mrf.mxu0
        %v1833 = vadd.f32 0.0, %v1832
        %v1834 = vpop.f32.mrf.mxu0
        %v1835 = vadd.f32 0.0, %v1834
        %1836 = vdwg.mxu0
        %v1837 = vadd.f32 %v1814, %v1833
        %v1838 = vadd.f32 %v1815, %v1835
        %v1839 = vmul.f32 %v1737, %v644
        %v1840 = vmul.f32 %v1738, %v644
        %v1841 = vpack.c.bf16 %v1840, %v1839
        %1842 = vmatpush.bf16.msra.mxu0 0
        %1843 = vmatpush.bf16.msra.mxu0 0
        %1844 = vmatpush.bf16.msra.mxu0 0
        %1845 = vmatpush.bf16.msra.mxu0 0
        %1846 = vmatpush.bf16.msra.mxu0 0
        %1847 = vmatpush.bf16.msra.mxu0 0
        %1848 = vmatpush.bf16.msra.mxu0 0
        %1849 = vmatpush.bf16.msra.mxu0 %v1841
        %1850 = vmatmul.bf16.gmra.mxu0 %v973
        %v1851 = vpop.f32.mrf.mxu0
        %v1852 = vadd.f32 0.0, %v1851
        %v1853 = vpop.f32.mrf.mxu0
        %v1854 = vadd.f32 0.0, %v1853
        %1855 = vdwg.mxu0
        %v1856 = vadd.f32 %v1837, %v1852
        %v1857 = vadd.f32 %v1838, %v1854
        %v1858 = vmul.f32 %v1749, %v675
        %v1859 = vmul.f32 %v1750, %v675
        %v1860 = vpack.c.bf16 %v1859, %v1858
        %1862 = vrot.lane.b32.xlu0 %v1860, 127
        %v1863 = vpop.permute.xlu0 %1862
        %1865 = vmatpush.bf16.msra.mxu0 0
        %1866 = vmatpush.bf16.msra.mxu0 0
        %1867 = vmatpush.bf16.msra.mxu0 0
        %1868 = vmatpush.bf16.msra.mxu0 0
        %1869 = vmatpush.bf16.msra.mxu0 0
        %1870 = vmatpush.bf16.msra.mxu0 0
        %1871 = vmatpush.bf16.msra.mxu0 0
        %1872 = vmatpush.bf16.msra.mxu0 %v1863
        %1873 = vmatmul.bf16.gmra.mxu0 %v1004
        %v1874 = vpop.f32.mrf.mxu0
        %v1875 = vadd.f32 0.0, %v1874
        %v1876 = vpop.f32.mrf.mxu0
        %v1877 = vadd.f32 0.0, %v1876
        %1878 = vdwg.mxu0
        %v1879 = vadd.f32 %v1856, %v1875
        %v1880 = vadd.f32 %v1857, %v1877
        %v1881 = vmul.f32 %v1749, %v711
        %v1882 = vmul.f32 %v1750, %v711
        %v1883 = vpack.c.bf16 %v1882, %v1881
        %1885 = vrot.lane.b32.xlu0 %v1883, 121
        %v1886 = vpop.permute.xlu0 %1885
        %1888 = vmatpush.bf16.msra.mxu0 0
        %1889 = vmatpush.bf16.msra.mxu0 0
        %1890 = vmatpush.bf16.msra.mxu0 0
        %1891 = vmatpush.bf16.msra.mxu0 0
        %1892 = vmatpush.bf16.msra.mxu0 0
        %1893 = vmatpush.bf16.msra.mxu0 0
        %1894 = vmatpush.bf16.msra.mxu0 0
        %1895 = vmatpush.bf16.msra.mxu0 %v1886
        %1896 = vmatmul.bf16.gmra.mxu0 %v1035
        %v1897 = vpop.f32.mrf.mxu0
        %v1898 = vadd.f32 0.0, %v1897
        %v1899 = vpop.f32.mrf.mxu0
        %v1900 = vadd.f32 0.0, %v1899
        %1901 = vdwg.mxu0
        %v1902 = vadd.f32 %v1879, %v1898
        %v1903 = vadd.f32 %v1880, %v1900
        %v1904 = vmul.f32 %v1749, %v747
        %v1905 = vmul.f32 %v1750, %v747
        %v1906 = vpack.c.bf16 %v1905, %v1904
        %1908 = vrot.lane.b32.xlu0 %v1906, 120
        %v1909 = vpop.permute.xlu0 %1908
        %1911 = vmatpush.bf16.msra.mxu0 0
        %1912 = vmatpush.bf16.msra.mxu0 0
        %1913 = vmatpush.bf16.msra.mxu0 0
        %1914 = vmatpush.bf16.msra.mxu0 0
        %1915 = vmatpush.bf16.msra.mxu0 0
        %1916 = vmatpush.bf16.msra.mxu0 0
        %1917 = vmatpush.bf16.msra.mxu0 0
        %1918 = vmatpush.bf16.msra.mxu0 %v1909
        %1919 = vmatmul.bf16.gmra.mxu0 %v1066
        %v1920 = vpop.f32.mrf.mxu0
        %v1921 = vadd.f32 0.0, %v1920
        %v1922 = vpop.f32.mrf.mxu0
        %v1923 = vadd.f32 0.0, %v1922
        %1924 = vdwg.mxu0
        %v1925 = vadd.f32 %v1902, %v1921
        %v1926 = vadd.f32 %v1903, %v1923
        %v1927 = vmul.f32 %v1749, %v783
        %v1928 = vmul.f32 %v1750, %v783
        %v1929 = vpack.c.bf16 %v1928, %v1927
        %1931 = vrot.lane.b32.xlu0 %v1929, 119
        %v1932 = vpop.permute.xlu0 %1931
        %1934 = vmatpush.bf16.msra.mxu0 0
        %1935 = vmatpush.bf16.msra.mxu0 0
        %1936 = vmatpush.bf16.msra.mxu0 0
        %1937 = vmatpush.bf16.msra.mxu0 0
        %1938 = vmatpush.bf16.msra.mxu0 0
        %1939 = vmatpush.bf16.msra.mxu0 0
        %1940 = vmatpush.bf16.msra.mxu0 0
        %1941 = vmatpush.bf16.msra.mxu0 %v1932
        %1942 = vmatmul.bf16.gmra.mxu0 %v1097
        %v1943 = vpop.f32.mrf.mxu0
        %v1944 = vadd.f32 0.0, %v1943
        %v1945 = vpop.f32.mrf.mxu0
        %v1946 = vadd.f32 0.0, %v1945
        %1947 = vdwg.mxu0
        %v1948 = vadd.f32 %v1925, %v1944
        %v1949 = vadd.f32 %v1926, %v1946
        %v1950 = vadd.f32 %v1948, %v1118
        %v1951 = vadd.f32 %v1949, %v1123
        %v1952 = vmax.f32 %v1950, 0.0
        %v1953 = vmax.f32 %v1951, 0.0
        %v1954 = vadd.f32 %v1952, %v1737
        %v1955 = vadd.f32 %v1953, %v1738
        %1956 = vrot.lane.b32.xlu0 %v1954, 64
        %v1957 = vpop.permute.xlu0 %1956
        %v1958 = vsel %vm490, %v1957, %v1954
        %1959 = vrot.lane.b32.xlu0 %v1955, 64
        %v1960 = vpop.permute.xlu0 %1959
        %v1961 = vsel %vm490, %v1960, %v1955
        %1962 = vrot.lane.b32.xlu0 %v1958, 64
        %v1963 = vpop.permute.xlu0 %1962
        %1964 = vrot.lane.b32.xlu0 %v1961, 64
        %v1965 = vpop.permute.xlu0 %1964
        %v1966 = vsel %vm490, %v1963, %v1954
        %v1967 = vsel %vm490, %v1965, %v1955
        %v1968 = vmul.f32 %v1966, %v506
        %v1969 = vmul.f32 %v1967, %v506
        %v1970 = vpack.c.bf16 %v1969, %v1968
        %v1971 = vmul.f32 %v1966, %v514
        %v1972 = vmul.f32 %v1967, %v514
        %v1973 = vpack.c.bf16 %v1972, %v1971
        %1975 = vrot.lane.b32.xlu0 %v1973, 72
        %v1976 = vpop.permute.xlu0 %1975
        %1978 = vmatpush.bf16.msra.mxu0 0
        %1979 = vmatpush.bf16.msra.mxu0 0
        %1980 = vmatpush.bf16.msra.mxu0 0
        %1981 = vmatpush.bf16.msra.mxu0 0
        %1982 = vmatpush.bf16.msra.mxu0 0
        %1983 = vmatpush.bf16.msra.mxu0 0
        %1984 = vmatpush.bf16.msra.mxu0 0
        %1985 = vmatpush.bf16.msra.mxu0 %v1976
        %1986 = vmatmul.bf16.gmra.mxu0 %v1159
        %v1987 = vpop.f32.mrf.mxu0
        %v1988 = vadd.f32 0.0, %v1987
        %v1989 = vpop.f32.mrf.mxu0
        %v1990 = vadd.f32 0.0, %v1989
        %1991 = vdwg.mxu0
        %1993 = vrot.lane.b32.xlu0 %v1970, 73
        %v1994 = vpop.permute.xlu0 %1993
        %1996 = vmatpush.bf16.msra.mxu0 0
        %1997 = vmatpush.bf16.msra.mxu0 0
        %1998 = vmatpush.bf16.msra.mxu0 0
        %1999 = vmatpush.bf16.msra.mxu0 0
        %2000 = vmatpush.bf16.msra.mxu0 0
        %2001 = vmatpush.bf16.msra.mxu0 0
        %2002 = vmatpush.bf16.msra.mxu0 0
        %2003 = vmatpush.bf16.msra.mxu0 %v1994
        %2004 = vmatmul.bf16.gmra.mxu0 %v1185
        %v2005 = vpop.f32.mrf.mxu0
        %v2006 = vadd.f32 %v1988, %v2005
        %v2007 = vpop.f32.mrf.mxu0
        %v2008 = vadd.f32 %v1990, %v2007
        %2009 = vdwg.mxu0
        %v2010 = vmul.f32 %v1966, %v575
        %v2011 = vmul.f32 %v1967, %v575
        %v2012 = vpack.c.bf16 %v2011, %v2010
        %2014 = vrot.lane.b32.xlu0 %v2012, 71
        %v2015 = vpop.permute.xlu0 %2014
        %2017 = vmatpush.bf16.msra.mxu0 0
        %2018 = vmatpush.bf16.msra.mxu0 0
        %2019 = vmatpush.bf16.msra.mxu0 0
        %2020 = vmatpush.bf16.msra.mxu0 0
        %2021 = vmatpush.bf16.msra.mxu0 0
        %2022 = vmatpush.bf16.msra.mxu0 0
        %2023 = vmatpush.bf16.msra.mxu0 0
        %2024 = vmatpush.bf16.msra.mxu0 %v2015
        %2025 = vmatmul.bf16.gmra.mxu0 %v1214
        %v2026 = vpop.f32.mrf.mxu0
        %v2027 = vadd.f32 0.0, %v2026
        %v2028 = vpop.f32.mrf.mxu0
        %v2029 = vadd.f32 0.0, %v2028
        %2030 = vdwg.mxu0
        %v2031 = vadd.f32 %v2006, %v2027
        %v2032 = vadd.f32 %v2008, %v2029
        %v2033 = vmul.f32 %v1966, %v611
        %v2034 = vmul.f32 %v1967, %v611
        %v2035 = vpack.c.bf16 %v2034, %v2033
        %2037 = vrot.lane.b32.xlu0 %v2035, 65
        %v2038 = vpop.permute.xlu0 %2037
        %2040 = vmatpush.bf16.msra.mxu0 0
        %2041 = vmatpush.bf16.msra.mxu0 0
        %2042 = vmatpush.bf16.msra.mxu0 0
        %2043 = vmatpush.bf16.msra.mxu0 0
        %2044 = vmatpush.bf16.msra.mxu0 0
        %2045 = vmatpush.bf16.msra.mxu0 0
        %2046 = vmatpush.bf16.msra.mxu0 0
        %2047 = vmatpush.bf16.msra.mxu0 %v2038
        %2048 = vmatmul.bf16.gmra.mxu0 %v1245
        %v2049 = vpop.f32.mrf.mxu0
        %v2050 = vadd.f32 0.0, %v2049
        %v2051 = vpop.f32.mrf.mxu0
        %v2052 = vadd.f32 0.0, %v2051
        %2053 = vdwg.mxu0
        %v2054 = vadd.f32 %v2031, %v2050
        %v2055 = vadd.f32 %v2032, %v2052
        %v2056 = vmul.f32 %v1954, %v644
        %v2057 = vmul.f32 %v1955, %v644
        %v2058 = vpack.c.bf16 %v2057, %v2056
        %2059 = vmatpush.bf16.msra.mxu0 0
        %2060 = vmatpush.bf16.msra.mxu0 0
        %2061 = vmatpush.bf16.msra.mxu0 0
        %2062 = vmatpush.bf16.msra.mxu0 0
        %2063 = vmatpush.bf16.msra.mxu0 0
        %2064 = vmatpush.bf16.msra.mxu0 0
        %2065 = vmatpush.bf16.msra.mxu0 0
        %2066 = vmatpush.bf16.msra.mxu0 %v2058
        %2067 = vmatmul.bf16.gmra.mxu0 %v1272
        %v2068 = vpop.f32.mrf.mxu0
        %v2069 = vadd.f32 0.0, %v2068
        %v2070 = vpop.f32.mrf.mxu0
        %v2071 = vadd.f32 0.0, %v2070
        %2072 = vdwg.mxu0
        %v2073 = vadd.f32 %v2054, %v2069
        %v2074 = vadd.f32 %v2055, %v2071
        %v2075 = vmul.f32 %v1966, %v675
        %v2076 = vmul.f32 %v1967, %v675
        %v2077 = vpack.c.bf16 %v2076, %v2075
        %2079 = vrot.lane.b32.xlu0 %v2077, 127
        %v2080 = vpop.permute.xlu0 %2079
        %2082 = vmatpush.bf16.msra.mxu0 0
        %2083 = vmatpush.bf16.msra.mxu0 0
        %2084 = vmatpush.bf16.msra.mxu0 0
        %2085 = vmatpush.bf16.msra.mxu0 0
        %2086 = vmatpush.bf16.msra.mxu0 0
        %2087 = vmatpush.bf16.msra.mxu0 0
        %2088 = vmatpush.bf16.msra.mxu0 0
        %2089 = vmatpush.bf16.msra.mxu0 %v2080
        %2090 = vmatmul.bf16.gmra.mxu0 %v1303
        %v2091 = vpop.f32.mrf.mxu0
        %v2092 = vadd.f32 0.0, %v2091
        %v2093 = vpop.f32.mrf.mxu0
        %v2094 = vadd.f32 0.0, %v2093
        %2095 = vdwg.mxu0
        %v2096 = vadd.f32 %v2073, %v2092
        %v2097 = vadd.f32 %v2074, %v2094
        %v2098 = vmul.f32 %v1966, %v711
        %v2099 = vmul.f32 %v1967, %v711
        %v2100 = vpack.c.bf16 %v2099, %v2098
        %2102 = vrot.lane.b32.xlu0 %v2100, 121
        %v2103 = vpop.permute.xlu0 %2102
        %2105 = vmatpush.bf16.msra.mxu0 0
        %2106 = vmatpush.bf16.msra.mxu0 0
        %2107 = vmatpush.bf16.msra.mxu0 0
        %2108 = vmatpush.bf16.msra.mxu0 0
        %2109 = vmatpush.bf16.msra.mxu0 0
        %2110 = vmatpush.bf16.msra.mxu0 0
        %2111 = vmatpush.bf16.msra.mxu0 0
        %2112 = vmatpush.bf16.msra.mxu0 %v2103
        %2113 = vmatmul.bf16.gmra.mxu0 %v1334
        %v2114 = vpop.f32.mrf.mxu0
        %v2115 = vadd.f32 0.0, %v2114
        %v2116 = vpop.f32.mrf.mxu0
        %v2117 = vadd.f32 0.0, %v2116
        %2118 = vdwg.mxu0
        %v2119 = vadd.f32 %v2096, %v2115
        %v2120 = vadd.f32 %v2097, %v2117
        %v2121 = vmul.f32 %v1966, %v747
        %v2122 = vmul.f32 %v1967, %v747
        %v2123 = vpack.c.bf16 %v2122, %v2121
        %2125 = vrot.lane.b32.xlu0 %v2123, 120
        %v2126 = vpop.permute.xlu0 %2125
        %2128 = vmatpush.bf16.msra.mxu0 0
        %2129 = vmatpush.bf16.msra.mxu0 0
        %2130 = vmatpush.bf16.msra.mxu0 0
        %2131 = vmatpush.bf16.msra.mxu0 0
        %2132 = vmatpush.bf16.msra.mxu0 0
        %2133 = vmatpush.bf16.msra.mxu0 0
        %2134 = vmatpush.bf16.msra.mxu0 0
        %2135 = vmatpush.bf16.msra.mxu0 %v2126
        %2136 = vmatmul.bf16.gmra.mxu0 %v1365
        %v2137 = vpop.f32.mrf.mxu0
        %v2138 = vadd.f32 0.0, %v2137
        %v2139 = vpop.f32.mrf.mxu0
        %v2140 = vadd.f32 0.0, %v2139
        %2141 = vdwg.mxu0
        %v2142 = vadd.f32 %v2119, %v2138
        %v2143 = vadd.f32 %v2120, %v2140
        %v2144 = vmul.f32 %v1966, %v783
        %v2145 = vmul.f32 %v1967, %v783
        %v2146 = vpack.c.bf16 %v2145, %v2144
        %2148 = vrot.lane.b32.xlu0 %v2146, 119
        %v2149 = vpop.permute.xlu0 %2148
        %2151 = vmatpush.bf16.msra.mxu0 0
        %2152 = vmatpush.bf16.msra.mxu0 0
        %2153 = vmatpush.bf16.msra.mxu0 0
        %2154 = vmatpush.bf16.msra.mxu0 0
        %2155 = vmatpush.bf16.msra.mxu0 0
        %2156 = vmatpush.bf16.msra.mxu0 0
        %2157 = vmatpush.bf16.msra.mxu0 0
        %2158 = vmatpush.bf16.msra.mxu0 %v2149
        %2159 = vmatmul.bf16.gmra.mxu0 %v1396
        %v2160 = vpop.f32.mrf.mxu0
        %v2161 = vadd.f32 0.0, %v2160
        %v2162 = vpop.f32.mrf.mxu0
        %v2163 = vadd.f32 0.0, %v2162
        %2164 = vdwg.mxu0
        %v2165 = vadd.f32 %v2142, %v2161
        %v2166 = vadd.f32 %v2143, %v2163
        %v2167 = vadd.f32 %v2165, %v1417
        %v2168 = vadd.f32 %v2166, %v1422
        %v2169 = vmax.f32 %v2167, 0.0
        %v2170 = vmax.f32 %v2168, 0.0
        %v2171 = vadd.f32 %v2169, %v1954
        %v2172 = vadd.f32 %v2170, %v1955
        %v2173 = vpack.c.bf16 %v2172, %v2171
        %2174 = vmatpush.bf16.msra.mxu0 0
        %2175 = vmatpush.bf16.msra.mxu0 0
        %2176 = vmatpush.bf16.msra.mxu0 0
        %2177 = vmatpush.bf16.msra.mxu0 0
        %2178 = vmatpush.bf16.msra.mxu0 0
        %2179 = vmatpush.bf16.msra.mxu0 0
        %2180 = vmatpush.bf16.msra.mxu0 0
        %2181 = vmatpush.bf16.msra.mxu0 %v2173
        %2182 = vmatmul.bf16.gmra.mxu0 %v1437
        %v2183 = vpop.f32.mrf.mxu0
        %v2184 = vadd.f32 %v1434, %v2183
        %v2185 = vpop.f32.mrf.mxu0
        %2186 = vdwg.mxu0
        %v2187 = vmax.f32 %v2184, 0.0
        %v2188 = vpack.c.bf16 %v2187, %v2187
        %v2190 = vsel %vm1464, %v2188, 0
        %2192 = vmatpush.bf16.msra.mxu0 0
        %2193 = vmatpush.bf16.msra.mxu0 0
        %2194 = vmatpush.bf16.msra.mxu0 0
        %2195 = vmatpush.bf16.msra.mxu0 0
        %2196 = vmatpush.bf16.msra.mxu0 0
        %2197 = vmatpush.bf16.msra.mxu0 0
        %2198 = vmatpush.bf16.msra.mxu0 0
        %2199 = vmatpush.bf16.msra.mxu0 %v2190
        %2200 = vmatmul.bf16.gmra.mxu0 %v1462
        %v2201 = vpop.f32.mrf.mxu0
        %v2202 = vadd.f32 %v1459, %v2201
        %v2203 = vpop.f32.mrf.mxu0
        %2204 = vdwg.mxu0
        %v2205 = vxor.u32 %v2202, 2147483648
        %v2206 = vmul.f32 %v2205, 1.442695
        %v2207 = vpow.pop %v2206
        %v2208 = vadd.f32 %v2207, 1.0
        %v2209 = vrcp.pop %v2208
        %v2210 = vmul.f32 %v2208, %v2209
        %v2211 = vsub.f32 1.0, %v2210
        %v2212 = vmul.f32 %v2209, %v2211
        %v2213 = vadd.f32 %v2209, %v2212
        %vm2214 = vweird.f32 %v2208
        %vm2215 = vweird.f32 %v2209
        %vm2216 = vmor %vm2214, %vm2215
        %v2217 = vsel %vm2216, %v2209, %v2213
        %v2218 = vand.u32 2147483647, %v2208
        %vm2219 = vcmp.eq.f32.partialorder %v2218, 8.507059e+37
        %v2220 = vand.u32 %v2208, 2147483648
        %v2221 = vor.u32 1.1754944e-38, %v2220
        %v2222 = vsel %vm2219, %v2221, %v2217
        %v2223 = vmul.f32 1.0, %v2222
        %v2224 = vperm.slane %v2223, 0
        %v2225 = vmul.f32 %v2171, %v2224
        %v2226 = vmul.f32 %v2172, %v2224
        %v2227 = vsel %vm1503, %v2225, 0.0
        %2228 = vadd.xlane.f32.xlu0 %v2227
        %v2229 = vpop.xlane.xlu0 %2228
        %v2230 = vsel %vm1503, %v2226, 0.0
        %2231 = vadd.xlane.f32.xlu0 %v2230
        %v2232 = vpop.xlane.xlu0 %2231
        %v2233 = vmul.f32 %v2229, %v1516
        %v2234 = vmul.f32 %v2232, %v1516
        %s2235 = scalar_lea.vmem %s335, 32 [#allocation3]
        %v2236 = vld [vmem:[%s2235] sm:$0xff]
        %v2237 = vld [vmem:[%s2235 + $0x8] sm:$0xff]
        %2238 = vrot.lane.b32.xlu0 %v2236, 64
        %v2239 = vpop.permute.xlu0 %2238
        %v2240 = vsel %vm490, %v2239, %v2236
        %2241 = vrot.lane.b32.xlu0 %v2237, 64
        %v2242 = vpop.permute.xlu0 %2241
        %v2243 = vsel %vm490, %v2242, %v2237
        %2244 = vrot.lane.b32.xlu0 %v2240, 64
        %v2245 = vpop.permute.xlu0 %2244
        %2246 = vrot.lane.b32.xlu0 %v2243, 64
        %v2247 = vpop.permute.xlu0 %2246
        %v2248 = vsel %vm490, %v2245, %v2236
        %v2249 = vsel %vm490, %v2247, %v2237
        %v2250 = vmul.f32 %v2248, %v506
        %v2251 = vmul.f32 %v2249, %v506
        %v2252 = vpack.c.bf16 %v2251, %v2250
        %v2253 = vmul.f32 %v2248, %v514
        %v2254 = vmul.f32 %v2249, %v514
        %v2255 = vpack.c.bf16 %v2254, %v2253
        %2257 = vrot.lane.b32.xlu0 %v2255, 72
        %v2258 = vpop.permute.xlu0 %2257
        %2260 = vmatpush.bf16.msra.mxu0 0
        %2261 = vmatpush.bf16.msra.mxu0 0
        %2262 = vmatpush.bf16.msra.mxu0 0
        %2263 = vmatpush.bf16.msra.mxu0 0
        %2264 = vmatpush.bf16.msra.mxu0 0
        %2265 = vmatpush.bf16.msra.mxu0 0
        %2266 = vmatpush.bf16.msra.mxu0 0
        %2267 = vmatpush.bf16.msra.mxu0 %v2258
        %2268 = vmatmul.bf16.gmra.mxu0 %v530
        %v2269 = vpop.f32.mrf.mxu0
        %v2270 = vadd.f32 0.0, %v2269
        %v2271 = vpop.f32.mrf.mxu0
        %v2272 = vadd.f32 0.0, %v2271
        %2273 = vdwg.mxu0
        %2275 = vrot.lane.b32.xlu0 %v2252, 73
        %v2276 = vpop.permute.xlu0 %2275
        %2278 = vmatpush.bf16.msra.mxu0 0
        %2279 = vmatpush.bf16.msra.mxu0 0
        %2280 = vmatpush.bf16.msra.mxu0 0
        %2281 = vmatpush.bf16.msra.mxu0 0
        %2282 = vmatpush.bf16.msra.mxu0 0
        %2283 = vmatpush.bf16.msra.mxu0 0
        %2284 = vmatpush.bf16.msra.mxu0 0
        %2285 = vmatpush.bf16.msra.mxu0 %v2276
        %2286 = vmatmul.bf16.gmra.mxu0 %v556
        %v2287 = vpop.f32.mrf.mxu0
        %v2288 = vadd.f32 %v2270, %v2287
        %v2289 = vpop.f32.mrf.mxu0
        %v2290 = vadd.f32 %v2272, %v2289
        %2291 = vdwg.mxu0
        %v2292 = vmul.f32 %v2248, %v575
        %v2293 = vmul.f32 %v2249, %v575
        %v2294 = vpack.c.bf16 %v2293, %v2292
        %2296 = vrot.lane.b32.xlu0 %v2294, 71
        %v2297 = vpop.permute.xlu0 %2296
        %2299 = vmatpush.bf16.msra.mxu0 0
        %2300 = vmatpush.bf16.msra.mxu0 0
        %2301 = vmatpush.bf16.msra.mxu0 0
        %2302 = vmatpush.bf16.msra.mxu0 0
        %2303 = vmatpush.bf16.msra.mxu0 0
        %2304 = vmatpush.bf16.msra.mxu0 0
        %2305 = vmatpush.bf16.msra.mxu0 0
        %2306 = vmatpush.bf16.msra.mxu0 %v2297
        %2307 = vmatmul.bf16.gmra.mxu0 %v590
        %v2308 = vpop.f32.mrf.mxu0
        %v2309 = vadd.f32 0.0, %v2308
        %v2310 = vpop.f32.mrf.mxu0
        %v2311 = vadd.f32 0.0, %v2310
        %2312 = vdwg.mxu0
        %v2313 = vadd.f32 %v2288, %v2309
        %v2314 = vadd.f32 %v2290, %v2311
        %v2315 = vmul.f32 %v2248, %v611
        %v2316 = vmul.f32 %v2249, %v611
        %v2317 = vpack.c.bf16 %v2316, %v2315
        %2319 = vrot.lane.b32.xlu0 %v2317, 65
        %v2320 = vpop.permute.xlu0 %2319
        %2322 = vmatpush.bf16.msra.mxu0 0
        %2323 = vmatpush.bf16.msra.mxu0 0
        %2324 = vmatpush.bf16.msra.mxu0 0
        %2325 = vmatpush.bf16.msra.mxu0 0
        %2326 = vmatpush.bf16.msra.mxu0 0
        %2327 = vmatpush.bf16.msra.mxu0 0
        %2328 = vmatpush.bf16.msra.mxu0 0
        %2329 = vmatpush.bf16.msra.mxu0 %v2320
        %2330 = vmatmul.bf16.gmra.mxu0 %v626
        %v2331 = vpop.f32.mrf.mxu0
        %v2332 = vadd.f32 0.0, %v2331
        %v2333 = vpop.f32.mrf.mxu0
        %v2334 = vadd.f32 0.0, %v2333
        %2335 = vdwg.mxu0
        %v2336 = vadd.f32 %v2313, %v2332
        %v2337 = vadd.f32 %v2314, %v2334
        %v2338 = vmul.f32 %v2236, %v644
        %v2339 = vmul.f32 %v2237, %v644
        %v2340 = vpack.c.bf16 %v2339, %v2338
        %2341 = vmatpush.bf16.msra.mxu0 0
        %2342 = vmatpush.bf16.msra.mxu0 0
        %2343 = vmatpush.bf16.msra.mxu0 0
        %2344 = vmatpush.bf16.msra.mxu0 0
        %2345 = vmatpush.bf16.msra.mxu0 0
        %2346 = vmatpush.bf16.msra.mxu0 0
        %2347 = vmatpush.bf16.msra.mxu0 0
        %2348 = vmatpush.bf16.msra.mxu0 %v2340
        %2349 = vmatmul.bf16.gmra.mxu0 %v654
        %v2350 = vpop.f32.mrf.mxu0
        %v2351 = vadd.f32 0.0, %v2350
        %v2352 = vpop.f32.mrf.mxu0
        %v2353 = vadd.f32 0.0, %v2352
        %2354 = vdwg.mxu0
        %v2355 = vadd.f32 %v2336, %v2351
        %v2356 = vadd.f32 %v2337, %v2353
        %v2357 = vmul.f32 %v2248, %v675
        %v2358 = vmul.f32 %v2249, %v675
        %v2359 = vpack.c.bf16 %v2358, %v2357
        %2361 = vrot.lane.b32.xlu0 %v2359, 127
        %v2362 = vpop.permute.xlu0 %2361
        %2364 = vmatpush.bf16.msra.mxu0 0
        %2365 = vmatpush.bf16.msra.mxu0 0
        %2366 = vmatpush.bf16.msra.mxu0 0
        %2367 = vmatpush.bf16.msra.mxu0 0
        %2368 = vmatpush.bf16.msra.mxu0 0
        %2369 = vmatpush.bf16.msra.mxu0 0
        %2370 = vmatpush.bf16.msra.mxu0 0
        %2371 = vmatpush.bf16.msra.mxu0 %v2362
        %2372 = vmatmul.bf16.gmra.mxu0 %v690
        %v2373 = vpop.f32.mrf.mxu0
        %v2374 = vadd.f32 0.0, %v2373
        %v2375 = vpop.f32.mrf.mxu0
        %v2376 = vadd.f32 0.0, %v2375
        %2377 = vdwg.mxu0
        %v2378 = vadd.f32 %v2355, %v2374
        %v2379 = vadd.f32 %v2356, %v2376
        %v2380 = vmul.f32 %v2248, %v711
        %v2381 = vmul.f32 %v2249, %v711
        %v2382 = vpack.c.bf16 %v2381, %v2380
        %2384 = vrot.lane.b32.xlu0 %v2382, 121
        %v2385 = vpop.permute.xlu0 %2384
        %2387 = vmatpush.bf16.msra.mxu0 0
        %2388 = vmatpush.bf16.msra.mxu0 0
        %2389 = vmatpush.bf16.msra.mxu0 0
        %2390 = vmatpush.bf16.msra.mxu0 0
        %2391 = vmatpush.bf16.msra.mxu0 0
        %2392 = vmatpush.bf16.msra.mxu0 0
        %2393 = vmatpush.bf16.msra.mxu0 0
        %2394 = vmatpush.bf16.msra.mxu0 %v2385
        %2395 = vmatmul.bf16.gmra.mxu0 %v726
        %v2396 = vpop.f32.mrf.mxu0
        %v2397 = vadd.f32 0.0, %v2396
        %v2398 = vpop.f32.mrf.mxu0
        %v2399 = vadd.f32 0.0, %v2398
        %2400 = vdwg.mxu0
        %v2401 = vadd.f32 %v2378, %v2397
        %v2402 = vadd.f32 %v2379, %v2399
        %v2403 = vmul.f32 %v2248, %v747
        %v2404 = vmul.f32 %v2249, %v747
        %v2405 = vpack.c.bf16 %v2404, %v2403
        %2407 = vrot.lane.b32.xlu0 %v2405, 120
        %v2408 = vpop.permute.xlu0 %2407
        %2410 = vmatpush.bf16.msra.mxu0 0
        %2411 = vmatpush.bf16.msra.mxu0 0
        %2412 = vmatpush.bf16.msra.mxu0 0
        %2413 = vmatpush.bf16.msra.mxu0 0
        %2414 = vmatpush.bf16.msra.mxu0 0
        %2415 = vmatpush.bf16.msra.mxu0 0
        %2416 = vmatpush.bf16.msra.mxu0 0
        %2417 = vmatpush.bf16.msra.mxu0 %v2408
        %2418 = vmatmul.bf16.gmra.mxu0 %v762
        %v2419 = vpop.f32.mrf.mxu0
        %v2420 = vadd.f32 0.0, %v2419
        %v2421 = vpop.f32.mrf.mxu0
        %v2422 = vadd.f32 0.0, %v2421
        %2423 = vdwg.mxu0
        %v2424 = vadd.f32 %v2401, %v2420
        %v2425 = vadd.f32 %v2402, %v2422
        %v2426 = vmul.f32 %v2248, %v783
        %v2427 = vmul.f32 %v2249, %v783
        %v2428 = vpack.c.bf16 %v2427, %v2426
        %2430 = vrot.lane.b32.xlu0 %v2428, 119
        %v2431 = vpop.permute.xlu0 %2430
        %2433 = vmatpush.bf16.msra.mxu0 0
        %2434 = vmatpush.bf16.msra.mxu0 0
        %2435 = vmatpush.bf16.msra.mxu0 0
        %2436 = vmatpush.bf16.msra.mxu0 0
        %2437 = vmatpush.bf16.msra.mxu0 0
        %2438 = vmatpush.bf16.msra.mxu0 0
        %2439 = vmatpush.bf16.msra.mxu0 0
        %2440 = vmatpush.bf16.msra.mxu0 %v2431
        %2441 = vmatmul.bf16.gmra.mxu0 %v798
        %v2442 = vpop.f32.mrf.mxu0
        %v2443 = vadd.f32 0.0, %v2442
        %v2444 = vpop.f32.mrf.mxu0
        %v2445 = vadd.f32 0.0, %v2444
        %2446 = vdwg.mxu0
        %v2447 = vadd.f32 %v2424, %v2443
        %v2448 = vadd.f32 %v2425, %v2445
        %v2449 = vadd.f32 %v2447, %v819
        %v2450 = vadd.f32 %v2448, %v824
        %v2451 = vmax.f32 %v2449, 0.0
        %v2452 = vmax.f32 %v2450, 0.0
        %v2453 = vadd.f32 %v2451, %v2236
        %v2454 = vadd.f32 %v2452, %v2237
        %2455 = vrot.lane.b32.xlu0 %v2453, 64
        %v2456 = vpop.permute.xlu0 %2455
        %v2457 = vsel %vm490, %v2456, %v2453
        %2458 = vrot.lane.b32.xlu0 %v2454, 64
        %v2459 = vpop.permute.xlu0 %2458
        %v2460 = vsel %vm490, %v2459, %v2454
        %2461 = vrot.lane.b32.xlu0 %v2457, 64
        %v2462 = vpop.permute.xlu0 %2461
        %2463 = vrot.lane.b32.xlu0 %v2460, 64
        %v2464 = vpop.permute.xlu0 %2463
        %v2465 = vsel %vm490, %v2462, %v2453
        %v2466 = vsel %vm490, %v2464, %v2454
        %v2467 = vmul.f32 %v2465, %v506
        %v2468 = vmul.f32 %v2466, %v506
        %v2469 = vpack.c.bf16 %v2468, %v2467
        %v2470 = vmul.f32 %v2465, %v514
        %v2471 = vmul.f32 %v2466, %v514
        %v2472 = vpack.c.bf16 %v2471, %v2470
        %2474 = vrot.lane.b32.xlu0 %v2472, 72
        %v2475 = vpop.permute.xlu0 %2474
        %2477 = vmatpush.bf16.msra.mxu0 0
        %2478 = vmatpush.bf16.msra.mxu0 0
        %2479 = vmatpush.bf16.msra.mxu0 0
        %2480 = vmatpush.bf16.msra.mxu0 0
        %2481 = vmatpush.bf16.msra.mxu0 0
        %2482 = vmatpush.bf16.msra.mxu0 0
        %2483 = vmatpush.bf16.msra.mxu0 0
        %2484 = vmatpush.bf16.msra.mxu0 %v2475
        %2485 = vmatmul.bf16.gmra.mxu0 %v860
        %v2486 = vpop.f32.mrf.mxu0
        %v2487 = vadd.f32 0.0, %v2486
        %v2488 = vpop.f32.mrf.mxu0
        %v2489 = vadd.f32 0.0, %v2488
        %2490 = vdwg.mxu0
        %2492 = vrot.lane.b32.xlu0 %v2469, 73
        %v2493 = vpop.permute.xlu0 %2492
        %2495 = vmatpush.bf16.msra.mxu0 0
        %2496 = vmatpush.bf16.msra.mxu0 0
        %2497 = vmatpush.bf16.msra.mxu0 0
        %2498 = vmatpush.bf16.msra.mxu0 0
        %2499 = vmatpush.bf16.msra.mxu0 0
        %2500 = vmatpush.bf16.msra.mxu0 0
        %2501 = vmatpush.bf16.msra.mxu0 0
        %2502 = vmatpush.bf16.msra.mxu0 %v2493
        %2503 = vmatmul.bf16.gmra.mxu0 %v886
        %v2504 = vpop.f32.mrf.mxu0
        %v2505 = vadd.f32 %v2487, %v2504
        %v2506 = vpop.f32.mrf.mxu0
        %v2507 = vadd.f32 %v2489, %v2506
        %2508 = vdwg.mxu0
        %v2509 = vmul.f32 %v2465, %v575
        %v2510 = vmul.f32 %v2466, %v575
        %v2511 = vpack.c.bf16 %v2510, %v2509
        %2513 = vrot.lane.b32.xlu0 %v2511, 71
        %v2514 = vpop.permute.xlu0 %2513
        %2516 = vmatpush.bf16.msra.mxu0 0
        %2517 = vmatpush.bf16.msra.mxu0 0
        %2518 = vmatpush.bf16.msra.mxu0 0
        %2519 = vmatpush.bf16.msra.mxu0 0
        %2520 = vmatpush.bf16.msra.mxu0 0
        %2521 = vmatpush.bf16.msra.mxu0 0
        %2522 = vmatpush.bf16.msra.mxu0 0
        %2523 = vmatpush.bf16.msra.mxu0 %v2514
        %2524 = vmatmul.bf16.gmra.mxu0 %v915
        %v2525 = vpop.f32.mrf.mxu0
        %v2526 = vadd.f32 0.0, %v2525
        %v2527 = vpop.f32.mrf.mxu0
        %v2528 = vadd.f32 0.0, %v2527
        %2529 = vdwg.mxu0
        %v2530 = vadd.f32 %v2505, %v2526
        %v2531 = vadd.f32 %v2507, %v2528
        %v2532 = vmul.f32 %v2465, %v611
        %v2533 = vmul.f32 %v2466, %v611
        %v2534 = vpack.c.bf16 %v2533, %v2532
        %2536 = vrot.lane.b32.xlu0 %v2534, 65
        %v2537 = vpop.permute.xlu0 %2536
        %2539 = vmatpush.bf16.msra.mxu0 0
        %2540 = vmatpush.bf16.msra.mxu0 0
        %2541 = vmatpush.bf16.msra.mxu0 0
        %2542 = vmatpush.bf16.msra.mxu0 0
        %2543 = vmatpush.bf16.msra.mxu0 0
        %2544 = vmatpush.bf16.msra.mxu0 0
        %2545 = vmatpush.bf16.msra.mxu0 0
        %2546 = vmatpush.bf16.msra.mxu0 %v2537
        %2547 = vmatmul.bf16.gmra.mxu0 %v946
        %v2548 = vpop.f32.mrf.mxu0
        %v2549 = vadd.f32 0.0, %v2548
        %v2550 = vpop.f32.mrf.mxu0
        %v2551 = vadd.f32 0.0, %v2550
        %2552 = vdwg.mxu0
        %v2553 = vadd.f32 %v2530, %v2549
        %v2554 = vadd.f32 %v2531, %v2551
        %v2555 = vmul.f32 %v2453, %v644
        %v2556 = vmul.f32 %v2454, %v644
        %v2557 = vpack.c.bf16 %v2556, %v2555
        %2558 = vmatpush.bf16.msra.mxu0 0
        %2559 = vmatpush.bf16.msra.mxu0 0
        %2560 = vmatpush.bf16.msra.mxu0 0
        %2561 = vmatpush.bf16.msra.mxu0 0
        %2562 = vmatpush.bf16.msra.mxu0 0
        %2563 = vmatpush.bf16.msra.mxu0 0
        %2564 = vmatpush.bf16.msra.mxu0 0
        %2565 = vmatpush.bf16.msra.mxu0 %v2557
        %2566 = vmatmul.bf16.gmra.mxu0 %v973
        %v2567 = vpop.f32.mrf.mxu0
        %v2568 = vadd.f32 0.0, %v2567
        %v2569 = vpop.f32.mrf.mxu0
        %v2570 = vadd.f32 0.0, %v2569
        %2571 = vdwg.mxu0
        %v2572 = vadd.f32 %v2553, %v2568
        %v2573 = vadd.f32 %v2554, %v2570
        %v2574 = vmul.f32 %v2465, %v675
        %v2575 = vmul.f32 %v2466, %v675
        %v2576 = vpack.c.bf16 %v2575, %v2574
        %2578 = vrot.lane.b32.xlu0 %v2576, 127
        %v2579 = vpop.permute.xlu0 %2578
        %2581 = vmatpush.bf16.msra.mxu0 0
        %2582 = vmatpush.bf16.msra.mxu0 0
        %2583 = vmatpush.bf16.msra.mxu0 0
        %2584 = vmatpush.bf16.msra.mxu0 0
        %2585 = vmatpush.bf16.msra.mxu0 0
        %2586 = vmatpush.bf16.msra.mxu0 0
        %2587 = vmatpush.bf16.msra.mxu0 0
        %2588 = vmatpush.bf16.msra.mxu0 %v2579
        %2589 = vmatmul.bf16.gmra.mxu0 %v1004
        %v2590 = vpop.f32.mrf.mxu0
        %v2591 = vadd.f32 0.0, %v2590
        %v2592 = vpop.f32.mrf.mxu0
        %v2593 = vadd.f32 0.0, %v2592
        %2594 = vdwg.mxu0
        %v2595 = vadd.f32 %v2572, %v2591
        %v2596 = vadd.f32 %v2573, %v2593
        %v2597 = vmul.f32 %v2465, %v711
        %v2598 = vmul.f32 %v2466, %v711
        %v2599 = vpack.c.bf16 %v2598, %v2597
        %2601 = vrot.lane.b32.xlu0 %v2599, 121
        %v2602 = vpop.permute.xlu0 %2601
        %2604 = vmatpush.bf16.msra.mxu0 0
        %2605 = vmatpush.bf16.msra.mxu0 0
        %2606 = vmatpush.bf16.msra.mxu0 0
        %2607 = vmatpush.bf16.msra.mxu0 0
        %2608 = vmatpush.bf16.msra.mxu0 0
        %2609 = vmatpush.bf16.msra.mxu0 0
        %2610 = vmatpush.bf16.msra.mxu0 0
        %2611 = vmatpush.bf16.msra.mxu0 %v2602
        %2612 = vmatmul.bf16.gmra.mxu0 %v1035
        %v2613 = vpop.f32.mrf.mxu0
        %v2614 = vadd.f32 0.0, %v2613
        %v2615 = vpop.f32.mrf.mxu0
        %v2616 = vadd.f32 0.0, %v2615
        %2617 = vdwg.mxu0
        %v2618 = vadd.f32 %v2595, %v2614
        %v2619 = vadd.f32 %v2596, %v2616
        %v2620 = vmul.f32 %v2465, %v747
        %v2621 = vmul.f32 %v2466, %v747
        %v2622 = vpack.c.bf16 %v2621, %v2620
        %2624 = vrot.lane.b32.xlu0 %v2622, 120
        %v2625 = vpop.permute.xlu0 %2624
        %2627 = vmatpush.bf16.msra.mxu0 0
        %2628 = vmatpush.bf16.msra.mxu0 0
        %2629 = vmatpush.bf16.msra.mxu0 0
        %2630 = vmatpush.bf16.msra.mxu0 0
        %2631 = vmatpush.bf16.msra.mxu0 0
        %2632 = vmatpush.bf16.msra.mxu0 0
        %2633 = vmatpush.bf16.msra.mxu0 0
        %2634 = vmatpush.bf16.msra.mxu0 %v2625
        %2635 = vmatmul.bf16.gmra.mxu0 %v1066
        %v2636 = vpop.f32.mrf.mxu0
        %v2637 = vadd.f32 0.0, %v2636
        %v2638 = vpop.f32.mrf.mxu0
        %v2639 = vadd.f32 0.0, %v2638
        %2640 = vdwg.mxu0
        %v2641 = vadd.f32 %v2618, %v2637
        %v2642 = vadd.f32 %v2619, %v2639
        %v2643 = vmul.f32 %v2465, %v783
        %v2644 = vmul.f32 %v2466, %v783
        %v2645 = vpack.c.bf16 %v2644, %v2643
        %2647 = vrot.lane.b32.xlu0 %v2645, 119
        %v2648 = vpop.permute.xlu0 %2647
        %2650 = vmatpush.bf16.msra.mxu0 0
        %2651 = vmatpush.bf16.msra.mxu0 0
        %2652 = vmatpush.bf16.msra.mxu0 0
        %2653 = vmatpush.bf16.msra.mxu0 0
        %2654 = vmatpush.bf16.msra.mxu0 0
        %2655 = vmatpush.bf16.msra.mxu0 0
        %2656 = vmatpush.bf16.msra.mxu0 0
        %2657 = vmatpush.bf16.msra.mxu0 %v2648
        %2658 = vmatmul.bf16.gmra.mxu0 %v1097
        %v2659 = vpop.f32.mrf.mxu0
        %v2660 = vadd.f32 0.0, %v2659
        %v2661 = vpop.f32.mrf.mxu0
        %v2662 = vadd.f32 0.0, %v2661
        %2663 = vdwg.mxu0
        %v2664 = vadd.f32 %v2641, %v2660
        %v2665 = vadd.f32 %v2642, %v2662
        %v2666 = vadd.f32 %v2664, %v1118
        %v2667 = vadd.f32 %v2665, %v1123
        %v2668 = vmax.f32 %v2666, 0.0
        %v2669 = vmax.f32 %v2667, 0.0
        %v2670 = vadd.f32 %v2668, %v2453
        %v2671 = vadd.f32 %v2669, %v2454
        %2672 = vrot.lane.b32.xlu0 %v2670, 64
        %v2673 = vpop.permute.xlu0 %2672
        %v2674 = vsel %vm490, %v2673, %v2670
        %2675 = vrot.lane.b32.xlu0 %v2671, 64
        %v2676 = vpop.permute.xlu0 %2675
        %v2677 = vsel %vm490, %v2676, %v2671
        %2678 = vrot.lane.b32.xlu0 %v2674, 64
        %v2679 = vpop.permute.xlu0 %2678
        %2680 = vrot.lane.b32.xlu0 %v2677, 64
        %v2681 = vpop.permute.xlu0 %2680
        %v2682 = vsel %vm490, %v2679, %v2670
        %v2683 = vsel %vm490, %v2681, %v2671
        %v2684 = vmul.f32 %v2682, %v506
        %v2685 = vmul.f32 %v2683, %v506
        %v2686 = vpack.c.bf16 %v2685, %v2684
        %v2687 = vmul.f32 %v2682, %v514
        %v2688 = vmul.f32 %v2683, %v514
        %v2689 = vpack.c.bf16 %v2688, %v2687
        %2691 = vrot.lane.b32.xlu0 %v2689, 72
        %v2692 = vpop.permute.xlu0 %2691
        %2694 = vmatpush.bf16.msra.mxu0 0
        %2695 = vmatpush.bf16.msra.mxu0 0
        %2696 = vmatpush.bf16.msra.mxu0 0
        %2697 = vmatpush.bf16.msra.mxu0 0
        %2698 = vmatpush.bf16.msra.mxu0 0
        %2699 = vmatpush.bf16.msra.mxu0 0
        %2700 = vmatpush.bf16.msra.mxu0 0
        %2701 = vmatpush.bf16.msra.mxu0 %v2692
        %2702 = vmatmul.bf16.gmra.mxu0 %v1159
        %v2703 = vpop.f32.mrf.mxu0
        %v2704 = vadd.f32 0.0, %v2703
        %v2705 = vpop.f32.mrf.mxu0
        %v2706 = vadd.f32 0.0, %v2705
        %2707 = vdwg.mxu0
        %2709 = vrot.lane.b32.xlu0 %v2686, 73
        %v2710 = vpop.permute.xlu0 %2709
        %2712 = vmatpush.bf16.msra.mxu0 0
        %2713 = vmatpush.bf16.msra.mxu0 0
        %2714 = vmatpush.bf16.msra.mxu0 0
        %2715 = vmatpush.bf16.msra.mxu0 0
        %2716 = vmatpush.bf16.msra.mxu0 0
        %2717 = vmatpush.bf16.msra.mxu0 0
        %2718 = vmatpush.bf16.msra.mxu0 0
        %2719 = vmatpush.bf16.msra.mxu0 %v2710
        %2720 = vmatmul.bf16.gmra.mxu0 %v1185
        %v2721 = vpop.f32.mrf.mxu0
        %v2722 = vadd.f32 %v2704, %v2721
        %v2723 = vpop.f32.mrf.mxu0
        %v2724 = vadd.f32 %v2706, %v2723
        %2725 = vdwg.mxu0
        %v2726 = vmul.f32 %v2682, %v575
        %v2727 = vmul.f32 %v2683, %v575
        %v2728 = vpack.c.bf16 %v2727, %v2726
        %2730 = vrot.lane.b32.xlu0 %v2728, 71
        %v2731 = vpop.permute.xlu0 %2730
        %2733 = vmatpush.bf16.msra.mxu0 0
        %2734 = vmatpush.bf16.msra.mxu0 0
        %2735 = vmatpush.bf16.msra.mxu0 0
        %2736 = vmatpush.bf16.msra.mxu0 0
        %2737 = vmatpush.bf16.msra.mxu0 0
        %2738 = vmatpush.bf16.msra.mxu0 0
        %2739 = vmatpush.bf16.msra.mxu0 0
        %2740 = vmatpush.bf16.msra.mxu0 %v2731
        %2741 = vmatmul.bf16.gmra.mxu0 %v1214
        %v2742 = vpop.f32.mrf.mxu0
        %v2743 = vadd.f32 0.0, %v2742
        %v2744 = vpop.f32.mrf.mxu0
        %v2745 = vadd.f32 0.0, %v2744
        %2746 = vdwg.mxu0
        %v2747 = vadd.f32 %v2722, %v2743
        %v2748 = vadd.f32 %v2724, %v2745
        %v2749 = vmul.f32 %v2682, %v611
        %v2750 = vmul.f32 %v2683, %v611
        %v2751 = vpack.c.bf16 %v2750, %v2749
        %2753 = vrot.lane.b32.xlu0 %v2751, 65
        %v2754 = vpop.permute.xlu0 %2753
        %2756 = vmatpush.bf16.msra.mxu0 0
        %2757 = vmatpush.bf16.msra.mxu0 0
        %2758 = vmatpush.bf16.msra.mxu0 0
        %2759 = vmatpush.bf16.msra.mxu0 0
        %2760 = vmatpush.bf16.msra.mxu0 0
        %2761 = vmatpush.bf16.msra.mxu0 0
        %2762 = vmatpush.bf16.msra.mxu0 0
        %2763 = vmatpush.bf16.msra.mxu0 %v2754
        %2764 = vmatmul.bf16.gmra.mxu0 %v1245
        %v2765 = vpop.f32.mrf.mxu0
        %v2766 = vadd.f32 0.0, %v2765
        %v2767 = vpop.f32.mrf.mxu0
        %v2768 = vadd.f32 0.0, %v2767
        %2769 = vdwg.mxu0
        %v2770 = vadd.f32 %v2747, %v2766
        %v2771 = vadd.f32 %v2748, %v2768
        %v2772 = vmul.f32 %v2670, %v644
        %v2773 = vmul.f32 %v2671, %v644
        %v2774 = vpack.c.bf16 %v2773, %v2772
        %2775 = vmatpush.bf16.msra.mxu0 0
        %2776 = vmatpush.bf16.msra.mxu0 0
        %2777 = vmatpush.bf16.msra.mxu0 0
        %2778 = vmatpush.bf16.msra.mxu0 0
        %2779 = vmatpush.bf16.msra.mxu0 0
        %2780 = vmatpush.bf16.msra.mxu0 0
        %2781 = vmatpush.bf16.msra.mxu0 0
        %2782 = vmatpush.bf16.msra.mxu0 %v2774
        %2783 = vmatmul.bf16.gmra.mxu0 %v1272
        %v2784 = vpop.f32.mrf.mxu0
        %v2785 = vadd.f32 0.0, %v2784
        %v2786 = vpop.f32.mrf.mxu0
        %v2787 = vadd.f32 0.0, %v2786
        %2788 = vdwg.mxu0
        %v2789 = vadd.f32 %v2770, %v2785
        %v2790 = vadd.f32 %v2771, %v2787
        %v2791 = vmul.f32 %v2682, %v675
        %v2792 = vmul.f32 %v2683, %v675
        %v2793 = vpack.c.bf16 %v2792, %v2791
        %2795 = vrot.lane.b32.xlu0 %v2793, 127
        %v2796 = vpop.permute.xlu0 %2795
        %2798 = vmatpush.bf16.msra.mxu0 0
        %2799 = vmatpush.bf16.msra.mxu0 0
        %2800 = vmatpush.bf16.msra.mxu0 0
        %2801 = vmatpush.bf16.msra.mxu0 0
        %2802 = vmatpush.bf16.msra.mxu0 0
        %2803 = vmatpush.bf16.msra.mxu0 0
        %2804 = vmatpush.bf16.msra.mxu0 0
        %2805 = vmatpush.bf16.msra.mxu0 %v2796
        %2806 = vmatmul.bf16.gmra.mxu0 %v1303
        %v2807 = vpop.f32.mrf.mxu0
        %v2808 = vadd.f32 0.0, %v2807
        %v2809 = vpop.f32.mrf.mxu0
        %v2810 = vadd.f32 0.0, %v2809
        %2811 = vdwg.mxu0
        %v2812 = vadd.f32 %v2789, %v2808
        %v2813 = vadd.f32 %v2790, %v2810
        %v2814 = vmul.f32 %v2682, %v711
        %v2815 = vmul.f32 %v2683, %v711
        %v2816 = vpack.c.bf16 %v2815, %v2814
        %2818 = vrot.lane.b32.xlu0 %v2816, 121
        %v2819 = vpop.permute.xlu0 %2818
        %2821 = vmatpush.bf16.msra.mxu0 0
        %2822 = vmatpush.bf16.msra.mxu0 0
        %2823 = vmatpush.bf16.msra.mxu0 0
        %2824 = vmatpush.bf16.msra.mxu0 0
        %2825 = vmatpush.bf16.msra.mxu0 0
        %2826 = vmatpush.bf16.msra.mxu0 0
        %2827 = vmatpush.bf16.msra.mxu0 0
        %2828 = vmatpush.bf16.msra.mxu0 %v2819
        %2829 = vmatmul.bf16.gmra.mxu0 %v1334
        %v2830 = vpop.f32.mrf.mxu0
        %v2831 = vadd.f32 0.0, %v2830
        %v2832 = vpop.f32.mrf.mxu0
        %v2833 = vadd.f32 0.0, %v2832
        %2834 = vdwg.mxu0
        %v2835 = vadd.f32 %v2812, %v2831
        %v2836 = vadd.f32 %v2813, %v2833
        %v2837 = vmul.f32 %v2682, %v747
        %v2838 = vmul.f32 %v2683, %v747
        %v2839 = vpack.c.bf16 %v2838, %v2837
        %2841 = vrot.lane.b32.xlu0 %v2839, 120
        %v2842 = vpop.permute.xlu0 %2841
        %2844 = vmatpush.bf16.msra.mxu0 0
        %2845 = vmatpush.bf16.msra.mxu0 0
        %2846 = vmatpush.bf16.msra.mxu0 0
        %2847 = vmatpush.bf16.msra.mxu0 0
        %2848 = vmatpush.bf16.msra.mxu0 0
        %2849 = vmatpush.bf16.msra.mxu0 0
        %2850 = vmatpush.bf16.msra.mxu0 0
        %2851 = vmatpush.bf16.msra.mxu0 %v2842
        %2852 = vmatmul.bf16.gmra.mxu0 %v1365
        %v2853 = vpop.f32.mrf.mxu0
        %v2854 = vadd.f32 0.0, %v2853
        %v2855 = vpop.f32.mrf.mxu0
        %v2856 = vadd.f32 0.0, %v2855
        %2857 = vdwg.mxu0
        %v2858 = vadd.f32 %v2835, %v2854
        %v2859 = vadd.f32 %v2836, %v2856
        %v2860 = vmul.f32 %v2682, %v783
        %v2861 = vmul.f32 %v2683, %v783
        %v2862 = vpack.c.bf16 %v2861, %v2860
        %2864 = vrot.lane.b32.xlu0 %v2862, 119
        %v2865 = vpop.permute.xlu0 %2864
        %2867 = vmatpush.bf16.msra.mxu0 0
        %2868 = vmatpush.bf16.msra.mxu0 0
        %2869 = vmatpush.bf16.msra.mxu0 0
        %2870 = vmatpush.bf16.msra.mxu0 0
        %2871 = vmatpush.bf16.msra.mxu0 0
        %2872 = vmatpush.bf16.msra.mxu0 0
        %2873 = vmatpush.bf16.msra.mxu0 0
        %2874 = vmatpush.bf16.msra.mxu0 %v2865
        %2875 = vmatmul.bf16.gmra.mxu0 %v1396
        %v2876 = vpop.f32.mrf.mxu0
        %v2877 = vadd.f32 0.0, %v2876
        %v2878 = vpop.f32.mrf.mxu0
        %v2879 = vadd.f32 0.0, %v2878
        %2880 = vdwg.mxu0
        %v2881 = vadd.f32 %v2858, %v2877
        %v2882 = vadd.f32 %v2859, %v2879
        %v2883 = vadd.f32 %v2881, %v1417
        %v2884 = vadd.f32 %v2882, %v1422
        %v2885 = vmax.f32 %v2883, 0.0
        %v2886 = vmax.f32 %v2884, 0.0
        %v2887 = vadd.f32 %v2885, %v2670
        %v2888 = vadd.f32 %v2886, %v2671
        %v2889 = vpack.c.bf16 %v2888, %v2887
        %2890 = vmatpush.bf16.msra.mxu0 0
        %2891 = vmatpush.bf16.msra.mxu0 0
        %2892 = vmatpush.bf16.msra.mxu0 0
        %2893 = vmatpush.bf16.msra.mxu0 0
        %2894 = vmatpush.bf16.msra.mxu0 0
        %2895 = vmatpush.bf16.msra.mxu0 0
        %2896 = vmatpush.bf16.msra.mxu0 0
        %2897 = vmatpush.bf16.msra.mxu0 %v2889
        %2898 = vmatmul.bf16.gmra.mxu0 %v1437
        %v2899 = vpop.f32.mrf.mxu0
        %v2900 = vadd.f32 %v1434, %v2899
        %v2901 = vpop.f32.mrf.mxu0
        %2902 = vdwg.mxu0
        %v2903 = vmax.f32 %v2900, 0.0
        %v2904 = vpack.c.bf16 %v2903, %v2903
        %v2906 = vsel %vm1464, %v2904, 0
        %2908 = vmatpush.bf16.msra.mxu0 0
        %2909 = vmatpush.bf16.msra.mxu0 0
        %2910 = vmatpush.bf16.msra.mxu0 0
        %2911 = vmatpush.bf16.msra.mxu0 0
        %2912 = vmatpush.bf16.msra.mxu0 0
        %2913 = vmatpush.bf16.msra.mxu0 0
        %2914 = vmatpush.bf16.msra.mxu0 0
        %2915 = vmatpush.bf16.msra.mxu0 %v2906
        %2916 = vmatmul.bf16.gmra.mxu0 %v1462
        %v2917 = vpop.f32.mrf.mxu0
        %v2918 = vadd.f32 %v1459, %v2917
        %v2919 = vpop.f32.mrf.mxu0
        %2920 = vdwg.mxu0
        %v2921 = vxor.u32 %v2918, 2147483648
        %v2922 = vmul.f32 %v2921, 1.442695
        %v2923 = vpow.pop %v2922
        %v2924 = vadd.f32 %v2923, 1.0
        %v2925 = vrcp.pop %v2924
        %v2926 = vmul.f32 %v2924, %v2925
        %v2927 = vsub.f32 1.0, %v2926
        %v2928 = vmul.f32 %v2925, %v2927
        %v2929 = vadd.f32 %v2925, %v2928
        %vm2930 = vweird.f32 %v2924
        %vm2931 = vweird.f32 %v2925
        %vm2932 = vmor %vm2930, %vm2931
        %v2933 = vsel %vm2932, %v2925, %v2929
        %v2934 = vand.u32 2147483647, %v2924
        %vm2935 = vcmp.eq.f32.partialorder %v2934, 8.507059e+37
        %v2936 = vand.u32 %v2924, 2147483648
        %v2937 = vor.u32 1.1754944e-38, %v2936
        %v2938 = vsel %vm2935, %v2937, %v2933
        %v2939 = vmul.f32 1.0, %v2938
        %v2940 = vperm.slane %v2939, 0
        %v2941 = vmul.f32 %v2887, %v2940
        %v2942 = vmul.f32 %v2888, %v2940
        %v2943 = vsel %vm1503, %v2941, 0.0
        %2944 = vadd.xlane.f32.xlu0 %v2943
        %v2945 = vpop.xlane.xlu0 %2944
        %v2946 = vsel %vm1503, %v2942, 0.0
        %2947 = vadd.xlane.f32.xlu0 %v2946
        %v2948 = vpop.xlane.xlu0 %2947
        %v2949 = vmul.f32 %v2945, %v1516
        %v2950 = vmul.f32 %v2948, %v1516
        %s2951 = scalar_lea.vmem %s335, 48 [#allocation3]
        %v2952 = vld [vmem:[%s2951] sm:$0xff]
        %v2953 = vld [vmem:[%s2951 + $0x8] sm:$0xff]
        %2954 = vrot.lane.b32.xlu0 %v2952, 64
        %v2955 = vpop.permute.xlu0 %2954
        %v2956 = vsel %vm490, %v2955, %v2952
        %2957 = vrot.lane.b32.xlu0 %v2953, 64
        %v2958 = vpop.permute.xlu0 %2957
        %v2959 = vsel %vm490, %v2958, %v2953
        %2960 = vrot.lane.b32.xlu0 %v2956, 64
        %v2961 = vpop.permute.xlu0 %2960
        %2962 = vrot.lane.b32.xlu0 %v2959, 64
        %v2963 = vpop.permute.xlu0 %2962
        %v2964 = vsel %vm490, %v2961, %v2952
        %v2965 = vsel %vm490, %v2963, %v2953
        %v2966 = vmul.f32 %v2964, %v506
        %v2967 = vmul.f32 %v2965, %v506
        %v2968 = vpack.c.bf16 %v2967, %v2966
        %v2969 = vmul.f32 %v2964, %v514
        %v2970 = vmul.f32 %v2965, %v514
        %v2971 = vpack.c.bf16 %v2970, %v2969
        %2973 = vrot.lane.b32.xlu0 %v2971, 72
        %v2974 = vpop.permute.xlu0 %2973
        %2976 = vmatpush.bf16.msra.mxu0 0
        %2977 = vmatpush.bf16.msra.mxu0 0
        %2978 = vmatpush.bf16.msra.mxu0 0
        %2979 = vmatpush.bf16.msra.mxu0 0
        %2980 = vmatpush.bf16.msra.mxu0 0
        %2981 = vmatpush.bf16.msra.mxu0 0
        %2982 = vmatpush.bf16.msra.mxu0 0
        %2983 = vmatpush.bf16.msra.mxu0 %v2974
        %2984 = vmatmul.bf16.gmra.mxu0 %v530
        %v2985 = vpop.f32.mrf.mxu0
        %v2986 = vadd.f32 0.0, %v2985
        %v2987 = vpop.f32.mrf.mxu0
        %v2988 = vadd.f32 0.0, %v2987
        %2989 = vdwg.mxu0
        %2991 = vrot.lane.b32.xlu0 %v2968, 73
        %v2992 = vpop.permute.xlu0 %2991
        %2994 = vmatpush.bf16.msra.mxu0 0
        %2995 = vmatpush.bf16.msra.mxu0 0
        %2996 = vmatpush.bf16.msra.mxu0 0
        %2997 = vmatpush.bf16.msra.mxu0 0
        %2998 = vmatpush.bf16.msra.mxu0 0
        %2999 = vmatpush.bf16.msra.mxu0 0
        %3000 = vmatpush.bf16.msra.mxu0 0
        %3001 = vmatpush.bf16.msra.mxu0 %v2992
        %3002 = vmatmul.bf16.gmra.mxu0 %v556
        %v3003 = vpop.f32.mrf.mxu0
        %v3004 = vadd.f32 %v2986, %v3003
        %v3005 = vpop.f32.mrf.mxu0
        %v3006 = vadd.f32 %v2988, %v3005
        %3007 = vdwg.mxu0
        %v3008 = vmul.f32 %v2964, %v575
        %v3009 = vmul.f32 %v2965, %v575
        %v3010 = vpack.c.bf16 %v3009, %v3008
        %3012 = vrot.lane.b32.xlu0 %v3010, 71
        %v3013 = vpop.permute.xlu0 %3012
        %3015 = vmatpush.bf16.msra.mxu0 0
        %3016 = vmatpush.bf16.msra.mxu0 0
        %3017 = vmatpush.bf16.msra.mxu0 0
        %3018 = vmatpush.bf16.msra.mxu0 0
        %3019 = vmatpush.bf16.msra.mxu0 0
        %3020 = vmatpush.bf16.msra.mxu0 0
        %3021 = vmatpush.bf16.msra.mxu0 0
        %3022 = vmatpush.bf16.msra.mxu0 %v3013
        %3023 = vmatmul.bf16.gmra.mxu0 %v590
        %v3024 = vpop.f32.mrf.mxu0
        %v3025 = vadd.f32 0.0, %v3024
        %v3026 = vpop.f32.mrf.mxu0
        %v3027 = vadd.f32 0.0, %v3026
        %3028 = vdwg.mxu0
        %v3029 = vadd.f32 %v3004, %v3025
        %v3030 = vadd.f32 %v3006, %v3027
        %v3031 = vmul.f32 %v2964, %v611
        %v3032 = vmul.f32 %v2965, %v611
        %v3033 = vpack.c.bf16 %v3032, %v3031
        %3035 = vrot.lane.b32.xlu0 %v3033, 65
        %v3036 = vpop.permute.xlu0 %3035
        %3038 = vmatpush.bf16.msra.mxu0 0
        %3039 = vmatpush.bf16.msra.mxu0 0
        %3040 = vmatpush.bf16.msra.mxu0 0
        %3041 = vmatpush.bf16.msra.mxu0 0
        %3042 = vmatpush.bf16.msra.mxu0 0
        %3043 = vmatpush.bf16.msra.mxu0 0
        %3044 = vmatpush.bf16.msra.mxu0 0
        %3045 = vmatpush.bf16.msra.mxu0 %v3036
        %3046 = vmatmul.bf16.gmra.mxu0 %v626
        %v3047 = vpop.f32.mrf.mxu0
        %v3048 = vadd.f32 0.0, %v3047
        %v3049 = vpop.f32.mrf.mxu0
        %v3050 = vadd.f32 0.0, %v3049
        %3051 = vdwg.mxu0
        %v3052 = vadd.f32 %v3029, %v3048
        %v3053 = vadd.f32 %v3030, %v3050
        %v3054 = vmul.f32 %v2952, %v644
        %v3055 = vmul.f32 %v2953, %v644
        %v3056 = vpack.c.bf16 %v3055, %v3054
        %3057 = vmatpush.bf16.msra.mxu0 0
        %3058 = vmatpush.bf16.msra.mxu0 0
        %3059 = vmatpush.bf16.msra.mxu0 0
        %3060 = vmatpush.bf16.msra.mxu0 0
        %3061 = vmatpush.bf16.msra.mxu0 0
        %3062 = vmatpush.bf16.msra.mxu0 0
        %3063 = vmatpush.bf16.msra.mxu0 0
        %3064 = vmatpush.bf16.msra.mxu0 %v3056
        %3065 = vmatmul.bf16.gmra.mxu0 %v654
        %v3066 = vpop.f32.mrf.mxu0
        %v3067 = vadd.f32 0.0, %v3066
        %v3068 = vpop.f32.mrf.mxu0
        %v3069 = vadd.f32 0.0, %v3068
        %3070 = vdwg.mxu0
        %v3071 = vadd.f32 %v3052, %v3067
        %v3072 = vadd.f32 %v3053, %v3069
        %v3073 = vmul.f32 %v2964, %v675
        %v3074 = vmul.f32 %v2965, %v675
        %v3075 = vpack.c.bf16 %v3074, %v3073
        %3077 = vrot.lane.b32.xlu0 %v3075, 127
        %v3078 = vpop.permute.xlu0 %3077
        %3080 = vmatpush.bf16.msra.mxu0 0
        %3081 = vmatpush.bf16.msra.mxu0 0
        %3082 = vmatpush.bf16.msra.mxu0 0
        %3083 = vmatpush.bf16.msra.mxu0 0
        %3084 = vmatpush.bf16.msra.mxu0 0
        %3085 = vmatpush.bf16.msra.mxu0 0
        %3086 = vmatpush.bf16.msra.mxu0 0
        %3087 = vmatpush.bf16.msra.mxu0 %v3078
        %3088 = vmatmul.bf16.gmra.mxu0 %v690
        %v3089 = vpop.f32.mrf.mxu0
        %v3090 = vadd.f32 0.0, %v3089
        %v3091 = vpop.f32.mrf.mxu0
        %v3092 = vadd.f32 0.0, %v3091
        %3093 = vdwg.mxu0
        %v3094 = vadd.f32 %v3071, %v3090
        %v3095 = vadd.f32 %v3072, %v3092
        %v3096 = vmul.f32 %v2964, %v711
        %v3097 = vmul.f32 %v2965, %v711
        %v3098 = vpack.c.bf16 %v3097, %v3096
        %3100 = vrot.lane.b32.xlu0 %v3098, 121
        %v3101 = vpop.permute.xlu0 %3100
        %3103 = vmatpush.bf16.msra.mxu0 0
        %3104 = vmatpush.bf16.msra.mxu0 0
        %3105 = vmatpush.bf16.msra.mxu0 0
        %3106 = vmatpush.bf16.msra.mxu0 0
        %3107 = vmatpush.bf16.msra.mxu0 0
        %3108 = vmatpush.bf16.msra.mxu0 0
        %3109 = vmatpush.bf16.msra.mxu0 0
        %3110 = vmatpush.bf16.msra.mxu0 %v3101
        %3111 = vmatmul.bf16.gmra.mxu0 %v726
        %v3112 = vpop.f32.mrf.mxu0
        %v3113 = vadd.f32 0.0, %v3112
        %v3114 = vpop.f32.mrf.mxu0
        %v3115 = vadd.f32 0.0, %v3114
        %3116 = vdwg.mxu0
        %v3117 = vadd.f32 %v3094, %v3113
        %v3118 = vadd.f32 %v3095, %v3115
        %v3119 = vmul.f32 %v2964, %v747
        %v3120 = vmul.f32 %v2965, %v747
        %v3121 = vpack.c.bf16 %v3120, %v3119
        %3123 = vrot.lane.b32.xlu0 %v3121, 120
        %v3124 = vpop.permute.xlu0 %3123
        %3126 = vmatpush.bf16.msra.mxu0 0
        %3127 = vmatpush.bf16.msra.mxu0 0
        %3128 = vmatpush.bf16.msra.mxu0 0
        %3129 = vmatpush.bf16.msra.mxu0 0
        %3130 = vmatpush.bf16.msra.mxu0 0
        %3131 = vmatpush.bf16.msra.mxu0 0
        %3132 = vmatpush.bf16.msra.mxu0 0
        %3133 = vmatpush.bf16.msra.mxu0 %v3124
        %3134 = vmatmul.bf16.gmra.mxu0 %v762
        %v3135 = vpop.f32.mrf.mxu0
        %v3136 = vadd.f32 0.0, %v3135
        %v3137 = vpop.f32.mrf.mxu0
        %v3138 = vadd.f32 0.0, %v3137
        %3139 = vdwg.mxu0
        %v3140 = vadd.f32 %v3117, %v3136
        %v3141 = vadd.f32 %v3118, %v3138
        %v3142 = vmul.f32 %v2964, %v783
        %v3143 = vmul.f32 %v2965, %v783
        %v3144 = vpack.c.bf16 %v3143, %v3142
        %3146 = vrot.lane.b32.xlu0 %v3144, 119
        %v3147 = vpop.permute.xlu0 %3146
        %3149 = vmatpush.bf16.msra.mxu0 0
        %3150 = vmatpush.bf16.msra.mxu0 0
        %3151 = vmatpush.bf16.msra.mxu0 0
        %3152 = vmatpush.bf16.msra.mxu0 0
        %3153 = vmatpush.bf16.msra.mxu0 0
        %3154 = vmatpush.bf16.msra.mxu0 0
        %3155 = vmatpush.bf16.msra.mxu0 0
        %3156 = vmatpush.bf16.msra.mxu0 %v3147
        %3157 = vmatmul.bf16.gmra.mxu0 %v798
        %v3158 = vpop.f32.mrf.mxu0
        %v3159 = vadd.f32 0.0, %v3158
        %v3160 = vpop.f32.mrf.mxu0
        %v3161 = vadd.f32 0.0, %v3160
        %3162 = vdwg.mxu0
        %v3163 = vadd.f32 %v3140, %v3159
        %v3164 = vadd.f32 %v3141, %v3161
        %v3165 = vadd.f32 %v3163, %v819
        %v3166 = vadd.f32 %v3164, %v824
        %v3167 = vmax.f32 %v3165, 0.0
        %v3168 = vmax.f32 %v3166, 0.0
        %v3169 = vadd.f32 %v3167, %v2952
        %v3170 = vadd.f32 %v3168, %v2953
        %3171 = vrot.lane.b32.xlu0 %v3169, 64
        %v3172 = vpop.permute.xlu0 %3171
        %v3173 = vsel %vm490, %v3172, %v3169
        %3174 = vrot.lane.b32.xlu0 %v3170, 64
        %v3175 = vpop.permute.xlu0 %3174
        %v3176 = vsel %vm490, %v3175, %v3170
        %3177 = vrot.lane.b32.xlu0 %v3173, 64
        %v3178 = vpop.permute.xlu0 %3177
        %3179 = vrot.lane.b32.xlu0 %v3176, 64
        %v3180 = vpop.permute.xlu0 %3179
        %v3181 = vsel %vm490, %v3178, %v3169
        %v3182 = vsel %vm490, %v3180, %v3170
        %v3183 = vmul.f32 %v3181, %v506
        %v3184 = vmul.f32 %v3182, %v506
        %v3185 = vpack.c.bf16 %v3184, %v3183
        %v3186 = vmul.f32 %v3181, %v514
        %v3187 = vmul.f32 %v3182, %v514
        %v3188 = vpack.c.bf16 %v3187, %v3186
        %3190 = vrot.lane.b32.xlu0 %v3188, 72
        %v3191 = vpop.permute.xlu0 %3190
        %3193 = vmatpush.bf16.msra.mxu0 0
        %3194 = vmatpush.bf16.msra.mxu0 0
        %3195 = vmatpush.bf16.msra.mxu0 0
        %3196 = vmatpush.bf16.msra.mxu0 0
        %3197 = vmatpush.bf16.msra.mxu0 0
        %3198 = vmatpush.bf16.msra.mxu0 0
        %3199 = vmatpush.bf16.msra.mxu0 0
        %3200 = vmatpush.bf16.msra.mxu0 %v3191
        %3201 = vmatmul.bf16.gmra.mxu0 %v860
        %v3202 = vpop.f32.mrf.mxu0
        %v3203 = vadd.f32 0.0, %v3202
        %v3204 = vpop.f32.mrf.mxu0
        %v3205 = vadd.f32 0.0, %v3204
        %3206 = vdwg.mxu0
        %3208 = vrot.lane.b32.xlu0 %v3185, 73
        %v3209 = vpop.permute.xlu0 %3208
        %3211 = vmatpush.bf16.msra.mxu0 0
        %3212 = vmatpush.bf16.msra.mxu0 0
        %3213 = vmatpush.bf16.msra.mxu0 0
        %3214 = vmatpush.bf16.msra.mxu0 0
        %3215 = vmatpush.bf16.msra.mxu0 0
        %3216 = vmatpush.bf16.msra.mxu0 0
        %3217 = vmatpush.bf16.msra.mxu0 0
        %3218 = vmatpush.bf16.msra.mxu0 %v3209
        %3219 = vmatmul.bf16.gmra.mxu0 %v886
        %v3220 = vpop.f32.mrf.mxu0
        %v3221 = vadd.f32 %v3203, %v3220
        %v3222 = vpop.f32.mrf.mxu0
        %v3223 = vadd.f32 %v3205, %v3222
        %3224 = vdwg.mxu0
        %v3225 = vmul.f32 %v3181, %v575
        %v3226 = vmul.f32 %v3182, %v575
        %v3227 = vpack.c.bf16 %v3226, %v3225
        %3229 = vrot.lane.b32.xlu0 %v3227, 71
        %v3230 = vpop.permute.xlu0 %3229
        %3232 = vmatpush.bf16.msra.mxu0 0
        %3233 = vmatpush.bf16.msra.mxu0 0
        %3234 = vmatpush.bf16.msra.mxu0 0
        %3235 = vmatpush.bf16.msra.mxu0 0
        %3236 = vmatpush.bf16.msra.mxu0 0
        %3237 = vmatpush.bf16.msra.mxu0 0
        %3238 = vmatpush.bf16.msra.mxu0 0
        %3239 = vmatpush.bf16.msra.mxu0 %v3230
        %3240 = vmatmul.bf16.gmra.mxu0 %v915
        %v3241 = vpop.f32.mrf.mxu0
        %v3242 = vadd.f32 0.0, %v3241
        %v3243 = vpop.f32.mrf.mxu0
        %v3244 = vadd.f32 0.0, %v3243
        %3245 = vdwg.mxu0
        %v3246 = vadd.f32 %v3221, %v3242
        %v3247 = vadd.f32 %v3223, %v3244
        %v3248 = vmul.f32 %v3181, %v611
        %v3249 = vmul.f32 %v3182, %v611
        %v3250 = vpack.c.bf16 %v3249, %v3248
        %3252 = vrot.lane.b32.xlu0 %v3250, 65
        %v3253 = vpop.permute.xlu0 %3252
        %3255 = vmatpush.bf16.msra.mxu0 0
        %3256 = vmatpush.bf16.msra.mxu0 0
        %3257 = vmatpush.bf16.msra.mxu0 0
        %3258 = vmatpush.bf16.msra.mxu0 0
        %3259 = vmatpush.bf16.msra.mxu0 0
        %3260 = vmatpush.bf16.msra.mxu0 0
        %3261 = vmatpush.bf16.msra.mxu0 0
        %3262 = vmatpush.bf16.msra.mxu0 %v3253
        %3263 = vmatmul.bf16.gmra.mxu0 %v946
        %v3264 = vpop.f32.mrf.mxu0
        %v3265 = vadd.f32 0.0, %v3264
        %v3266 = vpop.f32.mrf.mxu0
        %v3267 = vadd.f32 0.0, %v3266
        %3268 = vdwg.mxu0
        %v3269 = vadd.f32 %v3246, %v3265
        %v3270 = vadd.f32 %v3247, %v3267
        %v3271 = vmul.f32 %v3169, %v644
        %v3272 = vmul.f32 %v3170, %v644
        %v3273 = vpack.c.bf16 %v3272, %v3271
        %3274 = vmatpush.bf16.msra.mxu0 0
        %3275 = vmatpush.bf16.msra.mxu0 0
        %3276 = vmatpush.bf16.msra.mxu0 0
        %3277 = vmatpush.bf16.msra.mxu0 0
        %3278 = vmatpush.bf16.msra.mxu0 0
        %3279 = vmatpush.bf16.msra.mxu0 0
        %3280 = vmatpush.bf16.msra.mxu0 0
        %3281 = vmatpush.bf16.msra.mxu0 %v3273
        %3282 = vmatmul.bf16.gmra.mxu0 %v973
        %v3283 = vpop.f32.mrf.mxu0
        %v3284 = vadd.f32 0.0, %v3283
        %v3285 = vpop.f32.mrf.mxu0
        %v3286 = vadd.f32 0.0, %v3285
        %3287 = vdwg.mxu0
        %v3288 = vadd.f32 %v3269, %v3284
        %v3289 = vadd.f32 %v3270, %v3286
        %v3290 = vmul.f32 %v3181, %v675
        %v3291 = vmul.f32 %v3182, %v675
        %v3292 = vpack.c.bf16 %v3291, %v3290
        %3294 = vrot.lane.b32.xlu0 %v3292, 127
        %v3295 = vpop.permute.xlu0 %3294
        %3297 = vmatpush.bf16.msra.mxu0 0
        %3298 = vmatpush.bf16.msra.mxu0 0
        %3299 = vmatpush.bf16.msra.mxu0 0
        %3300 = vmatpush.bf16.msra.mxu0 0
        %3301 = vmatpush.bf16.msra.mxu0 0
        %3302 = vmatpush.bf16.msra.mxu0 0
        %3303 = vmatpush.bf16.msra.mxu0 0
        %3304 = vmatpush.bf16.msra.mxu0 %v3295
        %3305 = vmatmul.bf16.gmra.mxu0 %v1004
        %v3306 = vpop.f32.mrf.mxu0
        %v3307 = vadd.f32 0.0, %v3306
        %v3308 = vpop.f32.mrf.mxu0
        %v3309 = vadd.f32 0.0, %v3308
        %3310 = vdwg.mxu0
        %v3311 = vadd.f32 %v3288, %v3307
        %v3312 = vadd.f32 %v3289, %v3309
        %v3313 = vmul.f32 %v3181, %v711
        %v3314 = vmul.f32 %v3182, %v711
        %v3315 = vpack.c.bf16 %v3314, %v3313
        %3317 = vrot.lane.b32.xlu0 %v3315, 121
        %v3318 = vpop.permute.xlu0 %3317
        %3320 = vmatpush.bf16.msra.mxu0 0
        %3321 = vmatpush.bf16.msra.mxu0 0
        %3322 = vmatpush.bf16.msra.mxu0 0
        %3323 = vmatpush.bf16.msra.mxu0 0
        %3324 = vmatpush.bf16.msra.mxu0 0
        %3325 = vmatpush.bf16.msra.mxu0 0
        %3326 = vmatpush.bf16.msra.mxu0 0
        %3327 = vmatpush.bf16.msra.mxu0 %v3318
        %3328 = vmatmul.bf16.gmra.mxu0 %v1035
        %v3329 = vpop.f32.mrf.mxu0
        %v3330 = vadd.f32 0.0, %v3329
        %v3331 = vpop.f32.mrf.mxu0
        %v3332 = vadd.f32 0.0, %v3331
        %3333 = vdwg.mxu0
        %v3334 = vadd.f32 %v3311, %v3330
        %v3335 = vadd.f32 %v3312, %v3332
        %v3336 = vmul.f32 %v3181, %v747
        %v3337 = vmul.f32 %v3182, %v747
        %v3338 = vpack.c.bf16 %v3337, %v3336
        %3340 = vrot.lane.b32.xlu0 %v3338, 120
        %v3341 = vpop.permute.xlu0 %3340
        %3343 = vmatpush.bf16.msra.mxu0 0
        %3344 = vmatpush.bf16.msra.mxu0 0
        %3345 = vmatpush.bf16.msra.mxu0 0
        %3346 = vmatpush.bf16.msra.mxu0 0
        %3347 = vmatpush.bf16.msra.mxu0 0
        %3348 = vmatpush.bf16.msra.mxu0 0
        %3349 = vmatpush.bf16.msra.mxu0 0
        %3350 = vmatpush.bf16.msra.mxu0 %v3341
        %3351 = vmatmul.bf16.gmra.mxu0 %v1066
        %v3352 = vpop.f32.mrf.mxu0
        %v3353 = vadd.f32 0.0, %v3352
        %v3354 = vpop.f32.mrf.mxu0
        %v3355 = vadd.f32 0.0, %v3354
        %3356 = vdwg.mxu0
        %v3357 = vadd.f32 %v3334, %v3353
        %v3358 = vadd.f32 %v3335, %v3355
        %v3359 = vmul.f32 %v3181, %v783
        %v3360 = vmul.f32 %v3182, %v783
        %v3361 = vpack.c.bf16 %v3360, %v3359
        %3363 = vrot.lane.b32.xlu0 %v3361, 119
        %v3364 = vpop.permute.xlu0 %3363
        %3366 = vmatpush.bf16.msra.mxu0 0
        %3367 = vmatpush.bf16.msra.mxu0 0
        %3368 = vmatpush.bf16.msra.mxu0 0
        %3369 = vmatpush.bf16.msra.mxu0 0
        %3370 = vmatpush.bf16.msra.mxu0 0
        %3371 = vmatpush.bf16.msra.mxu0 0
        %3372 = vmatpush.bf16.msra.mxu0 0
        %3373 = vmatpush.bf16.msra.mxu0 %v3364
        %3374 = vmatmul.bf16.gmra.mxu0 %v1097
        %v3375 = vpop.f32.mrf.mxu0
        %v3376 = vadd.f32 0.0, %v3375
        %v3377 = vpop.f32.mrf.mxu0
        %v3378 = vadd.f32 0.0, %v3377
        %3379 = vdwg.mxu0
        %v3380 = vadd.f32 %v3357, %v3376
        %v3381 = vadd.f32 %v3358, %v3378
        %v3382 = vadd.f32 %v3380, %v1118
        %v3383 = vadd.f32 %v3381, %v1123
        %v3384 = vmax.f32 %v3382, 0.0
        %v3385 = vmax.f32 %v3383, 0.0
        %v3386 = vadd.f32 %v3384, %v3169
        %v3387 = vadd.f32 %v3385, %v3170
        %3388 = vrot.lane.b32.xlu0 %v3386, 64
        %v3389 = vpop.permute.xlu0 %3388
        %v3390 = vsel %vm490, %v3389, %v3386
        %3391 = vrot.lane.b32.xlu0 %v3387, 64
        %v3392 = vpop.permute.xlu0 %3391
        %v3393 = vsel %vm490, %v3392, %v3387
        %3394 = vrot.lane.b32.xlu0 %v3390, 64
        %v3395 = vpop.permute.xlu0 %3394
        %3396 = vrot.lane.b32.xlu0 %v3393, 64
        %v3397 = vpop.permute.xlu0 %3396
        %v3398 = vsel %vm490, %v3395, %v3386
        %v3399 = vsel %vm490, %v3397, %v3387
        %v3400 = vmul.f32 %v3398, %v506
        %v3401 = vmul.f32 %v3399, %v506
        %v3402 = vpack.c.bf16 %v3401, %v3400
        %v3403 = vmul.f32 %v3398, %v514
        %v3404 = vmul.f32 %v3399, %v514
        %v3405 = vpack.c.bf16 %v3404, %v3403
        %3407 = vrot.lane.b32.xlu0 %v3405, 72
        %v3408 = vpop.permute.xlu0 %3407
        %3410 = vmatpush.bf16.msra.mxu0 0
        %3411 = vmatpush.bf16.msra.mxu0 0
        %3412 = vmatpush.bf16.msra.mxu0 0
        %3413 = vmatpush.bf16.msra.mxu0 0
        %3414 = vmatpush.bf16.msra.mxu0 0
        %3415 = vmatpush.bf16.msra.mxu0 0
        %3416 = vmatpush.bf16.msra.mxu0 0
        %3417 = vmatpush.bf16.msra.mxu0 %v3408
        %3418 = vmatmul.bf16.gmra.mxu0 %v1159
        %v3419 = vpop.f32.mrf.mxu0
        %v3420 = vadd.f32 0.0, %v3419
        %v3421 = vpop.f32.mrf.mxu0
        %v3422 = vadd.f32 0.0, %v3421
        %3423 = vdwg.mxu0
        %3425 = vrot.lane.b32.xlu0 %v3402, 73
        %v3426 = vpop.permute.xlu0 %3425
        %3428 = vmatpush.bf16.msra.mxu0 0
        %3429 = vmatpush.bf16.msra.mxu0 0
        %3430 = vmatpush.bf16.msra.mxu0 0
        %3431 = vmatpush.bf16.msra.mxu0 0
        %3432 = vmatpush.bf16.msra.mxu0 0
        %3433 = vmatpush.bf16.msra.mxu0 0
        %3434 = vmatpush.bf16.msra.mxu0 0
        %3435 = vmatpush.bf16.msra.mxu0 %v3426
        %3436 = vmatmul.bf16.gmra.mxu0 %v1185
        %v3437 = vpop.f32.mrf.mxu0
        %v3438 = vadd.f32 %v3420, %v3437
        %v3439 = vpop.f32.mrf.mxu0
        %v3440 = vadd.f32 %v3422, %v3439
        %3441 = vdwg.mxu0
        %v3442 = vmul.f32 %v3398, %v575
        %v3443 = vmul.f32 %v3399, %v575
        %v3444 = vpack.c.bf16 %v3443, %v3442
        %3446 = vrot.lane.b32.xlu0 %v3444, 71
        %v3447 = vpop.permute.xlu0 %3446
        %3449 = vmatpush.bf16.msra.mxu0 0
        %3450 = vmatpush.bf16.msra.mxu0 0
        %3451 = vmatpush.bf16.msra.mxu0 0
        %3452 = vmatpush.bf16.msra.mxu0 0
        %3453 = vmatpush.bf16.msra.mxu0 0
        %3454 = vmatpush.bf16.msra.mxu0 0
        %3455 = vmatpush.bf16.msra.mxu0 0
        %3456 = vmatpush.bf16.msra.mxu0 %v3447
        %3457 = vmatmul.bf16.gmra.mxu0 %v1214
        %v3458 = vpop.f32.mrf.mxu0
        %v3459 = vadd.f32 0.0, %v3458
        %v3460 = vpop.f32.mrf.mxu0
        %v3461 = vadd.f32 0.0, %v3460
        %3462 = vdwg.mxu0
        %v3463 = vadd.f32 %v3438, %v3459
        %v3464 = vadd.f32 %v3440, %v3461
        %v3465 = vmul.f32 %v3398, %v611
        %v3466 = vmul.f32 %v3399, %v611
        %v3467 = vpack.c.bf16 %v3466, %v3465
        %3469 = vrot.lane.b32.xlu0 %v3467, 65
        %v3470 = vpop.permute.xlu0 %3469
        %3472 = vmatpush.bf16.msra.mxu0 0
        %3473 = vmatpush.bf16.msra.mxu0 0
        %3474 = vmatpush.bf16.msra.mxu0 0
        %3475 = vmatpush.bf16.msra.mxu0 0
        %3476 = vmatpush.bf16.msra.mxu0 0
        %3477 = vmatpush.bf16.msra.mxu0 0
        %3478 = vmatpush.bf16.msra.mxu0 0
        %3479 = vmatpush.bf16.msra.mxu0 %v3470
        %3480 = vmatmul.bf16.gmra.mxu0 %v1245
        %v3481 = vpop.f32.mrf.mxu0
        %v3482 = vadd.f32 0.0, %v3481
        %v3483 = vpop.f32.mrf.mxu0
        %v3484 = vadd.f32 0.0, %v3483
        %3485 = vdwg.mxu0
        %v3486 = vadd.f32 %v3463, %v3482
        %v3487 = vadd.f32 %v3464, %v3484
        %v3488 = vmul.f32 %v3386, %v644
        %v3489 = vmul.f32 %v3387, %v644
        %v3490 = vpack.c.bf16 %v3489, %v3488
        %3491 = vmatpush.bf16.msra.mxu0 0
        %3492 = vmatpush.bf16.msra.mxu0 0
        %3493 = vmatpush.bf16.msra.mxu0 0
        %3494 = vmatpush.bf16.msra.mxu0 0
        %3495 = vmatpush.bf16.msra.mxu0 0
        %3496 = vmatpush.bf16.msra.mxu0 0
        %3497 = vmatpush.bf16.msra.mxu0 0
        %3498 = vmatpush.bf16.msra.mxu0 %v3490
        %3499 = vmatmul.bf16.gmra.mxu0 %v1272
        %v3500 = vpop.f32.mrf.mxu0
        %v3501 = vadd.f32 0.0, %v3500
        %v3502 = vpop.f32.mrf.mxu0
        %v3503 = vadd.f32 0.0, %v3502
        %3504 = vdwg.mxu0
        %v3505 = vadd.f32 %v3486, %v3501
        %v3506 = vadd.f32 %v3487, %v3503
        %v3507 = vmul.f32 %v3398, %v675
        %v3508 = vmul.f32 %v3399, %v675
        %v3509 = vpack.c.bf16 %v3508, %v3507
        %3511 = vrot.lane.b32.xlu0 %v3509, 127
        %v3512 = vpop.permute.xlu0 %3511
        %3514 = vmatpush.bf16.msra.mxu0 0
        %3515 = vmatpush.bf16.msra.mxu0 0
        %3516 = vmatpush.bf16.msra.mxu0 0
        %3517 = vmatpush.bf16.msra.mxu0 0
        %3518 = vmatpush.bf16.msra.mxu0 0
        %3519 = vmatpush.bf16.msra.mxu0 0
        %3520 = vmatpush.bf16.msra.mxu0 0
        %3521 = vmatpush.bf16.msra.mxu0 %v3512
        %3522 = vmatmul.bf16.gmra.mxu0 %v1303
        %v3523 = vpop.f32.mrf.mxu0
        %v3524 = vadd.f32 0.0, %v3523
        %v3525 = vpop.f32.mrf.mxu0
        %v3526 = vadd.f32 0.0, %v3525
        %3527 = vdwg.mxu0
        %v3528 = vadd.f32 %v3505, %v3524
        %v3529 = vadd.f32 %v3506, %v3526
        %v3530 = vmul.f32 %v3398, %v711
        %v3531 = vmul.f32 %v3399, %v711
        %v3532 = vpack.c.bf16 %v3531, %v3530
        %3534 = vrot.lane.b32.xlu0 %v3532, 121
        %v3535 = vpop.permute.xlu0 %3534
        %3537 = vmatpush.bf16.msra.mxu0 0
        %3538 = vmatpush.bf16.msra.mxu0 0
        %3539 = vmatpush.bf16.msra.mxu0 0
        %3540 = vmatpush.bf16.msra.mxu0 0
        %3541 = vmatpush.bf16.msra.mxu0 0
        %3542 = vmatpush.bf16.msra.mxu0 0
        %3543 = vmatpush.bf16.msra.mxu0 0
        %3544 = vmatpush.bf16.msra.mxu0 %v3535
        %3545 = vmatmul.bf16.gmra.mxu0 %v1334
        %v3546 = vpop.f32.mrf.mxu0
        %v3547 = vadd.f32 0.0, %v3546
        %v3548 = vpop.f32.mrf.mxu0
        %v3549 = vadd.f32 0.0, %v3548
        %3550 = vdwg.mxu0
        %v3551 = vadd.f32 %v3528, %v3547
        %v3552 = vadd.f32 %v3529, %v3549
        %v3553 = vmul.f32 %v3398, %v747
        %v3554 = vmul.f32 %v3399, %v747
        %v3555 = vpack.c.bf16 %v3554, %v3553
        %3557 = vrot.lane.b32.xlu0 %v3555, 120
        %v3558 = vpop.permute.xlu0 %3557
        %3560 = vmatpush.bf16.msra.mxu0 0
        %3561 = vmatpush.bf16.msra.mxu0 0
        %3562 = vmatpush.bf16.msra.mxu0 0
        %3563 = vmatpush.bf16.msra.mxu0 0
        %3564 = vmatpush.bf16.msra.mxu0 0
        %3565 = vmatpush.bf16.msra.mxu0 0
        %3566 = vmatpush.bf16.msra.mxu0 0
        %3567 = vmatpush.bf16.msra.mxu0 %v3558
        %3568 = vmatmul.bf16.gmra.mxu0 %v1365
        %v3569 = vpop.f32.mrf.mxu0
        %v3570 = vadd.f32 0.0, %v3569
        %v3571 = vpop.f32.mrf.mxu0
        %v3572 = vadd.f32 0.0, %v3571
        %3573 = vdwg.mxu0
        %v3574 = vadd.f32 %v3551, %v3570
        %v3575 = vadd.f32 %v3552, %v3572
        %v3576 = vmul.f32 %v3398, %v783
        %v3577 = vmul.f32 %v3399, %v783
        %v3578 = vpack.c.bf16 %v3577, %v3576
        %3580 = vrot.lane.b32.xlu0 %v3578, 119
        %v3581 = vpop.permute.xlu0 %3580
        %3583 = vmatpush.bf16.msra.mxu0 0
        %3584 = vmatpush.bf16.msra.mxu0 0
        %3585 = vmatpush.bf16.msra.mxu0 0
        %3586 = vmatpush.bf16.msra.mxu0 0
        %3587 = vmatpush.bf16.msra.mxu0 0
        %3588 = vmatpush.bf16.msra.mxu0 0
        %3589 = vmatpush.bf16.msra.mxu0 0
        %3590 = vmatpush.bf16.msra.mxu0 %v3581
        %3591 = vmatmul.bf16.gmra.mxu0 %v1396
        %v3592 = vpop.f32.mrf.mxu0
        %v3593 = vadd.f32 0.0, %v3592
        %v3594 = vpop.f32.mrf.mxu0
        %v3595 = vadd.f32 0.0, %v3594
        %3596 = vdwg.mxu0
        %v3597 = vadd.f32 %v3574, %v3593
        %v3598 = vadd.f32 %v3575, %v3595
        %v3599 = vadd.f32 %v3597, %v1417
        %v3600 = vadd.f32 %v3598, %v1422
        %v3601 = vmax.f32 %v3599, 0.0
        %v3602 = vmax.f32 %v3600, 0.0
        %v3603 = vadd.f32 %v3601, %v3386
        %v3604 = vadd.f32 %v3602, %v3387
        %v3605 = vpack.c.bf16 %v3604, %v3603
        %3606 = vmatpush.bf16.msra.mxu0 0
        %3607 = vmatpush.bf16.msra.mxu0 0
        %3608 = vmatpush.bf16.msra.mxu0 0
        %3609 = vmatpush.bf16.msra.mxu0 0
        %3610 = vmatpush.bf16.msra.mxu0 0
        %3611 = vmatpush.bf16.msra.mxu0 0
        %3612 = vmatpush.bf16.msra.mxu0 0
        %3613 = vmatpush.bf16.msra.mxu0 %v3605
        %3614 = vmatmul.bf16.gmra.mxu0 %v1437
        %v3615 = vpop.f32.mrf.mxu0
        %v3616 = vadd.f32 %v1434, %v3615
        %v3617 = vpop.f32.mrf.mxu0
        %3618 = vdwg.mxu0
        %v3619 = vmax.f32 %v3616, 0.0
        %v3620 = vpack.c.bf16 %v3619, %v3619
        %v3622 = vsel %vm1464, %v3620, 0
        %3624 = vmatpush.bf16.msra.mxu0 0
        %3625 = vmatpush.bf16.msra.mxu0 0
        %3626 = vmatpush.bf16.msra.mxu0 0
        %3627 = vmatpush.bf16.msra.mxu0 0
        %3628 = vmatpush.bf16.msra.mxu0 0
        %3629 = vmatpush.bf16.msra.mxu0 0
        %3630 = vmatpush.bf16.msra.mxu0 0
        %3631 = vmatpush.bf16.msra.mxu0 %v3622
        %3632 = vmatmul.bf16.gmra.mxu0 %v1462
        %v3633 = vpop.f32.mrf.mxu0
        %v3634 = vadd.f32 %v1459, %v3633
        %v3635 = vpop.f32.mrf.mxu0
        %3636 = vdwg.mxu0
        %v3637 = vxor.u32 %v3634, 2147483648
        %v3638 = vmul.f32 %v3637, 1.442695
        %v3639 = vpow.pop %v3638
        %v3640 = vadd.f32 %v3639, 1.0
        %v3641 = vrcp.pop %v3640
        %v3642 = vmul.f32 %v3640, %v3641
        %v3643 = vsub.f32 1.0, %v3642
        %v3644 = vmul.f32 %v3641, %v3643
        %v3645 = vadd.f32 %v3641, %v3644
        %vm3646 = vweird.f32 %v3640
        %vm3647 = vweird.f32 %v3641
        %vm3648 = vmor %vm3646, %vm3647
        %v3649 = vsel %vm3648, %v3641, %v3645
        %v3650 = vand.u32 2147483647, %v3640
        %vm3651 = vcmp.eq.f32.partialorder %v3650, 8.507059e+37
        %v3652 = vand.u32 %v3640, 2147483648
        %v3653 = vor.u32 1.1754944e-38, %v3652
        %v3654 = vsel %vm3651, %v3653, %v3649
        %v3655 = vmul.f32 1.0, %v3654
        %v3656 = vperm.slane %v3655, 0
        %v3657 = vmul.f32 %v3603, %v3656
        %v3658 = vmul.f32 %v3604, %v3656
        %v3659 = vsel %vm1503, %v3657, 0.0
        %3660 = vadd.xlane.f32.xlu0 %v3659
        %v3661 = vpop.xlane.xlu0 %3660
        %v3662 = vsel %vm1503, %v3658, 0.0
        %3663 = vadd.xlane.f32.xlu0 %v3662
        %v3664 = vpop.xlane.xlu0 %3663
        %v3665 = vmul.f32 %v3661, %v1516
        %v3666 = vmul.f32 %v3664, %v1516
        %s3667 = scalar_lea.vmem %s335, 64 [#allocation3]
        %v3668 = vld [vmem:[%s3667] sm:$0xff]
        %v3669 = vld [vmem:[%s3667 + $0x8] sm:$0xff]
        %3670 = vrot.lane.b32.xlu0 %v3668, 64
        %v3671 = vpop.permute.xlu0 %3670
        %v3672 = vsel %vm490, %v3671, %v3668
        %3673 = vrot.lane.b32.xlu0 %v3669, 64
        %v3674 = vpop.permute.xlu0 %3673
        %v3675 = vsel %vm490, %v3674, %v3669
        %3676 = vrot.lane.b32.xlu0 %v3672, 64
        %v3677 = vpop.permute.xlu0 %3676
        %3678 = vrot.lane.b32.xlu0 %v3675, 64
        %v3679 = vpop.permute.xlu0 %3678
        %v3680 = vsel %vm490, %v3677, %v3668
        %v3681 = vsel %vm490, %v3679, %v3669
        %v3682 = vmul.f32 %v3680, %v506
        %v3683 = vmul.f32 %v3681, %v506
        %v3684 = vpack.c.bf16 %v3683, %v3682
        %v3685 = vmul.f32 %v3680, %v514
        %v3686 = vmul.f32 %v3681, %v514
        %v3687 = vpack.c.bf16 %v3686, %v3685
        %3689 = vrot.lane.b32.xlu0 %v3687, 72
        %v3690 = vpop.permute.xlu0 %3689
        %3692 = vmatpush.bf16.msra.mxu0 0
        %3693 = vmatpush.bf16.msra.mxu0 0
        %3694 = vmatpush.bf16.msra.mxu0 0
        %3695 = vmatpush.bf16.msra.mxu0 0
        %3696 = vmatpush.bf16.msra.mxu0 0
        %3697 = vmatpush.bf16.msra.mxu0 0
        %3698 = vmatpush.bf16.msra.mxu0 0
        %3699 = vmatpush.bf16.msra.mxu0 %v3690
        %3700 = vmatmul.bf16.gmra.mxu0 %v530
        %v3701 = vpop.f32.mrf.mxu0
        %v3702 = vadd.f32 0.0, %v3701
        %v3703 = vpop.f32.mrf.mxu0
        %v3704 = vadd.f32 0.0, %v3703
        %3705 = vdwg.mxu0
        %3707 = vrot.lane.b32.xlu0 %v3684, 73
        %v3708 = vpop.permute.xlu0 %3707
        %3710 = vmatpush.bf16.msra.mxu0 0
        %3711 = vmatpush.bf16.msra.mxu0 0
        %3712 = vmatpush.bf16.msra.mxu0 0
        %3713 = vmatpush.bf16.msra.mxu0 0
        %3714 = vmatpush.bf16.msra.mxu0 0
        %3715 = vmatpush.bf16.msra.mxu0 0
        %3716 = vmatpush.bf16.msra.mxu0 0
        %3717 = vmatpush.bf16.msra.mxu0 %v3708
        %3718 = vmatmul.bf16.gmra.mxu0 %v556
        %v3719 = vpop.f32.mrf.mxu0
        %v3720 = vadd.f32 %v3702, %v3719
        %v3721 = vpop.f32.mrf.mxu0
        %v3722 = vadd.f32 %v3704, %v3721
        %3723 = vdwg.mxu0
        %v3724 = vmul.f32 %v3680, %v575
        %v3725 = vmul.f32 %v3681, %v575
        %v3726 = vpack.c.bf16 %v3725, %v3724
        %3728 = vrot.lane.b32.xlu0 %v3726, 71
        %v3729 = vpop.permute.xlu0 %3728
        %3731 = vmatpush.bf16.msra.mxu0 0
        %3732 = vmatpush.bf16.msra.mxu0 0
        %3733 = vmatpush.bf16.msra.mxu0 0
        %3734 = vmatpush.bf16.msra.mxu0 0
        %3735 = vmatpush.bf16.msra.mxu0 0
        %3736 = vmatpush.bf16.msra.mxu0 0
        %3737 = vmatpush.bf16.msra.mxu0 0
        %3738 = vmatpush.bf16.msra.mxu0 %v3729
        %3739 = vmatmul.bf16.gmra.mxu0 %v590
        %v3740 = vpop.f32.mrf.mxu0
        %v3741 = vadd.f32 0.0, %v3740
        %v3742 = vpop.f32.mrf.mxu0
        %v3743 = vadd.f32 0.0, %v3742
        %3744 = vdwg.mxu0
        %v3745 = vadd.f32 %v3720, %v3741
        %v3746 = vadd.f32 %v3722, %v3743
        %v3747 = vmul.f32 %v3680, %v611
        %v3748 = vmul.f32 %v3681, %v611
        %v3749 = vpack.c.bf16 %v3748, %v3747
        %3751 = vrot.lane.b32.xlu0 %v3749, 65
        %v3752 = vpop.permute.xlu0 %3751
        %3754 = vmatpush.bf16.msra.mxu0 0
        %3755 = vmatpush.bf16.msra.mxu0 0
        %3756 = vmatpush.bf16.msra.mxu0 0
        %3757 = vmatpush.bf16.msra.mxu0 0
        %3758 = vmatpush.bf16.msra.mxu0 0
        %3759 = vmatpush.bf16.msra.mxu0 0
        %3760 = vmatpush.bf16.msra.mxu0 0
        %3761 = vmatpush.bf16.msra.mxu0 %v3752
        %3762 = vmatmul.bf16.gmra.mxu0 %v626
        %v3763 = vpop.f32.mrf.mxu0
        %v3764 = vadd.f32 0.0, %v3763
        %v3765 = vpop.f32.mrf.mxu0
        %v3766 = vadd.f32 0.0, %v3765
        %3767 = vdwg.mxu0
        %v3768 = vadd.f32 %v3745, %v3764
        %v3769 = vadd.f32 %v3746, %v3766
        %v3770 = vmul.f32 %v3668, %v644
        %v3771 = vmul.f32 %v3669, %v644
        %v3772 = vpack.c.bf16 %v3771, %v3770
        %3773 = vmatpush.bf16.msra.mxu0 0
        %3774 = vmatpush.bf16.msra.mxu0 0
        %3775 = vmatpush.bf16.msra.mxu0 0
        %3776 = vmatpush.bf16.msra.mxu0 0
        %3777 = vmatpush.bf16.msra.mxu0 0
        %3778 = vmatpush.bf16.msra.mxu0 0
        %3779 = vmatpush.bf16.msra.mxu0 0
        %3780 = vmatpush.bf16.msra.mxu0 %v3772
        %3781 = vmatmul.bf16.gmra.mxu0 %v654
        %v3782 = vpop.f32.mrf.mxu0
        %v3783 = vadd.f32 0.0, %v3782
        %v3784 = vpop.f32.mrf.mxu0
        %v3785 = vadd.f32 0.0, %v3784
        %3786 = vdwg.mxu0
        %v3787 = vadd.f32 %v3768, %v3783
        %v3788 = vadd.f32 %v3769, %v3785
        %v3789 = vmul.f32 %v3680, %v675
        %v3790 = vmul.f32 %v3681, %v675
        %v3791 = vpack.c.bf16 %v3790, %v3789
        %3793 = vrot.lane.b32.xlu0 %v3791, 127
        %v3794 = vpop.permute.xlu0 %3793
        %3796 = vmatpush.bf16.msra.mxu0 0
        %3797 = vmatpush.bf16.msra.mxu0 0
        %3798 = vmatpush.bf16.msra.mxu0 0
        %3799 = vmatpush.bf16.msra.mxu0 0
        %3800 = vmatpush.bf16.msra.mxu0 0
        %3801 = vmatpush.bf16.msra.mxu0 0
        %3802 = vmatpush.bf16.msra.mxu0 0
        %3803 = vmatpush.bf16.msra.mxu0 %v3794
        %3804 = vmatmul.bf16.gmra.mxu0 %v690
        %v3805 = vpop.f32.mrf.mxu0
        %v3806 = vadd.f32 0.0, %v3805
        %v3807 = vpop.f32.mrf.mxu0
        %v3808 = vadd.f32 0.0, %v3807
        %3809 = vdwg.mxu0
        %v3810 = vadd.f32 %v3787, %v3806
        %v3811 = vadd.f32 %v3788, %v3808
        %v3812 = vmul.f32 %v3680, %v711
        %v3813 = vmul.f32 %v3681, %v711
        %v3814 = vpack.c.bf16 %v3813, %v3812
        %3816 = vrot.lane.b32.xlu0 %v3814, 121
        %v3817 = vpop.permute.xlu0 %3816
        %3819 = vmatpush.bf16.msra.mxu0 0
        %3820 = vmatpush.bf16.msra.mxu0 0
        %3821 = vmatpush.bf16.msra.mxu0 0
        %3822 = vmatpush.bf16.msra.mxu0 0
        %3823 = vmatpush.bf16.msra.mxu0 0
        %3824 = vmatpush.bf16.msra.mxu0 0
        %3825 = vmatpush.bf16.msra.mxu0 0
        %3826 = vmatpush.bf16.msra.mxu0 %v3817
        %3827 = vmatmul.bf16.gmra.mxu0 %v726
        %v3828 = vpop.f32.mrf.mxu0
        %v3829 = vadd.f32 0.0, %v3828
        %v3830 = vpop.f32.mrf.mxu0
        %v3831 = vadd.f32 0.0, %v3830
        %3832 = vdwg.mxu0
        %v3833 = vadd.f32 %v3810, %v3829
        %v3834 = vadd.f32 %v3811, %v3831
        %v3835 = vmul.f32 %v3680, %v747
        %v3836 = vmul.f32 %v3681, %v747
        %v3837 = vpack.c.bf16 %v3836, %v3835
        %3839 = vrot.lane.b32.xlu0 %v3837, 120
        %v3840 = vpop.permute.xlu0 %3839
        %3842 = vmatpush.bf16.msra.mxu0 0
        %3843 = vmatpush.bf16.msra.mxu0 0
        %3844 = vmatpush.bf16.msra.mxu0 0
        %3845 = vmatpush.bf16.msra.mxu0 0
        %3846 = vmatpush.bf16.msra.mxu0 0
        %3847 = vmatpush.bf16.msra.mxu0 0
        %3848 = vmatpush.bf16.msra.mxu0 0
        %3849 = vmatpush.bf16.msra.mxu0 %v3840
        %3850 = vmatmul.bf16.gmra.mxu0 %v762
        %v3851 = vpop.f32.mrf.mxu0
        %v3852 = vadd.f32 0.0, %v3851
        %v3853 = vpop.f32.mrf.mxu0
        %v3854 = vadd.f32 0.0, %v3853
        %3855 = vdwg.mxu0
        %v3856 = vadd.f32 %v3833, %v3852
        %v3857 = vadd.f32 %v3834, %v3854
        %v3858 = vmul.f32 %v3680, %v783
        %v3859 = vmul.f32 %v3681, %v783
        %v3860 = vpack.c.bf16 %v3859, %v3858
        %3862 = vrot.lane.b32.xlu0 %v3860, 119
        %v3863 = vpop.permute.xlu0 %3862
        %3865 = vmatpush.bf16.msra.mxu0 0
        %3866 = vmatpush.bf16.msra.mxu0 0
        %3867 = vmatpush.bf16.msra.mxu0 0
        %3868 = vmatpush.bf16.msra.mxu0 0
        %3869 = vmatpush.bf16.msra.mxu0 0
        %3870 = vmatpush.bf16.msra.mxu0 0
        %3871 = vmatpush.bf16.msra.mxu0 0
        %3872 = vmatpush.bf16.msra.mxu0 %v3863
        %3873 = vmatmul.bf16.gmra.mxu0 %v798
        %v3874 = vpop.f32.mrf.mxu0
        %v3875 = vadd.f32 0.0, %v3874
        %v3876 = vpop.f32.mrf.mxu0
        %v3877 = vadd.f32 0.0, %v3876
        %3878 = vdwg.mxu0
        %v3879 = vadd.f32 %v3856, %v3875
        %v3880 = vadd.f32 %v3857, %v3877
        %v3881 = vadd.f32 %v3879, %v819
        %v3882 = vadd.f32 %v3880, %v824
        %v3883 = vmax.f32 %v3881, 0.0
        %v3884 = vmax.f32 %v3882, 0.0
        %v3885 = vadd.f32 %v3883, %v3668
        %v3886 = vadd.f32 %v3884, %v3669
        %3887 = vrot.lane.b32.xlu0 %v3885, 64
        %v3888 = vpop.permute.xlu0 %3887
        %v3889 = vsel %vm490, %v3888, %v3885
        %3890 = vrot.lane.b32.xlu0 %v3886, 64
        %v3891 = vpop.permute.xlu0 %3890
        %v3892 = vsel %vm490, %v3891, %v3886
        %3893 = vrot.lane.b32.xlu0 %v3889, 64
        %v3894 = vpop.permute.xlu0 %3893
        %3895 = vrot.lane.b32.xlu0 %v3892, 64
        %v3896 = vpop.permute.xlu0 %3895
        %v3897 = vsel %vm490, %v3894, %v3885
        %v3898 = vsel %vm490, %v3896, %v3886
        %v3899 = vmul.f32 %v3897, %v506
        %v3900 = vmul.f32 %v3898, %v506
        %v3901 = vpack.c.bf16 %v3900, %v3899
        %v3902 = vmul.f32 %v3897, %v514
        %v3903 = vmul.f32 %v3898, %v514
        %v3904 = vpack.c.bf16 %v3903, %v3902
        %3906 = vrot.lane.b32.xlu0 %v3904, 72
        %v3907 = vpop.permute.xlu0 %3906
        %3909 = vmatpush.bf16.msra.mxu0 0
        %3910 = vmatpush.bf16.msra.mxu0 0
        %3911 = vmatpush.bf16.msra.mxu0 0
        %3912 = vmatpush.bf16.msra.mxu0 0
        %3913 = vmatpush.bf16.msra.mxu0 0
        %3914 = vmatpush.bf16.msra.mxu0 0
        %3915 = vmatpush.bf16.msra.mxu0 0
        %3916 = vmatpush.bf16.msra.mxu0 %v3907
        %3917 = vmatmul.bf16.gmra.mxu0 %v860
        %v3918 = vpop.f32.mrf.mxu0
        %v3919 = vadd.f32 0.0, %v3918
        %v3920 = vpop.f32.mrf.mxu0
        %v3921 = vadd.f32 0.0, %v3920
        %3922 = vdwg.mxu0
        %3924 = vrot.lane.b32.xlu0 %v3901, 73
        %v3925 = vpop.permute.xlu0 %3924
        %3927 = vmatpush.bf16.msra.mxu0 0
        %3928 = vmatpush.bf16.msra.mxu0 0
        %3929 = vmatpush.bf16.msra.mxu0 0
        %3930 = vmatpush.bf16.msra.mxu0 0
        %3931 = vmatpush.bf16.msra.mxu0 0
        %3932 = vmatpush.bf16.msra.mxu0 0
        %3933 = vmatpush.bf16.msra.mxu0 0
        %3934 = vmatpush.bf16.msra.mxu0 %v3925
        %3935 = vmatmul.bf16.gmra.mxu0 %v886
        %v3936 = vpop.f32.mrf.mxu0
        %v3937 = vadd.f32 %v3919, %v3936
        %v3938 = vpop.f32.mrf.mxu0
        %v3939 = vadd.f32 %v3921, %v3938
        %3940 = vdwg.mxu0
        %v3941 = vmul.f32 %v3897, %v575
        %v3942 = vmul.f32 %v3898, %v575
        %v3943 = vpack.c.bf16 %v3942, %v3941
        %3945 = vrot.lane.b32.xlu0 %v3943, 71
        %v3946 = vpop.permute.xlu0 %3945
        %3948 = vmatpush.bf16.msra.mxu0 0
        %3949 = vmatpush.bf16.msra.mxu0 0
        %3950 = vmatpush.bf16.msra.mxu0 0
        %3951 = vmatpush.bf16.msra.mxu0 0
        %3952 = vmatpush.bf16.msra.mxu0 0
        %3953 = vmatpush.bf16.msra.mxu0 0
        %3954 = vmatpush.bf16.msra.mxu0 0
        %3955 = vmatpush.bf16.msra.mxu0 %v3946
        %3956 = vmatmul.bf16.gmra.mxu0 %v915
        %v3957 = vpop.f32.mrf.mxu0
        %v3958 = vadd.f32 0.0, %v3957
        %v3959 = vpop.f32.mrf.mxu0
        %v3960 = vadd.f32 0.0, %v3959
        %3961 = vdwg.mxu0
        %v3962 = vadd.f32 %v3937, %v3958
        %v3963 = vadd.f32 %v3939, %v3960
        %v3964 = vmul.f32 %v3897, %v611
        %v3965 = vmul.f32 %v3898, %v611
        %v3966 = vpack.c.bf16 %v3965, %v3964
        %3968 = vrot.lane.b32.xlu0 %v3966, 65
        %v3969 = vpop.permute.xlu0 %3968
        %3971 = vmatpush.bf16.msra.mxu0 0
        %3972 = vmatpush.bf16.msra.mxu0 0
        %3973 = vmatpush.bf16.msra.mxu0 0
        %3974 = vmatpush.bf16.msra.mxu0 0
        %3975 = vmatpush.bf16.msra.mxu0 0
        %3976 = vmatpush.bf16.msra.mxu0 0
        %3977 = vmatpush.bf16.msra.mxu0 0
        %3978 = vmatpush.bf16.msra.mxu0 %v3969
        %3979 = vmatmul.bf16.gmra.mxu0 %v946
        %v3980 = vpop.f32.mrf.mxu0
        %v3981 = vadd.f32 0.0, %v3980
        %v3982 = vpop.f32.mrf.mxu0
        %v3983 = vadd.f32 0.0, %v3982
        %3984 = vdwg.mxu0
        %v3985 = vadd.f32 %v3962, %v3981
        %v3986 = vadd.f32 %v3963, %v3983
        %v3987 = vmul.f32 %v3885, %v644
        %v3988 = vmul.f32 %v3886, %v644
        %v3989 = vpack.c.bf16 %v3988, %v3987
        %3990 = vmatpush.bf16.msra.mxu0 0
        %3991 = vmatpush.bf16.msra.mxu0 0
        %3992 = vmatpush.bf16.msra.mxu0 0
        %3993 = vmatpush.bf16.msra.mxu0 0
        %3994 = vmatpush.bf16.msra.mxu0 0
        %3995 = vmatpush.bf16.msra.mxu0 0
        %3996 = vmatpush.bf16.msra.mxu0 0
        %3997 = vmatpush.bf16.msra.mxu0 %v3989
        %3998 = vmatmul.bf16.gmra.mxu0 %v973
        %v3999 = vpop.f32.mrf.mxu0
        %v4000 = vadd.f32 0.0, %v3999
        %v4001 = vpop.f32.mrf.mxu0
        %v4002 = vadd.f32 0.0, %v4001
        %4003 = vdwg.mxu0
        %v4004 = vadd.f32 %v3985, %v4000
        %v4005 = vadd.f32 %v3986, %v4002
        %v4006 = vmul.f32 %v3897, %v675
        %v4007 = vmul.f32 %v3898, %v675
        %v4008 = vpack.c.bf16 %v4007, %v4006
        %4010 = vrot.lane.b32.xlu0 %v4008, 127
        %v4011 = vpop.permute.xlu0 %4010
        %4013 = vmatpush.bf16.msra.mxu0 0
        %4014 = vmatpush.bf16.msra.mxu0 0
        %4015 = vmatpush.bf16.msra.mxu0 0
        %4016 = vmatpush.bf16.msra.mxu0 0
        %4017 = vmatpush.bf16.msra.mxu0 0
        %4018 = vmatpush.bf16.msra.mxu0 0
        %4019 = vmatpush.bf16.msra.mxu0 0
        %4020 = vmatpush.bf16.msra.mxu0 %v4011
        %4021 = vmatmul.bf16.gmra.mxu0 %v1004
        %v4022 = vpop.f32.mrf.mxu0
        %v4023 = vadd.f32 0.0, %v4022
        %v4024 = vpop.f32.mrf.mxu0
        %v4025 = vadd.f32 0.0, %v4024
        %4026 = vdwg.mxu0
        %v4027 = vadd.f32 %v4004, %v4023
        %v4028 = vadd.f32 %v4005, %v4025
        %v4029 = vmul.f32 %v3897, %v711
        %v4030 = vmul.f32 %v3898, %v711
        %v4031 = vpack.c.bf16 %v4030, %v4029
        %4033 = vrot.lane.b32.xlu0 %v4031, 121
        %v4034 = vpop.permute.xlu0 %4033
        %4036 = vmatpush.bf16.msra.mxu0 0
        %4037 = vmatpush.bf16.msra.mxu0 0
        %4038 = vmatpush.bf16.msra.mxu0 0
        %4039 = vmatpush.bf16.msra.mxu0 0
        %4040 = vmatpush.bf16.msra.mxu0 0
        %4041 = vmatpush.bf16.msra.mxu0 0
        %4042 = vmatpush.bf16.msra.mxu0 0
        %4043 = vmatpush.bf16.msra.mxu0 %v4034
        %4044 = vmatmul.bf16.gmra.mxu0 %v1035
        %v4045 = vpop.f32.mrf.mxu0
        %v4046 = vadd.f32 0.0, %v4045
        %v4047 = vpop.f32.mrf.mxu0
        %v4048 = vadd.f32 0.0, %v4047
        %4049 = vdwg.mxu0
        %v4050 = vadd.f32 %v4027, %v4046
        %v4051 = vadd.f32 %v4028, %v4048
        %v4052 = vmul.f32 %v3897, %v747
        %v4053 = vmul.f32 %v3898, %v747
        %v4054 = vpack.c.bf16 %v4053, %v4052
        %4056 = vrot.lane.b32.xlu0 %v4054, 120
        %v4057 = vpop.permute.xlu0 %4056
        %4059 = vmatpush.bf16.msra.mxu0 0
        %4060 = vmatpush.bf16.msra.mxu0 0
        %4061 = vmatpush.bf16.msra.mxu0 0
        %4062 = vmatpush.bf16.msra.mxu0 0
        %4063 = vmatpush.bf16.msra.mxu0 0
        %4064 = vmatpush.bf16.msra.mxu0 0
        %4065 = vmatpush.bf16.msra.mxu0 0
        %4066 = vmatpush.bf16.msra.mxu0 %v4057
        %4067 = vmatmul.bf16.gmra.mxu0 %v1066
        %v4068 = vpop.f32.mrf.mxu0
        %v4069 = vadd.f32 0.0, %v4068
        %v4070 = vpop.f32.mrf.mxu0
        %v4071 = vadd.f32 0.0, %v4070
        %4072 = vdwg.mxu0
        %v4073 = vadd.f32 %v4050, %v4069
        %v4074 = vadd.f32 %v4051, %v4071
        %v4075 = vmul.f32 %v3897, %v783
        %v4076 = vmul.f32 %v3898, %v783
        %v4077 = vpack.c.bf16 %v4076, %v4075
        %4079 = vrot.lane.b32.xlu0 %v4077, 119
        %v4080 = vpop.permute.xlu0 %4079
        %4082 = vmatpush.bf16.msra.mxu0 0
        %4083 = vmatpush.bf16.msra.mxu0 0
        %4084 = vmatpush.bf16.msra.mxu0 0
        %4085 = vmatpush.bf16.msra.mxu0 0
        %4086 = vmatpush.bf16.msra.mxu0 0
        %4087 = vmatpush.bf16.msra.mxu0 0
        %4088 = vmatpush.bf16.msra.mxu0 0
        %4089 = vmatpush.bf16.msra.mxu0 %v4080
        %4090 = vmatmul.bf16.gmra.mxu0 %v1097
        %v4091 = vpop.f32.mrf.mxu0
        %v4092 = vadd.f32 0.0, %v4091
        %v4093 = vpop.f32.mrf.mxu0
        %v4094 = vadd.f32 0.0, %v4093
        %4095 = vdwg.mxu0
        %v4096 = vadd.f32 %v4073, %v4092
        %v4097 = vadd.f32 %v4074, %v4094
        %v4098 = vadd.f32 %v4096, %v1118
        %v4099 = vadd.f32 %v4097, %v1123
        %v4100 = vmax.f32 %v4098, 0.0
        %v4101 = vmax.f32 %v4099, 0.0
        %v4102 = vadd.f32 %v4100, %v3885
        %v4103 = vadd.f32 %v4101, %v3886
        %4104 = vrot.lane.b32.xlu0 %v4102, 64
        %v4105 = vpop.permute.xlu0 %4104
        %v4106 = vsel %vm490, %v4105, %v4102
        %4107 = vrot.lane.b32.xlu0 %v4103, 64
        %v4108 = vpop.permute.xlu0 %4107
        %v4109 = vsel %vm490, %v4108, %v4103
        %4110 = vrot.lane.b32.xlu0 %v4106, 64
        %v4111 = vpop.permute.xlu0 %4110
        %4112 = vrot.lane.b32.xlu0 %v4109, 64
        %v4113 = vpop.permute.xlu0 %4112
        %v4114 = vsel %vm490, %v4111, %v4102
        %v4115 = vsel %vm490, %v4113, %v4103
        %v4116 = vmul.f32 %v4114, %v506
        %v4117 = vmul.f32 %v4115, %v506
        %v4118 = vpack.c.bf16 %v4117, %v4116
        %v4119 = vmul.f32 %v4114, %v514
        %v4120 = vmul.f32 %v4115, %v514
        %v4121 = vpack.c.bf16 %v4120, %v4119
        %4123 = vrot.lane.b32.xlu0 %v4121, 72
        %v4124 = vpop.permute.xlu0 %4123
        %4126 = vmatpush.bf16.msra.mxu0 0
        %4127 = vmatpush.bf16.msra.mxu0 0
        %4128 = vmatpush.bf16.msra.mxu0 0
        %4129 = vmatpush.bf16.msra.mxu0 0
        %4130 = vmatpush.bf16.msra.mxu0 0
        %4131 = vmatpush.bf16.msra.mxu0 0
        %4132 = vmatpush.bf16.msra.mxu0 0
        %4133 = vmatpush.bf16.msra.mxu0 %v4124
        %4134 = vmatmul.bf16.gmra.mxu0 %v1159
        %v4135 = vpop.f32.mrf.mxu0
        %v4136 = vadd.f32 0.0, %v4135
        %v4137 = vpop.f32.mrf.mxu0
        %v4138 = vadd.f32 0.0, %v4137
        %4139 = vdwg.mxu0
        %4141 = vrot.lane.b32.xlu0 %v4118, 73
        %v4142 = vpop.permute.xlu0 %4141
        %4144 = vmatpush.bf16.msra.mxu0 0
        %4145 = vmatpush.bf16.msra.mxu0 0
        %4146 = vmatpush.bf16.msra.mxu0 0
        %4147 = vmatpush.bf16.msra.mxu0 0
        %4148 = vmatpush.bf16.msra.mxu0 0
        %4149 = vmatpush.bf16.msra.mxu0 0
        %4150 = vmatpush.bf16.msra.mxu0 0
        %4151 = vmatpush.bf16.msra.mxu0 %v4142
        %4152 = vmatmul.bf16.gmra.mxu0 %v1185
        %v4153 = vpop.f32.mrf.mxu0
        %v4154 = vadd.f32 %v4136, %v4153
        %v4155 = vpop.f32.mrf.mxu0
        %v4156 = vadd.f32 %v4138, %v4155
        %4157 = vdwg.mxu0
        %v4158 = vmul.f32 %v4114, %v575
        %v4159 = vmul.f32 %v4115, %v575
        %v4160 = vpack.c.bf16 %v4159, %v4158
        %4162 = vrot.lane.b32.xlu0 %v4160, 71
        %v4163 = vpop.permute.xlu0 %4162
        %4165 = vmatpush.bf16.msra.mxu0 0
        %4166 = vmatpush.bf16.msra.mxu0 0
        %4167 = vmatpush.bf16.msra.mxu0 0
        %4168 = vmatpush.bf16.msra.mxu0 0
        %4169 = vmatpush.bf16.msra.mxu0 0
        %4170 = vmatpush.bf16.msra.mxu0 0
        %4171 = vmatpush.bf16.msra.mxu0 0
        %4172 = vmatpush.bf16.msra.mxu0 %v4163
        %4173 = vmatmul.bf16.gmra.mxu0 %v1214
        %v4174 = vpop.f32.mrf.mxu0
        %v4175 = vadd.f32 0.0, %v4174
        %v4176 = vpop.f32.mrf.mxu0
        %v4177 = vadd.f32 0.0, %v4176
        %4178 = vdwg.mxu0
        %v4179 = vadd.f32 %v4154, %v4175
        %v4180 = vadd.f32 %v4156, %v4177
        %v4181 = vmul.f32 %v4114, %v611
        %v4182 = vmul.f32 %v4115, %v611
        %v4183 = vpack.c.bf16 %v4182, %v4181
        %4185 = vrot.lane.b32.xlu0 %v4183, 65
        %v4186 = vpop.permute.xlu0 %4185
        %4188 = vmatpush.bf16.msra.mxu0 0
        %4189 = vmatpush.bf16.msra.mxu0 0
        %4190 = vmatpush.bf16.msra.mxu0 0
        %4191 = vmatpush.bf16.msra.mxu0 0
        %4192 = vmatpush.bf16.msra.mxu0 0
        %4193 = vmatpush.bf16.msra.mxu0 0
        %4194 = vmatpush.bf16.msra.mxu0 0
        %4195 = vmatpush.bf16.msra.mxu0 %v4186
        %4196 = vmatmul.bf16.gmra.mxu0 %v1245
        %v4197 = vpop.f32.mrf.mxu0
        %v4198 = vadd.f32 0.0, %v4197
        %v4199 = vpop.f32.mrf.mxu0
        %v4200 = vadd.f32 0.0, %v4199
        %4201 = vdwg.mxu0
        %v4202 = vadd.f32 %v4179, %v4198
        %v4203 = vadd.f32 %v4180, %v4200
        %v4204 = vmul.f32 %v4102, %v644
        %v4205 = vmul.f32 %v4103, %v644
        %v4206 = vpack.c.bf16 %v4205, %v4204
        %4207 = vmatpush.bf16.msra.mxu0 0
        %4208 = vmatpush.bf16.msra.mxu0 0
        %4209 = vmatpush.bf16.msra.mxu0 0
        %4210 = vmatpush.bf16.msra.mxu0 0
        %4211 = vmatpush.bf16.msra.mxu0 0
        %4212 = vmatpush.bf16.msra.mxu0 0
        %4213 = vmatpush.bf16.msra.mxu0 0
        %4214 = vmatpush.bf16.msra.mxu0 %v4206
        %4215 = vmatmul.bf16.gmra.mxu0 %v1272
        %v4216 = vpop.f32.mrf.mxu0
        %v4217 = vadd.f32 0.0, %v4216
        %v4218 = vpop.f32.mrf.mxu0
        %v4219 = vadd.f32 0.0, %v4218
        %4220 = vdwg.mxu0
        %v4221 = vadd.f32 %v4202, %v4217
        %v4222 = vadd.f32 %v4203, %v4219
        %v4223 = vmul.f32 %v4114, %v675
        %v4224 = vmul.f32 %v4115, %v675
        %v4225 = vpack.c.bf16 %v4224, %v4223
        %4227 = vrot.lane.b32.xlu0 %v4225, 127
        %v4228 = vpop.permute.xlu0 %4227
        %4230 = vmatpush.bf16.msra.mxu0 0
        %4231 = vmatpush.bf16.msra.mxu0 0
        %4232 = vmatpush.bf16.msra.mxu0 0
        %4233 = vmatpush.bf16.msra.mxu0 0
        %4234 = vmatpush.bf16.msra.mxu0 0
        %4235 = vmatpush.bf16.msra.mxu0 0
        %4236 = vmatpush.bf16.msra.mxu0 0
        %4237 = vmatpush.bf16.msra.mxu0 %v4228
        %4238 = vmatmul.bf16.gmra.mxu0 %v1303
        %v4239 = vpop.f32.mrf.mxu0
        %v4240 = vadd.f32 0.0, %v4239
        %v4241 = vpop.f32.mrf.mxu0
        %v4242 = vadd.f32 0.0, %v4241
        %4243 = vdwg.mxu0
        %v4244 = vadd.f32 %v4221, %v4240
        %v4245 = vadd.f32 %v4222, %v4242
        %v4246 = vmul.f32 %v4114, %v711
        %v4247 = vmul.f32 %v4115, %v711
        %v4248 = vpack.c.bf16 %v4247, %v4246
        %4250 = vrot.lane.b32.xlu0 %v4248, 121
        %v4251 = vpop.permute.xlu0 %4250
        %4253 = vmatpush.bf16.msra.mxu0 0
        %4254 = vmatpush.bf16.msra.mxu0 0
        %4255 = vmatpush.bf16.msra.mxu0 0
        %4256 = vmatpush.bf16.msra.mxu0 0
        %4257 = vmatpush.bf16.msra.mxu0 0
        %4258 = vmatpush.bf16.msra.mxu0 0
        %4259 = vmatpush.bf16.msra.mxu0 0
        %4260 = vmatpush.bf16.msra.mxu0 %v4251
        %4261 = vmatmul.bf16.gmra.mxu0 %v1334
        %v4262 = vpop.f32.mrf.mxu0
        %v4263 = vadd.f32 0.0, %v4262
        %v4264 = vpop.f32.mrf.mxu0
        %v4265 = vadd.f32 0.0, %v4264
        %4266 = vdwg.mxu0
        %v4267 = vadd.f32 %v4244, %v4263
        %v4268 = vadd.f32 %v4245, %v4265
        %v4269 = vmul.f32 %v4114, %v747
        %v4270 = vmul.f32 %v4115, %v747
        %v4271 = vpack.c.bf16 %v4270, %v4269
        %4273 = vrot.lane.b32.xlu0 %v4271, 120
        %v4274 = vpop.permute.xlu0 %4273
        %4276 = vmatpush.bf16.msra.mxu0 0
        %4277 = vmatpush.bf16.msra.mxu0 0
        %4278 = vmatpush.bf16.msra.mxu0 0
        %4279 = vmatpush.bf16.msra.mxu0 0
        %4280 = vmatpush.bf16.msra.mxu0 0
        %4281 = vmatpush.bf16.msra.mxu0 0
        %4282 = vmatpush.bf16.msra.mxu0 0
        %4283 = vmatpush.bf16.msra.mxu0 %v4274
        %4284 = vmatmul.bf16.gmra.mxu0 %v1365
        %v4285 = vpop.f32.mrf.mxu0
        %v4286 = vadd.f32 0.0, %v4285
        %v4287 = vpop.f32.mrf.mxu0
        %v4288 = vadd.f32 0.0, %v4287
        %4289 = vdwg.mxu0
        %v4290 = vadd.f32 %v4267, %v4286
        %v4291 = vadd.f32 %v4268, %v4288
        %v4292 = vmul.f32 %v4114, %v783
        %v4293 = vmul.f32 %v4115, %v783
        %v4294 = vpack.c.bf16 %v4293, %v4292
        %4296 = vrot.lane.b32.xlu0 %v4294, 119
        %v4297 = vpop.permute.xlu0 %4296
        %4299 = vmatpush.bf16.msra.mxu0 0
        %4300 = vmatpush.bf16.msra.mxu0 0
        %4301 = vmatpush.bf16.msra.mxu0 0
        %4302 = vmatpush.bf16.msra.mxu0 0
        %4303 = vmatpush.bf16.msra.mxu0 0
        %4304 = vmatpush.bf16.msra.mxu0 0
        %4305 = vmatpush.bf16.msra.mxu0 0
        %4306 = vmatpush.bf16.msra.mxu0 %v4297
        %4307 = vmatmul.bf16.gmra.mxu0 %v1396
        %v4308 = vpop.f32.mrf.mxu0
        %v4309 = vadd.f32 0.0, %v4308
        %v4310 = vpop.f32.mrf.mxu0
        %v4311 = vadd.f32 0.0, %v4310
        %4312 = vdwg.mxu0
        %v4313 = vadd.f32 %v4290, %v4309
        %v4314 = vadd.f32 %v4291, %v4311
        %v4315 = vadd.f32 %v4313, %v1417
        %v4316 = vadd.f32 %v4314, %v1422
        %v4317 = vmax.f32 %v4315, 0.0
        %v4318 = vmax.f32 %v4316, 0.0
        %v4319 = vadd.f32 %v4317, %v4102
        %v4320 = vadd.f32 %v4318, %v4103
        %v4321 = vpack.c.bf16 %v4320, %v4319
        %4322 = vmatpush.bf16.msra.mxu0 0
        %4323 = vmatpush.bf16.msra.mxu0 0
        %4324 = vmatpush.bf16.msra.mxu0 0
        %4325 = vmatpush.bf16.msra.mxu0 0
        %4326 = vmatpush.bf16.msra.mxu0 0
        %4327 = vmatpush.bf16.msra.mxu0 0
        %4328 = vmatpush.bf16.msra.mxu0 0
        %4329 = vmatpush.bf16.msra.mxu0 %v4321
        %4330 = vmatmul.bf16.gmra.mxu0 %v1437
        %v4331 = vpop.f32.mrf.mxu0
        %v4332 = vadd.f32 %v1434, %v4331
        %v4333 = vpop.f32.mrf.mxu0
        %4334 = vdwg.mxu0
        %v4335 = vmax.f32 %v4332, 0.0
        %v4336 = vpack.c.bf16 %v4335, %v4335
        %v4338 = vsel %vm1464, %v4336, 0
        %4340 = vmatpush.bf16.msra.mxu0 0
        %4341 = vmatpush.bf16.msra.mxu0 0
        %4342 = vmatpush.bf16.msra.mxu0 0
        %4343 = vmatpush.bf16.msra.mxu0 0
        %4344 = vmatpush.bf16.msra.mxu0 0
        %4345 = vmatpush.bf16.msra.mxu0 0
        %4346 = vmatpush.bf16.msra.mxu0 0
        %4347 = vmatpush.bf16.msra.mxu0 %v4338
        %4348 = vmatmul.bf16.gmra.mxu0 %v1462
        %v4349 = vpop.f32.mrf.mxu0
        %v4350 = vadd.f32 %v1459, %v4349
        %v4351 = vpop.f32.mrf.mxu0
        %4352 = vdwg.mxu0
        %v4353 = vxor.u32 %v4350, 2147483648
        %v4354 = vmul.f32 %v4353, 1.442695
        %v4355 = vpow.pop %v4354
        %v4356 = vadd.f32 %v4355, 1.0
        %v4357 = vrcp.pop %v4356
        %v4358 = vmul.f32 %v4356, %v4357
        %v4359 = vsub.f32 1.0, %v4358
        %v4360 = vmul.f32 %v4357, %v4359
        %v4361 = vadd.f32 %v4357, %v4360
        %vm4362 = vweird.f32 %v4356
        %vm4363 = vweird.f32 %v4357
        %vm4364 = vmor %vm4362, %vm4363
        %v4365 = vsel %vm4364, %v4357, %v4361
        %v4366 = vand.u32 2147483647, %v4356
        %vm4367 = vcmp.eq.f32.partialorder %v4366, 8.507059e+37
        %v4368 = vand.u32 %v4356, 2147483648
        %v4369 = vor.u32 1.1754944e-38, %v4368
        %v4370 = vsel %vm4367, %v4369, %v4365
        %v4371 = vmul.f32 1.0, %v4370
        %v4372 = vperm.slane %v4371, 0
        %v4373 = vmul.f32 %v4319, %v4372
        %v4374 = vmul.f32 %v4320, %v4372
        %v4375 = vsel %vm1503, %v4373, 0.0
        %4376 = vadd.xlane.f32.xlu0 %v4375
        %v4377 = vpop.xlane.xlu0 %4376
        %v4378 = vsel %vm1503, %v4374, 0.0
        %4379 = vadd.xlane.f32.xlu0 %v4378
        %v4380 = vpop.xlane.xlu0 %4379
        %v4381 = vmul.f32 %v4377, %v1516
        %v4382 = vmul.f32 %v4380, %v1516
        %s4383 = scalar_lea.vmem %s335, 80 [#allocation3]
        %v4384 = vld [vmem:[%s4383] sm:$0xff]
        %v4385 = vld [vmem:[%s4383 + $0x8] sm:$0xff]
        %4386 = vrot.lane.b32.xlu0 %v4384, 64
        %v4387 = vpop.permute.xlu0 %4386
        %v4388 = vsel %vm490, %v4387, %v4384
        %4389 = vrot.lane.b32.xlu0 %v4385, 64
        %v4390 = vpop.permute.xlu0 %4389
        %v4391 = vsel %vm490, %v4390, %v4385
        %4392 = vrot.lane.b32.xlu0 %v4388, 64
        %v4393 = vpop.permute.xlu0 %4392
        %4394 = vrot.lane.b32.xlu0 %v4391, 64
        %v4395 = vpop.permute.xlu0 %4394
        %v4396 = vsel %vm490, %v4393, %v4384
        %v4397 = vsel %vm490, %v4395, %v4385
        %v4398 = vmul.f32 %v4396, %v506
        %v4399 = vmul.f32 %v4397, %v506
        %v4400 = vpack.c.bf16 %v4399, %v4398
        %v4401 = vmul.f32 %v4396, %v514
        %v4402 = vmul.f32 %v4397, %v514
        %v4403 = vpack.c.bf16 %v4402, %v4401
        %4405 = vrot.lane.b32.xlu0 %v4403, 72
        %v4406 = vpop.permute.xlu0 %4405
        %4408 = vmatpush.bf16.msra.mxu0 0
        %4409 = vmatpush.bf16.msra.mxu0 0
        %4410 = vmatpush.bf16.msra.mxu0 0
        %4411 = vmatpush.bf16.msra.mxu0 0
        %4412 = vmatpush.bf16.msra.mxu0 0
        %4413 = vmatpush.bf16.msra.mxu0 0
        %4414 = vmatpush.bf16.msra.mxu0 0
        %4415 = vmatpush.bf16.msra.mxu0 %v4406
        %4416 = vmatmul.bf16.gmra.mxu0 %v530
        %v4417 = vpop.f32.mrf.mxu0
        %v4418 = vadd.f32 0.0, %v4417
        %v4419 = vpop.f32.mrf.mxu0
        %v4420 = vadd.f32 0.0, %v4419
        %4421 = vdwg.mxu0
        %4423 = vrot.lane.b32.xlu0 %v4400, 73
        %v4424 = vpop.permute.xlu0 %4423
        %4426 = vmatpush.bf16.msra.mxu0 0
        %4427 = vmatpush.bf16.msra.mxu0 0
        %4428 = vmatpush.bf16.msra.mxu0 0
        %4429 = vmatpush.bf16.msra.mxu0 0
        %4430 = vmatpush.bf16.msra.mxu0 0
        %4431 = vmatpush.bf16.msra.mxu0 0
        %4432 = vmatpush.bf16.msra.mxu0 0
        %4433 = vmatpush.bf16.msra.mxu0 %v4424
        %4434 = vmatmul.bf16.gmra.mxu0 %v556
        %v4435 = vpop.f32.mrf.mxu0
        %v4436 = vadd.f32 %v4418, %v4435
        %v4437 = vpop.f32.mrf.mxu0
        %v4438 = vadd.f32 %v4420, %v4437
        %4439 = vdwg.mxu0
        %v4440 = vmul.f32 %v4396, %v575
        %v4441 = vmul.f32 %v4397, %v575
        %v4442 = vpack.c.bf16 %v4441, %v4440
        %4444 = vrot.lane.b32.xlu0 %v4442, 71
        %v4445 = vpop.permute.xlu0 %4444
        %4447 = vmatpush.bf16.msra.mxu0 0
        %4448 = vmatpush.bf16.msra.mxu0 0
        %4449 = vmatpush.bf16.msra.mxu0 0
        %4450 = vmatpush.bf16.msra.mxu0 0
        %4451 = vmatpush.bf16.msra.mxu0 0
        %4452 = vmatpush.bf16.msra.mxu0 0
        %4453 = vmatpush.bf16.msra.mxu0 0
        %4454 = vmatpush.bf16.msra.mxu0 %v4445
        %4455 = vmatmul.bf16.gmra.mxu0 %v590
        %v4456 = vpop.f32.mrf.mxu0
        %v4457 = vadd.f32 0.0, %v4456
        %v4458 = vpop.f32.mrf.mxu0
        %v4459 = vadd.f32 0.0, %v4458
        %4460 = vdwg.mxu0
        %v4461 = vadd.f32 %v4436, %v4457
        %v4462 = vadd.f32 %v4438, %v4459
        %v4463 = vmul.f32 %v4396, %v611
        %v4464 = vmul.f32 %v4397, %v611
        %v4465 = vpack.c.bf16 %v4464, %v4463
        %4467 = vrot.lane.b32.xlu0 %v4465, 65
        %v4468 = vpop.permute.xlu0 %4467
        %4470 = vmatpush.bf16.msra.mxu0 0
        %4471 = vmatpush.bf16.msra.mxu0 0
        %4472 = vmatpush.bf16.msra.mxu0 0
        %4473 = vmatpush.bf16.msra.mxu0 0
        %4474 = vmatpush.bf16.msra.mxu0 0
        %4475 = vmatpush.bf16.msra.mxu0 0
        %4476 = vmatpush.bf16.msra.mxu0 0
        %4477 = vmatpush.bf16.msra.mxu0 %v4468
        %4478 = vmatmul.bf16.gmra.mxu0 %v626
        %v4479 = vpop.f32.mrf.mxu0
        %v4480 = vadd.f32 0.0, %v4479
        %v4481 = vpop.f32.mrf.mxu0
        %v4482 = vadd.f32 0.0, %v4481
        %4483 = vdwg.mxu0
        %v4484 = vadd.f32 %v4461, %v4480
        %v4485 = vadd.f32 %v4462, %v4482
        %v4486 = vmul.f32 %v4384, %v644
        %v4487 = vmul.f32 %v4385, %v644
        %v4488 = vpack.c.bf16 %v4487, %v4486
        %4489 = vmatpush.bf16.msra.mxu0 0
        %4490 = vmatpush.bf16.msra.mxu0 0
        %4491 = vmatpush.bf16.msra.mxu0 0
        %4492 = vmatpush.bf16.msra.mxu0 0
        %4493 = vmatpush.bf16.msra.mxu0 0
        %4494 = vmatpush.bf16.msra.mxu0 0
        %4495 = vmatpush.bf16.msra.mxu0 0
        %4496 = vmatpush.bf16.msra.mxu0 %v4488
        %4497 = vmatmul.bf16.gmra.mxu0 %v654
        %v4498 = vpop.f32.mrf.mxu0
        %v4499 = vadd.f32 0.0, %v4498
        %v4500 = vpop.f32.mrf.mxu0
        %v4501 = vadd.f32 0.0, %v4500
        %4502 = vdwg.mxu0
        %v4503 = vadd.f32 %v4484, %v4499
        %v4504 = vadd.f32 %v4485, %v4501
        %v4505 = vmul.f32 %v4396, %v675
        %v4506 = vmul.f32 %v4397, %v675
        %v4507 = vpack.c.bf16 %v4506, %v4505
        %4509 = vrot.lane.b32.xlu0 %v4507, 127
        %v4510 = vpop.permute.xlu0 %4509
        %4512 = vmatpush.bf16.msra.mxu0 0
        %4513 = vmatpush.bf16.msra.mxu0 0
        %4514 = vmatpush.bf16.msra.mxu0 0
        %4515 = vmatpush.bf16.msra.mxu0 0
        %4516 = vmatpush.bf16.msra.mxu0 0
        %4517 = vmatpush.bf16.msra.mxu0 0
        %4518 = vmatpush.bf16.msra.mxu0 0
        %4519 = vmatpush.bf16.msra.mxu0 %v4510
        %4520 = vmatmul.bf16.gmra.mxu0 %v690
        %v4521 = vpop.f32.mrf.mxu0
        %v4522 = vadd.f32 0.0, %v4521
        %v4523 = vpop.f32.mrf.mxu0
        %v4524 = vadd.f32 0.0, %v4523
        %4525 = vdwg.mxu0
        %v4526 = vadd.f32 %v4503, %v4522
        %v4527 = vadd.f32 %v4504, %v4524
        %v4528 = vmul.f32 %v4396, %v711
        %v4529 = vmul.f32 %v4397, %v711
        %v4530 = vpack.c.bf16 %v4529, %v4528
        %4532 = vrot.lane.b32.xlu0 %v4530, 121
        %v4533 = vpop.permute.xlu0 %4532
        %4535 = vmatpush.bf16.msra.mxu0 0
        %4536 = vmatpush.bf16.msra.mxu0 0
        %4537 = vmatpush.bf16.msra.mxu0 0
        %4538 = vmatpush.bf16.msra.mxu0 0
        %4539 = vmatpush.bf16.msra.mxu0 0
        %4540 = vmatpush.bf16.msra.mxu0 0
        %4541 = vmatpush.bf16.msra.mxu0 0
        %4542 = vmatpush.bf16.msra.mxu0 %v4533
        %4543 = vmatmul.bf16.gmra.mxu0 %v726
        %v4544 = vpop.f32.mrf.mxu0
        %v4545 = vadd.f32 0.0, %v4544
        %v4546 = vpop.f32.mrf.mxu0
        %v4547 = vadd.f32 0.0, %v4546
        %4548 = vdwg.mxu0
        %v4549 = vadd.f32 %v4526, %v4545
        %v4550 = vadd.f32 %v4527, %v4547
        %v4551 = vmul.f32 %v4396, %v747
        %v4552 = vmul.f32 %v4397, %v747
        %v4553 = vpack.c.bf16 %v4552, %v4551
        %4555 = vrot.lane.b32.xlu0 %v4553, 120
        %v4556 = vpop.permute.xlu0 %4555
        %4558 = vmatpush.bf16.msra.mxu0 0
        %4559 = vmatpush.bf16.msra.mxu0 0
        %4560 = vmatpush.bf16.msra.mxu0 0
        %4561 = vmatpush.bf16.msra.mxu0 0
        %4562 = vmatpush.bf16.msra.mxu0 0
        %4563 = vmatpush.bf16.msra.mxu0 0
        %4564 = vmatpush.bf16.msra.mxu0 0
        %4565 = vmatpush.bf16.msra.mxu0 %v4556
        %4566 = vmatmul.bf16.gmra.mxu0 %v762
        %v4567 = vpop.f32.mrf.mxu0
        %v4568 = vadd.f32 0.0, %v4567
        %v4569 = vpop.f32.mrf.mxu0
        %v4570 = vadd.f32 0.0, %v4569
        %4571 = vdwg.mxu0
        %v4572 = vadd.f32 %v4549, %v4568
        %v4573 = vadd.f32 %v4550, %v4570
        %v4574 = vmul.f32 %v4396, %v783
        %v4575 = vmul.f32 %v4397, %v783
        %v4576 = vpack.c.bf16 %v4575, %v4574
        %4578 = vrot.lane.b32.xlu0 %v4576, 119
        %v4579 = vpop.permute.xlu0 %4578
        %4581 = vmatpush.bf16.msra.mxu0 0
        %4582 = vmatpush.bf16.msra.mxu0 0
        %4583 = vmatpush.bf16.msra.mxu0 0
        %4584 = vmatpush.bf16.msra.mxu0 0
        %4585 = vmatpush.bf16.msra.mxu0 0
        %4586 = vmatpush.bf16.msra.mxu0 0
        %4587 = vmatpush.bf16.msra.mxu0 0
        %4588 = vmatpush.bf16.msra.mxu0 %v4579
        %4589 = vmatmul.bf16.gmra.mxu0 %v798
        %v4590 = vpop.f32.mrf.mxu0
        %v4591 = vadd.f32 0.0, %v4590
        %v4592 = vpop.f32.mrf.mxu0
        %v4593 = vadd.f32 0.0, %v4592
        %4594 = vdwg.mxu0
        %v4595 = vadd.f32 %v4572, %v4591
        %v4596 = vadd.f32 %v4573, %v4593
        %v4597 = vadd.f32 %v4595, %v819
        %v4598 = vadd.f32 %v4596, %v824
        %v4599 = vmax.f32 %v4597, 0.0
        %v4600 = vmax.f32 %v4598, 0.0
        %v4601 = vadd.f32 %v4599, %v4384
        %v4602 = vadd.f32 %v4600, %v4385
        %4603 = vrot.lane.b32.xlu0 %v4601, 64
        %v4604 = vpop.permute.xlu0 %4603
        %v4605 = vsel %vm490, %v4604, %v4601
        %4606 = vrot.lane.b32.xlu0 %v4602, 64
        %v4607 = vpop.permute.xlu0 %4606
        %v4608 = vsel %vm490, %v4607, %v4602
        %4609 = vrot.lane.b32.xlu0 %v4605, 64
        %v4610 = vpop.permute.xlu0 %4609
        %4611 = vrot.lane.b32.xlu0 %v4608, 64
        %v4612 = vpop.permute.xlu0 %4611
        %v4613 = vsel %vm490, %v4610, %v4601
        %v4614 = vsel %vm490, %v4612, %v4602
        %v4615 = vmul.f32 %v4613, %v506
        %v4616 = vmul.f32 %v4614, %v506
        %v4617 = vpack.c.bf16 %v4616, %v4615
        %v4618 = vmul.f32 %v4613, %v514
        %v4619 = vmul.f32 %v4614, %v514
        %v4620 = vpack.c.bf16 %v4619, %v4618
        %4622 = vrot.lane.b32.xlu0 %v4620, 72
        %v4623 = vpop.permute.xlu0 %4622
        %4625 = vmatpush.bf16.msra.mxu0 0
        %4626 = vmatpush.bf16.msra.mxu0 0
        %4627 = vmatpush.bf16.msra.mxu0 0
        %4628 = vmatpush.bf16.msra.mxu0 0
        %4629 = vmatpush.bf16.msra.mxu0 0
        %4630 = vmatpush.bf16.msra.mxu0 0
        %4631 = vmatpush.bf16.msra.mxu0 0
        %4632 = vmatpush.bf16.msra.mxu0 %v4623
        %4633 = vmatmul.bf16.gmra.mxu0 %v860
        %v4634 = vpop.f32.mrf.mxu0
        %v4635 = vadd.f32 0.0, %v4634
        %v4636 = vpop.f32.mrf.mxu0
        %v4637 = vadd.f32 0.0, %v4636
        %4638 = vdwg.mxu0
        %4640 = vrot.lane.b32.xlu0 %v4617, 73
        %v4641 = vpop.permute.xlu0 %4640
        %4643 = vmatpush.bf16.msra.mxu0 0
        %4644 = vmatpush.bf16.msra.mxu0 0
        %4645 = vmatpush.bf16.msra.mxu0 0
        %4646 = vmatpush.bf16.msra.mxu0 0
        %4647 = vmatpush.bf16.msra.mxu0 0
        %4648 = vmatpush.bf16.msra.mxu0 0
        %4649 = vmatpush.bf16.msra.mxu0 0
        %4650 = vmatpush.bf16.msra.mxu0 %v4641
        %4651 = vmatmul.bf16.gmra.mxu0 %v886
        %v4652 = vpop.f32.mrf.mxu0
        %v4653 = vadd.f32 %v4635, %v4652
        %v4654 = vpop.f32.mrf.mxu0
        %v4655 = vadd.f32 %v4637, %v4654
        %4656 = vdwg.mxu0
        %v4657 = vmul.f32 %v4613, %v575
        %v4658 = vmul.f32 %v4614, %v575
        %v4659 = vpack.c.bf16 %v4658, %v4657
        %4661 = vrot.lane.b32.xlu0 %v4659, 71
        %v4662 = vpop.permute.xlu0 %4661
        %4664 = vmatpush.bf16.msra.mxu0 0
        %4665 = vmatpush.bf16.msra.mxu0 0
        %4666 = vmatpush.bf16.msra.mxu0 0
        %4667 = vmatpush.bf16.msra.mxu0 0
        %4668 = vmatpush.bf16.msra.mxu0 0
        %4669 = vmatpush.bf16.msra.mxu0 0
        %4670 = vmatpush.bf16.msra.mxu0 0
        %4671 = vmatpush.bf16.msra.mxu0 %v4662
        %4672 = vmatmul.bf16.gmra.mxu0 %v915
        %v4673 = vpop.f32.mrf.mxu0
        %v4674 = vadd.f32 0.0, %v4673
        %v4675 = vpop.f32.mrf.mxu0
        %v4676 = vadd.f32 0.0, %v4675
        %4677 = vdwg.mxu0
        %v4678 = vadd.f32 %v4653, %v4674
        %v4679 = vadd.f32 %v4655, %v4676
        %v4680 = vmul.f32 %v4613, %v611
        %v4681 = vmul.f32 %v4614, %v611
        %v4682 = vpack.c.bf16 %v4681, %v4680
        %4684 = vrot.lane.b32.xlu0 %v4682, 65
        %v4685 = vpop.permute.xlu0 %4684
        %4687 = vmatpush.bf16.msra.mxu0 0
        %4688 = vmatpush.bf16.msra.mxu0 0
        %4689 = vmatpush.bf16.msra.mxu0 0
        %4690 = vmatpush.bf16.msra.mxu0 0
        %4691 = vmatpush.bf16.msra.mxu0 0
        %4692 = vmatpush.bf16.msra.mxu0 0
        %4693 = vmatpush.bf16.msra.mxu0 0
        %4694 = vmatpush.bf16.msra.mxu0 %v4685
        %4695 = vmatmul.bf16.gmra.mxu0 %v946
        %v4696 = vpop.f32.mrf.mxu0
        %v4697 = vadd.f32 0.0, %v4696
        %v4698 = vpop.f32.mrf.mxu0
        %v4699 = vadd.f32 0.0, %v4698
        %4700 = vdwg.mxu0
        %v4701 = vadd.f32 %v4678, %v4697
        %v4702 = vadd.f32 %v4679, %v4699
        %v4703 = vmul.f32 %v4601, %v644
        %v4704 = vmul.f32 %v4602, %v644
        %v4705 = vpack.c.bf16 %v4704, %v4703
        %4706 = vmatpush.bf16.msra.mxu0 0
        %4707 = vmatpush.bf16.msra.mxu0 0
        %4708 = vmatpush.bf16.msra.mxu0 0
        %4709 = vmatpush.bf16.msra.mxu0 0
        %4710 = vmatpush.bf16.msra.mxu0 0
        %4711 = vmatpush.bf16.msra.mxu0 0
        %4712 = vmatpush.bf16.msra.mxu0 0
        %4713 = vmatpush.bf16.msra.mxu0 %v4705
        %4714 = vmatmul.bf16.gmra.mxu0 %v973
        %v4715 = vpop.f32.mrf.mxu0
        %v4716 = vadd.f32 0.0, %v4715
        %v4717 = vpop.f32.mrf.mxu0
        %v4718 = vadd.f32 0.0, %v4717
        %4719 = vdwg.mxu0
        %v4720 = vadd.f32 %v4701, %v4716
        %v4721 = vadd.f32 %v4702, %v4718
        %v4722 = vmul.f32 %v4613, %v675
        %v4723 = vmul.f32 %v4614, %v675
        %v4724 = vpack.c.bf16 %v4723, %v4722
        %4726 = vrot.lane.b32.xlu0 %v4724, 127
        %v4727 = vpop.permute.xlu0 %4726
        %4729 = vmatpush.bf16.msra.mxu0 0
        %4730 = vmatpush.bf16.msra.mxu0 0
        %4731 = vmatpush.bf16.msra.mxu0 0
        %4732 = vmatpush.bf16.msra.mxu0 0
        %4733 = vmatpush.bf16.msra.mxu0 0
        %4734 = vmatpush.bf16.msra.mxu0 0
        %4735 = vmatpush.bf16.msra.mxu0 0
        %4736 = vmatpush.bf16.msra.mxu0 %v4727
        %4737 = vmatmul.bf16.gmra.mxu0 %v1004
        %v4738 = vpop.f32.mrf.mxu0
        %v4739 = vadd.f32 0.0, %v4738
        %v4740 = vpop.f32.mrf.mxu0
        %v4741 = vadd.f32 0.0, %v4740
        %4742 = vdwg.mxu0
        %v4743 = vadd.f32 %v4720, %v4739
        %v4744 = vadd.f32 %v4721, %v4741
        %v4745 = vmul.f32 %v4613, %v711
        %v4746 = vmul.f32 %v4614, %v711
        %v4747 = vpack.c.bf16 %v4746, %v4745
        %4749 = vrot.lane.b32.xlu0 %v4747, 121
        %v4750 = vpop.permute.xlu0 %4749
        %4752 = vmatpush.bf16.msra.mxu0 0
        %4753 = vmatpush.bf16.msra.mxu0 0
        %4754 = vmatpush.bf16.msra.mxu0 0
        %4755 = vmatpush.bf16.msra.mxu0 0
        %4756 = vmatpush.bf16.msra.mxu0 0
        %4757 = vmatpush.bf16.msra.mxu0 0
        %4758 = vmatpush.bf16.msra.mxu0 0
        %4759 = vmatpush.bf16.msra.mxu0 %v4750
        %4760 = vmatmul.bf16.gmra.mxu0 %v1035
        %v4761 = vpop.f32.mrf.mxu0
        %v4762 = vadd.f32 0.0, %v4761
        %v4763 = vpop.f32.mrf.mxu0
        %v4764 = vadd.f32 0.0, %v4763
        %4765 = vdwg.mxu0
        %v4766 = vadd.f32 %v4743, %v4762
        %v4767 = vadd.f32 %v4744, %v4764
        %v4768 = vmul.f32 %v4613, %v747
        %v4769 = vmul.f32 %v4614, %v747
        %v4770 = vpack.c.bf16 %v4769, %v4768
        %4772 = vrot.lane.b32.xlu0 %v4770, 120
        %v4773 = vpop.permute.xlu0 %4772
        %4775 = vmatpush.bf16.msra.mxu0 0
        %4776 = vmatpush.bf16.msra.mxu0 0
        %4777 = vmatpush.bf16.msra.mxu0 0
        %4778 = vmatpush.bf16.msra.mxu0 0
        %4779 = vmatpush.bf16.msra.mxu0 0
        %4780 = vmatpush.bf16.msra.mxu0 0
        %4781 = vmatpush.bf16.msra.mxu0 0
        %4782 = vmatpush.bf16.msra.mxu0 %v4773
        %4783 = vmatmul.bf16.gmra.mxu0 %v1066
        %v4784 = vpop.f32.mrf.mxu0
        %v4785 = vadd.f32 0.0, %v4784
        %v4786 = vpop.f32.mrf.mxu0
        %v4787 = vadd.f32 0.0, %v4786
        %4788 = vdwg.mxu0
        %v4789 = vadd.f32 %v4766, %v4785
        %v4790 = vadd.f32 %v4767, %v4787
        %v4791 = vmul.f32 %v4613, %v783
        %v4792 = vmul.f32 %v4614, %v783
        %v4793 = vpack.c.bf16 %v4792, %v4791
        %4795 = vrot.lane.b32.xlu0 %v4793, 119
        %v4796 = vpop.permute.xlu0 %4795
        %4798 = vmatpush.bf16.msra.mxu0 0
        %4799 = vmatpush.bf16.msra.mxu0 0
        %4800 = vmatpush.bf16.msra.mxu0 0
        %4801 = vmatpush.bf16.msra.mxu0 0
        %4802 = vmatpush.bf16.msra.mxu0 0
        %4803 = vmatpush.bf16.msra.mxu0 0
        %4804 = vmatpush.bf16.msra.mxu0 0
        %4805 = vmatpush.bf16.msra.mxu0 %v4796
        %4806 = vmatmul.bf16.gmra.mxu0 %v1097
        %v4807 = vpop.f32.mrf.mxu0
        %v4808 = vadd.f32 0.0, %v4807
        %v4809 = vpop.f32.mrf.mxu0
        %v4810 = vadd.f32 0.0, %v4809
        %4811 = vdwg.mxu0
        %v4812 = vadd.f32 %v4789, %v4808
        %v4813 = vadd.f32 %v4790, %v4810
        %v4814 = vadd.f32 %v4812, %v1118
        %v4815 = vadd.f32 %v4813, %v1123
        %v4816 = vmax.f32 %v4814, 0.0
        %v4817 = vmax.f32 %v4815, 0.0
        %v4818 = vadd.f32 %v4816, %v4601
        %v4819 = vadd.f32 %v4817, %v4602
        %4820 = vrot.lane.b32.xlu0 %v4818, 64
        %v4821 = vpop.permute.xlu0 %4820
        %v4822 = vsel %vm490, %v4821, %v4818
        %4823 = vrot.lane.b32.xlu0 %v4819, 64
        %v4824 = vpop.permute.xlu0 %4823
        %v4825 = vsel %vm490, %v4824, %v4819
        %4826 = vrot.lane.b32.xlu0 %v4822, 64
        %v4827 = vpop.permute.xlu0 %4826
        %4828 = vrot.lane.b32.xlu0 %v4825, 64
        %v4829 = vpop.permute.xlu0 %4828
        %v4830 = vsel %vm490, %v4827, %v4818
        %v4831 = vsel %vm490, %v4829, %v4819
        %v4832 = vmul.f32 %v4830, %v506
        %v4833 = vmul.f32 %v4831, %v506
        %v4834 = vpack.c.bf16 %v4833, %v4832
        %v4835 = vmul.f32 %v4830, %v514
        %v4836 = vmul.f32 %v4831, %v514
        %v4837 = vpack.c.bf16 %v4836, %v4835
        %4839 = vrot.lane.b32.xlu0 %v4837, 72
        %v4840 = vpop.permute.xlu0 %4839
        %4842 = vmatpush.bf16.msra.mxu0 0
        %4843 = vmatpush.bf16.msra.mxu0 0
        %4844 = vmatpush.bf16.msra.mxu0 0
        %4845 = vmatpush.bf16.msra.mxu0 0
        %4846 = vmatpush.bf16.msra.mxu0 0
        %4847 = vmatpush.bf16.msra.mxu0 0
        %4848 = vmatpush.bf16.msra.mxu0 0
        %4849 = vmatpush.bf16.msra.mxu0 %v4840
        %4850 = vmatmul.bf16.gmra.mxu0 %v1159
        %v4851 = vpop.f32.mrf.mxu0
        %v4852 = vadd.f32 0.0, %v4851
        %v4853 = vpop.f32.mrf.mxu0
        %v4854 = vadd.f32 0.0, %v4853
        %4855 = vdwg.mxu0
        %4857 = vrot.lane.b32.xlu0 %v4834, 73
        %v4858 = vpop.permute.xlu0 %4857
        %4860 = vmatpush.bf16.msra.mxu0 0
        %4861 = vmatpush.bf16.msra.mxu0 0
        %4862 = vmatpush.bf16.msra.mxu0 0
        %4863 = vmatpush.bf16.msra.mxu0 0
        %4864 = vmatpush.bf16.msra.mxu0 0
        %4865 = vmatpush.bf16.msra.mxu0 0
        %4866 = vmatpush.bf16.msra.mxu0 0
        %4867 = vmatpush.bf16.msra.mxu0 %v4858
        %4868 = vmatmul.bf16.gmra.mxu0 %v1185
        %v4869 = vpop.f32.mrf.mxu0
        %v4870 = vadd.f32 %v4852, %v4869
        %v4871 = vpop.f32.mrf.mxu0
        %v4872 = vadd.f32 %v4854, %v4871
        %4873 = vdwg.mxu0
        %v4874 = vmul.f32 %v4830, %v575
        %v4875 = vmul.f32 %v4831, %v575
        %v4876 = vpack.c.bf16 %v4875, %v4874
        %4878 = vrot.lane.b32.xlu0 %v4876, 71
        %v4879 = vpop.permute.xlu0 %4878
        %4881 = vmatpush.bf16.msra.mxu0 0
        %4882 = vmatpush.bf16.msra.mxu0 0
        %4883 = vmatpush.bf16.msra.mxu0 0
        %4884 = vmatpush.bf16.msra.mxu0 0
        %4885 = vmatpush.bf16.msra.mxu0 0
        %4886 = vmatpush.bf16.msra.mxu0 0
        %4887 = vmatpush.bf16.msra.mxu0 0
        %4888 = vmatpush.bf16.msra.mxu0 %v4879
        %4889 = vmatmul.bf16.gmra.mxu0 %v1214
        %v4890 = vpop.f32.mrf.mxu0
        %v4891 = vadd.f32 0.0, %v4890
        %v4892 = vpop.f32.mrf.mxu0
        %v4893 = vadd.f32 0.0, %v4892
        %4894 = vdwg.mxu0
        %v4895 = vadd.f32 %v4870, %v4891
        %v4896 = vadd.f32 %v4872, %v4893
        %v4897 = vmul.f32 %v4830, %v611
        %v4898 = vmul.f32 %v4831, %v611
        %v4899 = vpack.c.bf16 %v4898, %v4897
        %4901 = vrot.lane.b32.xlu0 %v4899, 65
        %v4902 = vpop.permute.xlu0 %4901
        %4904 = vmatpush.bf16.msra.mxu0 0
        %4905 = vmatpush.bf16.msra.mxu0 0
        %4906 = vmatpush.bf16.msra.mxu0 0
        %4907 = vmatpush.bf16.msra.mxu0 0
        %4908 = vmatpush.bf16.msra.mxu0 0
        %4909 = vmatpush.bf16.msra.mxu0 0
        %4910 = vmatpush.bf16.msra.mxu0 0
        %4911 = vmatpush.bf16.msra.mxu0 %v4902
        %4912 = vmatmul.bf16.gmra.mxu0 %v1245
        %v4913 = vpop.f32.mrf.mxu0
        %v4914 = vadd.f32 0.0, %v4913
        %v4915 = vpop.f32.mrf.mxu0
        %v4916 = vadd.f32 0.0, %v4915
        %4917 = vdwg.mxu0
        %v4918 = vadd.f32 %v4895, %v4914
        %v4919 = vadd.f32 %v4896, %v4916
        %v4920 = vmul.f32 %v4818, %v644
        %v4921 = vmul.f32 %v4819, %v644
        %v4922 = vpack.c.bf16 %v4921, %v4920
        %4923 = vmatpush.bf16.msra.mxu0 0
        %4924 = vmatpush.bf16.msra.mxu0 0
        %4925 = vmatpush.bf16.msra.mxu0 0
        %4926 = vmatpush.bf16.msra.mxu0 0
        %4927 = vmatpush.bf16.msra.mxu0 0
        %4928 = vmatpush.bf16.msra.mxu0 0
        %4929 = vmatpush.bf16.msra.mxu0 0
        %4930 = vmatpush.bf16.msra.mxu0 %v4922
        %4931 = vmatmul.bf16.gmra.mxu0 %v1272
        %v4932 = vpop.f32.mrf.mxu0
        %v4933 = vadd.f32 0.0, %v4932
        %v4934 = vpop.f32.mrf.mxu0
        %v4935 = vadd.f32 0.0, %v4934
        %4936 = vdwg.mxu0
        %v4937 = vadd.f32 %v4918, %v4933
        %v4938 = vadd.f32 %v4919, %v4935
        %v4939 = vmul.f32 %v4830, %v675
        %v4940 = vmul.f32 %v4831, %v675
        %v4941 = vpack.c.bf16 %v4940, %v4939
        %4943 = vrot.lane.b32.xlu0 %v4941, 127
        %v4944 = vpop.permute.xlu0 %4943
        %4946 = vmatpush.bf16.msra.mxu0 0
        %4947 = vmatpush.bf16.msra.mxu0 0
        %4948 = vmatpush.bf16.msra.mxu0 0
        %4949 = vmatpush.bf16.msra.mxu0 0
        %4950 = vmatpush.bf16.msra.mxu0 0
        %4951 = vmatpush.bf16.msra.mxu0 0
        %4952 = vmatpush.bf16.msra.mxu0 0
        %4953 = vmatpush.bf16.msra.mxu0 %v4944
        %4954 = vmatmul.bf16.gmra.mxu0 %v1303
        %v4955 = vpop.f32.mrf.mxu0
        %v4956 = vadd.f32 0.0, %v4955
        %v4957 = vpop.f32.mrf.mxu0
        %v4958 = vadd.f32 0.0, %v4957
        %4959 = vdwg.mxu0
        %v4960 = vadd.f32 %v4937, %v4956
        %v4961 = vadd.f32 %v4938, %v4958
        %v4962 = vmul.f32 %v4830, %v711
        %v4963 = vmul.f32 %v4831, %v711
        %v4964 = vpack.c.bf16 %v4963, %v4962
        %4966 = vrot.lane.b32.xlu0 %v4964, 121
        %v4967 = vpop.permute.xlu0 %4966
        %4969 = vmatpush.bf16.msra.mxu0 0
        %4970 = vmatpush.bf16.msra.mxu0 0
        %4971 = vmatpush.bf16.msra.mxu0 0
        %4972 = vmatpush.bf16.msra.mxu0 0
        %4973 = vmatpush.bf16.msra.mxu0 0
        %4974 = vmatpush.bf16.msra.mxu0 0
        %4975 = vmatpush.bf16.msra.mxu0 0
        %4976 = vmatpush.bf16.msra.mxu0 %v4967
        %4977 = vmatmul.bf16.gmra.mxu0 %v1334
        %v4978 = vpop.f32.mrf.mxu0
        %v4979 = vadd.f32 0.0, %v4978
        %v4980 = vpop.f32.mrf.mxu0
        %v4981 = vadd.f32 0.0, %v4980
        %4982 = vdwg.mxu0
        %v4983 = vadd.f32 %v4960, %v4979
        %v4984 = vadd.f32 %v4961, %v4981
        %v4985 = vmul.f32 %v4830, %v747
        %v4986 = vmul.f32 %v4831, %v747
        %v4987 = vpack.c.bf16 %v4986, %v4985
        %4989 = vrot.lane.b32.xlu0 %v4987, 120
        %v4990 = vpop.permute.xlu0 %4989
        %4992 = vmatpush.bf16.msra.mxu0 0
        %4993 = vmatpush.bf16.msra.mxu0 0
        %4994 = vmatpush.bf16.msra.mxu0 0
        %4995 = vmatpush.bf16.msra.mxu0 0
        %4996 = vmatpush.bf16.msra.mxu0 0
        %4997 = vmatpush.bf16.msra.mxu0 0
        %4998 = vmatpush.bf16.msra.mxu0 0
        %4999 = vmatpush.bf16.msra.mxu0 %v4990
        %5000 = vmatmul.bf16.gmra.mxu0 %v1365
        %v5001 = vpop.f32.mrf.mxu0
        %v5002 = vadd.f32 0.0, %v5001
        %v5003 = vpop.f32.mrf.mxu0
        %v5004 = vadd.f32 0.0, %v5003
        %5005 = vdwg.mxu0
        %v5006 = vadd.f32 %v4983, %v5002
        %v5007 = vadd.f32 %v4984, %v5004
        %v5008 = vmul.f32 %v4830, %v783
        %v5009 = vmul.f32 %v4831, %v783
        %v5010 = vpack.c.bf16 %v5009, %v5008
        %5012 = vrot.lane.b32.xlu0 %v5010, 119
        %v5013 = vpop.permute.xlu0 %5012
        %5015 = vmatpush.bf16.msra.mxu0 0
        %5016 = vmatpush.bf16.msra.mxu0 0
        %5017 = vmatpush.bf16.msra.mxu0 0
        %5018 = vmatpush.bf16.msra.mxu0 0
        %5019 = vmatpush.bf16.msra.mxu0 0
        %5020 = vmatpush.bf16.msra.mxu0 0
        %5021 = vmatpush.bf16.msra.mxu0 0
        %5022 = vmatpush.bf16.msra.mxu0 %v5013
        %5023 = vmatmul.bf16.gmra.mxu0 %v1396
        %v5024 = vpop.f32.mrf.mxu0
        %v5025 = vadd.f32 0.0, %v5024
        %v5026 = vpop.f32.mrf.mxu0
        %v5027 = vadd.f32 0.0, %v5026
        %5028 = vdwg.mxu0
        %v5029 = vadd.f32 %v5006, %v5025
        %v5030 = vadd.f32 %v5007, %v5027
        %v5031 = vadd.f32 %v5029, %v1417
        %v5032 = vadd.f32 %v5030, %v1422
        %v5033 = vmax.f32 %v5031, 0.0
        %v5034 = vmax.f32 %v5032, 0.0
        %v5035 = vadd.f32 %v5033, %v4818
        %v5036 = vadd.f32 %v5034, %v4819
        %v5037 = vpack.c.bf16 %v5036, %v5035
        %5038 = vmatpush.bf16.msra.mxu0 0
        %5039 = vmatpush.bf16.msra.mxu0 0
        %5040 = vmatpush.bf16.msra.mxu0 0
        %5041 = vmatpush.bf16.msra.mxu0 0
        %5042 = vmatpush.bf16.msra.mxu0 0
        %5043 = vmatpush.bf16.msra.mxu0 0
        %5044 = vmatpush.bf16.msra.mxu0 0
        %5045 = vmatpush.bf16.msra.mxu0 %v5037
        %5046 = vmatmul.bf16.gmra.mxu0 %v1437
        %v5047 = vpop.f32.mrf.mxu0
        %v5048 = vadd.f32 %v1434, %v5047
        %v5049 = vpop.f32.mrf.mxu0
        %5050 = vdwg.mxu0
        %v5051 = vmax.f32 %v5048, 0.0
        %v5052 = vpack.c.bf16 %v5051, %v5051
        %v5054 = vsel %vm1464, %v5052, 0
        %5056 = vmatpush.bf16.msra.mxu0 0
        %5057 = vmatpush.bf16.msra.mxu0 0
        %5058 = vmatpush.bf16.msra.mxu0 0
        %5059 = vmatpush.bf16.msra.mxu0 0
        %5060 = vmatpush.bf16.msra.mxu0 0
        %5061 = vmatpush.bf16.msra.mxu0 0
        %5062 = vmatpush.bf16.msra.mxu0 0
        %5063 = vmatpush.bf16.msra.mxu0 %v5054
        %5064 = vmatmul.bf16.gmra.mxu0 %v1462
        %v5065 = vpop.f32.mrf.mxu0
        %v5066 = vadd.f32 %v1459, %v5065
        %v5067 = vpop.f32.mrf.mxu0
        %5068 = vdwg.mxu0
        %v5069 = vxor.u32 %v5066, 2147483648
        %v5070 = vmul.f32 %v5069, 1.442695
        %v5071 = vpow.pop %v5070
        %v5072 = vadd.f32 %v5071, 1.0
        %v5073 = vrcp.pop %v5072
        %v5074 = vmul.f32 %v5072, %v5073
        %v5075 = vsub.f32 1.0, %v5074
        %v5076 = vmul.f32 %v5073, %v5075
        %v5077 = vadd.f32 %v5073, %v5076
        %vm5078 = vweird.f32 %v5072
        %vm5079 = vweird.f32 %v5073
        %vm5080 = vmor %vm5078, %vm5079
        %v5081 = vsel %vm5080, %v5073, %v5077
        %v5082 = vand.u32 2147483647, %v5072
        %vm5083 = vcmp.eq.f32.partialorder %v5082, 8.507059e+37
        %v5084 = vand.u32 %v5072, 2147483648
        %v5085 = vor.u32 1.1754944e-38, %v5084
        %v5086 = vsel %vm5083, %v5085, %v5081
        %v5087 = vmul.f32 1.0, %v5086
        %v5088 = vperm.slane %v5087, 0
        %v5089 = vmul.f32 %v5035, %v5088
        %v5090 = vmul.f32 %v5036, %v5088
        %v5091 = vsel %vm1503, %v5089, 0.0
        %5092 = vadd.xlane.f32.xlu0 %v5091
        %v5093 = vpop.xlane.xlu0 %5092
        %v5094 = vsel %vm1503, %v5090, 0.0
        %5095 = vadd.xlane.f32.xlu0 %v5094
        %v5096 = vpop.xlane.xlu0 %5095
        %v5097 = vmul.f32 %v5093, %v1516
        %v5098 = vmul.f32 %v5096, %v1516
        %s5099 = scalar_lea.vmem %s335, 96 [#allocation3]
        %v5100 = vld [vmem:[%s5099] sm:$0xff]
        %v5101 = vld [vmem:[%s5099 + $0x8] sm:$0xff]
        %5102 = vrot.lane.b32.xlu0 %v5100, 64
        %v5103 = vpop.permute.xlu0 %5102
        %v5104 = vsel %vm490, %v5103, %v5100
        %5105 = vrot.lane.b32.xlu0 %v5101, 64
        %v5106 = vpop.permute.xlu0 %5105
        %v5107 = vsel %vm490, %v5106, %v5101
        %5108 = vrot.lane.b32.xlu0 %v5104, 64
        %v5109 = vpop.permute.xlu0 %5108
        %5110 = vrot.lane.b32.xlu0 %v5107, 64
        %v5111 = vpop.permute.xlu0 %5110
        %v5112 = vsel %vm490, %v5109, %v5100
        %v5113 = vsel %vm490, %v5111, %v5101
        %v5114 = vmul.f32 %v5112, %v506
        %v5115 = vmul.f32 %v5113, %v506
        %v5116 = vpack.c.bf16 %v5115, %v5114
        %v5117 = vmul.f32 %v5112, %v514
        %v5118 = vmul.f32 %v5113, %v514
        %v5119 = vpack.c.bf16 %v5118, %v5117
        %5121 = vrot.lane.b32.xlu0 %v5119, 72
        %v5122 = vpop.permute.xlu0 %5121
        %5124 = vmatpush.bf16.msra.mxu0 0
        %5125 = vmatpush.bf16.msra.mxu0 0
        %5126 = vmatpush.bf16.msra.mxu0 0
        %5127 = vmatpush.bf16.msra.mxu0 0
        %5128 = vmatpush.bf16.msra.mxu0 0
        %5129 = vmatpush.bf16.msra.mxu0 0
        %5130 = vmatpush.bf16.msra.mxu0 0
        %5131 = vmatpush.bf16.msra.mxu0 %v5122
        %5132 = vmatmul.bf16.gmra.mxu0 %v530
        %v5133 = vpop.f32.mrf.mxu0
        %v5134 = vadd.f32 0.0, %v5133
        %v5135 = vpop.f32.mrf.mxu0
        %v5136 = vadd.f32 0.0, %v5135
        %5137 = vdwg.mxu0
        %5139 = vrot.lane.b32.xlu0 %v5116, 73
        %v5140 = vpop.permute.xlu0 %5139
        %5142 = vmatpush.bf16.msra.mxu0 0
        %5143 = vmatpush.bf16.msra.mxu0 0
        %5144 = vmatpush.bf16.msra.mxu0 0
        %5145 = vmatpush.bf16.msra.mxu0 0
        %5146 = vmatpush.bf16.msra.mxu0 0
        %5147 = vmatpush.bf16.msra.mxu0 0
        %5148 = vmatpush.bf16.msra.mxu0 0
        %5149 = vmatpush.bf16.msra.mxu0 %v5140
        %5150 = vmatmul.bf16.gmra.mxu0 %v556
        %v5151 = vpop.f32.mrf.mxu0
        %v5152 = vadd.f32 %v5134, %v5151
        %v5153 = vpop.f32.mrf.mxu0
        %v5154 = vadd.f32 %v5136, %v5153
        %5155 = vdwg.mxu0
        %v5156 = vmul.f32 %v5112, %v575
        %v5157 = vmul.f32 %v5113, %v575
        %v5158 = vpack.c.bf16 %v5157, %v5156
        %5160 = vrot.lane.b32.xlu0 %v5158, 71
        %v5161 = vpop.permute.xlu0 %5160
        %5163 = vmatpush.bf16.msra.mxu0 0
        %5164 = vmatpush.bf16.msra.mxu0 0
        %5165 = vmatpush.bf16.msra.mxu0 0
        %5166 = vmatpush.bf16.msra.mxu0 0
        %5167 = vmatpush.bf16.msra.mxu0 0
        %5168 = vmatpush.bf16.msra.mxu0 0
        %5169 = vmatpush.bf16.msra.mxu0 0
        %5170 = vmatpush.bf16.msra.mxu0 %v5161
        %5171 = vmatmul.bf16.gmra.mxu0 %v590
        %v5172 = vpop.f32.mrf.mxu0
        %v5173 = vadd.f32 0.0, %v5172
        %v5174 = vpop.f32.mrf.mxu0
        %v5175 = vadd.f32 0.0, %v5174
        %5176 = vdwg.mxu0
        %v5177 = vadd.f32 %v5152, %v5173
        %v5178 = vadd.f32 %v5154, %v5175
        %v5179 = vmul.f32 %v5112, %v611
        %v5180 = vmul.f32 %v5113, %v611
        %v5181 = vpack.c.bf16 %v5180, %v5179
        %5183 = vrot.lane.b32.xlu0 %v5181, 65
        %v5184 = vpop.permute.xlu0 %5183
        %5186 = vmatpush.bf16.msra.mxu0 0
        %5187 = vmatpush.bf16.msra.mxu0 0
        %5188 = vmatpush.bf16.msra.mxu0 0
        %5189 = vmatpush.bf16.msra.mxu0 0
        %5190 = vmatpush.bf16.msra.mxu0 0
        %5191 = vmatpush.bf16.msra.mxu0 0
        %5192 = vmatpush.bf16.msra.mxu0 0
        %5193 = vmatpush.bf16.msra.mxu0 %v5184
        %5194 = vmatmul.bf16.gmra.mxu0 %v626
        %v5195 = vpop.f32.mrf.mxu0
        %v5196 = vadd.f32 0.0, %v5195
        %v5197 = vpop.f32.mrf.mxu0
        %v5198 = vadd.f32 0.0, %v5197
        %5199 = vdwg.mxu0
        %v5200 = vadd.f32 %v5177, %v5196
        %v5201 = vadd.f32 %v5178, %v5198
        %v5202 = vmul.f32 %v5100, %v644
        %v5203 = vmul.f32 %v5101, %v644
        %v5204 = vpack.c.bf16 %v5203, %v5202
        %5205 = vmatpush.bf16.msra.mxu0 0
        %5206 = vmatpush.bf16.msra.mxu0 0
        %5207 = vmatpush.bf16.msra.mxu0 0
        %5208 = vmatpush.bf16.msra.mxu0 0
        %5209 = vmatpush.bf16.msra.mxu0 0
        %5210 = vmatpush.bf16.msra.mxu0 0
        %5211 = vmatpush.bf16.msra.mxu0 0
        %5212 = vmatpush.bf16.msra.mxu0 %v5204
        %5213 = vmatmul.bf16.gmra.mxu0 %v654
        %v5214 = vpop.f32.mrf.mxu0
        %v5215 = vadd.f32 0.0, %v5214
        %v5216 = vpop.f32.mrf.mxu0
        %v5217 = vadd.f32 0.0, %v5216
        %5218 = vdwg.mxu0
        %v5219 = vadd.f32 %v5200, %v5215
        %v5220 = vadd.f32 %v5201, %v5217
        %v5221 = vmul.f32 %v5112, %v675
        %v5222 = vmul.f32 %v5113, %v675
        %v5223 = vpack.c.bf16 %v5222, %v5221
        %5225 = vrot.lane.b32.xlu0 %v5223, 127
        %v5226 = vpop.permute.xlu0 %5225
        %5228 = vmatpush.bf16.msra.mxu0 0
        %5229 = vmatpush.bf16.msra.mxu0 0
        %5230 = vmatpush.bf16.msra.mxu0 0
        %5231 = vmatpush.bf16.msra.mxu0 0
        %5232 = vmatpush.bf16.msra.mxu0 0
        %5233 = vmatpush.bf16.msra.mxu0 0
        %5234 = vmatpush.bf16.msra.mxu0 0
        %5235 = vmatpush.bf16.msra.mxu0 %v5226
        %5236 = vmatmul.bf16.gmra.mxu0 %v690
        %v5237 = vpop.f32.mrf.mxu0
        %v5238 = vadd.f32 0.0, %v5237
        %v5239 = vpop.f32.mrf.mxu0
        %v5240 = vadd.f32 0.0, %v5239
        %5241 = vdwg.mxu0
        %v5242 = vadd.f32 %v5219, %v5238
        %v5243 = vadd.f32 %v5220, %v5240
        %v5244 = vmul.f32 %v5112, %v711
        %v5245 = vmul.f32 %v5113, %v711
        %v5246 = vpack.c.bf16 %v5245, %v5244
        %5248 = vrot.lane.b32.xlu0 %v5246, 121
        %v5249 = vpop.permute.xlu0 %5248
        %5251 = vmatpush.bf16.msra.mxu0 0
        %5252 = vmatpush.bf16.msra.mxu0 0
        %5253 = vmatpush.bf16.msra.mxu0 0
        %5254 = vmatpush.bf16.msra.mxu0 0
        %5255 = vmatpush.bf16.msra.mxu0 0
        %5256 = vmatpush.bf16.msra.mxu0 0
        %5257 = vmatpush.bf16.msra.mxu0 0
        %5258 = vmatpush.bf16.msra.mxu0 %v5249
        %5259 = vmatmul.bf16.gmra.mxu0 %v726
        %v5260 = vpop.f32.mrf.mxu0
        %v5261 = vadd.f32 0.0, %v5260
        %v5262 = vpop.f32.mrf.mxu0
        %v5263 = vadd.f32 0.0, %v5262
        %5264 = vdwg.mxu0
        %v5265 = vadd.f32 %v5242, %v5261
        %v5266 = vadd.f32 %v5243, %v5263
        %v5267 = vmul.f32 %v5112, %v747
        %v5268 = vmul.f32 %v5113, %v747
        %v5269 = vpack.c.bf16 %v5268, %v5267
        %5271 = vrot.lane.b32.xlu0 %v5269, 120
        %v5272 = vpop.permute.xlu0 %5271
        %5274 = vmatpush.bf16.msra.mxu0 0
        %5275 = vmatpush.bf16.msra.mxu0 0
        %5276 = vmatpush.bf16.msra.mxu0 0
        %5277 = vmatpush.bf16.msra.mxu0 0
        %5278 = vmatpush.bf16.msra.mxu0 0
        %5279 = vmatpush.bf16.msra.mxu0 0
        %5280 = vmatpush.bf16.msra.mxu0 0
        %5281 = vmatpush.bf16.msra.mxu0 %v5272
        %5282 = vmatmul.bf16.gmra.mxu0 %v762
        %v5283 = vpop.f32.mrf.mxu0
        %v5284 = vadd.f32 0.0, %v5283
        %v5285 = vpop.f32.mrf.mxu0
        %v5286 = vadd.f32 0.0, %v5285
        %5287 = vdwg.mxu0
        %v5288 = vadd.f32 %v5265, %v5284
        %v5289 = vadd.f32 %v5266, %v5286
        %v5290 = vmul.f32 %v5112, %v783
        %v5291 = vmul.f32 %v5113, %v783
        %v5292 = vpack.c.bf16 %v5291, %v5290
        %5294 = vrot.lane.b32.xlu0 %v5292, 119
        %v5295 = vpop.permute.xlu0 %5294
        %5297 = vmatpush.bf16.msra.mxu0 0
        %5298 = vmatpush.bf16.msra.mxu0 0
        %5299 = vmatpush.bf16.msra.mxu0 0
        %5300 = vmatpush.bf16.msra.mxu0 0
        %5301 = vmatpush.bf16.msra.mxu0 0
        %5302 = vmatpush.bf16.msra.mxu0 0
        %5303 = vmatpush.bf16.msra.mxu0 0
        %5304 = vmatpush.bf16.msra.mxu0 %v5295
        %5305 = vmatmul.bf16.gmra.mxu0 %v798
        %v5306 = vpop.f32.mrf.mxu0
        %v5307 = vadd.f32 0.0, %v5306
        %v5308 = vpop.f32.mrf.mxu0
        %v5309 = vadd.f32 0.0, %v5308
        %5310 = vdwg.mxu0
        %v5311 = vadd.f32 %v5288, %v5307
        %v5312 = vadd.f32 %v5289, %v5309
        %v5313 = vadd.f32 %v5311, %v819
        %v5314 = vadd.f32 %v5312, %v824
        %v5315 = vmax.f32 %v5313, 0.0
        %v5316 = vmax.f32 %v5314, 0.0
        %v5317 = vadd.f32 %v5315, %v5100
        %v5318 = vadd.f32 %v5316, %v5101
        %5319 = vrot.lane.b32.xlu0 %v5317, 64
        %v5320 = vpop.permute.xlu0 %5319
        %v5321 = vsel %vm490, %v5320, %v5317
        %5322 = vrot.lane.b32.xlu0 %v5318, 64
        %v5323 = vpop.permute.xlu0 %5322
        %v5324 = vsel %vm490, %v5323, %v5318
        %5325 = vrot.lane.b32.xlu0 %v5321, 64
        %v5326 = vpop.permute.xlu0 %5325
        %5327 = vrot.lane.b32.xlu0 %v5324, 64
        %v5328 = vpop.permute.xlu0 %5327
        %v5329 = vsel %vm490, %v5326, %v5317
        %v5330 = vsel %vm490, %v5328, %v5318
        %v5331 = vmul.f32 %v5329, %v506
        %v5332 = vmul.f32 %v5330, %v506
        %v5333 = vpack.c.bf16 %v5332, %v5331
        %v5334 = vmul.f32 %v5329, %v514
        %v5335 = vmul.f32 %v5330, %v514
        %v5336 = vpack.c.bf16 %v5335, %v5334
        %5338 = vrot.lane.b32.xlu0 %v5336, 72
        %v5339 = vpop.permute.xlu0 %5338
        %5341 = vmatpush.bf16.msra.mxu0 0
        %5342 = vmatpush.bf16.msra.mxu0 0
        %5343 = vmatpush.bf16.msra.mxu0 0
        %5344 = vmatpush.bf16.msra.mxu0 0
        %5345 = vmatpush.bf16.msra.mxu0 0
        %5346 = vmatpush.bf16.msra.mxu0 0
        %5347 = vmatpush.bf16.msra.mxu0 0
        %5348 = vmatpush.bf16.msra.mxu0 %v5339
        %5349 = vmatmul.bf16.gmra.mxu0 %v860
        %v5350 = vpop.f32.mrf.mxu0
        %v5351 = vadd.f32 0.0, %v5350
        %v5352 = vpop.f32.mrf.mxu0
        %v5353 = vadd.f32 0.0, %v5352
        %5354 = vdwg.mxu0
        %5356 = vrot.lane.b32.xlu0 %v5333, 73
        %v5357 = vpop.permute.xlu0 %5356
        %5359 = vmatpush.bf16.msra.mxu0 0
        %5360 = vmatpush.bf16.msra.mxu0 0
        %5361 = vmatpush.bf16.msra.mxu0 0
        %5362 = vmatpush.bf16.msra.mxu0 0
        %5363 = vmatpush.bf16.msra.mxu0 0
        %5364 = vmatpush.bf16.msra.mxu0 0
        %5365 = vmatpush.bf16.msra.mxu0 0
        %5366 = vmatpush.bf16.msra.mxu0 %v5357
        %5367 = vmatmul.bf16.gmra.mxu0 %v886
        %v5368 = vpop.f32.mrf.mxu0
        %v5369 = vadd.f32 %v5351, %v5368
        %v5370 = vpop.f32.mrf.mxu0
        %v5371 = vadd.f32 %v5353, %v5370
        %5372 = vdwg.mxu0
        %v5373 = vmul.f32 %v5329, %v575
        %v5374 = vmul.f32 %v5330, %v575
        %v5375 = vpack.c.bf16 %v5374, %v5373
        %5377 = vrot.lane.b32.xlu0 %v5375, 71
        %v5378 = vpop.permute.xlu0 %5377
        %5380 = vmatpush.bf16.msra.mxu0 0
        %5381 = vmatpush.bf16.msra.mxu0 0
        %5382 = vmatpush.bf16.msra.mxu0 0
        %5383 = vmatpush.bf16.msra.mxu0 0
        %5384 = vmatpush.bf16.msra.mxu0 0
        %5385 = vmatpush.bf16.msra.mxu0 0
        %5386 = vmatpush.bf16.msra.mxu0 0
        %5387 = vmatpush.bf16.msra.mxu0 %v5378
        %5388 = vmatmul.bf16.gmra.mxu0 %v915
        %v5389 = vpop.f32.mrf.mxu0
        %v5390 = vadd.f32 0.0, %v5389
        %v5391 = vpop.f32.mrf.mxu0
        %v5392 = vadd.f32 0.0, %v5391
        %5393 = vdwg.mxu0
        %v5394 = vadd.f32 %v5369, %v5390
        %v5395 = vadd.f32 %v5371, %v5392
        %v5396 = vmul.f32 %v5329, %v611
        %v5397 = vmul.f32 %v5330, %v611
        %v5398 = vpack.c.bf16 %v5397, %v5396
        %5400 = vrot.lane.b32.xlu0 %v5398, 65
        %v5401 = vpop.permute.xlu0 %5400
        %5403 = vmatpush.bf16.msra.mxu0 0
        %5404 = vmatpush.bf16.msra.mxu0 0
        %5405 = vmatpush.bf16.msra.mxu0 0
        %5406 = vmatpush.bf16.msra.mxu0 0
        %5407 = vmatpush.bf16.msra.mxu0 0
        %5408 = vmatpush.bf16.msra.mxu0 0
        %5409 = vmatpush.bf16.msra.mxu0 0
        %5410 = vmatpush.bf16.msra.mxu0 %v5401
        %5411 = vmatmul.bf16.gmra.mxu0 %v946
        %v5412 = vpop.f32.mrf.mxu0
        %v5413 = vadd.f32 0.0, %v5412
        %v5414 = vpop.f32.mrf.mxu0
        %v5415 = vadd.f32 0.0, %v5414
        %5416 = vdwg.mxu0
        %v5417 = vadd.f32 %v5394, %v5413
        %v5418 = vadd.f32 %v5395, %v5415
        %v5419 = vmul.f32 %v5317, %v644
        %v5420 = vmul.f32 %v5318, %v644
        %v5421 = vpack.c.bf16 %v5420, %v5419
        %5422 = vmatpush.bf16.msra.mxu0 0
        %5423 = vmatpush.bf16.msra.mxu0 0
        %5424 = vmatpush.bf16.msra.mxu0 0
        %5425 = vmatpush.bf16.msra.mxu0 0
        %5426 = vmatpush.bf16.msra.mxu0 0
        %5427 = vmatpush.bf16.msra.mxu0 0
        %5428 = vmatpush.bf16.msra.mxu0 0
        %5429 = vmatpush.bf16.msra.mxu0 %v5421
        %5430 = vmatmul.bf16.gmra.mxu0 %v973
        %v5431 = vpop.f32.mrf.mxu0
        %v5432 = vadd.f32 0.0, %v5431
        %v5433 = vpop.f32.mrf.mxu0
        %v5434 = vadd.f32 0.0, %v5433
        %5435 = vdwg.mxu0
        %v5436 = vadd.f32 %v5417, %v5432
        %v5437 = vadd.f32 %v5418, %v5434
        %v5438 = vmul.f32 %v5329, %v675
        %v5439 = vmul.f32 %v5330, %v675
        %v5440 = vpack.c.bf16 %v5439, %v5438
        %5442 = vrot.lane.b32.xlu0 %v5440, 127
        %v5443 = vpop.permute.xlu0 %5442
        %5445 = vmatpush.bf16.msra.mxu0 0
        %5446 = vmatpush.bf16.msra.mxu0 0
        %5447 = vmatpush.bf16.msra.mxu0 0
        %5448 = vmatpush.bf16.msra.mxu0 0
        %5449 = vmatpush.bf16.msra.mxu0 0
        %5450 = vmatpush.bf16.msra.mxu0 0
        %5451 = vmatpush.bf16.msra.mxu0 0
        %5452 = vmatpush.bf16.msra.mxu0 %v5443
        %5453 = vmatmul.bf16.gmra.mxu0 %v1004
        %v5454 = vpop.f32.mrf.mxu0
        %v5455 = vadd.f32 0.0, %v5454
        %v5456 = vpop.f32.mrf.mxu0
        %v5457 = vadd.f32 0.0, %v5456
        %5458 = vdwg.mxu0
        %v5459 = vadd.f32 %v5436, %v5455
        %v5460 = vadd.f32 %v5437, %v5457
        %v5461 = vmul.f32 %v5329, %v711
        %v5462 = vmul.f32 %v5330, %v711
        %v5463 = vpack.c.bf16 %v5462, %v5461
        %5465 = vrot.lane.b32.xlu0 %v5463, 121
        %v5466 = vpop.permute.xlu0 %5465
        %5468 = vmatpush.bf16.msra.mxu0 0
        %5469 = vmatpush.bf16.msra.mxu0 0
        %5470 = vmatpush.bf16.msra.mxu0 0
        %5471 = vmatpush.bf16.msra.mxu0 0
        %5472 = vmatpush.bf16.msra.mxu0 0
        %5473 = vmatpush.bf16.msra.mxu0 0
        %5474 = vmatpush.bf16.msra.mxu0 0
        %5475 = vmatpush.bf16.msra.mxu0 %v5466
        %5476 = vmatmul.bf16.gmra.mxu0 %v1035
        %v5477 = vpop.f32.mrf.mxu0
        %v5478 = vadd.f32 0.0, %v5477
        %v5479 = vpop.f32.mrf.mxu0
        %v5480 = vadd.f32 0.0, %v5479
        %5481 = vdwg.mxu0
        %v5482 = vadd.f32 %v5459, %v5478
        %v5483 = vadd.f32 %v5460, %v5480
        %v5484 = vmul.f32 %v5329, %v747
        %v5485 = vmul.f32 %v5330, %v747
        %v5486 = vpack.c.bf16 %v5485, %v5484
        %5488 = vrot.lane.b32.xlu0 %v5486, 120
        %v5489 = vpop.permute.xlu0 %5488
        %5491 = vmatpush.bf16.msra.mxu0 0
        %5492 = vmatpush.bf16.msra.mxu0 0
        %5493 = vmatpush.bf16.msra.mxu0 0
        %5494 = vmatpush.bf16.msra.mxu0 0
        %5495 = vmatpush.bf16.msra.mxu0 0
        %5496 = vmatpush.bf16.msra.mxu0 0
        %5497 = vmatpush.bf16.msra.mxu0 0
        %5498 = vmatpush.bf16.msra.mxu0 %v5489
        %5499 = vmatmul.bf16.gmra.mxu0 %v1066
        %v5500 = vpop.f32.mrf.mxu0
        %v5501 = vadd.f32 0.0, %v5500
        %v5502 = vpop.f32.mrf.mxu0
        %v5503 = vadd.f32 0.0, %v5502
        %5504 = vdwg.mxu0
        %v5505 = vadd.f32 %v5482, %v5501
        %v5506 = vadd.f32 %v5483, %v5503
        %v5507 = vmul.f32 %v5329, %v783
        %v5508 = vmul.f32 %v5330, %v783
        %v5509 = vpack.c.bf16 %v5508, %v5507
        %5511 = vrot.lane.b32.xlu0 %v5509, 119
        %v5512 = vpop.permute.xlu0 %5511
        %5514 = vmatpush.bf16.msra.mxu0 0
        %5515 = vmatpush.bf16.msra.mxu0 0
        %5516 = vmatpush.bf16.msra.mxu0 0
        %5517 = vmatpush.bf16.msra.mxu0 0
        %5518 = vmatpush.bf16.msra.mxu0 0
        %5519 = vmatpush.bf16.msra.mxu0 0
        %5520 = vmatpush.bf16.msra.mxu0 0
        %5521 = vmatpush.bf16.msra.mxu0 %v5512
        %5522 = vmatmul.bf16.gmra.mxu0 %v1097
        %v5523 = vpop.f32.mrf.mxu0
        %v5524 = vadd.f32 0.0, %v5523
        %v5525 = vpop.f32.mrf.mxu0
        %v5526 = vadd.f32 0.0, %v5525
        %5527 = vdwg.mxu0
        %v5528 = vadd.f32 %v5505, %v5524
        %v5529 = vadd.f32 %v5506, %v5526
        %v5530 = vadd.f32 %v5528, %v1118
        %v5531 = vadd.f32 %v5529, %v1123
        %v5532 = vmax.f32 %v5530, 0.0
        %v5533 = vmax.f32 %v5531, 0.0
        %v5534 = vadd.f32 %v5532, %v5317
        %v5535 = vadd.f32 %v5533, %v5318
        %5536 = vrot.lane.b32.xlu0 %v5534, 64
        %v5537 = vpop.permute.xlu0 %5536
        %v5538 = vsel %vm490, %v5537, %v5534
        %5539 = vrot.lane.b32.xlu0 %v5535, 64
        %v5540 = vpop.permute.xlu0 %5539
        %v5541 = vsel %vm490, %v5540, %v5535
        %5542 = vrot.lane.b32.xlu0 %v5538, 64
        %v5543 = vpop.permute.xlu0 %5542
        %5544 = vrot.lane.b32.xlu0 %v5541, 64
        %v5545 = vpop.permute.xlu0 %5544
        %v5546 = vsel %vm490, %v5543, %v5534
        %v5547 = vsel %vm490, %v5545, %v5535
        %v5548 = vmul.f32 %v5546, %v506
        %v5549 = vmul.f32 %v5547, %v506
        %v5550 = vpack.c.bf16 %v5549, %v5548
        %v5551 = vmul.f32 %v5546, %v514
        %v5552 = vmul.f32 %v5547, %v514
        %v5553 = vpack.c.bf16 %v5552, %v5551
        %5555 = vrot.lane.b32.xlu0 %v5553, 72
        %v5556 = vpop.permute.xlu0 %5555
        %5558 = vmatpush.bf16.msra.mxu0 0
        %5559 = vmatpush.bf16.msra.mxu0 0
        %5560 = vmatpush.bf16.msra.mxu0 0
        %5561 = vmatpush.bf16.msra.mxu0 0
        %5562 = vmatpush.bf16.msra.mxu0 0
        %5563 = vmatpush.bf16.msra.mxu0 0
        %5564 = vmatpush.bf16.msra.mxu0 0
        %5565 = vmatpush.bf16.msra.mxu0 %v5556
        %5566 = vmatmul.bf16.gmra.mxu0 %v1159
        %v5567 = vpop.f32.mrf.mxu0
        %v5568 = vadd.f32 0.0, %v5567
        %v5569 = vpop.f32.mrf.mxu0
        %v5570 = vadd.f32 0.0, %v5569
        %5571 = vdwg.mxu0
        %5573 = vrot.lane.b32.xlu0 %v5550, 73
        %v5574 = vpop.permute.xlu0 %5573
        %5576 = vmatpush.bf16.msra.mxu0 0
        %5577 = vmatpush.bf16.msra.mxu0 0
        %5578 = vmatpush.bf16.msra.mxu0 0
        %5579 = vmatpush.bf16.msra.mxu0 0
        %5580 = vmatpush.bf16.msra.mxu0 0
        %5581 = vmatpush.bf16.msra.mxu0 0
        %5582 = vmatpush.bf16.msra.mxu0 0
        %5583 = vmatpush.bf16.msra.mxu0 %v5574
        %5584 = vmatmul.bf16.gmra.mxu0 %v1185
        %v5585 = vpop.f32.mrf.mxu0
        %v5586 = vadd.f32 %v5568, %v5585
        %v5587 = vpop.f32.mrf.mxu0
        %v5588 = vadd.f32 %v5570, %v5587
        %5589 = vdwg.mxu0
        %v5590 = vmul.f32 %v5546, %v575
        %v5591 = vmul.f32 %v5547, %v575
        %v5592 = vpack.c.bf16 %v5591, %v5590
        %5594 = vrot.lane.b32.xlu0 %v5592, 71
        %v5595 = vpop.permute.xlu0 %5594
        %5597 = vmatpush.bf16.msra.mxu0 0
        %5598 = vmatpush.bf16.msra.mxu0 0
        %5599 = vmatpush.bf16.msra.mxu0 0
        %5600 = vmatpush.bf16.msra.mxu0 0
        %5601 = vmatpush.bf16.msra.mxu0 0
        %5602 = vmatpush.bf16.msra.mxu0 0
        %5603 = vmatpush.bf16.msra.mxu0 0
        %5604 = vmatpush.bf16.msra.mxu0 %v5595
        %5605 = vmatmul.bf16.gmra.mxu0 %v1214
        %v5606 = vpop.f32.mrf.mxu0
        %v5607 = vadd.f32 0.0, %v5606
        %v5608 = vpop.f32.mrf.mxu0
        %v5609 = vadd.f32 0.0, %v5608
        %5610 = vdwg.mxu0
        %v5611 = vadd.f32 %v5586, %v5607
        %v5612 = vadd.f32 %v5588, %v5609
        %v5613 = vmul.f32 %v5546, %v611
        %v5614 = vmul.f32 %v5547, %v611
        %v5615 = vpack.c.bf16 %v5614, %v5613
        %5617 = vrot.lane.b32.xlu0 %v5615, 65
        %v5618 = vpop.permute.xlu0 %5617
        %5620 = vmatpush.bf16.msra.mxu0 0
        %5621 = vmatpush.bf16.msra.mxu0 0
        %5622 = vmatpush.bf16.msra.mxu0 0
        %5623 = vmatpush.bf16.msra.mxu0 0
        %5624 = vmatpush.bf16.msra.mxu0 0
        %5625 = vmatpush.bf16.msra.mxu0 0
        %5626 = vmatpush.bf16.msra.mxu0 0
        %5627 = vmatpush.bf16.msra.mxu0 %v5618
        %5628 = vmatmul.bf16.gmra.mxu0 %v1245
        %v5629 = vpop.f32.mrf.mxu0
        %v5630 = vadd.f32 0.0, %v5629
        %v5631 = vpop.f32.mrf.mxu0
        %v5632 = vadd.f32 0.0, %v5631
        %5633 = vdwg.mxu0
        %v5634 = vadd.f32 %v5611, %v5630
        %v5635 = vadd.f32 %v5612, %v5632
        %v5636 = vmul.f32 %v5534, %v644
        %v5637 = vmul.f32 %v5535, %v644
        %v5638 = vpack.c.bf16 %v5637, %v5636
        %5639 = vmatpush.bf16.msra.mxu0 0
        %5640 = vmatpush.bf16.msra.mxu0 0
        %5641 = vmatpush.bf16.msra.mxu0 0
        %5642 = vmatpush.bf16.msra.mxu0 0
        %5643 = vmatpush.bf16.msra.mxu0 0
        %5644 = vmatpush.bf16.msra.mxu0 0
        %5645 = vmatpush.bf16.msra.mxu0 0
        %5646 = vmatpush.bf16.msra.mxu0 %v5638
        %5647 = vmatmul.bf16.gmra.mxu0 %v1272
        %v5648 = vpop.f32.mrf.mxu0
        %v5649 = vadd.f32 0.0, %v5648
        %v5650 = vpop.f32.mrf.mxu0
        %v5651 = vadd.f32 0.0, %v5650
        %5652 = vdwg.mxu0
        %v5653 = vadd.f32 %v5634, %v5649
        %v5654 = vadd.f32 %v5635, %v5651
        %v5655 = vmul.f32 %v5546, %v675
        %v5656 = vmul.f32 %v5547, %v675
        %v5657 = vpack.c.bf16 %v5656, %v5655
        %5659 = vrot.lane.b32.xlu0 %v5657, 127
        %v5660 = vpop.permute.xlu0 %5659
        %5662 = vmatpush.bf16.msra.mxu0 0
        %5663 = vmatpush.bf16.msra.mxu0 0
        %5664 = vmatpush.bf16.msra.mxu0 0
        %5665 = vmatpush.bf16.msra.mxu0 0
        %5666 = vmatpush.bf16.msra.mxu0 0
        %5667 = vmatpush.bf16.msra.mxu0 0
        %5668 = vmatpush.bf16.msra.mxu0 0
        %5669 = vmatpush.bf16.msra.mxu0 %v5660
        %5670 = vmatmul.bf16.gmra.mxu0 %v1303
        %v5671 = vpop.f32.mrf.mxu0
        %v5672 = vadd.f32 0.0, %v5671
        %v5673 = vpop.f32.mrf.mxu0
        %v5674 = vadd.f32 0.0, %v5673
        %5675 = vdwg.mxu0
        %v5676 = vadd.f32 %v5653, %v5672
        %v5677 = vadd.f32 %v5654, %v5674
        %v5678 = vmul.f32 %v5546, %v711
        %v5679 = vmul.f32 %v5547, %v711
        %v5680 = vpack.c.bf16 %v5679, %v5678
        %5682 = vrot.lane.b32.xlu0 %v5680, 121
        %v5683 = vpop.permute.xlu0 %5682
        %5685 = vmatpush.bf16.msra.mxu0 0
        %5686 = vmatpush.bf16.msra.mxu0 0
        %5687 = vmatpush.bf16.msra.mxu0 0
        %5688 = vmatpush.bf16.msra.mxu0 0
        %5689 = vmatpush.bf16.msra.mxu0 0
        %5690 = vmatpush.bf16.msra.mxu0 0
        %5691 = vmatpush.bf16.msra.mxu0 0
        %5692 = vmatpush.bf16.msra.mxu0 %v5683
        %5693 = vmatmul.bf16.gmra.mxu0 %v1334
        %v5694 = vpop.f32.mrf.mxu0
        %v5695 = vadd.f32 0.0, %v5694
        %v5696 = vpop.f32.mrf.mxu0
        %v5697 = vadd.f32 0.0, %v5696
        %5698 = vdwg.mxu0
        %v5699 = vadd.f32 %v5676, %v5695
        %v5700 = vadd.f32 %v5677, %v5697
        %v5701 = vmul.f32 %v5546, %v747
        %v5702 = vmul.f32 %v5547, %v747
        %v5703 = vpack.c.bf16 %v5702, %v5701
        %5705 = vrot.lane.b32.xlu0 %v5703, 120
        %v5706 = vpop.permute.xlu0 %5705
        %5708 = vmatpush.bf16.msra.mxu0 0
        %5709 = vmatpush.bf16.msra.mxu0 0
        %5710 = vmatpush.bf16.msra.mxu0 0
        %5711 = vmatpush.bf16.msra.mxu0 0
        %5712 = vmatpush.bf16.msra.mxu0 0
        %5713 = vmatpush.bf16.msra.mxu0 0
        %5714 = vmatpush.bf16.msra.mxu0 0
        %5715 = vmatpush.bf16.msra.mxu0 %v5706
        %5716 = vmatmul.bf16.gmra.mxu0 %v1365
        %v5717 = vpop.f32.mrf.mxu0
        %v5718 = vadd.f32 0.0, %v5717
        %v5719 = vpop.f32.mrf.mxu0
        %v5720 = vadd.f32 0.0, %v5719
        %5721 = vdwg.mxu0
        %v5722 = vadd.f32 %v5699, %v5718
        %v5723 = vadd.f32 %v5700, %v5720
        %v5724 = vmul.f32 %v5546, %v783
        %v5725 = vmul.f32 %v5547, %v783
        %v5726 = vpack.c.bf16 %v5725, %v5724
        %5728 = vrot.lane.b32.xlu0 %v5726, 119
        %v5729 = vpop.permute.xlu0 %5728
        %5731 = vmatpush.bf16.msra.mxu0 0
        %5732 = vmatpush.bf16.msra.mxu0 0
        %5733 = vmatpush.bf16.msra.mxu0 0
        %5734 = vmatpush.bf16.msra.mxu0 0
        %5735 = vmatpush.bf16.msra.mxu0 0
        %5736 = vmatpush.bf16.msra.mxu0 0
        %5737 = vmatpush.bf16.msra.mxu0 0
        %5738 = vmatpush.bf16.msra.mxu0 %v5729
        %5739 = vmatmul.bf16.gmra.mxu0 %v1396
        %v5740 = vpop.f32.mrf.mxu0
        %v5741 = vadd.f32 0.0, %v5740
        %v5742 = vpop.f32.mrf.mxu0
        %v5743 = vadd.f32 0.0, %v5742
        %5744 = vdwg.mxu0
        %v5745 = vadd.f32 %v5722, %v5741
        %v5746 = vadd.f32 %v5723, %v5743
        %v5747 = vadd.f32 %v5745, %v1417
        %v5748 = vadd.f32 %v5746, %v1422
        %v5749 = vmax.f32 %v5747, 0.0
        %v5750 = vmax.f32 %v5748, 0.0
        %v5751 = vadd.f32 %v5749, %v5534
        %v5752 = vadd.f32 %v5750, %v5535
        %v5753 = vpack.c.bf16 %v5752, %v5751
        %5754 = vmatpush.bf16.msra.mxu0 0
        %5755 = vmatpush.bf16.msra.mxu0 0
        %5756 = vmatpush.bf16.msra.mxu0 0
        %5757 = vmatpush.bf16.msra.mxu0 0
        %5758 = vmatpush.bf16.msra.mxu0 0
        %5759 = vmatpush.bf16.msra.mxu0 0
        %5760 = vmatpush.bf16.msra.mxu0 0
        %5761 = vmatpush.bf16.msra.mxu0 %v5753
        %5762 = vmatmul.bf16.gmra.mxu0 %v1437
        %v5763 = vpop.f32.mrf.mxu0
        %v5764 = vadd.f32 %v1434, %v5763
        %v5765 = vpop.f32.mrf.mxu0
        %5766 = vdwg.mxu0
        %v5767 = vmax.f32 %v5764, 0.0
        %v5768 = vpack.c.bf16 %v5767, %v5767
        %v5770 = vsel %vm1464, %v5768, 0
        %5772 = vmatpush.bf16.msra.mxu0 0
        %5773 = vmatpush.bf16.msra.mxu0 0
        %5774 = vmatpush.bf16.msra.mxu0 0
        %5775 = vmatpush.bf16.msra.mxu0 0
        %5776 = vmatpush.bf16.msra.mxu0 0
        %5777 = vmatpush.bf16.msra.mxu0 0
        %5778 = vmatpush.bf16.msra.mxu0 0
        %5779 = vmatpush.bf16.msra.mxu0 %v5770
        %5780 = vmatmul.bf16.gmra.mxu0 %v1462
        %v5781 = vpop.f32.mrf.mxu0
        %v5782 = vadd.f32 %v1459, %v5781
        %v5783 = vpop.f32.mrf.mxu0
        %5784 = vdwg.mxu0
        %v5785 = vxor.u32 %v5782, 2147483648
        %v5786 = vmul.f32 %v5785, 1.442695
        %v5787 = vpow.pop %v5786
        %v5788 = vadd.f32 %v5787, 1.0
        %v5789 = vrcp.pop %v5788
        %v5790 = vmul.f32 %v5788, %v5789
        %v5791 = vsub.f32 1.0, %v5790
        %v5792 = vmul.f32 %v5789, %v5791
        %v5793 = vadd.f32 %v5789, %v5792
        %vm5794 = vweird.f32 %v5788
        %vm5795 = vweird.f32 %v5789
        %vm5796 = vmor %vm5794, %vm5795
        %v5797 = vsel %vm5796, %v5789, %v5793
        %v5798 = vand.u32 2147483647, %v5788
        %vm5799 = vcmp.eq.f32.partialorder %v5798, 8.507059e+37
        %v5800 = vand.u32 %v5788, 2147483648
        %v5801 = vor.u32 1.1754944e-38, %v5800
        %v5802 = vsel %vm5799, %v5801, %v5797
        %v5803 = vmul.f32 1.0, %v5802
        %v5804 = vperm.slane %v5803, 0
        %v5805 = vmul.f32 %v5751, %v5804
        %v5806 = vmul.f32 %v5752, %v5804
        %v5807 = vsel %vm1503, %v5805, 0.0
        %5808 = vadd.xlane.f32.xlu0 %v5807
        %v5809 = vpop.xlane.xlu0 %5808
        %v5810 = vsel %vm1503, %v5806, 0.0
        %5811 = vadd.xlane.f32.xlu0 %v5810
        %v5812 = vpop.xlane.xlu0 %5811
        %v5813 = vmul.f32 %v5809, %v1516
        %v5814 = vmul.f32 %v5812, %v1516
        %s5815 = scalar_lea.vmem %s335, 112 [#allocation3]
        %v5816 = vld [vmem:[%s5815] sm:$0xff]
        %v5817 = vld [vmem:[%s5815 + $0x8] sm:$0xff]
        %5818 = vrot.lane.b32.xlu0 %v5816, 64
        %v5819 = vpop.permute.xlu0 %5818
        %v5820 = vsel %vm490, %v5819, %v5816
        %5821 = vrot.lane.b32.xlu0 %v5817, 64
        %v5822 = vpop.permute.xlu0 %5821
        %v5823 = vsel %vm490, %v5822, %v5817
        %5824 = vrot.lane.b32.xlu0 %v5820, 64
        %v5825 = vpop.permute.xlu0 %5824
        %5826 = vrot.lane.b32.xlu0 %v5823, 64
        %v5827 = vpop.permute.xlu0 %5826
        %v5828 = vsel %vm490, %v5825, %v5816
        %v5829 = vsel %vm490, %v5827, %v5817
        %v5830 = vmul.f32 %v5828, %v506
        %v5831 = vmul.f32 %v5829, %v506
        %v5832 = vpack.c.bf16 %v5831, %v5830
        %v5833 = vmul.f32 %v5828, %v514
        %v5834 = vmul.f32 %v5829, %v514
        %v5835 = vpack.c.bf16 %v5834, %v5833
        %5837 = vrot.lane.b32.xlu0 %v5835, 72
        %v5838 = vpop.permute.xlu0 %5837
        %5840 = vmatpush.bf16.msra.mxu0 0
        %5841 = vmatpush.bf16.msra.mxu0 0
        %5842 = vmatpush.bf16.msra.mxu0 0
        %5843 = vmatpush.bf16.msra.mxu0 0
        %5844 = vmatpush.bf16.msra.mxu0 0
        %5845 = vmatpush.bf16.msra.mxu0 0
        %5846 = vmatpush.bf16.msra.mxu0 0
        %5847 = vmatpush.bf16.msra.mxu0 %v5838
        %5848 = vmatmul.bf16.gmra.mxu0 %v530
        %v5849 = vpop.f32.mrf.mxu0
        %v5850 = vadd.f32 0.0, %v5849
        %v5851 = vpop.f32.mrf.mxu0
        %v5852 = vadd.f32 0.0, %v5851
        %5853 = vdwg.mxu0
        %5855 = vrot.lane.b32.xlu0 %v5832, 73
        %v5856 = vpop.permute.xlu0 %5855
        %5858 = vmatpush.bf16.msra.mxu0 0
        %5859 = vmatpush.bf16.msra.mxu0 0
        %5860 = vmatpush.bf16.msra.mxu0 0
        %5861 = vmatpush.bf16.msra.mxu0 0
        %5862 = vmatpush.bf16.msra.mxu0 0
        %5863 = vmatpush.bf16.msra.mxu0 0
        %5864 = vmatpush.bf16.msra.mxu0 0
        %5865 = vmatpush.bf16.msra.mxu0 %v5856
        %5866 = vmatmul.bf16.gmra.mxu0 %v556
        %v5867 = vpop.f32.mrf.mxu0
        %v5868 = vadd.f32 %v5850, %v5867
        %v5869 = vpop.f32.mrf.mxu0
        %v5870 = vadd.f32 %v5852, %v5869
        %5871 = vdwg.mxu0
        %v5872 = vmul.f32 %v5828, %v575
        %v5873 = vmul.f32 %v5829, %v575
        %v5874 = vpack.c.bf16 %v5873, %v5872
        %5876 = vrot.lane.b32.xlu0 %v5874, 71
        %v5877 = vpop.permute.xlu0 %5876
        %5879 = vmatpush.bf16.msra.mxu0 0
        %5880 = vmatpush.bf16.msra.mxu0 0
        %5881 = vmatpush.bf16.msra.mxu0 0
        %5882 = vmatpush.bf16.msra.mxu0 0
        %5883 = vmatpush.bf16.msra.mxu0 0
        %5884 = vmatpush.bf16.msra.mxu0 0
        %5885 = vmatpush.bf16.msra.mxu0 0
        %5886 = vmatpush.bf16.msra.mxu0 %v5877
        %5887 = vmatmul.bf16.gmra.mxu0 %v590
        %v5888 = vpop.f32.mrf.mxu0
        %v5889 = vadd.f32 0.0, %v5888
        %v5890 = vpop.f32.mrf.mxu0
        %v5891 = vadd.f32 0.0, %v5890
        %5892 = vdwg.mxu0
        %v5893 = vadd.f32 %v5868, %v5889
        %v5894 = vadd.f32 %v5870, %v5891
        %v5895 = vmul.f32 %v5828, %v611
        %v5896 = vmul.f32 %v5829, %v611
        %v5897 = vpack.c.bf16 %v5896, %v5895
        %5899 = vrot.lane.b32.xlu0 %v5897, 65
        %v5900 = vpop.permute.xlu0 %5899
        %5902 = vmatpush.bf16.msra.mxu0 0
        %5903 = vmatpush.bf16.msra.mxu0 0
        %5904 = vmatpush.bf16.msra.mxu0 0
        %5905 = vmatpush.bf16.msra.mxu0 0
        %5906 = vmatpush.bf16.msra.mxu0 0
        %5907 = vmatpush.bf16.msra.mxu0 0
        %5908 = vmatpush.bf16.msra.mxu0 0
        %5909 = vmatpush.bf16.msra.mxu0 %v5900
        %5910 = vmatmul.bf16.gmra.mxu0 %v626
        %v5911 = vpop.f32.mrf.mxu0
        %v5912 = vadd.f32 0.0, %v5911
        %v5913 = vpop.f32.mrf.mxu0
        %v5914 = vadd.f32 0.0, %v5913
        %5915 = vdwg.mxu0
        %v5916 = vadd.f32 %v5893, %v5912
        %v5917 = vadd.f32 %v5894, %v5914
        %v5918 = vmul.f32 %v5816, %v644
        %v5919 = vmul.f32 %v5817, %v644
        %v5920 = vpack.c.bf16 %v5919, %v5918
        %5921 = vmatpush.bf16.msra.mxu0 0
        %5922 = vmatpush.bf16.msra.mxu0 0
        %5923 = vmatpush.bf16.msra.mxu0 0
        %5924 = vmatpush.bf16.msra.mxu0 0
        %5925 = vmatpush.bf16.msra.mxu0 0
        %5926 = vmatpush.bf16.msra.mxu0 0
        %5927 = vmatpush.bf16.msra.mxu0 0
        %5928 = vmatpush.bf16.msra.mxu0 %v5920
        %5929 = vmatmul.bf16.gmra.mxu0 %v654
        %v5930 = vpop.f32.mrf.mxu0
        %v5931 = vadd.f32 0.0, %v5930
        %v5932 = vpop.f32.mrf.mxu0
        %v5933 = vadd.f32 0.0, %v5932
        %5934 = vdwg.mxu0
        %v5935 = vadd.f32 %v5916, %v5931
        %v5936 = vadd.f32 %v5917, %v5933
        %v5937 = vmul.f32 %v5828, %v675
        %v5938 = vmul.f32 %v5829, %v675
        %v5939 = vpack.c.bf16 %v5938, %v5937
        %5941 = vrot.lane.b32.xlu0 %v5939, 127
        %v5942 = vpop.permute.xlu0 %5941
        %5944 = vmatpush.bf16.msra.mxu0 0
        %5945 = vmatpush.bf16.msra.mxu0 0
        %5946 = vmatpush.bf16.msra.mxu0 0
        %5947 = vmatpush.bf16.msra.mxu0 0
        %5948 = vmatpush.bf16.msra.mxu0 0
        %5949 = vmatpush.bf16.msra.mxu0 0
        %5950 = vmatpush.bf16.msra.mxu0 0
        %5951 = vmatpush.bf16.msra.mxu0 %v5942
        %5952 = vmatmul.bf16.gmra.mxu0 %v690
        %v5953 = vpop.f32.mrf.mxu0
        %v5954 = vadd.f32 0.0, %v5953
        %v5955 = vpop.f32.mrf.mxu0
        %v5956 = vadd.f32 0.0, %v5955
        %5957 = vdwg.mxu0
        %v5958 = vadd.f32 %v5935, %v5954
        %v5959 = vadd.f32 %v5936, %v5956
        %v5960 = vmul.f32 %v5828, %v711
        %v5961 = vmul.f32 %v5829, %v711
        %v5962 = vpack.c.bf16 %v5961, %v5960
        %5964 = vrot.lane.b32.xlu0 %v5962, 121
        %v5965 = vpop.permute.xlu0 %5964
        %5967 = vmatpush.bf16.msra.mxu0 0
        %5968 = vmatpush.bf16.msra.mxu0 0
        %5969 = vmatpush.bf16.msra.mxu0 0
        %5970 = vmatpush.bf16.msra.mxu0 0
        %5971 = vmatpush.bf16.msra.mxu0 0
        %5972 = vmatpush.bf16.msra.mxu0 0
        %5973 = vmatpush.bf16.msra.mxu0 0
        %5974 = vmatpush.bf16.msra.mxu0 %v5965
        %5975 = vmatmul.bf16.gmra.mxu0 %v726
        %v5976 = vpop.f32.mrf.mxu0
        %v5977 = vadd.f32 0.0, %v5976
        %v5978 = vpop.f32.mrf.mxu0
        %v5979 = vadd.f32 0.0, %v5978
        %5980 = vdwg.mxu0
        %v5981 = vadd.f32 %v5958, %v5977
        %v5982 = vadd.f32 %v5959, %v5979
        %v5983 = vmul.f32 %v5828, %v747
        %v5984 = vmul.f32 %v5829, %v747
        %v5985 = vpack.c.bf16 %v5984, %v5983
        %5987 = vrot.lane.b32.xlu0 %v5985, 120
        %v5988 = vpop.permute.xlu0 %5987
        %5990 = vmatpush.bf16.msra.mxu0 0
        %5991 = vmatpush.bf16.msra.mxu0 0
        %5992 = vmatpush.bf16.msra.mxu0 0
        %5993 = vmatpush.bf16.msra.mxu0 0
        %5994 = vmatpush.bf16.msra.mxu0 0
        %5995 = vmatpush.bf16.msra.mxu0 0
        %5996 = vmatpush.bf16.msra.mxu0 0
        %5997 = vmatpush.bf16.msra.mxu0 %v5988
        %5998 = vmatmul.bf16.gmra.mxu0 %v762
        %v5999 = vpop.f32.mrf.mxu0
        %v6000 = vadd.f32 0.0, %v5999
        %v6001 = vpop.f32.mrf.mxu0
        %v6002 = vadd.f32 0.0, %v6001
        %6003 = vdwg.mxu0
        %v6004 = vadd.f32 %v5981, %v6000
        %v6005 = vadd.f32 %v5982, %v6002
        %v6006 = vmul.f32 %v5828, %v783
        %v6007 = vmul.f32 %v5829, %v783
        %v6008 = vpack.c.bf16 %v6007, %v6006
        %6010 = vrot.lane.b32.xlu0 %v6008, 119
        %v6011 = vpop.permute.xlu0 %6010
        %6013 = vmatpush.bf16.msra.mxu0 0
        %6014 = vmatpush.bf16.msra.mxu0 0
        %6015 = vmatpush.bf16.msra.mxu0 0
        %6016 = vmatpush.bf16.msra.mxu0 0
        %6017 = vmatpush.bf16.msra.mxu0 0
        %6018 = vmatpush.bf16.msra.mxu0 0
        %6019 = vmatpush.bf16.msra.mxu0 0
        %6020 = vmatpush.bf16.msra.mxu0 %v6011
        %6021 = vmatmul.bf16.gmra.mxu0 %v798
        %v6022 = vpop.f32.mrf.mxu0
        %v6023 = vadd.f32 0.0, %v6022
        %v6024 = vpop.f32.mrf.mxu0
        %v6025 = vadd.f32 0.0, %v6024
        %6026 = vdwg.mxu0
        %v6027 = vadd.f32 %v6004, %v6023
        %v6028 = vadd.f32 %v6005, %v6025
        %v6029 = vadd.f32 %v6027, %v819
        %v6030 = vadd.f32 %v6028, %v824
        %v6031 = vmax.f32 %v6029, 0.0
        %v6032 = vmax.f32 %v6030, 0.0
        %v6033 = vadd.f32 %v6031, %v5816
        %v6034 = vadd.f32 %v6032, %v5817
        %6035 = vrot.lane.b32.xlu0 %v6033, 64
        %v6036 = vpop.permute.xlu0 %6035
        %v6037 = vsel %vm490, %v6036, %v6033
        %6038 = vrot.lane.b32.xlu0 %v6034, 64
        %v6039 = vpop.permute.xlu0 %6038
        %v6040 = vsel %vm490, %v6039, %v6034
        %6041 = vrot.lane.b32.xlu0 %v6037, 64
        %v6042 = vpop.permute.xlu0 %6041
        %6043 = vrot.lane.b32.xlu0 %v6040, 64
        %v6044 = vpop.permute.xlu0 %6043
        %v6045 = vsel %vm490, %v6042, %v6033
        %v6046 = vsel %vm490, %v6044, %v6034
        %v6047 = vmul.f32 %v6045, %v506
        %v6048 = vmul.f32 %v6046, %v506
        %v6049 = vpack.c.bf16 %v6048, %v6047
        %v6050 = vmul.f32 %v6045, %v514
        %v6051 = vmul.f32 %v6046, %v514
        %v6052 = vpack.c.bf16 %v6051, %v6050
        %6054 = vrot.lane.b32.xlu0 %v6052, 72
        %v6055 = vpop.permute.xlu0 %6054
        %6057 = vmatpush.bf16.msra.mxu0 0
        %6058 = vmatpush.bf16.msra.mxu0 0
        %6059 = vmatpush.bf16.msra.mxu0 0
        %6060 = vmatpush.bf16.msra.mxu0 0
        %6061 = vmatpush.bf16.msra.mxu0 0
        %6062 = vmatpush.bf16.msra.mxu0 0
        %6063 = vmatpush.bf16.msra.mxu0 0
        %6064 = vmatpush.bf16.msra.mxu0 %v6055
        %6065 = vmatmul.bf16.gmra.mxu0 %v860
        %v6066 = vpop.f32.mrf.mxu0
        %v6067 = vadd.f32 0.0, %v6066
        %v6068 = vpop.f32.mrf.mxu0
        %v6069 = vadd.f32 0.0, %v6068
        %6070 = vdwg.mxu0
        %6072 = vrot.lane.b32.xlu0 %v6049, 73
        %v6073 = vpop.permute.xlu0 %6072
        %6075 = vmatpush.bf16.msra.mxu0 0
        %6076 = vmatpush.bf16.msra.mxu0 0
        %6077 = vmatpush.bf16.msra.mxu0 0
        %6078 = vmatpush.bf16.msra.mxu0 0
        %6079 = vmatpush.bf16.msra.mxu0 0
        %6080 = vmatpush.bf16.msra.mxu0 0
        %6081 = vmatpush.bf16.msra.mxu0 0
        %6082 = vmatpush.bf16.msra.mxu0 %v6073
        %6083 = vmatmul.bf16.gmra.mxu0 %v886
        %v6084 = vpop.f32.mrf.mxu0
        %v6085 = vadd.f32 %v6067, %v6084
        %v6086 = vpop.f32.mrf.mxu0
        %v6087 = vadd.f32 %v6069, %v6086
        %6088 = vdwg.mxu0
        %v6089 = vmul.f32 %v6045, %v575
        %v6090 = vmul.f32 %v6046, %v575
        %v6091 = vpack.c.bf16 %v6090, %v6089
        %6093 = vrot.lane.b32.xlu0 %v6091, 71
        %v6094 = vpop.permute.xlu0 %6093
        %6096 = vmatpush.bf16.msra.mxu0 0
        %6097 = vmatpush.bf16.msra.mxu0 0
        %6098 = vmatpush.bf16.msra.mxu0 0
        %6099 = vmatpush.bf16.msra.mxu0 0
        %6100 = vmatpush.bf16.msra.mxu0 0
        %6101 = vmatpush.bf16.msra.mxu0 0
        %6102 = vmatpush.bf16.msra.mxu0 0
        %6103 = vmatpush.bf16.msra.mxu0 %v6094
        %6104 = vmatmul.bf16.gmra.mxu0 %v915
        %v6105 = vpop.f32.mrf.mxu0
        %v6106 = vadd.f32 0.0, %v6105
        %v6107 = vpop.f32.mrf.mxu0
        %v6108 = vadd.f32 0.0, %v6107
        %6109 = vdwg.mxu0
        %v6110 = vadd.f32 %v6085, %v6106
        %v6111 = vadd.f32 %v6087, %v6108
        %v6112 = vmul.f32 %v6045, %v611
        %v6113 = vmul.f32 %v6046, %v611
        %v6114 = vpack.c.bf16 %v6113, %v6112
        %6116 = vrot.lane.b32.xlu0 %v6114, 65
        %v6117 = vpop.permute.xlu0 %6116
        %6119 = vmatpush.bf16.msra.mxu0 0
        %6120 = vmatpush.bf16.msra.mxu0 0
        %6121 = vmatpush.bf16.msra.mxu0 0
        %6122 = vmatpush.bf16.msra.mxu0 0
        %6123 = vmatpush.bf16.msra.mxu0 0
        %6124 = vmatpush.bf16.msra.mxu0 0
        %6125 = vmatpush.bf16.msra.mxu0 0
        %6126 = vmatpush.bf16.msra.mxu0 %v6117
        %6127 = vmatmul.bf16.gmra.mxu0 %v946
        %v6128 = vpop.f32.mrf.mxu0
        %v6129 = vadd.f32 0.0, %v6128
        %v6130 = vpop.f32.mrf.mxu0
        %v6131 = vadd.f32 0.0, %v6130
        %6132 = vdwg.mxu0
        %v6133 = vadd.f32 %v6110, %v6129
        %v6134 = vadd.f32 %v6111, %v6131
        %v6135 = vmul.f32 %v6033, %v644
        %v6136 = vmul.f32 %v6034, %v644
        %v6137 = vpack.c.bf16 %v6136, %v6135
        %6138 = vmatpush.bf16.msra.mxu0 0
        %6139 = vmatpush.bf16.msra.mxu0 0
        %6140 = vmatpush.bf16.msra.mxu0 0
        %6141 = vmatpush.bf16.msra.mxu0 0
        %6142 = vmatpush.bf16.msra.mxu0 0
        %6143 = vmatpush.bf16.msra.mxu0 0
        %6144 = vmatpush.bf16.msra.mxu0 0
        %6145 = vmatpush.bf16.msra.mxu0 %v6137
        %6146 = vmatmul.bf16.gmra.mxu0 %v973
        %v6147 = vpop.f32.mrf.mxu0
        %v6148 = vadd.f32 0.0, %v6147
        %v6149 = vpop.f32.mrf.mxu0
        %v6150 = vadd.f32 0.0, %v6149
        %6151 = vdwg.mxu0
        %v6152 = vadd.f32 %v6133, %v6148
        %v6153 = vadd.f32 %v6134, %v6150
        %v6154 = vmul.f32 %v6045, %v675
        %v6155 = vmul.f32 %v6046, %v675
        %v6156 = vpack.c.bf16 %v6155, %v6154
        %6158 = vrot.lane.b32.xlu0 %v6156, 127
        %v6159 = vpop.permute.xlu0 %6158
        %6161 = vmatpush.bf16.msra.mxu0 0
        %6162 = vmatpush.bf16.msra.mxu0 0
        %6163 = vmatpush.bf16.msra.mxu0 0
        %6164 = vmatpush.bf16.msra.mxu0 0
        %6165 = vmatpush.bf16.msra.mxu0 0
        %6166 = vmatpush.bf16.msra.mxu0 0
        %6167 = vmatpush.bf16.msra.mxu0 0
        %6168 = vmatpush.bf16.msra.mxu0 %v6159
        %6169 = vmatmul.bf16.gmra.mxu0 %v1004
        %v6170 = vpop.f32.mrf.mxu0
        %v6171 = vadd.f32 0.0, %v6170
        %v6172 = vpop.f32.mrf.mxu0
        %v6173 = vadd.f32 0.0, %v6172
        %6174 = vdwg.mxu0
        %v6175 = vadd.f32 %v6152, %v6171
        %v6176 = vadd.f32 %v6153, %v6173
        %v6177 = vmul.f32 %v6045, %v711
        %v6178 = vmul.f32 %v6046, %v711
        %v6179 = vpack.c.bf16 %v6178, %v6177
        %6181 = vrot.lane.b32.xlu0 %v6179, 121
        %v6182 = vpop.permute.xlu0 %6181
        %6184 = vmatpush.bf16.msra.mxu0 0
        %6185 = vmatpush.bf16.msra.mxu0 0
        %6186 = vmatpush.bf16.msra.mxu0 0
        %6187 = vmatpush.bf16.msra.mxu0 0
        %6188 = vmatpush.bf16.msra.mxu0 0
        %6189 = vmatpush.bf16.msra.mxu0 0
        %6190 = vmatpush.bf16.msra.mxu0 0
        %6191 = vmatpush.bf16.msra.mxu0 %v6182
        %6192 = vmatmul.bf16.gmra.mxu0 %v1035
        %v6193 = vpop.f32.mrf.mxu0
        %v6194 = vadd.f32 0.0, %v6193
        %v6195 = vpop.f32.mrf.mxu0
        %v6196 = vadd.f32 0.0, %v6195
        %6197 = vdwg.mxu0
        %v6198 = vadd.f32 %v6175, %v6194
        %v6199 = vadd.f32 %v6176, %v6196
        %v6200 = vmul.f32 %v6045, %v747
        %v6201 = vmul.f32 %v6046, %v747
        %v6202 = vpack.c.bf16 %v6201, %v6200
        %6204 = vrot.lane.b32.xlu0 %v6202, 120
        %v6205 = vpop.permute.xlu0 %6204
        %6207 = vmatpush.bf16.msra.mxu0 0
        %6208 = vmatpush.bf16.msra.mxu0 0
        %6209 = vmatpush.bf16.msra.mxu0 0
        %6210 = vmatpush.bf16.msra.mxu0 0
        %6211 = vmatpush.bf16.msra.mxu0 0
        %6212 = vmatpush.bf16.msra.mxu0 0
        %6213 = vmatpush.bf16.msra.mxu0 0
        %6214 = vmatpush.bf16.msra.mxu0 %v6205
        %6215 = vmatmul.bf16.gmra.mxu0 %v1066
        %v6216 = vpop.f32.mrf.mxu0
        %v6217 = vadd.f32 0.0, %v6216
        %v6218 = vpop.f32.mrf.mxu0
        %v6219 = vadd.f32 0.0, %v6218
        %6220 = vdwg.mxu0
        %v6221 = vadd.f32 %v6198, %v6217
        %v6222 = vadd.f32 %v6199, %v6219
        %v6223 = vmul.f32 %v6045, %v783
        %v6224 = vmul.f32 %v6046, %v783
        %v6225 = vpack.c.bf16 %v6224, %v6223
        %6227 = vrot.lane.b32.xlu0 %v6225, 119
        %v6228 = vpop.permute.xlu0 %6227
        %6230 = vmatpush.bf16.msra.mxu0 0
        %6231 = vmatpush.bf16.msra.mxu0 0
        %6232 = vmatpush.bf16.msra.mxu0 0
        %6233 = vmatpush.bf16.msra.mxu0 0
        %6234 = vmatpush.bf16.msra.mxu0 0
        %6235 = vmatpush.bf16.msra.mxu0 0
        %6236 = vmatpush.bf16.msra.mxu0 0
        %6237 = vmatpush.bf16.msra.mxu0 %v6228
        %6238 = vmatmul.bf16.gmra.mxu0 %v1097
        %v6239 = vpop.f32.mrf.mxu0
        %v6240 = vadd.f32 0.0, %v6239
        %v6241 = vpop.f32.mrf.mxu0
        %v6242 = vadd.f32 0.0, %v6241
        %6243 = vdwg.mxu0
        %v6244 = vadd.f32 %v6221, %v6240
        %v6245 = vadd.f32 %v6222, %v6242
        %v6246 = vadd.f32 %v6244, %v1118
        %v6247 = vadd.f32 %v6245, %v1123
        %v6248 = vmax.f32 %v6246, 0.0
        %v6249 = vmax.f32 %v6247, 0.0
        %v6250 = vadd.f32 %v6248, %v6033
        %v6251 = vadd.f32 %v6249, %v6034
        %6252 = vrot.lane.b32.xlu0 %v6250, 64
        %v6253 = vpop.permute.xlu0 %6252
        %v6254 = vsel %vm490, %v6253, %v6250
        %6255 = vrot.lane.b32.xlu0 %v6251, 64
        %v6256 = vpop.permute.xlu0 %6255
        %v6257 = vsel %vm490, %v6256, %v6251
        %6258 = vrot.lane.b32.xlu0 %v6254, 64
        %v6259 = vpop.permute.xlu0 %6258
        %6260 = vrot.lane.b32.xlu0 %v6257, 64
        %v6261 = vpop.permute.xlu0 %6260
        %v6262 = vsel %vm490, %v6259, %v6250
        %v6263 = vsel %vm490, %v6261, %v6251
        %v6264 = vmul.f32 %v6262, %v506
        %v6265 = vmul.f32 %v6263, %v506
        %v6266 = vpack.c.bf16 %v6265, %v6264
        %v6267 = vmul.f32 %v6262, %v514
        %v6268 = vmul.f32 %v6263, %v514
        %v6269 = vpack.c.bf16 %v6268, %v6267
        %6271 = vrot.lane.b32.xlu0 %v6269, 72
        %v6272 = vpop.permute.xlu0 %6271
        %6274 = vmatpush.bf16.msra.mxu0 0
        %6275 = vmatpush.bf16.msra.mxu0 0
        %6276 = vmatpush.bf16.msra.mxu0 0
        %6277 = vmatpush.bf16.msra.mxu0 0
        %6278 = vmatpush.bf16.msra.mxu0 0
        %6279 = vmatpush.bf16.msra.mxu0 0
        %6280 = vmatpush.bf16.msra.mxu0 0
        %6281 = vmatpush.bf16.msra.mxu0 %v6272
        %6282 = vmatmul.bf16.gmra.mxu0 %v1159
        %v6283 = vpop.f32.mrf.mxu0
        %v6284 = vadd.f32 0.0, %v6283
        %v6285 = vpop.f32.mrf.mxu0
        %v6286 = vadd.f32 0.0, %v6285
        %6287 = vdwg.mxu0
        %6289 = vrot.lane.b32.xlu0 %v6266, 73
        %v6290 = vpop.permute.xlu0 %6289
        %6292 = vmatpush.bf16.msra.mxu0 0
        %6293 = vmatpush.bf16.msra.mxu0 0
        %6294 = vmatpush.bf16.msra.mxu0 0
        %6295 = vmatpush.bf16.msra.mxu0 0
        %6296 = vmatpush.bf16.msra.mxu0 0
        %6297 = vmatpush.bf16.msra.mxu0 0
        %6298 = vmatpush.bf16.msra.mxu0 0
        %6299 = vmatpush.bf16.msra.mxu0 %v6290
        %6300 = vmatmul.bf16.gmra.mxu0 %v1185
        %v6301 = vpop.f32.mrf.mxu0
        %v6302 = vadd.f32 %v6284, %v6301
        %v6303 = vpop.f32.mrf.mxu0
        %v6304 = vadd.f32 %v6286, %v6303
        %6305 = vdwg.mxu0
        %v6306 = vmul.f32 %v6262, %v575
        %v6307 = vmul.f32 %v6263, %v575
        %v6308 = vpack.c.bf16 %v6307, %v6306
        %6310 = vrot.lane.b32.xlu0 %v6308, 71
        %v6311 = vpop.permute.xlu0 %6310
        %6313 = vmatpush.bf16.msra.mxu0 0
        %6314 = vmatpush.bf16.msra.mxu0 0
        %6315 = vmatpush.bf16.msra.mxu0 0
        %6316 = vmatpush.bf16.msra.mxu0 0
        %6317 = vmatpush.bf16.msra.mxu0 0
        %6318 = vmatpush.bf16.msra.mxu0 0
        %6319 = vmatpush.bf16.msra.mxu0 0
        %6320 = vmatpush.bf16.msra.mxu0 %v6311
        %6321 = vmatmul.bf16.gmra.mxu0 %v1214
        %v6322 = vpop.f32.mrf.mxu0
        %v6323 = vadd.f32 0.0, %v6322
        %v6324 = vpop.f32.mrf.mxu0
        %v6325 = vadd.f32 0.0, %v6324
        %6326 = vdwg.mxu0
        %v6327 = vadd.f32 %v6302, %v6323
        %v6328 = vadd.f32 %v6304, %v6325
        %v6329 = vmul.f32 %v6262, %v611
        %v6330 = vmul.f32 %v6263, %v611
        %v6331 = vpack.c.bf16 %v6330, %v6329
        %6333 = vrot.lane.b32.xlu0 %v6331, 65
        %v6334 = vpop.permute.xlu0 %6333
        %6336 = vmatpush.bf16.msra.mxu0 0
        %6337 = vmatpush.bf16.msra.mxu0 0
        %6338 = vmatpush.bf16.msra.mxu0 0
        %6339 = vmatpush.bf16.msra.mxu0 0
        %6340 = vmatpush.bf16.msra.mxu0 0
        %6341 = vmatpush.bf16.msra.mxu0 0
        %6342 = vmatpush.bf16.msra.mxu0 0
        %6343 = vmatpush.bf16.msra.mxu0 %v6334
        %6344 = vmatmul.bf16.gmra.mxu0 %v1245
        %v6345 = vpop.f32.mrf.mxu0
        %v6346 = vadd.f32 0.0, %v6345
        %v6347 = vpop.f32.mrf.mxu0
        %v6348 = vadd.f32 0.0, %v6347
        %6349 = vdwg.mxu0
        %v6350 = vadd.f32 %v6327, %v6346
        %v6351 = vadd.f32 %v6328, %v6348
        %v6352 = vmul.f32 %v6250, %v644
        %v6353 = vmul.f32 %v6251, %v644
        %v6354 = vpack.c.bf16 %v6353, %v6352
        %6355 = vmatpush.bf16.msra.mxu0 0
        %6356 = vmatpush.bf16.msra.mxu0 0
        %6357 = vmatpush.bf16.msra.mxu0 0
        %6358 = vmatpush.bf16.msra.mxu0 0
        %6359 = vmatpush.bf16.msra.mxu0 0
        %6360 = vmatpush.bf16.msra.mxu0 0
        %6361 = vmatpush.bf16.msra.mxu0 0
        %6362 = vmatpush.bf16.msra.mxu0 %v6354
        %6363 = vmatmul.bf16.gmra.mxu0 %v1272
        %v6364 = vpop.f32.mrf.mxu0
        %v6365 = vadd.f32 0.0, %v6364
        %v6366 = vpop.f32.mrf.mxu0
        %v6367 = vadd.f32 0.0, %v6366
        %6368 = vdwg.mxu0
        %v6369 = vadd.f32 %v6350, %v6365
        %v6370 = vadd.f32 %v6351, %v6367
        %v6371 = vmul.f32 %v6262, %v675
        %v6372 = vmul.f32 %v6263, %v675
        %v6373 = vpack.c.bf16 %v6372, %v6371
        %6375 = vrot.lane.b32.xlu0 %v6373, 127
        %v6376 = vpop.permute.xlu0 %6375
        %6378 = vmatpush.bf16.msra.mxu0 0
        %6379 = vmatpush.bf16.msra.mxu0 0
        %6380 = vmatpush.bf16.msra.mxu0 0
        %6381 = vmatpush.bf16.msra.mxu0 0
        %6382 = vmatpush.bf16.msra.mxu0 0
        %6383 = vmatpush.bf16.msra.mxu0 0
        %6384 = vmatpush.bf16.msra.mxu0 0
        %6385 = vmatpush.bf16.msra.mxu0 %v6376
        %6386 = vmatmul.bf16.gmra.mxu0 %v1303
        %v6387 = vpop.f32.mrf.mxu0
        %v6388 = vadd.f32 0.0, %v6387
        %v6389 = vpop.f32.mrf.mxu0
        %v6390 = vadd.f32 0.0, %v6389
        %6391 = vdwg.mxu0
        %v6392 = vadd.f32 %v6369, %v6388
        %v6393 = vadd.f32 %v6370, %v6390
        %v6394 = vmul.f32 %v6262, %v711
        %v6395 = vmul.f32 %v6263, %v711
        %v6396 = vpack.c.bf16 %v6395, %v6394
        %6398 = vrot.lane.b32.xlu0 %v6396, 121
        %v6399 = vpop.permute.xlu0 %6398
        %6401 = vmatpush.bf16.msra.mxu0 0
        %6402 = vmatpush.bf16.msra.mxu0 0
        %6403 = vmatpush.bf16.msra.mxu0 0
        %6404 = vmatpush.bf16.msra.mxu0 0
        %6405 = vmatpush.bf16.msra.mxu0 0
        %6406 = vmatpush.bf16.msra.mxu0 0
        %6407 = vmatpush.bf16.msra.mxu0 0
        %6408 = vmatpush.bf16.msra.mxu0 %v6399
        %6409 = vmatmul.bf16.gmra.mxu0 %v1334
        %v6410 = vpop.f32.mrf.mxu0
        %v6411 = vadd.f32 0.0, %v6410
        %v6412 = vpop.f32.mrf.mxu0
        %v6413 = vadd.f32 0.0, %v6412
        %6414 = vdwg.mxu0
        %v6415 = vadd.f32 %v6392, %v6411
        %v6416 = vadd.f32 %v6393, %v6413
        %v6417 = vmul.f32 %v6262, %v747
        %v6418 = vmul.f32 %v6263, %v747
        %v6419 = vpack.c.bf16 %v6418, %v6417
        %6421 = vrot.lane.b32.xlu0 %v6419, 120
        %v6422 = vpop.permute.xlu0 %6421
        %6424 = vmatpush.bf16.msra.mxu0 0
        %6425 = vmatpush.bf16.msra.mxu0 0
        %6426 = vmatpush.bf16.msra.mxu0 0
        %6427 = vmatpush.bf16.msra.mxu0 0
        %6428 = vmatpush.bf16.msra.mxu0 0
        %6429 = vmatpush.bf16.msra.mxu0 0
        %6430 = vmatpush.bf16.msra.mxu0 0
        %6431 = vmatpush.bf16.msra.mxu0 %v6422
        %6432 = vmatmul.bf16.gmra.mxu0 %v1365
        %v6433 = vpop.f32.mrf.mxu0
        %v6434 = vadd.f32 0.0, %v6433
        %v6435 = vpop.f32.mrf.mxu0
        %v6436 = vadd.f32 0.0, %v6435
        %6437 = vdwg.mxu0
        %v6438 = vadd.f32 %v6415, %v6434
        %v6439 = vadd.f32 %v6416, %v6436
        %v6440 = vmul.f32 %v6262, %v783
        %v6441 = vmul.f32 %v6263, %v783
        %v6442 = vpack.c.bf16 %v6441, %v6440
        %6444 = vrot.lane.b32.xlu0 %v6442, 119
        %v6445 = vpop.permute.xlu0 %6444
        %6447 = vmatpush.bf16.msra.mxu0 0
        %6448 = vmatpush.bf16.msra.mxu0 0
        %6449 = vmatpush.bf16.msra.mxu0 0
        %6450 = vmatpush.bf16.msra.mxu0 0
        %6451 = vmatpush.bf16.msra.mxu0 0
        %6452 = vmatpush.bf16.msra.mxu0 0
        %6453 = vmatpush.bf16.msra.mxu0 0
        %6454 = vmatpush.bf16.msra.mxu0 %v6445
        %6455 = vmatmul.bf16.gmra.mxu0 %v1396
        %v6456 = vpop.f32.mrf.mxu0
        %v6457 = vadd.f32 0.0, %v6456
        %v6458 = vpop.f32.mrf.mxu0
        %v6459 = vadd.f32 0.0, %v6458
        %6460 = vdwg.mxu0
        %v6461 = vadd.f32 %v6438, %v6457
        %v6462 = vadd.f32 %v6439, %v6459
        %v6463 = vadd.f32 %v6461, %v1417
        %v6464 = vadd.f32 %v6462, %v1422
        %v6465 = vmax.f32 %v6463, 0.0
        %v6466 = vmax.f32 %v6464, 0.0
        %v6467 = vadd.f32 %v6465, %v6250
        %v6468 = vadd.f32 %v6466, %v6251
        %v6469 = vpack.c.bf16 %v6468, %v6467
        %6470 = vmatpush.bf16.msra.mxu0 0
        %6471 = vmatpush.bf16.msra.mxu0 0
        %6472 = vmatpush.bf16.msra.mxu0 0
        %6473 = vmatpush.bf16.msra.mxu0 0
        %6474 = vmatpush.bf16.msra.mxu0 0
        %6475 = vmatpush.bf16.msra.mxu0 0
        %6476 = vmatpush.bf16.msra.mxu0 0
        %6477 = vmatpush.bf16.msra.mxu0 %v6469
        %6478 = vmatmul.bf16.gmra.mxu0 %v1437
        %v6479 = vpop.f32.mrf.mxu0
        %v6480 = vadd.f32 %v1434, %v6479
        %v6481 = vpop.f32.mrf.mxu0
        %6482 = vdwg.mxu0
        %v6483 = vmax.f32 %v6480, 0.0
        %v6484 = vpack.c.bf16 %v6483, %v6483
        %v6486 = vsel %vm1464, %v6484, 0
        %6488 = vmatpush.bf16.msra.mxu0 0
        %6489 = vmatpush.bf16.msra.mxu0 0
        %6490 = vmatpush.bf16.msra.mxu0 0
        %6491 = vmatpush.bf16.msra.mxu0 0
        %6492 = vmatpush.bf16.msra.mxu0 0
        %6493 = vmatpush.bf16.msra.mxu0 0
        %6494 = vmatpush.bf16.msra.mxu0 0
        %6495 = vmatpush.bf16.msra.mxu0 %v6486
        %6496 = vmatmul.bf16.gmra.mxu0 %v1462
        %v6497 = vpop.f32.mrf.mxu0
        %v6498 = vadd.f32 %v1459, %v6497
        %v6499 = vpop.f32.mrf.mxu0
        %6500 = vdwg.mxu0
        %v6501 = vxor.u32 %v6498, 2147483648
        %v6502 = vmul.f32 %v6501, 1.442695
        %v6503 = vpow.pop %v6502
        %v6504 = vadd.f32 %v6503, 1.0
        %v6505 = vrcp.pop %v6504
        %v6506 = vmul.f32 %v6504, %v6505
        %v6507 = vsub.f32 1.0, %v6506
        %v6508 = vmul.f32 %v6505, %v6507
        %v6509 = vadd.f32 %v6505, %v6508
        %vm6510 = vweird.f32 %v6504
        %vm6511 = vweird.f32 %v6505
        %vm6512 = vmor %vm6510, %vm6511
        %v6513 = vsel %vm6512, %v6505, %v6509
        %v6514 = vand.u32 2147483647, %v6504
        %vm6515 = vcmp.eq.f32.partialorder %v6514, 8.507059e+37
        %v6516 = vand.u32 %v6504, 2147483648
        %v6517 = vor.u32 1.1754944e-38, %v6516
        %v6518 = vsel %vm6515, %v6517, %v6513
        %v6519 = vmul.f32 1.0, %v6518
        %v6520 = vperm.slane %v6519, 0
        %v6521 = vmul.f32 %v6467, %v6520
        %v6522 = vmul.f32 %v6468, %v6520
        %v6523 = vsel %vm1503, %v6521, 0.0
        %6524 = vadd.xlane.f32.xlu0 %v6523
        %v6525 = vpop.xlane.xlu0 %6524
        %v6526 = vsel %vm1503, %v6522, 0.0
        %6527 = vadd.xlane.f32.xlu0 %v6526
        %v6528 = vpop.xlane.xlu0 %6527
        %v6529 = vmul.f32 %v6525, %v1516
        %v6530 = vmul.f32 %v6528, %v1516
        %vm6531 = vcmask 7168
        %v6532 = vsel %vm6531, %v1517, %v2233
        %v6533 = vsel %vm6531, %v1518, %v2234
        %v6534 = vsel %vm1460, %v6532, %v2949
        %v6535 = vsel %vm1460, %v6533, %v2950
        %vm6536 = vcmask 23552
        %v6537 = vsel %vm6536, %v6534, %v3665
        %v6538 = vsel %vm6536, %v6535, %v3666
        %vm6539 = vcmask 31744
        %v6540 = vsel %vm6539, %v6537, %v4381
        %v6541 = vsel %vm6539, %v6538, %v4382
        %vm6542 = vcmask 39936
        %v6543 = vsel %vm6542, %v6540, %v5097
        %v6544 = vsel %vm6542, %v6541, %v5098
        %vm6545 = vcmask 48128
        %v6546 = vsel %vm6545, %v6543, %v5813
        %v6547 = vsel %vm6545, %v6544, %v5814
        %vm6548 = vcmask 56320
        %v6549 = vsel %vm6548, %v6546, %v6529
        %v6550 = vsel %vm6548, %v6547, %v6530
        %vm6551 = vcmask 64512
        %6552 = vst.msk [vmem:[%s386] sm:$0xff] %vm6551, %v6549
        %6553 = vst.msk [vmem:[%s386 + $0x8] sm:$0xff] %vm6551, %v6550
        %v6555 = vrot.slane %v2223, 7
        %v6558 = vrot.slane %v2939, 6
        %v6561 = vrot.slane %v3655, 5
        %v6564 = vrot.slane %v4371, 4
        %v6567 = vrot.slane %v5087, 3
        %v6570 = vrot.slane %v5803, 2
        %v6573 = vrot.slane %v6519, 1
        %v6575 = vsel %vm1464, %v1499, %v6555
        %vm6576 = vcmask 1041408
        %v6577 = vsel %vm6576, %v6575, %v6558
        %vm6578 = vcmask 1042432
        %v6579 = vsel %vm6578, %v6577, %v6561
        %vm6580 = vcmask 1043456
        %v6581 = vsel %vm6580, %v6579, %v6564
        %vm6582 = vcmask 1044480
        %v6583 = vsel %vm6582, %v6581, %v6567
        %vm6584 = vcmask 1045504
        %v6585 = vsel %vm6584, %v6583, %v6570
        %vm6586 = vcmask 1046528
        %v6587 = vsel %vm6586, %v6585, %v6573
        %6588 = vst.msk [vmem:[%s380] sm:$0xff] %vm1503, %v6587
        %s6589 = smul.u32 2, %s30
        %p6590 = scmp.lt.s32.totalorder %s6589, 3
        %s6591 = scalar_select %p6590, %s6589, 3
        %s6592 = smul.addr %s6591, 8
        %s6593 = scalar_lea.vmem %s8, %s6592
        %s6594 = sand.u32 %s237, 1
        %s6595 = scalar_lea.sflag [#allocation5], %s6594
        %s6596 = sand.u32 %s237, 1
        %s6597 = smul.addr %s6596, 8
        %s6598 = scalar_lea.vmem [#allocation8], %s6597
        // Predicated region
        $region61: #{tpu_custom_call.1} parent=51 // pred_check
          %p6599 = pneg %p221
        $region62: #{tpu_custom_call.1} parent=51 // pred_check_branch
          %6601 = sbr.rel (%p6599) target = $region64
        $region63: #{tpu_custom_call.1} parent=51 // pred_region
          %s6602 = smul.u32 2, %s30
        $region64: #{tpu_custom_call.1} parent=51 // pred_fallthru
          _
        // Predicated region
        $region65: #{tpu_custom_call.1} parent=51 // pred_check
          %p6603 = pneg %p247
        $region66: #{tpu_custom_call.1} parent=51 // pred_check_branch
          %6605 = sbr.rel (%p6603) target = $region68
        $region67: #{tpu_custom_call.1} parent=51 // pred_region
          %6607 = vsyncadd %s6595, 0
          %s6608 = smul.addr %s30, 8
          %s6609 = scalar_lea.hbm %s9, %s6608
          %s6611 = sshll.u32 %s6598, 4
          %s6612 = int_to_ptr.vmem [resolvable:$true] %s6611
          %s6613 = sshll.u32 %s6609, 4
          %s6614 = int_to_ptr.hbm [resolvable:$true] %s6613
          %6616 = dma.vmem_to_hbm [thread:$0]  %s6612, 128, %s6614, %s6595
        $region68: #{tpu_custom_call.1} parent=51 // pred_fallthru
          _
      $region52: #{tpu_custom_call.1} parent=5 // pred_fallthru
        _
      %p6617 = scmp.le.s32.totalorder 2, %s25
      // Predicated region
      $region69: #{tpu_custom_call.1} parent=5 // pred_check
        %p6618 = pneg %p6617
      $region70: #{tpu_custom_call.1} parent=5 // pred_check_branch
        %6620 = sbr.rel (%p6618) target = $region72
      $region71: #{tpu_custom_call.1} parent=5 // pred_region
        %s6621 = ssub.s32 %s25, 2
        // Predicated region
        $region73: #{tpu_custom_call.1} parent=71 // pred_check
          %p6622 = pneg %p227
        $region74: #{tpu_custom_call.1} parent=71 // pred_check_branch
          %6624 = sbr.rel (%p6622) target = $region76
        $region75: #{tpu_custom_call.1} parent=71 // pred_region
          %s6625 = smul.u32 2, %s31
          %p6626 = scmp.lt.s32.totalorder %s6625, 3
          %s6627 = scalar_select %p6626, %s6625, 3
          %s6628 = smul.addr %s6627, 8
          %s6629 = scalar_lea.vmem %s8, %s6628
        $region76: #{tpu_custom_call.1} parent=71 // pred_fallthru
          _
        // Predicated region
        $region77: #{tpu_custom_call.1} parent=71 // pred_check
          %p6630 = pneg %p253
        $region78: #{tpu_custom_call.1} parent=71 // pred_check_branch
          %6632 = sbr.rel (%p6630) target = $region80
        $region79: #{tpu_custom_call.1} parent=71 // pred_region
          %s6633 = sand.u32 %s238, 1
          %s6634 = scalar_lea.sflag [#allocation5], %s6633
          %s6635 = sand.u32 %s238, 1
          %s6636 = smul.addr %s6635, 8
          %s6637 = scalar_lea.vmem [#allocation8], %s6636
          %6639 = dma.done %s6634, 128
        $region80: #{tpu_custom_call.1} parent=71 // pred_fallthru
          _
      $region72: #{tpu_custom_call.1} parent=5 // pred_fallthru
        _
    $region6: #{tpu_custom_call.1} parent=1 // loop_footer
      %s29 = sadd.s32 1, %s25
    $region7: #{tpu_custom_call.1} parent=1 // loop_footer_branch
      %24 = sbr.rel target = $region3
    $region8: #{tpu_custom_call.1} parent=1 // loop_exit
      _
    %6640 = vsyncpa [#allocation4], 1
    %s6641 = scalar_lea.sflag [#allocation4], 1
    %6642 = vsyncpa %s6641, 1
    %6643 = vsyncpa [#allocation7], 1
    %6644 = vsyncpa [#allocation5], 1
    %s6645 = scalar_lea.sflag [#allocation5], 1
    %6646 = vsyncpa %s6645, 1

</llo_original>
